<compile_context>
chip_gen: v6e
topology: v6e:2x2x1
jax: 0.10.0
libtpu: 0.0.40
codegen_flags: <defaults>
</compile_context>

<pallas_src>
import jax
import jax.numpy as jnp
from jax.experimental import pallas as pl
from jax.experimental.pallas import tpu as pltpu

EPS = 1e-5  # PyTorch InstanceNorm2d default eps


def _round_up(v, m):
    return (v + m - 1) // m * m


def _vmem_capacity_bytes():
    """Physical VMEM of the local TPU generation, with a conservative fallback."""
    try:
        info = pltpu.get_tpu_info()
        cap = getattr(info, "vmem_capacity_bytes", None)
        if cap:
            return int(cap)
    except Exception:
        pass
    return 64 * 1024 * 1024  # v7x-sized conservative default


def _conv3x3_instancenorm(img, wf_ref, colcat_ref, acc_ref):
    """reflect_pad(1) -> conv3x3 (no bias) -> InstanceNorm2d(affine=False), one sample.

    img:        (H, W, C) float32 value.
    wf_ref:     (3, 3C, C) bf16 ref; kw folded into the contraction dim:
                wf[kh, kw*C + ci, co] == weight[kh, kw, ci, co].
    colcat_ref: (H+2, Wp, 3C) bf16 VMEM scratch, Wp = round_up(W, 16).
                Row r holds reflect-padded row r; channel group kw holds that padded
                row shifted so that colcat[r, w, kw*C:kw*C+C] == pad[r, w+kw, :].
    acc_ref:    (H, Wp, C) f32 VMEM scratch accumulator.
    Returns (H, W, C) float32 normalized conv output.
    """
    H, W, C = img.shape
    Wp = colcat_ref.shape[1]
    rows = H * Wp
    img_bf = img.astype(jnp.bfloat16)

    # Junk columns [W, Wp): keep them exactly zero so the matmul produces exact zeros
    # there and the InstanceNorm sums over the full Wp pitch remain correct.
    if Wp > W:
        colcat_ref[:, W:, :] = jnp.zeros((H + 2, Wp - W, 3 * C), jnp.bfloat16)

    # ---- build the three kw-shifted copies (ReflectionPad2d(1) fused in) ----
    # Interior rows 1..H hold padded rows 1..H (= image rows 0..H-1).
    # group kw=0 : pad[r, w]   = [img col 1 | img cols 0..W-2]
    colcat_ref[1:H + 1, 0:1, 0:C] = img_bf[:, 1:2, :]
    colcat_ref[1:H + 1, 1:W, 0:C] = img_bf[:, 0:W - 1, :]
    # group kw=1 : pad[r, w+1] = img cols 0..W-1  (aligned bulk store)
    colcat_ref[1:H + 1, 0:W, C:2 * C] = img_bf
    # group kw=2 : pad[r, w+2] = [img cols 1..W-1 | img col W-2]
    colcat_ref[1:H + 1, 0:W - 1, 2 * C:3 * C] = img_bf[:, 1:W, :]
    colcat_ref[1:H + 1, W - 1:W, 2 * C:3 * C] = img_bf[:, W - 2:W - 1, :]
    # Reflected top / bottom padded rows: whole-row copies cover all three groups
    # (pad row 0 = img row 1 = pad row 2; pad row H+1 = img row H-2 = pad row H-1).
    colcat_ref[0, :, :] = colcat_ref[2, :, :]
    colcat_ref[H + 1, :, :] = colcat_ref[H - 1, :, :]

    # ---- 3 matmuls with K = 3C; each kh tap slices the untiled leading axis and the
    # reshape is layout-free (Wp % 16 == 0), so every slice is sublane-aligned. ----
    for kh in range(3):
        tap = colcat_ref[kh:kh + H, :, :].reshape(rows, 3 * C)
        d = jnp.dot(tap, wf_ref[kh, :, :],
                    preferred_element_type=jnp.float32).reshape(H, Wp, C)
        if kh == 0:
            acc_ref[...] = d
        else:
            acc_ref[...] += d

    # ---- InstanceNorm2d(affine=False): one-pass stats over the valid H*W positions
    # (junk columns contribute exact zeros to both sums, divisor stays H*W). ----
    y = acc_ref[...]
    inv_n = 1.0 / float(H * W)
    s1 = jnp.sum(jnp.sum(y, axis=0, keepdims=True), axis=1, keepdims=True)
    s2 = jnp.sum(jnp.sum(y * y, axis=0, keepdims=True), axis=1, keepdims=True)
    mean = s1 * inv_n
    var = jnp.maximum(s2 * inv_n - mean * mean, 0.0)  # biased var (PyTorch IN), clamp cancellation
    yn = (y - mean) * jax.lax.rsqrt(var + EPS)
    return yn[:, :W, :]


def resnet_block_kernel(x_ref, wf1_ref, wf2_ref, o_ref, colcat_ref, acc_ref):
    # x_ref/o_ref: (1, H, W, C) f32; wf*_ref: (3, 3C, C) bf16 (kw folded into K).
    y = _conv3x3_instancenorm(x_ref[0], wf1_ref, colcat_ref, acc_ref)
    y = jnp.maximum(y, 0.0)                            # ReLU
    # TODO(synk): use_dropout=True variant would need pltpu.prng_* here; this block
    # implements the use_dropout=False configuration.
    y = _conv3x3_instancenorm(y, wf2_ref, colcat_ref, acc_ref)
    # Residual add: re-read the (still VMEM-resident) input block instead of holding a
    # live f32 copy of it across both conv stages.
    o_ref[0] = (x_ref[0] + y).astype(o_ref.dtype)


def resnet_block_forward(x_nchw, params):
    """ResnetBlock forward.  x_nchw: (N, C, H, W) float32 -> (N, C, H, W) float32."""
    w1, _b1, w2, _b2 = params
    # NOTE: conv bias immediately followed by InstanceNorm2d(affine=False) is a
    # mathematical no-op (mean subtraction removes any per-channel constant), so the
    # biases are never sent to the kernel.  (True of the PyTorch reference as well.)
    x = jnp.transpose(x_nchw, (0, 2, 3, 1)).astype(jnp.float32)   # NCHW -> NHWC
    N, H, W, C = x.shape
    Wp = _round_up(W, 16)          # bf16 sublane tile => layout-free flat reshape

    # Weights: (3, 3, Cin, Cout) -> (3, 3*Cin, Cout), kw folded into K; bf16 MXU feed.
    wf1 = w1.astype(jnp.bfloat16).reshape(3, 3 * C, C)
    wf2 = w2.astype(jnp.bfloat16).reshape(3, 3 * C, C)

    # Generation-aware scoped-VMEM budget (v5e/v6e: 128 MiB physical, v7x: 64 MiB).
    blk = H * W * C * 4                       # one f32 (1,H,W,C) I/O block
    wts = 9 * C * C * 2                       # one bf16 weight tensor
    colcat = (H + 2) * Wp * 3 * C * 2
    acc = H * Wp * C * 4
    temps = 4 * H * W * C * 4                 # live f32 temporaries headroom
    est = 2 * blk + 2 * blk + 2 * 2 * wts + colcat + acc + temps
    cap = (_vmem_capacity_bytes() * 85) // 100
    vmem_limit = int(min(max(int(1.5 * est), 32 * 1024 * 1024), cap))
    # TODO(synk): when `est` exceeds `cap` (e.g. C=256 with H=W>~96 on v7x) add H-row
    # tiling with halo rows + two-pass InstanceNorm statistics (and a second parallel
    # grid axis so both v7x TensorCores stay busy at N=1).

    def call(single_buffer_weights):
        if single_buffer_weights:
            # Grid-constant weights: never re-fetched across grid steps, so one
            # pipeline buffer is enough (saves VMEM, zero perf cost).
            w_spec = pl.BlockSpec((3, 3 * C, C), lambda n: (0, 0, 0),
                                  pipeline_mode=pl.Buffered(1))
        else:
            w_spec = pl.BlockSpec((3, 3 * C, C), lambda n: (0, 0, 0))
        return pl.pallas_call(
            resnet_block_kernel,
            out_shape=jax.ShapeDtypeStruct((N, H, W, C), jnp.float32),
            grid_spec=pltpu.PrefetchScalarGridSpec(
                num_scalar_prefetch=0,
                grid=(N,),
                in_specs=[
                    pl.BlockSpec((1, H, W, C), lambda n: (n, 0, 0, 0)),
                    w_spec,
                    w_spec,
                ],
                out_specs=pl.BlockSpec((1, H, W, C), lambda n: (n, 0, 0, 0)),
                scratch_shapes=[
                    pltpu.VMEM((H + 2, Wp, 3 * C), jnp.bfloat16),  # kw-folded padded image
                    pltpu.VMEM((H, Wp, C), jnp.float32),           # conv f32 accumulator
                ],
            ),
            compiler_params=pltpu.CompilerParams(
                dimension_semantics=("parallel",),
                vmem_limit_bytes=vmem_limit,
            ),
        )(x, wf1, wf2)

    try:
        out = call(single_buffer_weights=True)
    except Exception:
        # Fallback for JAX versions where pl.Buffered(buffer_count=1) is rejected.
        out = call(single_buffer_weights=False)
    return jnp.transpose(out, (0, 3, 1, 2))             # NHWC -> NCHW


def init_params(key, dim):
    """Deterministic parameter init.

    Conv weights stored as (3, 3, Cin, Cout); bias as (1, C).
    NOTE: real PyTorch Conv2d weights (Cout, Cin, 3, 3) must be permuted with
    transpose(2, 3, 1, 0) before being used here.  Biases are kept for interface
    parity but are mathematically inert under InstanceNorm2d(affine=False).
    """
    k1, k2, k3, k4 = jax.random.split(key, 4)
    fan_in = 3 * 3 * dim
    scale = 1.0 / jnp.sqrt(fan_in)
    w1 = jax.random.uniform(k1, (3, 3, dim, dim), jnp.float32, -scale, scale)
    b1 = jax.random.uniform(k2, (1, dim), jnp.float32, -scale, scale)
    w2 = jax.random.uniform(k3, (3, 3, dim, dim), jnp.float32, -scale, scale)
    b2 = jax.random.uniform(k4, (1, dim), jnp.float32, -scale, scale)
    return (w1, b1, w2, b2)


if __name__ == "__main__":
    key = jax.random.PRNGKey(0)
    kx, kp = jax.random.split(key)

    N, C, H, W = 2, 4, 16, 16  # dim = 4
    x = jax.random.normal(kx, (N, C, H, W), jnp.float32)
    params = init_params(kp, C)

    out = resnet_block_forward(x, params)
    out = jax.block_until_ready(out)
    assert out.shape == (N, C, H, W)
    assert bool(jnp.all(jnp.isfinite(out)))
    print("KERNEL_OK")
</pallas_src>

<mosaic_0001>
module attributes {stable_mosaic.version = 11 : i64} {
  func.func @resnet_block_kernel(%arg0: i32, %arg1: memref<1x16x16x4xf32, #tpu.memory_space<vmem>>, %arg2: memref<3x12x4xbf16, #tpu.memory_space<vmem>>, %arg3: memref<3x12x4xbf16, #tpu.memory_space<vmem>>, %arg4: memref<1x16x16x4xf32, #tpu.memory_space<vmem>>, %arg5: memref<18x16x12xbf16, #tpu.memory_space<vmem>>, %arg6: memref<16x16x4xf32, #tpu.memory_space<vmem>>) attributes {dimension_semantics = [#tpu.dimension_semantics<parallel>], iteration_bounds = array<i64: 2>, scalar_prefetch = 0 : i64, scratch_operands = 2 : i64, tpu.core_type = #tpu.core_type<tc>, window_params = [{transform_indices = @transform_0, window_bounds = array<i64: 1, 16, 16, 4>}, {pipeline_mode = #tpu.pipeline_mode<synchronous>, transform_indices = @transform_1, window_bounds = array<i64: 3, 12, 4>}, {pipeline_mode = #tpu.pipeline_mode<synchronous>, transform_indices = @transform_2, window_bounds = array<i64: 3, 12, 4>}, {transform_indices = @transform_3, window_bounds = array<i64: 1, 16, 16, 4>}]} {
    %c0 = arith.constant 0 : index
    %c0_0 = arith.constant 0 : index
    %c0_1 = arith.constant 0 : index
    %c0_2 = arith.constant 0 : index
    %0 = vector.load %arg1[%c0, %c0_0, %c0_1, %c0_2] : memref<1x16x16x4xf32, #tpu.memory_space<vmem>>, vector<1x16x16x4xf32>
    %1 = vector.shape_cast %0 : vector<1x16x16x4xf32> to vector<16x16x4xf32>
    %2 = arith.truncf %1 : vector<16x16x4xf32> to vector<16x16x4xbf16>
    %3 = vector.extract_strided_slice %2 {offsets = [0, 1, 0], sizes = [16, 1, 4], strides = [1, 1, 1]} : vector<16x16x4xbf16> to vector<16x1x4xbf16>
    %c1 = arith.constant 1 : index
    %c0_3 = arith.constant 0 : index
    %c0_4 = arith.constant 0 : index
    %4 = vector.load %arg5[%c1, %c0_3, %c0_4] : memref<18x16x12xbf16, #tpu.memory_space<vmem>>, vector<16x1x4xbf16>
    tpu.vector_store %arg5[%c1, %c0_3, %c0_4], %3 {strides = array<i32>} : memref<18x16x12xbf16, #tpu.memory_space<vmem>>, vector<16x1x4xbf16>,
    %5 = vector.extract_strided_slice %2 {offsets = [0, 0, 0], sizes = [16, 15, 4], strides = [1, 1, 1]} : vector<16x16x4xbf16> to vector<16x15x4xbf16>
    %c1_5 = arith.constant 1 : index
    %c1_6 = arith.constant 1 : index
    %c0_7 = arith.constant 0 : index
    %6 = vector.load %arg5[%c1_5, %c1_6, %c0_7] : memref<18x16x12xbf16, #tpu.memory_space<vmem>>, vector<16x15x4xbf16>
    tpu.vector_store %arg5[%c1_5, %c1_6, %c0_7], %5 {strides = array<i32>} : memref<18x16x12xbf16, #tpu.memory_space<vmem>>, vector<16x15x4xbf16>,
    %c1_8 = arith.constant 1 : index
    %c0_9 = arith.constant 0 : index
    %c4 = arith.constant 4 : index
    %7 = vector.load %arg5[%c1_8, %c0_9, %c4] : memref<18x16x12xbf16, #tpu.memory_space<vmem>>, vector<16x16x4xbf16>
    tpu.vector_store %arg5[%c1_8, %c0_9, %c4], %2 {strides = array<i32>} : memref<18x16x12xbf16, #tpu.memory_space<vmem>>, vector<16x16x4xbf16>,
    %8 = vector.extract_strided_slice %2 {offsets = [0, 1, 0], sizes = [16, 15, 4], strides = [1, 1, 1]} : vector<16x16x4xbf16> to vector<16x15x4xbf16>
    %c1_10 = arith.constant 1 : index
    %c0_11 = arith.constant 0 : index
    %c8 = arith.constant 8 : index
    %9 = vector.load %arg5[%c1_10, %c0_11, %c8] : memref<18x16x12xbf16, #tpu.memory_space<vmem>>, vector<16x15x4xbf16>
    tpu.vector_store %arg5[%c1_10, %c0_11, %c8], %8 {strides = array<i32>} : memref<18x16x12xbf16, #tpu.memory_space<vmem>>, vector<16x15x4xbf16>,
    %10 = vector.extract_strided_slice %2 {offsets = [0, 14, 0], sizes = [16, 1, 4], strides = [1, 1, 1]} : vector<16x16x4xbf16> to vector<16x1x4xbf16>
    %c1_12 = arith.constant 1 : index
    %c15 = arith.constant 15 : index
    %c8_13 = arith.constant 8 : index
    %11 = vector.load %arg5[%c1_12, %c15, %c8_13] : memref<18x16x12xbf16, #tpu.memory_space<vmem>>, vector<16x1x4xbf16>
    tpu.vector_store %arg5[%c1_12, %c15, %c8_13], %10 {strides = array<i32>} : memref<18x16x12xbf16, #tpu.memory_space<vmem>>, vector<16x1x4xbf16>,
    %c2 = arith.constant 2 : index
    %c0_14 = arith.constant 0 : index
    %c0_15 = arith.constant 0 : index
    %12 = vector.load %arg5[%c2, %c0_14, %c0_15] : memref<18x16x12xbf16, #tpu.memory_space<vmem>>, vector<1x16x12xbf16>
    %13 = vector.shape_cast %12 : vector<1x16x12xbf16> to vector<16x12xbf16>
    %c0_16 = arith.constant 0 : index
    %c0_17 = arith.constant 0 : index
    %c0_18 = arith.constant 0 : index
    %14 = vector.load %arg5[%c0_16, %c0_17, %c0_18] : memref<18x16x12xbf16, #tpu.memory_space<vmem>>, vector<1x16x12xbf16>
    %15 = vector.shape_cast %14 : vector<1x16x12xbf16> to vector<16x12xbf16>
    %16 = vector.shape_cast %13 : vector<16x12xbf16> to vector<1x16x12xbf16>
    tpu.vector_store %arg5[%c0_16, %c0_17, %c0_18], %16 {strides = array<i32>} : memref<18x16x12xbf16, #tpu.memory_space<vmem>>, vector<1x16x12xbf16>,
    %c15_19 = arith.constant 15 : index
    %c0_20 = arith.constant 0 : index
    %c0_21 = arith.constant 0 : index
    %17 = vector.load %arg5[%c15_19, %c0_20, %c0_21] : memref<18x16x12xbf16, #tpu.memory_space<vmem>>, vector<1x16x12xbf16>
    %18 = vector.shape_cast %17 : vector<1x16x12xbf16> to vector<16x12xbf16>
    %c17 = arith.constant 17 : index
    %c0_22 = arith.constant 0 : index
    %c0_23 = arith.constant 0 : index
    %19 = vector.load %arg5[%c17, %c0_22, %c0_23] : memref<18x16x12xbf16, #tpu.memory_space<vmem>>, vector<1x16x12xbf16>
    %20 = vector.shape_cast %19 : vector<1x16x12xbf16> to vector<16x12xbf16>
    %21 = vector.shape_cast %18 : vector<16x12xbf16> to vector<1x16x12xbf16>
    tpu.vector_store %arg5[%c17, %c0_22, %c0_23], %21 {strides = array<i32>} : memref<18x16x12xbf16, #tpu.memory_space<vmem>>, vector<1x16x12xbf16>,
    %c0_24 = arith.constant 0 : index
    %c0_25 = arith.constant 0 : index
    %c0_26 = arith.constant 0 : index
    %22 = vector.load %arg5[%c0_24, %c0_25, %c0_26] : memref<18x16x12xbf16, #tpu.memory_space<vmem>>, vector<16x16x12xbf16>
    %23 = vector.shape_cast %22 : vector<16x16x12xbf16> to vector<256x12xbf16>
    %c0_27 = arith.constant 0 : index
    %c0_28 = arith.constant 0 : index
    %c0_29 = arith.constant 0 : index
    %24 = vector.load %arg2[%c0_27, %c0_28, %c0_29] : memref<3x12x4xbf16, #tpu.memory_space<vmem>>, vector<1x12x4xbf16>
    %25 = vector.shape_cast %24 : vector<1x12x4xbf16> to vector<12x4xbf16>
    %cst = arith.constant dense<0.000000e+00> : vector<256x4xf32>
    %26 = tpu.matmul %23, %25, %cst {dimension_numbers = #tpu.dot_dimension_numbers<[1], [0], [0], [1], [0, 0, 1, 1], [], []>} : vector<256x12xbf16>, vector<12x4xbf16>, vector<256x4xf32> -> vector<256x4xf32>
    %27 = vector.shape_cast %26 : vector<256x4xf32> to vector<16x16x4xf32>
    %c0_30 = arith.constant 0 : index
    %c0_31 = arith.constant 0 : index
    %c0_32 = arith.constant 0 : index
    %28 = vector.load %arg6[%c0_30, %c0_31, %c0_32] : memref<16x16x4xf32, #tpu.memory_space<vmem>>, vector<16x16x4xf32>
    tpu.vector_store %arg6[%c0_30, %c0_31, %c0_32], %27 {strides = array<i32>} : memref<16x16x4xf32, #tpu.memory_space<vmem>>, vector<16x16x4xf32>,
    %c1_33 = arith.constant 1 : index
    %c0_34 = arith.constant 0 : index
    %c0_35 = arith.constant 0 : index
    %29 = vector.load %arg5[%c1_33, %c0_34, %c0_35] : memref<18x16x12xbf16, #tpu.memory_space<vmem>>, vector<16x16x12xbf16>
    %30 = vector.shape_cast %29 : vector<16x16x12xbf16> to vector<256x12xbf16>
    %c1_36 = arith.constant 1 : index
    %c0_37 = arith.constant 0 : index
    %c0_38 = arith.constant 0 : index
    %31 = vector.load %arg2[%c1_36, %c0_37, %c0_38] : memref<3x12x4xbf16, #tpu.memory_space<vmem>>, vector<1x12x4xbf16>
    %32 = vector.shape_cast %31 : vector<1x12x4xbf16> to vector<12x4xbf16>
    %cst_39 = arith.constant dense<0.000000e+00> : vector<256x4xf32>
    %33 = tpu.matmul %30, %32, %cst_39 {dimension_numbers = #tpu.dot_dimension_numbers<[1], [0], [0], [1], [0, 0, 1, 1], [], []>} : vector<256x12xbf16>, vector<12x4xbf16>, vector<256x4xf32> -> vector<256x4xf32>
    %34 = vector.shape_cast %33 : vector<256x4xf32> to vector<16x16x4xf32>
    %c0_40 = arith.constant 0 : index
    %c0_41 = arith.constant 0 : index
    %c0_42 = arith.constant 0 : index
    %35 = vector.load %arg6[%c0_40, %c0_41, %c0_42] : memref<16x16x4xf32, #tpu.memory_space<vmem>>, vector<16x16x4xf32>
    %36 = arith.addf %35, %34 : vector<16x16x4xf32>
    %c0_43 = arith.constant 0 : index
    %c0_44 = arith.constant 0 : index
    %c0_45 = arith.constant 0 : index
    %37 = vector.load %arg6[%c0_43, %c0_44, %c0_45] : memref<16x16x4xf32, #tpu.memory_space<vmem>>, vector<16x16x4xf32>
    tpu.vector_store %arg6[%c0_43, %c0_44, %c0_45], %36 {strides = array<i32>} : memref<16x16x4xf32, #tpu.memory_space<vmem>>, vector<16x16x4xf32>,
    %c2_46 = arith.constant 2 : index
    %c0_47 = arith.constant 0 : index
    %c0_48 = arith.constant 0 : index
    %38 = vector.load %arg5[%c2_46, %c0_47, %c0_48] : memref<18x16x12xbf16, #tpu.memory_space<vmem>>, vector<16x16x12xbf16>
    %39 = vector.shape_cast %38 : vector<16x16x12xbf16> to vector<256x12xbf16>
    %c2_49 = arith.constant 2 : index
    %c0_50 = arith.constant 0 : index
    %c0_51 = arith.constant 0 : index
    %40 = vector.load %arg2[%c2_49, %c0_50, %c0_51] : memref<3x12x4xbf16, #tpu.memory_space<vmem>>, vector<1x12x4xbf16>
    %41 = vector.shape_cast %40 : vector<1x12x4xbf16> to vector<12x4xbf16>
    %cst_52 = arith.constant dense<0.000000e+00> : vector<256x4xf32>
    %42 = tpu.matmul %39, %41, %cst_52 {dimension_numbers = #tpu.dot_dimension_numbers<[1], [0], [0], [1], [0, 0, 1, 1], [], []>} : vector<256x12xbf16>, vector<12x4xbf16>, vector<256x4xf32> -> vector<256x4xf32>
    %43 = vector.shape_cast %42 : vector<256x4xf32> to vector<16x16x4xf32>
    %c0_53 = arith.constant 0 : index
    %c0_54 = arith.constant 0 : index
    %c0_55 = arith.constant 0 : index
    %44 = vector.load %arg6[%c0_53, %c0_54, %c0_55] : memref<16x16x4xf32, #tpu.memory_space<vmem>>, vector<16x16x4xf32>
    %45 = arith.addf %44, %43 : vector<16x16x4xf32>
    %c0_56 = arith.constant 0 : index
    %c0_57 = arith.constant 0 : index
    %c0_58 = arith.constant 0 : index
    %46 = vector.load %arg6[%c0_56, %c0_57, %c0_58] : memref<16x16x4xf32, #tpu.memory_space<vmem>>, vector<16x16x4xf32>
    tpu.vector_store %arg6[%c0_56, %c0_57, %c0_58], %45 {strides = array<i32>} : memref<16x16x4xf32, #tpu.memory_space<vmem>>, vector<16x16x4xf32>,
    %c0_59 = arith.constant 0 : index
    %c0_60 = arith.constant 0 : index
    %c0_61 = arith.constant 0 : index
    %47 = vector.load %arg6[%c0_59, %c0_60, %c0_61] : memref<16x16x4xf32, #tpu.memory_space<vmem>>, vector<16x16x4xf32>
    %cst_62 = arith.constant dense<0.000000e+00> : vector<16x4xf32>
    %48 = vector.multi_reduction <add>, %47, %cst_62 [0] : vector<16x16x4xf32> to vector<16x4xf32>
    %49 = vector.shape_cast %48 : vector<16x4xf32> to vector<1x16x4xf32>
    %cst_63 = arith.constant dense<0.000000e+00> : vector<1x4xf32>
    %50 = vector.multi_reduction <add>, %49, %cst_63 [1] : vector<1x16x4xf32> to vector<1x4xf32>
    %51 = vector.shape_cast %50 : vector<1x4xf32> to vector<1x1x4xf32>
    %52 = arith.mulf %47, %47 : vector<16x16x4xf32>
    %cst_64 = arith.constant dense<0.000000e+00> : vector<16x4xf32>
    %53 = vector.multi_reduction <add>, %52, %cst_64 [0] : vector<16x16x4xf32> to vector<16x4xf32>
    %54 = vector.shape_cast %53 : vector<16x4xf32> to vector<1x16x4xf32>
    %cst_65 = arith.constant dense<0.000000e+00> : vector<1x4xf32>
    %55 = vector.multi_reduction <add>, %54, %cst_65 [1] : vector<1x16x4xf32> to vector<1x4xf32>
    %56 = vector.shape_cast %55 : vector<1x4xf32> to vector<1x1x4xf32>
    %cst_66 = arith.constant 3.906250e-03 : f32
    %57 = vector.broadcast %cst_66 : f32 to vector<1x1x4xf32>
    %58 = arith.mulf %51, %57 : vector<1x1x4xf32>
    %cst_67 = arith.constant 3.906250e-03 : f32
    %59 = vector.broadcast %cst_67 : f32 to vector<1x1x4xf32>
    %60 = arith.mulf %56, %59 : vector<1x1x4xf32>
    %61 = arith.mulf %58, %58 : vector<1x1x4xf32>
    %62 = arith.subf %60, %61 : vector<1x1x4xf32>
    %cst_68 = arith.constant 0.000000e+00 : f32
    %63 = vector.broadcast %cst_68 : f32 to vector<1x1x4xf32>
    %64 = arith.maximumf %62, %63 : vector<1x1x4xf32>
    %65 = vector.broadcast %58 : vector<1x1x4xf32> to vector<16x16x4xf32>
    %66 = arith.subf %47, %65 : vector<16x16x4xf32>
    %cst_69 = arith.constant 9.99999974E-6 : f32
    %67 = vector.broadcast %cst_69 : f32 to vector<1x1x4xf32>
    %68 = arith.addf %64, %67 : vector<1x1x4xf32>
    %69 = math.rsqrt %68 : vector<1x1x4xf32>
    %70 = vector.broadcast %69 : vector<1x1x4xf32> to vector<16x16x4xf32>
    %71 = arith.mulf %66, %70 : vector<16x16x4xf32>
    %cst_70 = arith.constant 0.000000e+00 : f32
    %72 = vector.broadcast %cst_70 : f32 to vector<16x16x4xf32>
    %73 = arith.maximumf %71, %72 : vector<16x16x4xf32>
    %74 = arith.truncf %73 : vector<16x16x4xf32> to vector<16x16x4xbf16>
    %75 = vector.extract_strided_slice %74 {offsets = [0, 1, 0], sizes = [16, 1, 4], strides = [1, 1, 1]} : vector<16x16x4xbf16> to vector<16x1x4xbf16>
    %c1_71 = arith.constant 1 : index
    %c0_72 = arith.constant 0 : index
    %c0_73 = arith.constant 0 : index
    %76 = vector.load %arg5[%c1_71, %c0_72, %c0_73] : memref<18x16x12xbf16, #tpu.memory_space<vmem>>, vector<16x1x4xbf16>
    tpu.vector_store %arg5[%c1_71, %c0_72, %c0_73], %75 {strides = array<i32>} : memref<18x16x12xbf16, #tpu.memory_space<vmem>>, vector<16x1x4xbf16>,
    %77 = vector.extract_strided_slice %74 {offsets = [0, 0, 0], sizes = [16, 15, 4], strides = [1, 1, 1]} : vector<16x16x4xbf16> to vector<16x15x4xbf16>
    %c1_74 = arith.constant 1 : index
    %c1_75 = arith.constant 1 : index
    %c0_76 = arith.constant 0 : index
    %78 = vector.load %arg5[%c1_74, %c1_75, %c0_76] : memref<18x16x12xbf16, #tpu.memory_space<vmem>>, vector<16x15x4xbf16>
    tpu.vector_store %arg5[%c1_74, %c1_75, %c0_76], %77 {strides = array<i32>} : memref<18x16x12xbf16, #tpu.memory_space<vmem>>, vector<16x15x4xbf16>,
    %c1_77 = arith.constant 1 : index
    %c0_78 = arith.constant 0 : index
    %c4_79 = arith.constant 4 : index
    %79 = vector.load %arg5[%c1_77, %c0_78, %c4_79] : memref<18x16x12xbf16, #tpu.memory_space<vmem>>, vector<16x16x4xbf16>
    tpu.vector_store %arg5[%c1_77, %c0_78, %c4_79], %74 {strides = array<i32>} : memref<18x16x12xbf16, #tpu.memory_space<vmem>>, vector<16x16x4xbf16>,
    %80 = vector.extract_strided_slice %74 {offsets = [0, 1, 0], sizes = [16, 15, 4], strides = [1, 1, 1]} : vector<16x16x4xbf16> to vector<16x15x4xbf16>
    %c1_80 = arith.constant 1 : index
    %c0_81 = arith.constant 0 : index
    %c8_82 = arith.constant 8 : index
    %81 = vector.load %arg5[%c1_80, %c0_81, %c8_82] : memref<18x16x12xbf16, #tpu.memory_space<vmem>>, vector<16x15x4xbf16>
    tpu.vector_store %arg5[%c1_80, %c0_81, %c8_82], %80 {strides = array<i32>} : memref<18x16x12xbf16, #tpu.memory_space<vmem>>, vector<16x15x4xbf16>,
    %82 = vector.extract_strided_slice %74 {offsets = [0, 14, 0], sizes = [16, 1, 4], strides = [1, 1, 1]} : vector<16x16x4xbf16> to vector<16x1x4xbf16>
    %c1_83 = arith.constant 1 : index
    %c15_84 = arith.constant 15 : index
    %c8_85 = arith.constant 8 : index
    %83 = vector.load %arg5[%c1_83, %c15_84, %c8_85] : memref<18x16x12xbf16, #tpu.memory_space<vmem>>, vector<16x1x4xbf16>
    tpu.vector_store %arg5[%c1_83, %c15_84, %c8_85], %82 {strides = array<i32>} : memref<18x16x12xbf16, #tpu.memory_space<vmem>>, vector<16x1x4xbf16>,
    %c2_86 = arith.constant 2 : index
    %c0_87 = arith.constant 0 : index
    %c0_88 = arith.constant 0 : index
    %84 = vector.load %arg5[%c2_86, %c0_87, %c0_88] : memref<18x16x12xbf16, #tpu.memory_space<vmem>>, vector<1x16x12xbf16>
    %85 = vector.shape_cast %84 : vector<1x16x12xbf16> to vector<16x12xbf16>
    %c0_89 = arith.constant 0 : index
    %c0_90 = arith.constant 0 : index
    %c0_91 = arith.constant 0 : index
    %86 = vector.load %arg5[%c0_89, %c0_90, %c0_91] : memref<18x16x12xbf16, #tpu.memory_space<vmem>>, vector<1x16x12xbf16>
    %87 = vector.shape_cast %86 : vector<1x16x12xbf16> to vector<16x12xbf16>
    %88 = vector.shape_cast %85 : vector<16x12xbf16> to vector<1x16x12xbf16>
    tpu.vector_store %arg5[%c0_89, %c0_90, %c0_91], %88 {strides = array<i32>} : memref<18x16x12xbf16, #tpu.memory_space<vmem>>, vector<1x16x12xbf16>,
    %c15_92 = arith.constant 15 : index
    %c0_93 = arith.constant 0 : index
    %c0_94 = arith.constant 0 : index
    %89 = vector.load %arg5[%c15_92, %c0_93, %c0_94] : memref<18x16x12xbf16, #tpu.memory_space<vmem>>, vector<1x16x12xbf16>
    %90 = vector.shape_cast %89 : vector<1x16x12xbf16> to vector<16x12xbf16>
    %c17_95 = arith.constant 17 : index
    %c0_96 = arith.constant 0 : index
    %c0_97 = arith.constant 0 : index
    %91 = vector.load %arg5[%c17_95, %c0_96, %c0_97] : memref<18x16x12xbf16, #tpu.memory_space<vmem>>, vector<1x16x12xbf16>
    %92 = vector.shape_cast %91 : vector<1x16x12xbf16> to vector<16x12xbf16>
    %93 = vector.shape_cast %90 : vector<16x12xbf16> to vector<1x16x12xbf16>
    tpu.vector_store %arg5[%c17_95, %c0_96, %c0_97], %93 {strides = array<i32>} : memref<18x16x12xbf16, #tpu.memory_space<vmem>>, vector<1x16x12xbf16>,
    %c0_98 = arith.constant 0 : index
    %c0_99 = arith.constant 0 : index
    %c0_100 = arith.constant 0 : index
    %94 = vector.load %arg5[%c0_98, %c0_99, %c0_100] : memref<18x16x12xbf16, #tpu.memory_space<vmem>>, vector<16x16x12xbf16>
    %95 = vector.shape_cast %94 : vector<16x16x12xbf16> to vector<256x12xbf16>
    %c0_101 = arith.constant 0 : index
    %c0_102 = arith.constant 0 : index
    %c0_103 = arith.constant 0 : index
    %96 = vector.load %arg3[%c0_101, %c0_102, %c0_103] : memref<3x12x4xbf16, #tpu.memory_space<vmem>>, vector<1x12x4xbf16>
    %97 = vector.shape_cast %96 : vector<1x12x4xbf16> to vector<12x4xbf16>
    %cst_104 = arith.constant dense<0.000000e+00> : vector<256x4xf32>
    %98 = tpu.matmul %95, %97, %cst_104 {dimension_numbers = #tpu.dot_dimension_numbers<[1], [0], [0], [1], [0, 0, 1, 1], [], []>} : vector<256x12xbf16>, vector<12x4xbf16>, vector<256x4xf32> -> vector<256x4xf32>
    %99 = vector.shape_cast %98 : vector<256x4xf32> to vector<16x16x4xf32>
    %c0_105 = arith.constant 0 : index
    %c0_106 = arith.constant 0 : index
    %c0_107 = arith.constant 0 : index
    %100 = vector.load %arg6[%c0_105, %c0_106, %c0_107] : memref<16x16x4xf32, #tpu.memory_space<vmem>>, vector<16x16x4xf32>
    tpu.vector_store %arg6[%c0_105, %c0_106, %c0_107], %99 {strides = array<i32>} : memref<16x16x4xf32, #tpu.memory_space<vmem>>, vector<16x16x4xf32>,
    %c1_108 = arith.constant 1 : index
    %c0_109 = arith.constant 0 : index
    %c0_110 = arith.constant 0 : index
    %101 = vector.load %arg5[%c1_108, %c0_109, %c0_110] : memref<18x16x12xbf16, #tpu.memory_space<vmem>>, vector<16x16x12xbf16>
    %102 = vector.shape_cast %101 : vector<16x16x12xbf16> to vector<256x12xbf16>
    %c1_111 = arith.constant 1 : index
    %c0_112 = arith.constant 0 : index
    %c0_113 = arith.constant 0 : index
    %103 = vector.load %arg3[%c1_111, %c0_112, %c0_113] : memref<3x12x4xbf16, #tpu.memory_space<vmem>>, vector<1x12x4xbf16>
    %104 = vector.shape_cast %103 : vector<1x12x4xbf16> to vector<12x4xbf16>
    %cst_114 = arith.constant dense<0.000000e+00> : vector<256x4xf32>
    %105 = tpu.matmul %102, %104, %cst_114 {dimension_numbers = #tpu.dot_dimension_numbers<[1], [0], [0], [1], [0, 0, 1, 1], [], []>} : vector<256x12xbf16>, vector<12x4xbf16>, vector<256x4xf32> -> vector<256x4xf32>
    %106 = vector.shape_cast %105 : vector<256x4xf32> to vector<16x16x4xf32>
    %c0_115 = arith.constant 0 : index
    %c0_116 = arith.constant 0 : index
    %c0_117 = arith.constant 0 : index
    %107 = vector.load %arg6[%c0_115, %c0_116, %c0_117] : memref<16x16x4xf32, #tpu.memory_space<vmem>>, vector<16x16x4xf32>
    %108 = arith.addf %107, %106 : vector<16x16x4xf32>
    %c0_118 = arith.constant 0 : index
    %c0_119 = arith.constant 0 : index
    %c0_120 = arith.constant 0 : index
    %109 = vector.load %arg6[%c0_118, %c0_119, %c0_120] : memref<16x16x4xf32, #tpu.memory_space<vmem>>, vector<16x16x4xf32>
    tpu.vector_store %arg6[%c0_118, %c0_119, %c0_120], %108 {strides = array<i32>} : memref<16x16x4xf32, #tpu.memory_space<vmem>>, vector<16x16x4xf32>,
    %c2_121 = arith.constant 2 : index
    %c0_122 = arith.constant 0 : index
    %c0_123 = arith.constant 0 : index
    %110 = vector.load %arg5[%c2_121, %c0_122, %c0_123] : memref<18x16x12xbf16, #tpu.memory_space<vmem>>, vector<16x16x12xbf16>
    %111 = vector.shape_cast %110 : vector<16x16x12xbf16> to vector<256x12xbf16>
    %c2_124 = arith.constant 2 : index
    %c0_125 = arith.constant 0 : index
    %c0_126 = arith.constant 0 : index
    %112 = vector.load %arg3[%c2_124, %c0_125, %c0_126] : memref<3x12x4xbf16, #tpu.memory_space<vmem>>, vector<1x12x4xbf16>
    %113 = vector.shape_cast %112 : vector<1x12x4xbf16> to vector<12x4xbf16>
    %cst_127 = arith.constant dense<0.000000e+00> : vector<256x4xf32>
    %114 = tpu.matmul %111, %113, %cst_127 {dimension_numbers = #tpu.dot_dimension_numbers<[1], [0], [0], [1], [0, 0, 1, 1], [], []>} : vector<256x12xbf16>, vector<12x4xbf16>, vector<256x4xf32> -> vector<256x4xf32>
    %115 = vector.shape_cast %114 : vector<256x4xf32> to vector<16x16x4xf32>
    %c0_128 = arith.constant 0 : index
    %c0_129 = arith.constant 0 : index
    %c0_130 = arith.constant 0 : index
    %116 = vector.load %arg6[%c0_128, %c0_129, %c0_130] : memref<16x16x4xf32, #tpu.memory_space<vmem>>, vector<16x16x4xf32>
    %117 = arith.addf %116, %115 : vector<16x16x4xf32>
    %c0_131 = arith.constant 0 : index
    %c0_132 = arith.constant 0 : index
    %c0_133 = arith.constant 0 : index
    %118 = vector.load %arg6[%c0_131, %c0_132, %c0_133] : memref<16x16x4xf32, #tpu.memory_space<vmem>>, vector<16x16x4xf32>
    tpu.vector_store %arg6[%c0_131, %c0_132, %c0_133], %117 {strides = array<i32>} : memref<16x16x4xf32, #tpu.memory_space<vmem>>, vector<16x16x4xf32>,
    %c0_134 = arith.constant 0 : index
    %c0_135 = arith.constant 0 : index
    %c0_136 = arith.constant 0 : index
    %119 = vector.load %arg6[%c0_134, %c0_135, %c0_136] : memref<16x16x4xf32, #tpu.memory_space<vmem>>, vector<16x16x4xf32>
    %cst_137 = arith.constant dense<0.000000e+00> : vector<16x4xf32>
    %120 = vector.multi_reduction <add>, %119, %cst_137 [0] : vector<16x16x4xf32> to vector<16x4xf32>
    %121 = vector.shape_cast %120 : vector<16x4xf32> to vector<1x16x4xf32>
    %cst_138 = arith.constant dense<0.000000e+00> : vector<1x4xf32>
    %122 = vector.multi_reduction <add>, %121, %cst_138 [1] : vector<1x16x4xf32> to vector<1x4xf32>
    %123 = vector.shape_cast %122 : vector<1x4xf32> to vector<1x1x4xf32>
    %124 = arith.mulf %119, %119 : vector<16x16x4xf32>
    %cst_139 = arith.constant dense<0.000000e+00> : vector<16x4xf32>
    %125 = vector.multi_reduction <add>, %124, %cst_139 [0] : vector<16x16x4xf32> to vector<16x4xf32>
    %126 = vector.shape_cast %125 : vector<16x4xf32> to vector<1x16x4xf32>
    %cst_140 = arith.constant dense<0.000000e+00> : vector<1x4xf32>
    %127 = vector.multi_reduction <add>, %126, %cst_140 [1] : vector<1x16x4xf32> to vector<1x4xf32>
    %128 = vector.shape_cast %127 : vector<1x4xf32> to vector<1x1x4xf32>
    %cst_141 = arith.constant 3.906250e-03 : f32
    %129 = vector.broadcast %cst_141 : f32 to vector<1x1x4xf32>
    %130 = arith.mulf %123, %129 : vector<1x1x4xf32>
    %cst_142 = arith.constant 3.906250e-03 : f32
    %131 = vector.broadcast %cst_142 : f32 to vector<1x1x4xf32>
    %132 = arith.mulf %128, %131 : vector<1x1x4xf32>
    %133 = arith.mulf %130, %130 : vector<1x1x4xf32>
    %134 = arith.subf %132, %133 : vector<1x1x4xf32>
    %cst_143 = arith.constant 0.000000e+00 : f32
    %135 = vector.broadcast %cst_143 : f32 to vector<1x1x4xf32>
    %136 = arith.maximumf %134, %135 : vector<1x1x4xf32>
    %137 = vector.broadcast %130 : vector<1x1x4xf32> to vector<16x16x4xf32>
    %138 = arith.subf %119, %137 : vector<16x16x4xf32>
    %cst_144 = arith.constant 9.99999974E-6 : f32
    %139 = vector.broadcast %cst_144 : f32 to vector<1x1x4xf32>
    %140 = arith.addf %136, %139 : vector<1x1x4xf32>
    %141 = math.rsqrt %140 : vector<1x1x4xf32>
    %142 = vector.broadcast %141 : vector<1x1x4xf32> to vector<16x16x4xf32>
    %143 = arith.mulf %138, %142 : vector<16x16x4xf32>
    %c0_145 = arith.constant 0 : index
    %c0_146 = arith.constant 0 : index
    %c0_147 = arith.constant 0 : index
    %c0_148 = arith.constant 0 : index
    %144 = vector.load %arg1[%c0_145, %c0_146, %c0_147, %c0_148] : memref<1x16x16x4xf32, #tpu.memory_space<vmem>>, vector<1x16x16x4xf32>
    %145 = vector.shape_cast %144 : vector<1x16x16x4xf32> to vector<16x16x4xf32>
    %146 = arith.addf %145, %143 : vector<16x16x4xf32>
    %c0_149 = arith.constant 0 : index
    %c0_150 = arith.constant 0 : index
    %c0_151 = arith.constant 0 : index
    %c0_152 = arith.constant 0 : index
    %147 = vector.load %arg4[%c0_149, %c0_150, %c0_151, %c0_152] : memref<1x16x16x4xf32, #tpu.memory_space<vmem>>, vector<1x16x16x4xf32>
    %148 = vector.shape_cast %147 : vector<1x16x16x4xf32> to vector<16x16x4xf32>
    %149 = vector.shape_cast %146 : vector<16x16x4xf32> to vector<1x16x16x4xf32>
    tpu.vector_store %arg4[%c0_149, %c0_150, %c0_151, %c0_152], %149 {strides = array<i32>} : memref<1x16x16x4xf32, #tpu.memory_space<vmem>>, vector<1x16x16x4xf32>,
    return
  }
  func.func @transform_0(%arg0: i32) -> (i32, i32, i32, i32) {
    %c0_i32 = arith.constant 0 : i32
    %c0_i32_0 = arith.constant 0 : i32
    %c0_i32_1 = arith.constant 0 : i32
    %c0_i32_2 = arith.constant 0 : i32
    return %arg0, %c0_i32, %c0_i32_0, %c0_i32_1 : i32, i32, i32, i32
  }
  func.func @transform_1(%arg0: i32) -> (i32, i32, i32) {
    %c0_i32 = arith.constant 0 : i32
    %c0_i32_0 = arith.constant 0 : i32
    %c0_i32_1 = arith.constant 0 : i32
    %c0_i32_2 = arith.constant 0 : i32
    return %c0_i32, %c0_i32_0, %c0_i32_1 : i32, i32, i32
  }
  func.func @transform_2(%arg0: i32) -> (i32, i32, i32) {
    %c0_i32 = arith.constant 0 : i32
    %c0_i32_0 = arith.constant 0 : i32
    %c0_i32_1 = arith.constant 0 : i32
    %c0_i32_2 = arith.constant 0 : i32
    return %c0_i32, %c0_i32_0, %c0_i32_1 : i32, i32, i32
  }
  func.func @transform_3(%arg0: i32) -> (i32, i32, i32, i32) {
    %c0_i32 = arith.constant 0 : i32
    %c0_i32_0 = arith.constant 0 : i32
    %c0_i32_1 = arith.constant 0 : i32
    %c0_i32_2 = arith.constant 0 : i32
    return %arg0, %c0_i32, %c0_i32_0, %c0_i32_1 : i32, i32, i32, i32
  }
}

module attributes {stable_mosaic.version = 11 : i64} {
  func.func @resnet_block_kernel(%arg0: i32, %arg1: memref<1x16x16x4xf32, #tpu.memory_space<vmem>>, %arg2: memref<3x12x4xbf16, #tpu.memory_space<vmem>>, %arg3: memref<3x12x4xbf16, #tpu.memory_space<vmem>>, %arg4: memref<1x16x16x4xf32, #tpu.memory_space<vmem>>, %arg5: memref<18x16x12xbf16, #tpu.memory_space<vmem>>, %arg6: memref<16x16x4xf32, #tpu.memory_space<vmem>>) attributes {dimension_semantics = [#tpu.dimension_semantics<parallel>], iteration_bounds = array<i64: 2>, scalar_prefetch = 0 : i64, scratch_operands = 2 : i64, tpu.core_type = #tpu.core_type<tc>, window_params = [{transform_indices = @transform_0, window_bounds = array<i64: 1, 16, 16, 4>}, {pipeline_mode = #tpu.pipeline_mode<synchronous>, transform_indices = @transform_1, window_bounds = array<i64: 3, 12, 4>}, {pipeline_mode = #tpu.pipeline_mode<synchronous>, transform_indices = @transform_2, window_bounds = array<i64: 3, 12, 4>}, {transform_indices = @transform_3, window_bounds = array<i64: 1, 16, 16, 4>}]} {
    %c0 = arith.constant 0 : index
    %c0_0 = arith.constant 0 : index
    %c0_1 = arith.constant 0 : index
    %c0_2 = arith.constant 0 : index
    %0 = vector.load %arg1[%c0, %c0_0, %c0_1, %c0_2] : memref<1x16x16x4xf32, #tpu.memory_space<vmem>>, vector<1x16x16x4xf32>
    %1 = vector.shape_cast %0 : vector<1x16x16x4xf32> to vector<16x16x4xf32>
    %2 = arith.truncf %1 : vector<16x16x4xf32> to vector<16x16x4xbf16>
    %3 = vector.extract_strided_slice %2 {offsets = [0, 1, 0], sizes = [16, 1, 4], strides = [1, 1, 1]} : vector<16x16x4xbf16> to vector<16x1x4xbf16>
    %c1 = arith.constant 1 : index
    %c0_3 = arith.constant 0 : index
    %c0_4 = arith.constant 0 : index
    %4 = vector.load %arg5[%c1, %c0_3, %c0_4] : memref<18x16x12xbf16, #tpu.memory_space<vmem>>, vector<16x1x4xbf16>
    tpu.vector_store %arg5[%c1, %c0_3, %c0_4], %3 {strides = array<i32>} : memref<18x16x12xbf16, #tpu.memory_space<vmem>>, vector<16x1x4xbf16>,
    %5 = vector.extract_strided_slice %2 {offsets = [0, 0, 0], sizes = [16, 15, 4], strides = [1, 1, 1]} : vector<16x16x4xbf16> to vector<16x15x4xbf16>
    %c1_5 = arith.constant 1 : index
    %c1_6 = arith.constant 1 : index
    %c0_7 = arith.constant 0 : index
    %6 = vector.load %arg5[%c1_5, %c1_6, %c0_7] : memref<18x16x12xbf16, #tpu.memory_space<vmem>>, vector<16x15x4xbf16>
    tpu.vector_store %arg5[%c1_5, %c1_6, %c0_7], %5 {strides = array<i32>} : memref<18x16x12xbf16, #tpu.memory_space<vmem>>, vector<16x15x4xbf16>,
    %c1_8 = arith.constant 1 : index
    %c0_9 = arith.constant 0 : index
    %c4 = arith.constant 4 : index
    %7 = vector.load %arg5[%c1_8, %c0_9, %c4] : memref<18x16x12xbf16, #tpu.memory_space<vmem>>, vector<16x16x4xbf16>
    tpu.vector_store %arg5[%c1_8, %c0_9, %c4], %2 {strides = array<i32>} : memref<18x16x12xbf16, #tpu.memory_space<vmem>>, vector<16x16x4xbf16>,
    %8 = vector.extract_strided_slice %2 {offsets = [0, 1, 0], sizes = [16, 15, 4], strides = [1, 1, 1]} : vector<16x16x4xbf16> to vector<16x15x4xbf16>
    %c1_10 = arith.constant 1 : index
    %c0_11 = arith.constant 0 : index
    %c8 = arith.constant 8 : index
    %9 = vector.load %arg5[%c1_10, %c0_11, %c8] : memref<18x16x12xbf16, #tpu.memory_space<vmem>>, vector<16x15x4xbf16>
    tpu.vector_store %arg5[%c1_10, %c0_11, %c8], %8 {strides = array<i32>} : memref<18x16x12xbf16, #tpu.memory_space<vmem>>, vector<16x15x4xbf16>,
    %10 = vector.extract_strided_slice %2 {offsets = [0, 14, 0], sizes = [16, 1, 4], strides = [1, 1, 1]} : vector<16x16x4xbf16> to vector<16x1x4xbf16>
    %c1_12 = arith.constant 1 : index
    %c15 = arith.constant 15 : index
    %c8_13 = arith.constant 8 : index
    %11 = vector.load %arg5[%c1_12, %c15, %c8_13] : memref<18x16x12xbf16, #tpu.memory_space<vmem>>, vector<16x1x4xbf16>
    tpu.vector_store %arg5[%c1_12, %c15, %c8_13], %10 {strides = array<i32>} : memref<18x16x12xbf16, #tpu.memory_space<vmem>>, vector<16x1x4xbf16>,
    %c2 = arith.constant 2 : index
    %c0_14 = arith.constant 0 : index
    %c0_15 = arith.constant 0 : index
    %12 = vector.load %arg5[%c2, %c0_14, %c0_15] : memref<18x16x12xbf16, #tpu.memory_space<vmem>>, vector<1x16x12xbf16>
    %13 = vector.shape_cast %12 : vector<1x16x12xbf16> to vector<16x12xbf16>
    %c0_16 = arith.constant 0 : index
    %c0_17 = arith.constant 0 : index
    %c0_18 = arith.constant 0 : index
    %14 = vector.load %arg5[%c0_16, %c0_17, %c0_18] : memref<18x16x12xbf16, #tpu.memory_space<vmem>>, vector<1x16x12xbf16>
    %15 = vector.shape_cast %14 : vector<1x16x12xbf16> to vector<16x12xbf16>
    %16 = vector.shape_cast %13 : vector<16x12xbf16> to vector<1x16x12xbf16>
    tpu.vector_store %arg5[%c0_16, %c0_17, %c0_18], %16 {strides = array<i32>} : memref<18x16x12xbf16, #tpu.memory_space<vmem>>, vector<1x16x12xbf16>,
    %c15_19 = arith.constant 15 : index
    %c0_20 = arith.constant 0 : index
    %c0_21 = arith.constant 0 : index
    %17 = vector.load %arg5[%c15_19, %c0_20, %c0_21] : memref<18x16x12xbf16, #tpu.memory_space<vmem>>, vector<1x16x12xbf16>
    %18 = vector.shape_cast %17 : vector<1x16x12xbf16> to vector<16x12xbf16>
    %c17 = arith.constant 17 : index
    %c0_22 = arith.constant 0 : index
    %c0_23 = arith.constant 0 : index
    %19 = vector.load %arg5[%c17, %c0_22, %c0_23] : memref<18x16x12xbf16, #tpu.memory_space<vmem>>, vector<1x16x12xbf16>
    %20 = vector.shape_cast %19 : vector<1x16x12xbf16> to vector<16x12xbf16>
    %21 = vector.shape_cast %18 : vector<16x12xbf16> to vector<1x16x12xbf16>
    tpu.vector_store %arg5[%c17, %c0_22, %c0_23], %21 {strides = array<i32>} : memref<18x16x12xbf16, #tpu.memory_space<vmem>>, vector<1x16x12xbf16>,
    %c0_24 = arith.constant 0 : index
    %c0_25 = arith.constant 0 : index
    %c0_26 = arith.constant 0 : index
    %22 = vector.load %arg5[%c0_24, %c0_25, %c0_26] : memref<18x16x12xbf16, #tpu.memory_space<vmem>>, vector<16x16x12xbf16>
    %23 = vector.shape_cast %22 : vector<16x16x12xbf16> to vector<256x12xbf16>
    %c0_27 = arith.constant 0 : index
    %c0_28 = arith.constant 0 : index
    %c0_29 = arith.constant 0 : index
    %24 = vector.load %arg2[%c0_27, %c0_28, %c0_29] : memref<3x12x4xbf16, #tpu.memory_space<vmem>>, vector<1x12x4xbf16>
    %25 = vector.shape_cast %24 : vector<1x12x4xbf16> to vector<12x4xbf16>
    %cst = arith.constant dense<0.000000e+00> : vector<256x4xf32>
    %26 = tpu.matmul %23, %25, %cst {dimension_numbers = #tpu.dot_dimension_numbers<[1], [0], [0], [1], [0, 0, 1, 1], [], []>} : vector<256x12xbf16>, vector<12x4xbf16>, vector<256x4xf32> -> vector<256x4xf32>
    %27 = vector.shape_cast %26 : vector<256x4xf32> to vector<16x16x4xf32>
    %c0_30 = arith.constant 0 : index
    %c0_31 = arith.constant 0 : index
    %c0_32 = arith.constant 0 : index
    %28 = vector.load %arg6[%c0_30, %c0_31, %c0_32] : memref<16x16x4xf32, #tpu.memory_space<vmem>>, vector<16x16x4xf32>
    tpu.vector_store %arg6[%c0_30, %c0_31, %c0_32], %27 {strides = array<i32>} : memref<16x16x4xf32, #tpu.memory_space<vmem>>, vector<16x16x4xf32>,
    %c1_33 = arith.constant 1 : index
    %c0_34 = arith.constant 0 : index
    %c0_35 = arith.constant 0 : index
    %29 = vector.load %arg5[%c1_33, %c0_34, %c0_35] : memref<18x16x12xbf16, #tpu.memory_space<vmem>>, vector<16x16x12xbf16>
    %30 = vector.shape_cast %29 : vector<16x16x12xbf16> to vector<256x12xbf16>
    %c1_36 = arith.constant 1 : index
    %c0_37 = arith.constant 0 : index
    %c0_38 = arith.constant 0 : index
    %31 = vector.load %arg2[%c1_36, %c0_37, %c0_38] : memref<3x12x4xbf16, #tpu.memory_space<vmem>>, vector<1x12x4xbf16>
    %32 = vector.shape_cast %31 : vector<1x12x4xbf16> to vector<12x4xbf16>
    %cst_39 = arith.constant dense<0.000000e+00> : vector<256x4xf32>
    %33 = tpu.matmul %30, %32, %cst_39 {dimension_numbers = #tpu.dot_dimension_numbers<[1], [0], [0], [1], [0, 0, 1, 1], [], []>} : vector<256x12xbf16>, vector<12x4xbf16>, vector<256x4xf32> -> vector<256x4xf32>
    %34 = vector.shape_cast %33 : vector<256x4xf32> to vector<16x16x4xf32>
    %c0_40 = arith.constant 0 : index
    %c0_41 = arith.constant 0 : index
    %c0_42 = arith.constant 0 : index
    %35 = vector.load %arg6[%c0_40, %c0_41, %c0_42] : memref<16x16x4xf32, #tpu.memory_space<vmem>>, vector<16x16x4xf32>
    %36 = arith.addf %35, %34 : vector<16x16x4xf32>
    %c0_43 = arith.constant 0 : index
    %c0_44 = arith.constant 0 : index
    %c0_45 = arith.constant 0 : index
    %37 = vector.load %arg6[%c0_43, %c0_44, %c0_45] : memref<16x16x4xf32, #tpu.memory_space<vmem>>, vector<16x16x4xf32>
    tpu.vector_store %arg6[%c0_43, %c0_44, %c0_45], %36 {strides = array<i32>} : memref<16x16x4xf32, #tpu.memory_space<vmem>>, vector<16x16x4xf32>,
    %c2_46 = arith.constant 2 : index
    %c0_47 = arith.constant 0 : index
    %c0_48 = arith.constant 0 : index
    %38 = vector.load %arg5[%c2_46, %c0_47, %c0_48] : memref<18x16x12xbf16, #tpu.memory_space<vmem>>, vector<16x16x12xbf16>
    %39 = vector.shape_cast %38 : vector<16x16x12xbf16> to vector<256x12xbf16>
    %c2_49 = arith.constant 2 : index
    %c0_50 = arith.constant 0 : index
    %c0_51 = arith.constant 0 : index
    %40 = vector.load %arg2[%c2_49, %c0_50, %c0_51] : memref<3x12x4xbf16, #tpu.memory_space<vmem>>, vector<1x12x4xbf16>
    %41 = vector.shape_cast %40 : vector<1x12x4xbf16> to vector<12x4xbf16>
    %cst_52 = arith.constant dense<0.000000e+00> : vector<256x4xf32>
    %42 = tpu.matmul %39, %41, %cst_52 {dimension_numbers = #tpu.dot_dimension_numbers<[1], [0], [0], [1], [0, 0, 1, 1], [], []>} : vector<256x12xbf16>, vector<12x4xbf16>, vector<256x4xf32> -> vector<256x4xf32>
    %43 = vector.shape_cast %42 : vector<256x4xf32> to vector<16x16x4xf32>
    %c0_53 = arith.constant 0 : index
    %c0_54 = arith.constant 0 : index
    %c0_55 = arith.constant 0 : index
    %44 = vector.load %arg6[%c0_53, %c0_54, %c0_55] : memref<16x16x4xf32, #tpu.memory_space<vmem>>, vector<16x16x4xf32>
    %45 = arith.addf %44, %43 : vector<16x16x4xf32>
    %c0_56 = arith.constant 0 : index
    %c0_57 = arith.constant 0 : index
    %c0_58 = arith.constant 0 : index
    %46 = vector.load %arg6[%c0_56, %c0_57, %c0_58] : memref<16x16x4xf32, #tpu.memory_space<vmem>>, vector<16x16x4xf32>
    tpu.vector_store %arg6[%c0_56, %c0_57, %c0_58], %45 {strides = array<i32>} : memref<16x16x4xf32, #tpu.memory_space<vmem>>, vector<16x16x4xf32>,
    %c0_59 = arith.constant 0 : index
    %c0_60 = arith.constant 0 : index
    %c0_61 = arith.constant 0 : index
    %47 = vector.load %arg6[%c0_59, %c0_60, %c0_61] : memref<16x16x4xf32, #tpu.memory_space<vmem>>, vector<16x16x4xf32>
    %cst_62 = arith.constant dense<0.000000e+00> : vector<16x4xf32>
    %48 = vector.multi_reduction <add>, %47, %cst_62 [0] : vector<16x16x4xf32> to vector<16x4xf32>
    %49 = vector.shape_cast %48 : vector<16x4xf32> to vector<1x16x4xf32>
    %cst_63 = arith.constant dense<0.000000e+00> : vector<1x4xf32>
    %50 = vector.multi_reduction <add>, %49, %cst_63 [1] : vector<1x16x4xf32> to vector<1x4xf32>
    %51 = vector.shape_cast %50 : vector<1x4xf32> to vector<1x1x4xf32>
    %52 = arith.mulf %47, %47 : vector<16x16x4xf32>
    %cst_64 = arith.constant dense<0.000000e+00> : vector<16x4xf32>
    %53 = vector.multi_reduction <add>, %52, %cst_64 [0] : vector<16x16x4xf32> to vector<16x4xf32>
    %54 = vector.shape_cast %53 : vector<16x4xf32> to vector<1x16x4xf32>
    %cst_65 = arith.constant dense<0.000000e+00> : vector<1x4xf32>
    %55 = vector.multi_reduction <add>, %54, %cst_65 [1] : vector<1x16x4xf32> to vector<1x4xf32>
    %56 = vector.shape_cast %55 : vector<1x4xf32> to vector<1x1x4xf32>
    %cst_66 = arith.constant 3.906250e-03 : f32
    %57 = vector.broadcast %cst_66 : f32 to vector<1x1x4xf32>
    %58 = arith.mulf %51, %57 : vector<1x1x4xf32>
    %cst_67 = arith.constant 3.906250e-03 : f32
    %59 = vector.broadcast %cst_67 : f32 to vector<1x1x4xf32>
    %60 = arith.mulf %56, %59 : vector<1x1x4xf32>
    %61 = arith.mulf %58, %58 : vector<1x1x4xf32>
    %62 = arith.subf %60, %61 : vector<1x1x4xf32>
    %cst_68 = arith.constant 0.000000e+00 : f32
    %63 = vector.broadcast %cst_68 : f32 to vector<1x1x4xf32>
    %64 = arith.maximumf %62, %63 : vector<1x1x4xf32>
    %65 = vector.broadcast %58 : vector<1x1x4xf32> to vector<16x16x4xf32>
    %66 = arith.subf %47, %65 : vector<16x16x4xf32>
    %cst_69 = arith.constant 9.99999974E-6 : f32
    %67 = vector.broadcast %cst_69 : f32 to vector<1x1x4xf32>
    %68 = arith.addf %64, %67 : vector<1x1x4xf32>
    %69 = math.rsqrt %68 : vector<1x1x4xf32>
    %70 = vector.broadcast %69 : vector<1x1x4xf32> to vector<16x16x4xf32>
    %71 = arith.mulf %66, %70 : vector<16x16x4xf32>
    %cst_70 = arith.constant 0.000000e+00 : f32
    %72 = vector.broadcast %cst_70 : f32 to vector<16x16x4xf32>
    %73 = arith.maximumf %71, %72 : vector<16x16x4xf32>
    %74 = arith.truncf %73 : vector<16x16x4xf32> to vector<16x16x4xbf16>
    %75 = vector.extract_strided_slice %74 {offsets = [0, 1, 0], sizes = [16, 1, 4], strides = [1, 1, 1]} : vector<16x16x4xbf16> to vector<16x1x4xbf16>
    %c1_71 = arith.constant 1 : index
    %c0_72 = arith.constant 0 : index
    %c0_73 = arith.constant 0 : index
    %76 = vector.load %arg5[%c1_71, %c0_72, %c0_73] : memref<18x16x12xbf16, #tpu.memory_space<vmem>>, vector<16x1x4xbf16>
    tpu.vector_store %arg5[%c1_71, %c0_72, %c0_73], %75 {strides = array<i32>} : memref<18x16x12xbf16, #tpu.memory_space<vmem>>, vector<16x1x4xbf16>,
    %77 = vector.extract_strided_slice %74 {offsets = [0, 0, 0], sizes = [16, 15, 4], strides = [1, 1, 1]} : vector<16x16x4xbf16> to vector<16x15x4xbf16>
    %c1_74 = arith.constant 1 : index
    %c1_75 = arith.constant 1 : index
    %c0_76 = arith.constant 0 : index
    %78 = vector.load %arg5[%c1_74, %c1_75, %c0_76] : memref<18x16x12xbf16, #tpu.memory_space<vmem>>, vector<16x15x4xbf16>
    tpu.vector_store %arg5[%c1_74, %c1_75, %c0_76], %77 {strides = array<i32>} : memref<18x16x12xbf16, #tpu.memory_space<vmem>>, vector<16x15x4xbf16>,
    %c1_77 = arith.constant 1 : index
    %c0_78 = arith.constant 0 : index
    %c4_79 = arith.constant 4 : index
    %79 = vector.load %arg5[%c1_77, %c0_78, %c4_79] : memref<18x16x12xbf16, #tpu.memory_space<vmem>>, vector<16x16x4xbf16>
    tpu.vector_store %arg5[%c1_77, %c0_78, %c4_79], %74 {strides = array<i32>} : memref<18x16x12xbf16, #tpu.memory_space<vmem>>, vector<16x16x4xbf16>,
    %80 = vector.extract_strided_slice %74 {offsets = [0, 1, 0], sizes = [16, 15, 4], strides = [1, 1, 1]} : vector<16x16x4xbf16> to vector<16x15x4xbf16>
    %c1_80 = arith.constant 1 : index
    %c0_81 = arith.constant 0 : index
    %c8_82 = arith.constant 8 : index
    %81 = vector.load %arg5[%c1_80, %c0_81, %c8_82] : memref<18x16x12xbf16, #tpu.memory_space<vmem>>, vector<16x15x4xbf16>
    tpu.vector_store %arg5[%c1_80, %c0_81, %c8_82], %80 {strides = array<i32>} : memref<18x16x12xbf16, #tpu.memory_space<vmem>>, vector<16x15x4xbf16>,
    %82 = vector.extract_strided_slice %74 {offsets = [0, 14, 0], sizes = [16, 1, 4], strides = [1, 1, 1]} : vector<16x16x4xbf16> to vector<16x1x4xbf16>
    %c1_83 = arith.constant 1 : index
    %c15_84 = arith.constant 15 : index
    %c8_85 = arith.constant 8 : index
    %83 = vector.load %arg5[%c1_83, %c15_84, %c8_85] : memref<18x16x12xbf16, #tpu.memory_space<vmem>>, vector<16x1x4xbf16>
    tpu.vector_store %arg5[%c1_83, %c15_84, %c8_85], %82 {strides = array<i32>} : memref<18x16x12xbf16, #tpu.memory_space<vmem>>, vector<16x1x4xbf16>,
    %c2_86 = arith.constant 2 : index
    %c0_87 = arith.constant 0 : index
    %c0_88 = arith.constant 0 : index
    %84 = vector.load %arg5[%c2_86, %c0_87, %c0_88] : memref<18x16x12xbf16, #tpu.memory_space<vmem>>, vector<1x16x12xbf16>
    %85 = vector.shape_cast %84 : vector<1x16x12xbf16> to vector<16x12xbf16>
    %c0_89 = arith.constant 0 : index
    %c0_90 = arith.constant 0 : index
    %c0_91 = arith.constant 0 : index
    %86 = vector.load %arg5[%c0_89, %c0_90, %c0_91] : memref<18x16x12xbf16, #tpu.memory_space<vmem>>, vector<1x16x12xbf16>
    %87 = vector.shape_cast %86 : vector<1x16x12xbf16> to vector<16x12xbf16>
    %88 = vector.shape_cast %85 : vector<16x12xbf16> to vector<1x16x12xbf16>
    tpu.vector_store %arg5[%c0_89, %c0_90, %c0_91], %88 {strides = array<i32>} : memref<18x16x12xbf16, #tpu.memory_space<vmem>>, vector<1x16x12xbf16>,
    %c15_92 = arith.constant 15 : index
    %c0_93 = arith.constant 0 : index
    %c0_94 = arith.constant 0 : index
    %89 = vector.load %arg5[%c15_92, %c0_93, %c0_94] : memref<18x16x12xbf16, #tpu.memory_space<vmem>>, vector<1x16x12xbf16>
    %90 = vector.shape_cast %89 : vector<1x16x12xbf16> to vector<16x12xbf16>
    %c17_95 = arith.constant 17 : index
    %c0_96 = arith.constant 0 : index
    %c0_97 = arith.constant 0 : index
    %91 = vector.load %arg5[%c17_95, %c0_96, %c0_97] : memref<18x16x12xbf16, #tpu.memory_space<vmem>>, vector<1x16x12xbf16>
    %92 = vector.shape_cast %91 : vector<1x16x12xbf16> to vector<16x12xbf16>
    %93 = vector.shape_cast %90 : vector<16x12xbf16> to vector<1x16x12xbf16>
    tpu.vector_store %arg5[%c17_95, %c0_96, %c0_97], %93 {strides = array<i32>} : memref<18x16x12xbf16, #tpu.memory_space<vmem>>, vector<1x16x12xbf16>,
    %c0_98 = arith.constant 0 : index
    %c0_99 = arith.constant 0 : index
    %c0_100 = arith.constant 0 : index
    %94 = vector.load %arg5[%c0_98, %c0_99, %c0_100] : memref<18x16x12xbf16, #tpu.memory_space<vmem>>, vector<16x16x12xbf16>
    %95 = vector.shape_cast %94 : vector<16x16x12xbf16> to vector<256x12xbf16>
    %c0_101 = arith.constant 0 : index
    %c0_102 = arith.constant 0 : index
    %c0_103 = arith.constant 0 : index
    %96 = vector.load %arg3[%c0_101, %c0_102, %c0_103] : memref<3x12x4xbf16, #tpu.memory_space<vmem>>, vector<1x12x4xbf16>
    %97 = vector.shape_cast %96 : vector<1x12x4xbf16> to vector<12x4xbf16>
    %cst_104 = arith.constant dense<0.000000e+00> : vector<256x4xf32>
    %98 = tpu.matmul %95, %97, %cst_104 {dimension_numbers = #tpu.dot_dimension_numbers<[1], [0], [0], [1], [0, 0, 1, 1], [], []>} : vector<256x12xbf16>, vector<12x4xbf16>, vector<256x4xf32> -> vector<256x4xf32>
    %99 = vector.shape_cast %98 : vector<256x4xf32> to vector<16x16x4xf32>
    %c0_105 = arith.constant 0 : index
    %c0_106 = arith.constant 0 : index
    %c0_107 = arith.constant 0 : index
    %100 = vector.load %arg6[%c0_105, %c0_106, %c0_107] : memref<16x16x4xf32, #tpu.memory_space<vmem>>, vector<16x16x4xf32>
    tpu.vector_store %arg6[%c0_105, %c0_106, %c0_107], %99 {strides = array<i32>} : memref<16x16x4xf32, #tpu.memory_space<vmem>>, vector<16x16x4xf32>,
    %c1_108 = arith.constant 1 : index
    %c0_109 = arith.constant 0 : index
    %c0_110 = arith.constant 0 : index
    %101 = vector.load %arg5[%c1_108, %c0_109, %c0_110] : memref<18x16x12xbf16, #tpu.memory_space<vmem>>, vector<16x16x12xbf16>
    %102 = vector.shape_cast %101 : vector<16x16x12xbf16> to vector<256x12xbf16>
    %c1_111 = arith.constant 1 : index
    %c0_112 = arith.constant 0 : index
    %c0_113 = arith.constant 0 : index
    %103 = vector.load %arg3[%c1_111, %c0_112, %c0_113] : memref<3x12x4xbf16, #tpu.memory_space<vmem>>, vector<1x12x4xbf16>
    %104 = vector.shape_cast %103 : vector<1x12x4xbf16> to vector<12x4xbf16>
    %cst_114 = arith.constant dense<0.000000e+00> : vector<256x4xf32>
    %105 = tpu.matmul %102, %104, %cst_114 {dimension_numbers = #tpu.dot_dimension_numbers<[1], [0], [0], [1], [0, 0, 1, 1], [], []>} : vector<256x12xbf16>, vector<12x4xbf16>, vector<256x4xf32> -> vector<256x4xf32>
    %106 = vector.shape_cast %105 : vector<256x4xf32> to vector<16x16x4xf32>
    %c0_115 = arith.constant 0 : index
    %c0_116 = arith.constant 0 : index
    %c0_117 = arith.constant 0 : index
    %107 = vector.load %arg6[%c0_115, %c0_116, %c0_117] : memref<16x16x4xf32, #tpu.memory_space<vmem>>, vector<16x16x4xf32>
    %108 = arith.addf %107, %106 : vector<16x16x4xf32>
    %c0_118 = arith.constant 0 : index
    %c0_119 = arith.constant 0 : index
    %c0_120 = arith.constant 0 : index
    %109 = vector.load %arg6[%c0_118, %c0_119, %c0_120] : memref<16x16x4xf32, #tpu.memory_space<vmem>>, vector<16x16x4xf32>
    tpu.vector_store %arg6[%c0_118, %c0_119, %c0_120], %108 {strides = array<i32>} : memref<16x16x4xf32, #tpu.memory_space<vmem>>, vector<16x16x4xf32>,
    %c2_121 = arith.constant 2 : index
    %c0_122 = arith.constant 0 : index
    %c0_123 = arith.constant 0 : index
    %110 = vector.load %arg5[%c2_121, %c0_122, %c0_123] : memref<18x16x12xbf16, #tpu.memory_space<vmem>>, vector<16x16x12xbf16>
    %111 = vector.shape_cast %110 : vector<16x16x12xbf16> to vector<256x12xbf16>
    %c2_124 = arith.constant 2 : index
    %c0_125 = arith.constant 0 : index
    %c0_126 = arith.constant 0 : index
    %112 = vector.load %arg3[%c2_124, %c0_125, %c0_126] : memref<3x12x4xbf16, #tpu.memory_space<vmem>>, vector<1x12x4xbf16>
    %113 = vector.shape_cast %112 : vector<1x12x4xbf16> to vector<12x4xbf16>
    %cst_127 = arith.constant dense<0.000000e+00> : vector<256x4xf32>
    %114 = tpu.matmul %111, %113, %cst_127 {dimension_numbers = #tpu.dot_dimension_numbers<[1], [0], [0], [1], [0, 0, 1, 1], [], []>} : vector<256x12xbf16>, vector<12x4xbf16>, vector<256x4xf32> -> vector<256x4xf32>
    %115 = vector.shape_cast %114 : vector<256x4xf32> to vector<16x16x4xf32>
    %c0_128 = arith.constant 0 : index
    %c0_129 = arith.constant 0 : index
    %c0_130 = arith.constant 0 : index
    %116 = vector.load %arg6[%c0_128, %c0_129, %c0_130] : memref<16x16x4xf32, #tpu.memory_space<vmem>>, vector<16x16x4xf32>
    %117 = arith.addf %116, %115 : vector<16x16x4xf32>
    %c0_131 = arith.constant 0 : index
    %c0_132 = arith.constant 0 : index
    %c0_133 = arith.constant 0 : index
    %118 = vector.load %arg6[%c0_131, %c0_132, %c0_133] : memref<16x16x4xf32, #tpu.memory_space<vmem>>, vector<16x16x4xf32>
    tpu.vector_store %arg6[%c0_131, %c0_132, %c0_133], %117 {strides = array<i32>} : memref<16x16x4xf32, #tpu.memory_space<vmem>>, vector<16x16x4xf32>,
    %c0_134 = arith.constant 0 : index
    %c0_135 = arith.constant 0 : index
    %c0_136 = arith.constant 0 : index
    %119 = vector.load %arg6[%c0_134, %c0_135, %c0_136] : memref<16x16x4xf32, #tpu.memory_space<vmem>>, vector<16x16x4xf32>
    %cst_137 = arith.constant dense<0.000000e+00> : vector<16x4xf32>
    %120 = vector.multi_reduction <add>, %119, %cst_137 [0] : vector<16x16x4xf32> to vector<16x4xf32>
    %121 = vector.shape_cast %120 : vector<16x4xf32> to vector<1x16x4xf32>
    %cst_138 = arith.constant dense<0.000000e+00> : vector<1x4xf32>
    %122 = vector.multi_reduction <add>, %121, %cst_138 [1] : vector<1x16x4xf32> to vector<1x4xf32>
    %123 = vector.shape_cast %122 : vector<1x4xf32> to vector<1x1x4xf32>
    %124 = arith.mulf %119, %119 : vector<16x16x4xf32>
    %cst_139 = arith.constant dense<0.000000e+00> : vector<16x4xf32>
    %125 = vector.multi_reduction <add>, %124, %cst_139 [0] : vector<16x16x4xf32> to vector<16x4xf32>
    %126 = vector.shape_cast %125 : vector<16x4xf32> to vector<1x16x4xf32>
    %cst_140 = arith.constant dense<0.000000e+00> : vector<1x4xf32>
    %127 = vector.multi_reduction <add>, %126, %cst_140 [1] : vector<1x16x4xf32> to vector<1x4xf32>
    %128 = vector.shape_cast %127 : vector<1x4xf32> to vector<1x1x4xf32>
    %cst_141 = arith.constant 3.906250e-03 : f32
    %129 = vector.broadcast %cst_141 : f32 to vector<1x1x4xf32>
    %130 = arith.mulf %123, %129 : vector<1x1x4xf32>
    %cst_142 = arith.constant 3.906250e-03 : f32
    %131 = vector.broadcast %cst_142 : f32 to vector<1x1x4xf32>
    %132 = arith.mulf %128, %131 : vector<1x1x4xf32>
    %133 = arith.mulf %130, %130 : vector<1x1x4xf32>
    %134 = arith.subf %132, %133 : vector<1x1x4xf32>
    %cst_143 = arith.constant 0.000000e+00 : f32
    %135 = vector.broadcast %cst_143 : f32 to vector<1x1x4xf32>
    %136 = arith.maximumf %134, %135 : vector<1x1x4xf32>
    %137 = vector.broadcast %130 : vector<1x1x4xf32> to vector<16x16x4xf32>
    %138 = arith.subf %119, %137 : vector<16x16x4xf32>
    %cst_144 = arith.constant 9.99999974E-6 : f32
    %139 = vector.broadcast %cst_144 : f32 to vector<1x1x4xf32>
    %140 = arith.addf %136, %139 : vector<1x1x4xf32>
    %141 = math.rsqrt %140 : vector<1x1x4xf32>
    %142 = vector.broadcast %141 : vector<1x1x4xf32> to vector<16x16x4xf32>
    %143 = arith.mulf %138, %142 : vector<16x16x4xf32>
    %c0_145 = arith.constant 0 : index
    %c0_146 = arith.constant 0 : index
    %c0_147 = arith.constant 0 : index
    %c0_148 = arith.constant 0 : index
    %144 = vector.load %arg1[%c0_145, %c0_146, %c0_147, %c0_148] : memref<1x16x16x4xf32, #tpu.memory_space<vmem>>, vector<1x16x16x4xf32>
    %145 = vector.shape_cast %144 : vector<1x16x16x4xf32> to vector<16x16x4xf32>
    %146 = arith.addf %145, %143 : vector<16x16x4xf32>
    %c0_149 = arith.constant 0 : index
    %c0_150 = arith.constant 0 : index
    %c0_151 = arith.constant 0 : index
    %c0_152 = arith.constant 0 : index
    %147 = vector.load %arg4[%c0_149, %c0_150, %c0_151, %c0_152] : memref<1x16x16x4xf32, #tpu.memory_space<vmem>>, vector<1x16x16x4xf32>
    %148 = vector.shape_cast %147 : vector<1x16x16x4xf32> to vector<16x16x4xf32>
    %149 = vector.shape_cast %146 : vector<16x16x4xf32> to vector<1x16x16x4xf32>
    tpu.vector_store %arg4[%c0_149, %c0_150, %c0_151, %c0_152], %149 {strides = array<i32>} : memref<1x16x16x4xf32, #tpu.memory_space<vmem>>, vector<1x16x16x4xf32>,
    return
  }
  func.func @transform_0(%arg0: i32) -> (i32, i32, i32, i32) {
    %c0_i32 = arith.constant 0 : i32
    %c0_i32_0 = arith.constant 0 : i32
    %c0_i32_1 = arith.constant 0 : i32
    %c0_i32_2 = arith.constant 0 : i32
    return %arg0, %c0_i32, %c0_i32_0, %c0_i32_1 : i32, i32, i32, i32
  }
  func.func @transform_1(%arg0: i32) -> (i32, i32, i32) {
    %c0_i32 = arith.constant 0 : i32
    %c0_i32_0 = arith.constant 0 : i32
    %c0_i32_1 = arith.constant 0 : i32
    %c0_i32_2 = arith.constant 0 : i32
    return %c0_i32, %c0_i32_0, %c0_i32_1 : i32, i32, i32
  }
  func.func @transform_2(%arg0: i32) -> (i32, i32, i32) {
    %c0_i32 = arith.constant 0 : i32
    %c0_i32_0 = arith.constant 0 : i32
    %c0_i32_1 = arith.constant 0 : i32
    %c0_i32_2 = arith.constant 0 : i32
    return %c0_i32, %c0_i32_0, %c0_i32_1 : i32, i32, i32
  }
  func.func @transform_3(%arg0: i32) -> (i32, i32, i32, i32) {
    %c0_i32 = arith.constant 0 : i32
    %c0_i32_0 = arith.constant 0 : i32
    %c0_i32_1 = arith.constant 0 : i32
    %c0_i32_2 = arith.constant 0 : i32
    return %arg0, %c0_i32, %c0_i32_0, %c0_i32_1 : i32, i32, i32, i32
  }
}

</mosaic_0001>

<llo_original>
// kernel: tpu_custom_call.1
$region0: #{tpu_custom_call.1}
  #allocation0 [shape = 'u32[]', space=smem, size = 0x4, offset = 0x4, fixed_abs, tag = 'smem constant byte address 0x4 - core index']
  #allocation1 [shape = 'u32[144,128]{1,0:T(1,128)}', space=vmem, size = 0x12000, scoped, tag = 'internal scratch']
  #allocation2 [shape = 'bf16[18,16,12]{2,1,0:T(8,128)(2,1)}', space=vmem, size = 0x12000, scoped, tag = 'scratch operand']
  #allocation3 [shape = 'f32[16,16,4]{2,1,0:T(8,128)}', space=vmem, size = 0x20000, scoped, tag = 'scratch operand']
  %s0 = inlined_call_operand.vmem [shape: f32[2,16,16,4], index: 0, kind: input, shape index: {}]
  %s1 = inlined_call_operand.vmem [shape: bf16[3,12,4], index: 1, kind: input, shape index: {}]
  %s2 = inlined_call_operand.vmem [shape: bf16[3,12,4], index: 2, kind: input, shape index: {}]
  %s3 = inlined_call_operand.vmem [shape: f32[2,16,16,4], index: 3, kind: output, shape index: {}]
  %s4 = sld [smem:[#allocation0]]
  $region45: #{tpu_custom_call.1} parent=0
    _
  %s6 = ssub.s32 1, %s4
  %s7 = scalar_select 0, %s6, %s4
  loop: start=0, step=1, limit=4
  $region2: #{tpu_custom_call.1} parent=0 // loop_pre_header
    _
  $region3: #{tpu_custom_call.1} parent=0 // loop_header
    %s9 = sphi 0, %s13
    %p10 = scmp.ge.s32.totalorder %s9, 4
    %s19 = sphi 0, %s21
    %s22 = sphi 0, %s19
    %s23 = sphi 0, %s22
    %s39 = sphi 0, %s23
    %s43 = sphi 0, %s43
    %s45 = sphi 0, %s43
    %s46 = sphi 0, %s45
    %s60 = sphi 0, %s46
    %s64 = sphi 0, %s64
    %s66 = sphi 0, %s64
    %s67 = sphi 0, %s66
    %s81 = sphi 0, %s67
    %s87 = sphi 0, %s89
    %s90 = sphi 0, %s87
    %s91 = sphi 0, %s90
    %s107 = sphi 0, %s91
  $region4: #{tpu_custom_call.1} parent=0 // loop_header_branch
    %12 = sbr.rel (%p10) target = $region8
  $region5: #{tpu_custom_call.1} parent=0 // loop_body
    %s14 = ssub.s32 %s9, 1
    %s15 = ssub.s32 %s9, 2
    %s16 = sadd.s32 %s9, 1
    %s17 = ssub.s32 %s9, %s16
    %p18 = scmp.eq.s32.totalorder %s17, 0
    %s20 = sadd.s32 %s19, 1
    %s21 = scalar_select %p18, %s19, %s20
    %p24 = pneg %p18
    %p25 = scmp.eq.s32.totalorder %s9, 1
    %p26 = por %p24, %p25
    %p27 = scmp.ne.s32.totalorder %s19, %s22
    %p28 = scmp.eq.s32.totalorder %s9, 0
    %p29 = por %p27, %p28
    %p30 = scmp.ne.s32.totalorder %s19, %s22
    %p31 = scmp.eq.s32.totalorder %s14, 1
    %p32 = por %p30, %p31
    %p33 = scmp.ne.s32.totalorder %s22, %s23
    %p34 = scmp.eq.s32.totalorder %s14, 0
    %p35 = por %p33, %p34
    %p36 = scmp.ne.s32.totalorder %s22, %s23
    %p37 = scmp.eq.s32.totalorder %s15, 1
    %p38 = por %p36, %p37
    %p40 = scmp.ne.s32.totalorder %s23, %s39
    %p41 = scmp.eq.s32.totalorder %s15, 0
    %p42 = por %p40, %p41
    %s44 = sadd.s32 %s43, 1
    %p47 = scmp.eq.s32.totalorder %s9, 1
    %p48 = scmp.ne.s32.totalorder %s43, %s45
    %p49 = scmp.eq.s32.totalorder %s9, 0
    %p50 = por %p48, %p49
    %p51 = scmp.ne.s32.totalorder %s43, %s45
    %p52 = scmp.eq.s32.totalorder %s14, 1
    %p53 = por %p51, %p52
    %p54 = scmp.ne.s32.totalorder %s45, %s46
    %p55 = scmp.eq.s32.totalorder %s14, 0
    %p56 = por %p54, %p55
    %p57 = scmp.ne.s32.totalorder %s45, %s46
    %p58 = scmp.eq.s32.totalorder %s15, 1
    %p59 = por %p57, %p58
    %p61 = scmp.ne.s32.totalorder %s46, %s60
    %p62 = scmp.eq.s32.totalorder %s15, 0
    %p63 = por %p61, %p62
    %s65 = sadd.s32 %s64, 1
    %p68 = scmp.eq.s32.totalorder %s9, 1
    %p69 = scmp.ne.s32.totalorder %s64, %s66
    %p70 = scmp.eq.s32.totalorder %s9, 0
    %p71 = por %p69, %p70
    %p72 = scmp.ne.s32.totalorder %s64, %s66
    %p73 = scmp.eq.s32.totalorder %s14, 1
    %p74 = por %p72, %p73
    %p75 = scmp.ne.s32.totalorder %s66, %s67
    %p76 = scmp.eq.s32.totalorder %s14, 0
    %p77 = por %p75, %p76
    %p78 = scmp.ne.s32.totalorder %s66, %s67
    %p79 = scmp.eq.s32.totalorder %s15, 1
    %p80 = por %p78, %p79
    %p82 = scmp.ne.s32.totalorder %s67, %s81
    %p83 = scmp.eq.s32.totalorder %s15, 0
    %p84 = por %p82, %p83
    %s85 = ssub.s32 %s9, %s16
    %p86 = scmp.eq.s32.totalorder %s85, 0
    %s88 = sadd.s32 %s87, 1
    %s89 = scalar_select %p86, %s87, %s88
    %p92 = pneg %p86
    %p93 = scmp.eq.s32.totalorder %s9, 1
    %p94 = por %p92, %p93
    %p95 = scmp.ne.s32.totalorder %s87, %s90
    %p96 = scmp.eq.s32.totalorder %s9, 0
    %p97 = por %p95, %p96
    %p98 = scmp.ne.s32.totalorder %s87, %s90
    %p99 = scmp.eq.s32.totalorder %s14, 1
    %p100 = por %p98, %p99
    %p101 = scmp.ne.s32.totalorder %s90, %s91
    %p102 = scmp.eq.s32.totalorder %s14, 0
    %p103 = por %p101, %p102
    %p104 = scmp.ne.s32.totalorder %s90, %s91
    %p105 = scmp.eq.s32.totalorder %s15, 1
    %p106 = por %p104, %p105
    %p108 = scmp.ne.s32.totalorder %s91, %s107
    %p109 = scmp.eq.s32.totalorder %s15, 0
    %p110 = por %p108, %p109
    %p111 = scmp.le.s32.totalorder 1, %s9
    %p112 = scmp.lt.s32.totalorder %s9, 3
    %p113 = pnand %p111, %p112
    %p114 = pneg %p113
    // Predicated region
    $region9: #{tpu_custom_call.1} parent=5 // pred_check
      _
    $region10: #{tpu_custom_call.1} parent=5 // pred_check_branch
      %116 = sbr.rel (%p113) target = $region12
    $region11: #{tpu_custom_call.1} parent=5 // pred_region
      %s117 = ssub.s32 %s9, 1
      // Predicated region
      $region13: #{tpu_custom_call.1} parent=11 // pred_check
        %p118 = pneg %p56
      $region14: #{tpu_custom_call.1} parent=11 // pred_check_branch
        %120 = sbr.rel (%p118) target = $region16
      $region15: #{tpu_custom_call.1} parent=11 // pred_region
        _
      $region16: #{tpu_custom_call.1} parent=11 // pred_fallthru
        _
      // Predicated region
      $region17: #{tpu_custom_call.1} parent=11 // pred_check
        %p121 = pneg %p77
      $region18: #{tpu_custom_call.1} parent=11 // pred_check_branch
        %123 = sbr.rel (%p121) target = $region20
      $region19: #{tpu_custom_call.1} parent=11 // pred_region
        _
      $region20: #{tpu_custom_call.1} parent=11 // pred_fallthru
        _
    $region12: #{tpu_custom_call.1} parent=5 // pred_fallthru
      _
    %p124 = scmp.lt.s32.totalorder %s9, 2
    // Predicated region
    $region21: #{tpu_custom_call.1} parent=5 // pred_check
      %p125 = pneg %p124
    $region22: #{tpu_custom_call.1} parent=5 // pred_check_branch
      %127 = sbr.rel (%p125) target = $region24
    $region23: #{tpu_custom_call.1} parent=5 // pred_region
      // Predicated region
      $region25: #{tpu_custom_call.1} parent=23 // pred_check
        %p128 = pneg %p29
      $region26: #{tpu_custom_call.1} parent=23 // pred_check_branch
        %130 = sbr.rel (%p128) target = $region28
      $region27: #{tpu_custom_call.1} parent=23 // pred_region
        %p131 = scmp.lt.s32.totalorder %s9, 1
        %s132 = scalar_select %p131, %s9, 1
        %s133 = smul.addr %s132, 32
        %s134 = smul.addr %s133, 8
        %s135 = scalar_lea.vmem %s0, %s134
      $region28: #{tpu_custom_call.1} parent=23 // pred_fallthru
        _
    $region24: #{tpu_custom_call.1} parent=5 // pred_fallthru
      _
    %p136 = scmp.le.s32.totalorder 1, %s9
    %p137 = scmp.lt.s32.totalorder %s9, 3
    %p138 = pnand %p136, %p137
    %p139 = pneg %p138
    // Predicated region
    $region29: #{tpu_custom_call.1} parent=5 // pred_check
      _
    $region30: #{tpu_custom_call.1} parent=5 // pred_check_branch
      %141 = sbr.rel (%p138) target = $region32
    $region31: #{tpu_custom_call.1} parent=5 // pred_region
      %s142 = ssub.s32 %s9, 1
      %p143 = scmp.lt.s32.totalorder %s14, 1
      %s144 = scalar_select %p143, %s14, 1
      %s145 = smul.addr %s144, 32
      %s146 = smul.addr %s145, 8
      %s147 = scalar_lea.vmem %s0, %s146
      %p148 = pneg %p35
      %p149 = pneg %p32
      %p150 = pneg %p56
      %p151 = pneg %p53
      %p152 = pneg %p77
      %p153 = pneg %p74
      %p154 = pneg %p103
      %p155 = pneg %p100
      %p156 = scmp.lt.s32.totalorder %s14, 1
      %s157 = scalar_select %p156, %s14, 1
      %s158 = smul.addr %s157, 32
      %s159 = smul.addr %s158, 8
      %s160 = scalar_lea.vmem %s3, %s159
      %p161 = scmp.lt.s32.totalorder %s14, 1
      %s162 = scalar_select %p161, %s14, 1
      %s163 = smul.addr %s162, 32
      %s164 = smul.addr %s163, 8
      %s165 = scalar_lea.vmem %s0, %s164
      %p166 = scmp.lt.s32.totalorder %s14, 1
      %s167 = scalar_select %p166, %s14, 1
      %s168 = smul.addr %s167, 32
      %s169 = smul.addr %s168, 8
      %s170 = scalar_lea.vmem %s3, %s169
      %v172 = vld [vmem:[%s165] sm:$0xff]
      %v173 = vld [vmem:[%s165 + $0x8] sm:$0xff]
      %v174 = vld [vmem:[%s165 + $0x10] sm:$0xff]
      %v175 = vld [vmem:[%s165 + $0x18] sm:$0xff]
      %v176 = vld [vmem:[%s165 + $0x20] sm:$0xff]
      %v177 = vld [vmem:[%s165 + $0x28] sm:$0xff]
      %v178 = vld [vmem:[%s165 + $0x30] sm:$0xff]
      %v179 = vld [vmem:[%s165 + $0x38] sm:$0xff]
      %v180 = vld [vmem:[%s165 + $0x40] sm:$0xff]
      %v181 = vld [vmem:[%s165 + $0x48] sm:$0xff]
      %v182 = vld [vmem:[%s165 + $0x50] sm:$0xff]
      %v183 = vld [vmem:[%s165 + $0x58] sm:$0xff]
      %v184 = vld [vmem:[%s165 + $0x60] sm:$0xff]
      %v185 = vld [vmem:[%s165 + $0x68] sm:$0xff]
      %v186 = vld [vmem:[%s165 + $0x70] sm:$0xff]
      %v187 = vld [vmem:[%s165 + $0x78] sm:$0xff]
      %v188 = vld [vmem:[%s165 + $0x80] sm:$0xff]
      %v189 = vld [vmem:[%s165 + $0x88] sm:$0xff]
      %v190 = vld [vmem:[%s165 + $0x90] sm:$0xff]
      %v191 = vld [vmem:[%s165 + $0x98] sm:$0xff]
      %v192 = vld [vmem:[%s165 + $0xa0] sm:$0xff]
      %v193 = vld [vmem:[%s165 + $0xa8] sm:$0xff]
      %v194 = vld [vmem:[%s165 + $0xb0] sm:$0xff]
      %v195 = vld [vmem:[%s165 + $0xb8] sm:$0xff]
      %v196 = vld [vmem:[%s165 + $0xc0] sm:$0xff]
      %v197 = vld [vmem:[%s165 + $0xc8] sm:$0xff]
      %v198 = vld [vmem:[%s165 + $0xd0] sm:$0xff]
      %v199 = vld [vmem:[%s165 + $0xd8] sm:$0xff]
      %v200 = vld [vmem:[%s165 + $0xe0] sm:$0xff]
      %v201 = vld [vmem:[%s165 + $0xe8] sm:$0xff]
      %v202 = vld [vmem:[%s165 + $0xf0] sm:$0xff]
      %v203 = vld [vmem:[%s165 + $0xf8] sm:$0xff]
      %v204 = vpack.c.bf16 %v173, %v172
      %v205 = vpack.c.bf16 %v175, %v174
      %v206 = vpack.c.bf16 %v177, %v176
      %v207 = vpack.c.bf16 %v179, %v178
      %v208 = vpack.c.bf16 %v181, %v180
      %v209 = vpack.c.bf16 %v183, %v182
      %v210 = vpack.c.bf16 %v185, %v184
      %v211 = vpack.c.bf16 %v187, %v186
      %v212 = vpack.c.bf16 %v189, %v188
      %v213 = vpack.c.bf16 %v191, %v190
      %v214 = vpack.c.bf16 %v193, %v192
      %v215 = vpack.c.bf16 %v195, %v194
      %v216 = vpack.c.bf16 %v197, %v196
      %v217 = vpack.c.bf16 %v199, %v198
      %v218 = vpack.c.bf16 %v201, %v200
      %v219 = vpack.c.bf16 %v203, %v202
      %v236 = vunpack.c.l.b16 %v204
      %v237 = vunpack.c.l.b16 %v205
      %v238 = vunpack.c.l.b16 %v206
      %v239 = vunpack.c.l.b16 %v207
      %v240 = vunpack.c.l.b16 %v208
      %v241 = vunpack.c.l.b16 %v209
      %v242 = vunpack.c.l.b16 %v210
      %v243 = vunpack.c.l.b16 %v211
      %v244 = vunpack.c.l.b16 %v212
      %v245 = vunpack.c.l.b16 %v213
      %v246 = vunpack.c.l.b16 %v214
      %v247 = vunpack.c.l.b16 %v215
      %v248 = vunpack.c.l.b16 %v216
      %v249 = vunpack.c.l.b16 %v217
      %v250 = vunpack.c.l.b16 %v218
      %v251 = vunpack.c.l.b16 %v219
      %v252 = vpack.c.b16 %v236, %v236
      %v253 = vpack.c.b16 %v237, %v237
      %v254 = vpack.c.b16 %v238, %v238
      %v255 = vpack.c.b16 %v239, %v239
      %v256 = vpack.c.b16 %v240, %v240
      %v257 = vpack.c.b16 %v241, %v241
      %v258 = vpack.c.b16 %v242, %v242
      %v259 = vpack.c.b16 %v243, %v243
      %v260 = vpack.c.b16 %v244, %v244
      %v261 = vpack.c.b16 %v245, %v245
      %v262 = vpack.c.b16 %v246, %v246
      %v263 = vpack.c.b16 %v247, %v247
      %v264 = vpack.c.b16 %v248, %v248
      %v265 = vpack.c.b16 %v249, %v249
      %v266 = vpack.c.b16 %v250, %v250
      %v267 = vpack.c.b16 %v251, %v251
      %v269 = vshrl.u32 %v252, 16
      %v271 = vrot.slane %v269, 4
      %v272 = vrot.slane %v271, 4
      %v274 = vshrl.u32 %v253, 16
      %v276 = vrot.slane %v274, 4
      %v277 = vrot.slane %v276, 4
      %v279 = vshrl.u32 %v254, 16
      %v281 = vrot.slane %v279, 4
      %v282 = vrot.slane %v281, 4
      %v284 = vshrl.u32 %v255, 16
      %v286 = vrot.slane %v284, 4
      %v287 = vrot.slane %v286, 4
      %v289 = vshrl.u32 %v256, 16
      %v291 = vrot.slane %v289, 4
      %v292 = vrot.slane %v291, 4
      %v294 = vshrl.u32 %v257, 16
      %v296 = vrot.slane %v294, 4
      %v297 = vrot.slane %v296, 4
      %v299 = vshrl.u32 %v258, 16
      %v301 = vrot.slane %v299, 4
      %v302 = vrot.slane %v301, 4
      %v304 = vshrl.u32 %v259, 16
      %v306 = vrot.slane %v304, 4
      %v307 = vrot.slane %v306, 4
      %v309 = vshrl.u32 %v260, 16
      %v311 = vrot.slane %v309, 4
      %v312 = vrot.slane %v311, 4
      %v314 = vshrl.u32 %v261, 16
      %v316 = vrot.slane %v314, 4
      %v317 = vrot.slane %v316, 4
      %v319 = vshrl.u32 %v262, 16
      %v321 = vrot.slane %v319, 4
      %v322 = vrot.slane %v321, 4
      %v324 = vshrl.u32 %v263, 16
      %v326 = vrot.slane %v324, 4
      %v327 = vrot.slane %v326, 4
      %v329 = vshrl.u32 %v264, 16
      %v331 = vrot.slane %v329, 4
      %v332 = vrot.slane %v331, 4
      %v334 = vshrl.u32 %v265, 16
      %v336 = vrot.slane %v334, 4
      %v337 = vrot.slane %v336, 4
      %v339 = vshrl.u32 %v266, 16
      %v341 = vrot.slane %v339, 4
      %v342 = vrot.slane %v341, 4
      %v344 = vshrl.u32 %v267, 16
      %v346 = vrot.slane %v344, 4
      %v347 = vrot.slane %v346, 4
      %s364 = scalar_lea.vmem [#allocation2], 8
      %vm365 = vcmask 24576
      %vm366 = vsmask.f32 256
      %vm367 = vmand %vm365, %vm366
      %v368 = vld [vmem:[%s364] sm:$0x1]
      %v369 = vsel %vm367, %v272, %v368
      %370 = vst [vmem:[%s364] sm:$0x1] %v369
      %v371 = vld [vmem:[%s364 + $0x8] sm:$0x1]
      %v372 = vsel %vm367, %v277, %v371
      %373 = vst [vmem:[%s364 + $0x8] sm:$0x1] %v372
      %v374 = vld [vmem:[%s364 + $0x10] sm:$0x1]
      %v375 = vsel %vm367, %v282, %v374
      %376 = vst [vmem:[%s364 + $0x10] sm:$0x1] %v375
      %v377 = vld [vmem:[%s364 + $0x18] sm:$0x1]
      %v378 = vsel %vm367, %v287, %v377
      %379 = vst [vmem:[%s364 + $0x18] sm:$0x1] %v378
      %v380 = vld [vmem:[%s364 + $0x20] sm:$0x1]
      %v381 = vsel %vm367, %v292, %v380
      %382 = vst [vmem:[%s364 + $0x20] sm:$0x1] %v381
      %v383 = vld [vmem:[%s364 + $0x28] sm:$0x1]
      %v384 = vsel %vm367, %v297, %v383
      %385 = vst [vmem:[%s364 + $0x28] sm:$0x1] %v384
      %v386 = vld [vmem:[%s364 + $0x30] sm:$0x1]
      %v387 = vsel %vm367, %v302, %v386
      %388 = vst [vmem:[%s364 + $0x30] sm:$0x1] %v387
      %v389 = vld [vmem:[%s364 + $0x38] sm:$0x1]
      %v390 = vsel %vm367, %v307, %v389
      %391 = vst [vmem:[%s364 + $0x38] sm:$0x1] %v390
      %v392 = vld [vmem:[%s364 + $0x40] sm:$0x1]
      %v393 = vsel %vm367, %v312, %v392
      %394 = vst [vmem:[%s364 + $0x40] sm:$0x1] %v393
      %v395 = vld [vmem:[%s364 + $0x48] sm:$0x1]
      %v396 = vsel %vm367, %v317, %v395
      %397 = vst [vmem:[%s364 + $0x48] sm:$0x1] %v396
      %v398 = vld [vmem:[%s364 + $0x50] sm:$0x1]
      %v399 = vsel %vm367, %v322, %v398
      %400 = vst [vmem:[%s364 + $0x50] sm:$0x1] %v399
      %v401 = vld [vmem:[%s364 + $0x58] sm:$0x1]
      %v402 = vsel %vm367, %v327, %v401
      %403 = vst [vmem:[%s364 + $0x58] sm:$0x1] %v402
      %v404 = vld [vmem:[%s364 + $0x60] sm:$0x1]
      %v405 = vsel %vm367, %v332, %v404
      %406 = vst [vmem:[%s364 + $0x60] sm:$0x1] %v405
      %v407 = vld [vmem:[%s364 + $0x68] sm:$0x1]
      %v408 = vsel %vm367, %v337, %v407
      %409 = vst [vmem:[%s364 + $0x68] sm:$0x1] %v408
      %v410 = vld [vmem:[%s364 + $0x70] sm:$0x1]
      %v411 = vsel %vm367, %v342, %v410
      %412 = vst [vmem:[%s364 + $0x70] sm:$0x1] %v411
      %v413 = vld [vmem:[%s364 + $0x78] sm:$0x1]
      %v414 = vsel %vm367, %v347, %v413
      %415 = vst [vmem:[%s364 + $0x78] sm:$0x1] %v414
      %v416 = vunpack.c.h.b16 %v204
      %v417 = vunpack.c.h.b16 %v205
      %v418 = vunpack.c.h.b16 %v206
      %v419 = vunpack.c.h.b16 %v207
      %v420 = vunpack.c.h.b16 %v208
      %v421 = vunpack.c.h.b16 %v209
      %v422 = vunpack.c.h.b16 %v210
      %v423 = vunpack.c.h.b16 %v211
      %v424 = vunpack.c.h.b16 %v212
      %v425 = vunpack.c.h.b16 %v213
      %v426 = vunpack.c.h.b16 %v214
      %v427 = vunpack.c.h.b16 %v215
      %v428 = vunpack.c.h.b16 %v216
      %v429 = vunpack.c.h.b16 %v217
      %v430 = vunpack.c.h.b16 %v218
      %v431 = vunpack.c.h.b16 %v219
      %v432 = vpack.c.b16 %v416, %v416
      %v433 = vpack.c.b16 %v417, %v417
      %v434 = vpack.c.b16 %v418, %v418
      %v435 = vpack.c.b16 %v419, %v419
      %v436 = vpack.c.b16 %v420, %v420
      %v437 = vpack.c.b16 %v421, %v421
      %v438 = vpack.c.b16 %v422, %v422
      %v439 = vpack.c.b16 %v423, %v423
      %v440 = vpack.c.b16 %v424, %v424
      %v441 = vpack.c.b16 %v425, %v425
      %v442 = vpack.c.b16 %v426, %v426
      %v443 = vpack.c.b16 %v427, %v427
      %v444 = vpack.c.b16 %v428, %v428
      %v445 = vpack.c.b16 %v429, %v429
      %v446 = vpack.c.b16 %v430, %v430
      %v447 = vpack.c.b16 %v431, %v431
      %vm448 = vsmask.f32 4368
      %vm449 = vmor %vm366, %vm448
      %v450 = vrot.slane %v269, 7
      %v451 = vshll.u32 %v252, 16
      %v453 = vor.u32 %v450, %v451
      %v454 = vrot.slane %v450, 4
      %v456 = vshrl.u32 %v432, 16
      %v458 = vrot.slane %v456, 7
      %v459 = vshll.u32 %v432, 16
      %v461 = vor.u32 %v458, %v459
      %v462 = vsel %vm449, %v454, %v461
      %v463 = vrot.slane %v274, 7
      %v464 = vshll.u32 %v253, 16
      %v466 = vor.u32 %v463, %v464
      %v467 = vrot.slane %v463, 4
      %v469 = vshrl.u32 %v433, 16
      %v471 = vrot.slane %v469, 7
      %v472 = vshll.u32 %v433, 16
      %v474 = vor.u32 %v471, %v472
      %v475 = vsel %vm449, %v467, %v474
      %v476 = vrot.slane %v279, 7
      %v477 = vshll.u32 %v254, 16
      %v479 = vor.u32 %v476, %v477
      %v480 = vrot.slane %v476, 4
      %v482 = vshrl.u32 %v434, 16
      %v484 = vrot.slane %v482, 7
      %v485 = vshll.u32 %v434, 16
      %v487 = vor.u32 %v484, %v485
      %v488 = vsel %vm449, %v480, %v487
      %v489 = vrot.slane %v284, 7
      %v490 = vshll.u32 %v255, 16
      %v492 = vor.u32 %v489, %v490
      %v493 = vrot.slane %v489, 4
      %v495 = vshrl.u32 %v435, 16
      %v497 = vrot.slane %v495, 7
      %v498 = vshll.u32 %v435, 16
      %v500 = vor.u32 %v497, %v498
      %v501 = vsel %vm449, %v493, %v500
      %v502 = vrot.slane %v289, 7
      %v503 = vshll.u32 %v256, 16
      %v505 = vor.u32 %v502, %v503
      %v506 = vrot.slane %v502, 4
      %v508 = vshrl.u32 %v436, 16
      %v510 = vrot.slane %v508, 7
      %v511 = vshll.u32 %v436, 16
      %v513 = vor.u32 %v510, %v511
      %v514 = vsel %vm449, %v506, %v513
      %v515 = vrot.slane %v294, 7
      %v516 = vshll.u32 %v257, 16
      %v518 = vor.u32 %v515, %v516
      %v519 = vrot.slane %v515, 4
      %v521 = vshrl.u32 %v437, 16
      %v523 = vrot.slane %v521, 7
      %v524 = vshll.u32 %v437, 16
      %v526 = vor.u32 %v523, %v524
      %v527 = vsel %vm449, %v519, %v526
      %v528 = vrot.slane %v299, 7
      %v529 = vshll.u32 %v258, 16
      %v531 = vor.u32 %v528, %v529
      %v532 = vrot.slane %v528, 4
      %v534 = vshrl.u32 %v438, 16
      %v536 = vrot.slane %v534, 7
      %v537 = vshll.u32 %v438, 16
      %v539 = vor.u32 %v536, %v537
      %v540 = vsel %vm449, %v532, %v539
      %v541 = vrot.slane %v304, 7
      %v542 = vshll.u32 %v259, 16
      %v544 = vor.u32 %v541, %v542
      %v545 = vrot.slane %v541, 4
      %v547 = vshrl.u32 %v439, 16
      %v549 = vrot.slane %v547, 7
      %v550 = vshll.u32 %v439, 16
      %v552 = vor.u32 %v549, %v550
      %v553 = vsel %vm449, %v545, %v552
      %v554 = vrot.slane %v309, 7
      %v555 = vshll.u32 %v260, 16
      %v557 = vor.u32 %v554, %v555
      %v558 = vrot.slane %v554, 4
      %v560 = vshrl.u32 %v440, 16
      %v562 = vrot.slane %v560, 7
      %v563 = vshll.u32 %v440, 16
      %v565 = vor.u32 %v562, %v563
      %v566 = vsel %vm449, %v558, %v565
      %v567 = vrot.slane %v314, 7
      %v568 = vshll.u32 %v261, 16
      %v570 = vor.u32 %v567, %v568
      %v571 = vrot.slane %v567, 4
      %v573 = vshrl.u32 %v441, 16
      %v575 = vrot.slane %v573, 7
      %v576 = vshll.u32 %v441, 16
      %v578 = vor.u32 %v575, %v576
      %v579 = vsel %vm449, %v571, %v578
      %v580 = vrot.slane %v319, 7
      %v581 = vshll.u32 %v262, 16
      %v583 = vor.u32 %v580, %v581
      %v584 = vrot.slane %v580, 4
      %v586 = vshrl.u32 %v442, 16
      %v588 = vrot.slane %v586, 7
      %v589 = vshll.u32 %v442, 16
      %v591 = vor.u32 %v588, %v589
      %v592 = vsel %vm449, %v584, %v591
      %v593 = vrot.slane %v324, 7
      %v594 = vshll.u32 %v263, 16
      %v596 = vor.u32 %v593, %v594
      %v597 = vrot.slane %v593, 4
      %v599 = vshrl.u32 %v443, 16
      %v601 = vrot.slane %v599, 7
      %v602 = vshll.u32 %v443, 16
      %v604 = vor.u32 %v601, %v602
      %v605 = vsel %vm449, %v597, %v604
      %v606 = vrot.slane %v329, 7
      %v607 = vshll.u32 %v264, 16
      %v609 = vor.u32 %v606, %v607
      %v610 = vrot.slane %v606, 4
      %v612 = vshrl.u32 %v444, 16
      %v614 = vrot.slane %v612, 7
      %v615 = vshll.u32 %v444, 16
      %v617 = vor.u32 %v614, %v615
      %v618 = vsel %vm449, %v610, %v617
      %v619 = vrot.slane %v334, 7
      %v620 = vshll.u32 %v265, 16
      %v622 = vor.u32 %v619, %v620
      %v623 = vrot.slane %v619, 4
      %v625 = vshrl.u32 %v445, 16
      %v627 = vrot.slane %v625, 7
      %v628 = vshll.u32 %v445, 16
      %v630 = vor.u32 %v627, %v628
      %v631 = vsel %vm449, %v623, %v630
      %v632 = vrot.slane %v339, 7
      %v633 = vshll.u32 %v266, 16
      %v635 = vor.u32 %v632, %v633
      %v636 = vrot.slane %v632, 4
      %v638 = vshrl.u32 %v446, 16
      %v640 = vrot.slane %v638, 7
      %v641 = vshll.u32 %v446, 16
      %v643 = vor.u32 %v640, %v641
      %v644 = vsel %vm449, %v636, %v643
      %v645 = vrot.slane %v344, 7
      %v646 = vshll.u32 %v267, 16
      %v648 = vor.u32 %v645, %v646
      %v649 = vrot.slane %v645, 4
      %v651 = vshrl.u32 %v447, 16
      %v653 = vrot.slane %v651, 7
      %v654 = vshll.u32 %v447, 16
      %v656 = vor.u32 %v653, %v654
      %v657 = vsel %vm449, %v649, %v656
      %vm690 = vcmask 27648
      %vm691 = vsmask.f32 7938
      %vm692 = vmand %vm690, %vm691
      %v693 = vld [vmem:[%s364] sm:$0xf]
      %v694 = vsel %vm692, %v453, %v693
      %695 = vst [vmem:[%s364] sm:$0xf] %v694
      %vm696 = vcmask 27648
      %697 = vst.msk [vmem:[%s364 + $0x4] sm:$0xf] %vm696, %v462
      %v698 = vld [vmem:[%s364 + $0x8] sm:$0xf]
      %v699 = vsel %vm692, %v466, %v698
      %700 = vst [vmem:[%s364 + $0x8] sm:$0xf] %v699
      %701 = vst.msk [vmem:[%s364 + $0xc] sm:$0xf] %vm696, %v475
      %v702 = vld [vmem:[%s364 + $0x10] sm:$0xf]
      %v703 = vsel %vm692, %v479, %v702
      %704 = vst [vmem:[%s364 + $0x10] sm:$0xf] %v703
      %705 = vst.msk [vmem:[%s364 + $0x14] sm:$0xf] %vm696, %v488
      %v706 = vld [vmem:[%s364 + $0x18] sm:$0xf]
      %v707 = vsel %vm692, %v492, %v706
      %708 = vst [vmem:[%s364 + $0x18] sm:$0xf] %v707
      %709 = vst.msk [vmem:[%s364 + $0x1c] sm:$0xf] %vm696, %v501
      %v710 = vld [vmem:[%s364 + $0x20] sm:$0xf]
      %v711 = vsel %vm692, %v505, %v710
      %712 = vst [vmem:[%s364 + $0x20] sm:$0xf] %v711
      %713 = vst.msk [vmem:[%s364 + $0x24] sm:$0xf] %vm696, %v514
      %v714 = vld [vmem:[%s364 + $0x28] sm:$0xf]
      %v715 = vsel %vm692, %v518, %v714
      %716 = vst [vmem:[%s364 + $0x28] sm:$0xf] %v715
      %717 = vst.msk [vmem:[%s364 + $0x2c] sm:$0xf] %vm696, %v527
      %v718 = vld [vmem:[%s364 + $0x30] sm:$0xf]
      %v719 = vsel %vm692, %v531, %v718
      %720 = vst [vmem:[%s364 + $0x30] sm:$0xf] %v719
      %721 = vst.msk [vmem:[%s364 + $0x34] sm:$0xf] %vm696, %v540
      %v722 = vld [vmem:[%s364 + $0x38] sm:$0xf]
      %v723 = vsel %vm692, %v544, %v722
      %724 = vst [vmem:[%s364 + $0x38] sm:$0xf] %v723
      %725 = vst.msk [vmem:[%s364 + $0x3c] sm:$0xf] %vm696, %v553
      %v726 = vld [vmem:[%s364 + $0x40] sm:$0xf]
      %v727 = vsel %vm692, %v557, %v726
      %728 = vst [vmem:[%s364 + $0x40] sm:$0xf] %v727
      %729 = vst.msk [vmem:[%s364 + $0x44] sm:$0xf] %vm696, %v566
      %v730 = vld [vmem:[%s364 + $0x48] sm:$0xf]
      %v731 = vsel %vm692, %v570, %v730
      %732 = vst [vmem:[%s364 + $0x48] sm:$0xf] %v731
      %733 = vst.msk [vmem:[%s364 + $0x4c] sm:$0xf] %vm696, %v579
      %v734 = vld [vmem:[%s364 + $0x50] sm:$0xf]
      %v735 = vsel %vm692, %v583, %v734
      %736 = vst [vmem:[%s364 + $0x50] sm:$0xf] %v735
      %737 = vst.msk [vmem:[%s364 + $0x54] sm:$0xf] %vm696, %v592
      %v738 = vld [vmem:[%s364 + $0x58] sm:$0xf]
      %v739 = vsel %vm692, %v596, %v738
      %740 = vst [vmem:[%s364 + $0x58] sm:$0xf] %v739
      %741 = vst.msk [vmem:[%s364 + $0x5c] sm:$0xf] %vm696, %v605
      %v742 = vld [vmem:[%s364 + $0x60] sm:$0xf]
      %v743 = vsel %vm692, %v609, %v742
      %744 = vst [vmem:[%s364 + $0x60] sm:$0xf] %v743
      %745 = vst.msk [vmem:[%s364 + $0x64] sm:$0xf] %vm696, %v618
      %v746 = vld [vmem:[%s364 + $0x68] sm:$0xf]
      %v747 = vsel %vm692, %v622, %v746
      %748 = vst [vmem:[%s364 + $0x68] sm:$0xf] %v747
      %749 = vst.msk [vmem:[%s364 + $0x6c] sm:$0xf] %vm696, %v631
      %v750 = vld [vmem:[%s364 + $0x70] sm:$0xf]
      %v751 = vsel %vm692, %v635, %v750
      %752 = vst [vmem:[%s364 + $0x70] sm:$0xf] %v751
      %753 = vst.msk [vmem:[%s364 + $0x74] sm:$0xf] %vm696, %v644
      %v754 = vld [vmem:[%s364 + $0x78] sm:$0xf]
      %v755 = vsel %vm692, %v648, %v754
      %756 = vst [vmem:[%s364 + $0x78] sm:$0xf] %v755
      %757 = vst.msk [vmem:[%s364 + $0x7c] sm:$0xf] %vm696, %v657
      %758 = vrot.lane.b32.xlu0 %v252, 4
      %v759 = vpop.permute.xlu0 %758
      %760 = vrot.lane.b32.xlu0 %v432, 4
      %v761 = vpop.permute.xlu0 %760
      %762 = vrot.lane.b32.xlu0 %v253, 4
      %v763 = vpop.permute.xlu0 %762
      %764 = vrot.lane.b32.xlu0 %v433, 4
      %v765 = vpop.permute.xlu0 %764
      %766 = vrot.lane.b32.xlu0 %v254, 4
      %v767 = vpop.permute.xlu0 %766
      %768 = vrot.lane.b32.xlu0 %v434, 4
      %v769 = vpop.permute.xlu0 %768
      %770 = vrot.lane.b32.xlu0 %v255, 4
      %v771 = vpop.permute.xlu0 %770
      %772 = vrot.lane.b32.xlu0 %v435, 4
      %v773 = vpop.permute.xlu0 %772
      %774 = vrot.lane.b32.xlu0 %v256, 4
      %v775 = vpop.permute.xlu0 %774
      %776 = vrot.lane.b32.xlu0 %v436, 4
      %v777 = vpop.permute.xlu0 %776
      %778 = vrot.lane.b32.xlu0 %v257, 4
      %v779 = vpop.permute.xlu0 %778
      %780 = vrot.lane.b32.xlu0 %v437, 4
      %v781 = vpop.permute.xlu0 %780
      %782 = vrot.lane.b32.xlu0 %v258, 4
      %v783 = vpop.permute.xlu0 %782
      %784 = vrot.lane.b32.xlu0 %v438, 4
      %v785 = vpop.permute.xlu0 %784
      %786 = vrot.lane.b32.xlu0 %v259, 4
      %v787 = vpop.permute.xlu0 %786
      %788 = vrot.lane.b32.xlu0 %v439, 4
      %v789 = vpop.permute.xlu0 %788
      %790 = vrot.lane.b32.xlu0 %v260, 4
      %v791 = vpop.permute.xlu0 %790
      %792 = vrot.lane.b32.xlu0 %v440, 4
      %v793 = vpop.permute.xlu0 %792
      %794 = vrot.lane.b32.xlu0 %v261, 4
      %v795 = vpop.permute.xlu0 %794
      %796 = vrot.lane.b32.xlu0 %v441, 4
      %v797 = vpop.permute.xlu0 %796
      %798 = vrot.lane.b32.xlu0 %v262, 4
      %v799 = vpop.permute.xlu0 %798
      %800 = vrot.lane.b32.xlu0 %v442, 4
      %v801 = vpop.permute.xlu0 %800
      %802 = vrot.lane.b32.xlu0 %v263, 4
      %v803 = vpop.permute.xlu0 %802
      %804 = vrot.lane.b32.xlu0 %v443, 4
      %v805 = vpop.permute.xlu0 %804
      %806 = vrot.lane.b32.xlu0 %v264, 4
      %v807 = vpop.permute.xlu0 %806
      %808 = vrot.lane.b32.xlu0 %v444, 4
      %v809 = vpop.permute.xlu0 %808
      %810 = vrot.lane.b32.xlu0 %v265, 4
      %v811 = vpop.permute.xlu0 %810
      %812 = vrot.lane.b32.xlu0 %v445, 4
      %v813 = vpop.permute.xlu0 %812
      %814 = vrot.lane.b32.xlu0 %v266, 4
      %v815 = vpop.permute.xlu0 %814
      %816 = vrot.lane.b32.xlu0 %v446, 4
      %v817 = vpop.permute.xlu0 %816
      %818 = vrot.lane.b32.xlu0 %v267, 4
      %v819 = vpop.permute.xlu0 %818
      %820 = vrot.lane.b32.xlu0 %v447, 4
      %v821 = vpop.permute.xlu0 %820
      %vm854 = vcmask 60448
      %855 = vst.msk [vmem:[%s364] sm:$0xf] %vm854, %v759
      %856 = vst.msk [vmem:[%s364 + $0x4] sm:$0xf] %vm854, %v761
      %857 = vst.msk [vmem:[%s364 + $0x8] sm:$0xf] %vm854, %v763
      %858 = vst.msk [vmem:[%s364 + $0xc] sm:$0xf] %vm854, %v765
      %859 = vst.msk [vmem:[%s364 + $0x10] sm:$0xf] %vm854, %v767
      %860 = vst.msk [vmem:[%s364 + $0x14] sm:$0xf] %vm854, %v769
      %861 = vst.msk [vmem:[%s364 + $0x18] sm:$0xf] %vm854, %v771
      %862 = vst.msk [vmem:[%s364 + $0x1c] sm:$0xf] %vm854, %v773
      %863 = vst.msk [vmem:[%s364 + $0x20] sm:$0xf] %vm854, %v775
      %864 = vst.msk [vmem:[%s364 + $0x24] sm:$0xf] %vm854, %v777
      %865 = vst.msk [vmem:[%s364 + $0x28] sm:$0xf] %vm854, %v779
      %866 = vst.msk [vmem:[%s364 + $0x2c] sm:$0xf] %vm854, %v781
      %867 = vst.msk [vmem:[%s364 + $0x30] sm:$0xf] %vm854, %v783
      %868 = vst.msk [vmem:[%s364 + $0x34] sm:$0xf] %vm854, %v785
      %869 = vst.msk [vmem:[%s364 + $0x38] sm:$0xf] %vm854, %v787
      %870 = vst.msk [vmem:[%s364 + $0x3c] sm:$0xf] %vm854, %v789
      %871 = vst.msk [vmem:[%s364 + $0x40] sm:$0xf] %vm854, %v791
      %872 = vst.msk [vmem:[%s364 + $0x44] sm:$0xf] %vm854, %v793
      %873 = vst.msk [vmem:[%s364 + $0x48] sm:$0xf] %vm854, %v795
      %874 = vst.msk [vmem:[%s364 + $0x4c] sm:$0xf] %vm854, %v797
      %875 = vst.msk [vmem:[%s364 + $0x50] sm:$0xf] %vm854, %v799
      %876 = vst.msk [vmem:[%s364 + $0x54] sm:$0xf] %vm854, %v801
      %877 = vst.msk [vmem:[%s364 + $0x58] sm:$0xf] %vm854, %v803
      %878 = vst.msk [vmem:[%s364 + $0x5c] sm:$0xf] %vm854, %v805
      %879 = vst.msk [vmem:[%s364 + $0x60] sm:$0xf] %vm854, %v807
      %880 = vst.msk [vmem:[%s364 + $0x64] sm:$0xf] %vm854, %v809
      %881 = vst.msk [vmem:[%s364 + $0x68] sm:$0xf] %vm854, %v811
      %882 = vst.msk [vmem:[%s364 + $0x6c] sm:$0xf] %vm854, %v813
      %883 = vst.msk [vmem:[%s364 + $0x70] sm:$0xf] %vm854, %v815
      %884 = vst.msk [vmem:[%s364 + $0x74] sm:$0xf] %vm854, %v817
      %885 = vst.msk [vmem:[%s364 + $0x78] sm:$0xf] %vm854, %v819
      %886 = vst.msk [vmem:[%s364 + $0x7c] sm:$0xf] %vm854, %v821
      %vm887 = vsmask.f32 3328
      %vm888 = vsmask.f32 7440
      %vm889 = vmor %vm887, %vm888
      %v890 = vrot.slane %v451, 5
      %v891 = vor.u32 %v271, %v890
      %v892 = vrot.slane %v891, 4
      %v893 = vrot.slane %v459, 5
      %v894 = vsel %vm889, %v892, %v893
      %v895 = vrot.slane %v456, 4
      %v896 = vor.u32 %v895, %v893
      %v897 = vrot.slane %v896, 4
      %v898 = vrot.slane %v464, 5
      %v899 = vor.u32 %v276, %v898
      %v900 = vrot.slane %v899, 4
      %v901 = vrot.slane %v472, 5
      %v902 = vsel %vm889, %v900, %v901
      %v903 = vrot.slane %v469, 4
      %v904 = vor.u32 %v903, %v901
      %v905 = vrot.slane %v904, 4
      %v906 = vrot.slane %v477, 5
      %v907 = vor.u32 %v281, %v906
      %v908 = vrot.slane %v907, 4
      %v909 = vrot.slane %v485, 5
      %v910 = vsel %vm889, %v908, %v909
      %v911 = vrot.slane %v482, 4
      %v912 = vor.u32 %v911, %v909
      %v913 = vrot.slane %v912, 4
      %v914 = vrot.slane %v490, 5
      %v915 = vor.u32 %v286, %v914
      %v916 = vrot.slane %v915, 4
      %v917 = vrot.slane %v498, 5
      %v918 = vsel %vm889, %v916, %v917
      %v919 = vrot.slane %v495, 4
      %v920 = vor.u32 %v919, %v917
      %v921 = vrot.slane %v920, 4
      %v922 = vrot.slane %v503, 5
      %v923 = vor.u32 %v291, %v922
      %v924 = vrot.slane %v923, 4
      %v925 = vrot.slane %v511, 5
      %v926 = vsel %vm889, %v924, %v925
      %v927 = vrot.slane %v508, 4
      %v928 = vor.u32 %v927, %v925
      %v929 = vrot.slane %v928, 4
      %v930 = vrot.slane %v516, 5
      %v931 = vor.u32 %v296, %v930
      %v932 = vrot.slane %v931, 4
      %v933 = vrot.slane %v524, 5
      %v934 = vsel %vm889, %v932, %v933
      %v935 = vrot.slane %v521, 4
      %v936 = vor.u32 %v935, %v933
      %v937 = vrot.slane %v936, 4
      %v938 = vrot.slane %v529, 5
      %v939 = vor.u32 %v301, %v938
      %v940 = vrot.slane %v939, 4
      %v941 = vrot.slane %v537, 5
      %v942 = vsel %vm889, %v940, %v941
      %v943 = vrot.slane %v534, 4
      %v944 = vor.u32 %v943, %v941
      %v945 = vrot.slane %v944, 4
      %v946 = vrot.slane %v542, 5
      %v947 = vor.u32 %v306, %v946
      %v948 = vrot.slane %v947, 4
      %v949 = vrot.slane %v550, 5
      %v950 = vsel %vm889, %v948, %v949
      %v951 = vrot.slane %v547, 4
      %v952 = vor.u32 %v951, %v949
      %v953 = vrot.slane %v952, 4
      %v954 = vrot.slane %v555, 5
      %v955 = vor.u32 %v311, %v954
      %v956 = vrot.slane %v955, 4
      %v957 = vrot.slane %v563, 5
      %v958 = vsel %vm889, %v956, %v957
      %v959 = vrot.slane %v560, 4
      %v960 = vor.u32 %v959, %v957
      %v961 = vrot.slane %v960, 4
      %v962 = vrot.slane %v568, 5
      %v963 = vor.u32 %v316, %v962
      %v964 = vrot.slane %v963, 4
      %v965 = vrot.slane %v576, 5
      %v966 = vsel %vm889, %v964, %v965
      %v967 = vrot.slane %v573, 4
      %v968 = vor.u32 %v967, %v965
      %v969 = vrot.slane %v968, 4
      %v970 = vrot.slane %v581, 5
      %v971 = vor.u32 %v321, %v970
      %v972 = vrot.slane %v971, 4
      %v973 = vrot.slane %v589, 5
      %v974 = vsel %vm889, %v972, %v973
      %v975 = vrot.slane %v586, 4
      %v976 = vor.u32 %v975, %v973
      %v977 = vrot.slane %v976, 4
      %v978 = vrot.slane %v594, 5
      %v979 = vor.u32 %v326, %v978
      %v980 = vrot.slane %v979, 4
      %v981 = vrot.slane %v602, 5
      %v982 = vsel %vm889, %v980, %v981
      %v983 = vrot.slane %v599, 4
      %v984 = vor.u32 %v983, %v981
      %v985 = vrot.slane %v984, 4
      %v986 = vrot.slane %v607, 5
      %v987 = vor.u32 %v331, %v986
      %v988 = vrot.slane %v987, 4
      %v989 = vrot.slane %v615, 5
      %v990 = vsel %vm889, %v988, %v989
      %v991 = vrot.slane %v612, 4
      %v992 = vor.u32 %v991, %v989
      %v993 = vrot.slane %v992, 4
      %v994 = vrot.slane %v620, 5
      %v995 = vor.u32 %v336, %v994
      %v996 = vrot.slane %v995, 4
      %v997 = vrot.slane %v628, 5
      %v998 = vsel %vm889, %v996, %v997
      %v999 = vrot.slane %v625, 4
      %v1000 = vor.u32 %v999, %v997
      %v1001 = vrot.slane %v1000, 4
      %v1002 = vrot.slane %v633, 5
      %v1003 = vor.u32 %v341, %v1002
      %v1004 = vrot.slane %v1003, 4
      %v1005 = vrot.slane %v641, 5
      %v1006 = vsel %vm889, %v1004, %v1005
      %v1007 = vrot.slane %v638, 4
      %v1008 = vor.u32 %v1007, %v1005
      %v1009 = vrot.slane %v1008, 4
      %v1010 = vrot.slane %v646, 5
      %v1011 = vor.u32 %v346, %v1010
      %v1012 = vrot.slane %v1011, 4
      %v1013 = vrot.slane %v654, 5
      %v1014 = vsel %vm889, %v1012, %v1013
      %v1015 = vrot.slane %v651, 4
      %v1016 = vor.u32 %v1015, %v1013
      %v1017 = vrot.slane %v1016, 4
      %1018 = vrot.lane.b32.xlu0 %v894, 8
      %v1019 = vpop.permute.xlu0 %1018
      %1020 = vrot.lane.b32.xlu0 %v897, 8
      %v1021 = vpop.permute.xlu0 %1020
      %1022 = vrot.lane.b32.xlu0 %v902, 8
      %v1023 = vpop.permute.xlu0 %1022
      %1024 = vrot.lane.b32.xlu0 %v905, 8
      %v1025 = vpop.permute.xlu0 %1024
      %1026 = vrot.lane.b32.xlu0 %v910, 8
      %v1027 = vpop.permute.xlu0 %1026
      %1028 = vrot.lane.b32.xlu0 %v913, 8
      %v1029 = vpop.permute.xlu0 %1028
      %1030 = vrot.lane.b32.xlu0 %v918, 8
      %v1031 = vpop.permute.xlu0 %1030
      %1032 = vrot.lane.b32.xlu0 %v921, 8
      %v1033 = vpop.permute.xlu0 %1032
      %1034 = vrot.lane.b32.xlu0 %v926, 8
      %v1035 = vpop.permute.xlu0 %1034
      %1036 = vrot.lane.b32.xlu0 %v929, 8
      %v1037 = vpop.permute.xlu0 %1036
      %1038 = vrot.lane.b32.xlu0 %v934, 8
      %v1039 = vpop.permute.xlu0 %1038
      %1040 = vrot.lane.b32.xlu0 %v937, 8
      %v1041 = vpop.permute.xlu0 %1040
      %1042 = vrot.lane.b32.xlu0 %v942, 8
      %v1043 = vpop.permute.xlu0 %1042
      %1044 = vrot.lane.b32.xlu0 %v945, 8
      %v1045 = vpop.permute.xlu0 %1044
      %1046 = vrot.lane.b32.xlu0 %v950, 8
      %v1047 = vpop.permute.xlu0 %1046
      %1048 = vrot.lane.b32.xlu0 %v953, 8
      %v1049 = vpop.permute.xlu0 %1048
      %1050 = vrot.lane.b32.xlu0 %v958, 8
      %v1051 = vpop.permute.xlu0 %1050
      %1052 = vrot.lane.b32.xlu0 %v961, 8
      %v1053 = vpop.permute.xlu0 %1052
      %1054 = vrot.lane.b32.xlu0 %v966, 8
      %v1055 = vpop.permute.xlu0 %1054
      %1056 = vrot.lane.b32.xlu0 %v969, 8
      %v1057 = vpop.permute.xlu0 %1056
      %1058 = vrot.lane.b32.xlu0 %v974, 8
      %v1059 = vpop.permute.xlu0 %1058
      %1060 = vrot.lane.b32.xlu0 %v977, 8
      %v1061 = vpop.permute.xlu0 %1060
      %1062 = vrot.lane.b32.xlu0 %v982, 8
      %v1063 = vpop.permute.xlu0 %1062
      %1064 = vrot.lane.b32.xlu0 %v985, 8
      %v1065 = vpop.permute.xlu0 %1064
      %1066 = vrot.lane.b32.xlu0 %v990, 8
      %v1067 = vpop.permute.xlu0 %1066
      %1068 = vrot.lane.b32.xlu0 %v993, 8
      %v1069 = vpop.permute.xlu0 %1068
      %1070 = vrot.lane.b32.xlu0 %v998, 8
      %v1071 = vpop.permute.xlu0 %1070
      %1072 = vrot.lane.b32.xlu0 %v1001, 8
      %v1073 = vpop.permute.xlu0 %1072
      %1074 = vrot.lane.b32.xlu0 %v1006, 8
      %v1075 = vpop.permute.xlu0 %1074
      %1076 = vrot.lane.b32.xlu0 %v1009, 8
      %v1077 = vpop.permute.xlu0 %1076
      %1078 = vrot.lane.b32.xlu0 %v1014, 8
      %v1079 = vpop.permute.xlu0 %1078
      %1080 = vrot.lane.b32.xlu0 %v1017, 8
      %v1081 = vpop.permute.xlu0 %1080
      %vm1114 = vcmask 93248
      %1115 = vst.msk [vmem:[%s364] sm:$0xf] %vm1114, %v1019
      %vm1116 = vcmask 93248
      %vm1117 = vmand %vm1116, %vm887
      %v1118 = vld [vmem:[%s364 + $0x4] sm:$0xf]
      %v1119 = vsel %vm1117, %v1021, %v1118
      %1120 = vst [vmem:[%s364 + $0x4] sm:$0xf] %v1119
      %1121 = vst.msk [vmem:[%s364 + $0x8] sm:$0xf] %vm1114, %v1023
      %v1122 = vld [vmem:[%s364 + $0xc] sm:$0xf]
      %v1123 = vsel %vm1117, %v1025, %v1122
      %1124 = vst [vmem:[%s364 + $0xc] sm:$0xf] %v1123
      %1125 = vst.msk [vmem:[%s364 + $0x10] sm:$0xf] %vm1114, %v1027
      %v1126 = vld [vmem:[%s364 + $0x14] sm:$0xf]
      %v1127 = vsel %vm1117, %v1029, %v1126
      %1128 = vst [vmem:[%s364 + $0x14] sm:$0xf] %v1127
      %1129 = vst.msk [vmem:[%s364 + $0x18] sm:$0xf] %vm1114, %v1031
      %v1130 = vld [vmem:[%s364 + $0x1c] sm:$0xf]
      %v1131 = vsel %vm1117, %v1033, %v1130
      %1132 = vst [vmem:[%s364 + $0x1c] sm:$0xf] %v1131
      %1133 = vst.msk [vmem:[%s364 + $0x20] sm:$0xf] %vm1114, %v1035
      %v1134 = vld [vmem:[%s364 + $0x24] sm:$0xf]
      %v1135 = vsel %vm1117, %v1037, %v1134
      %1136 = vst [vmem:[%s364 + $0x24] sm:$0xf] %v1135
      %1137 = vst.msk [vmem:[%s364 + $0x28] sm:$0xf] %vm1114, %v1039
      %v1138 = vld [vmem:[%s364 + $0x2c] sm:$0xf]
      %v1139 = vsel %vm1117, %v1041, %v1138
      %1140 = vst [vmem:[%s364 + $0x2c] sm:$0xf] %v1139
      %1141 = vst.msk [vmem:[%s364 + $0x30] sm:$0xf] %vm1114, %v1043
      %v1142 = vld [vmem:[%s364 + $0x34] sm:$0xf]
      %v1143 = vsel %vm1117, %v1045, %v1142
      %1144 = vst [vmem:[%s364 + $0x34] sm:$0xf] %v1143
      %1145 = vst.msk [vmem:[%s364 + $0x38] sm:$0xf] %vm1114, %v1047
      %v1146 = vld [vmem:[%s364 + $0x3c] sm:$0xf]
      %v1147 = vsel %vm1117, %v1049, %v1146
      %1148 = vst [vmem:[%s364 + $0x3c] sm:$0xf] %v1147
      %1149 = vst.msk [vmem:[%s364 + $0x40] sm:$0xf] %vm1114, %v1051
      %v1150 = vld [vmem:[%s364 + $0x44] sm:$0xf]
      %v1151 = vsel %vm1117, %v1053, %v1150
      %1152 = vst [vmem:[%s364 + $0x44] sm:$0xf] %v1151
      %1153 = vst.msk [vmem:[%s364 + $0x48] sm:$0xf] %vm1114, %v1055
      %v1154 = vld [vmem:[%s364 + $0x4c] sm:$0xf]
      %v1155 = vsel %vm1117, %v1057, %v1154
      %1156 = vst [vmem:[%s364 + $0x4c] sm:$0xf] %v1155
      %1157 = vst.msk [vmem:[%s364 + $0x50] sm:$0xf] %vm1114, %v1059
      %v1158 = vld [vmem:[%s364 + $0x54] sm:$0xf]
      %v1159 = vsel %vm1117, %v1061, %v1158
      %1160 = vst [vmem:[%s364 + $0x54] sm:$0xf] %v1159
      %1161 = vst.msk [vmem:[%s364 + $0x58] sm:$0xf] %vm1114, %v1063
      %v1162 = vld [vmem:[%s364 + $0x5c] sm:$0xf]
      %v1163 = vsel %vm1117, %v1065, %v1162
      %1164 = vst [vmem:[%s364 + $0x5c] sm:$0xf] %v1163
      %1165 = vst.msk [vmem:[%s364 + $0x60] sm:$0xf] %vm1114, %v1067
      %v1166 = vld [vmem:[%s364 + $0x64] sm:$0xf]
      %v1167 = vsel %vm1117, %v1069, %v1166
      %1168 = vst [vmem:[%s364 + $0x64] sm:$0xf] %v1167
      %1169 = vst.msk [vmem:[%s364 + $0x68] sm:$0xf] %vm1114, %v1071
      %v1170 = vld [vmem:[%s364 + $0x6c] sm:$0xf]
      %v1171 = vsel %vm1117, %v1073, %v1170
      %1172 = vst [vmem:[%s364 + $0x6c] sm:$0xf] %v1171
      %1173 = vst.msk [vmem:[%s364 + $0x70] sm:$0xf] %vm1114, %v1075
      %v1174 = vld [vmem:[%s364 + $0x74] sm:$0xf]
      %v1175 = vsel %vm1117, %v1077, %v1174
      %1176 = vst [vmem:[%s364 + $0x74] sm:$0xf] %v1175
      %1177 = vst.msk [vmem:[%s364 + $0x78] sm:$0xf] %vm1114, %v1079
      %v1178 = vld [vmem:[%s364 + $0x7c] sm:$0xf]
      %v1179 = vsel %vm1117, %v1081, %v1178
      %1180 = vst [vmem:[%s364 + $0x7c] sm:$0xf] %v1179
      %1181 = vrot.lane.b32.xlu0 %v459, 8
      %v1182 = vpop.permute.xlu0 %1181
      %1183 = vrot.lane.b32.xlu0 %v472, 8
      %v1184 = vpop.permute.xlu0 %1183
      %1185 = vrot.lane.b32.xlu0 %v485, 8
      %v1186 = vpop.permute.xlu0 %1185
      %1187 = vrot.lane.b32.xlu0 %v498, 8
      %v1188 = vpop.permute.xlu0 %1187
      %1189 = vrot.lane.b32.xlu0 %v511, 8
      %v1190 = vpop.permute.xlu0 %1189
      %1191 = vrot.lane.b32.xlu0 %v524, 8
      %v1192 = vpop.permute.xlu0 %1191
      %1193 = vrot.lane.b32.xlu0 %v537, 8
      %v1194 = vpop.permute.xlu0 %1193
      %1195 = vrot.lane.b32.xlu0 %v550, 8
      %v1196 = vpop.permute.xlu0 %1195
      %1197 = vrot.lane.b32.xlu0 %v563, 8
      %v1198 = vpop.permute.xlu0 %1197
      %1199 = vrot.lane.b32.xlu0 %v576, 8
      %v1200 = vpop.permute.xlu0 %1199
      %1201 = vrot.lane.b32.xlu0 %v589, 8
      %v1202 = vpop.permute.xlu0 %1201
      %1203 = vrot.lane.b32.xlu0 %v602, 8
      %v1204 = vpop.permute.xlu0 %1203
      %1205 = vrot.lane.b32.xlu0 %v615, 8
      %v1206 = vpop.permute.xlu0 %1205
      %1207 = vrot.lane.b32.xlu0 %v628, 8
      %v1208 = vpop.permute.xlu0 %1207
      %1209 = vrot.lane.b32.xlu0 %v641, 8
      %v1210 = vpop.permute.xlu0 %1209
      %1211 = vrot.lane.b32.xlu0 %v654, 8
      %v1212 = vpop.permute.xlu0 %1211
      %vm1229 = vcmask 93251
      %vm1230 = vsmask.f32 7950
      %vm1231 = vmand %vm1229, %vm1230
      %v1232 = vld [vmem:[%s364 + $0x4] sm:$0x8]
      %v1233 = vsel %vm1231, %v1182, %v1232
      %1234 = vst [vmem:[%s364 + $0x4] sm:$0x8] %v1233
      %v1235 = vld [vmem:[%s364 + $0xc] sm:$0x8]
      %v1236 = vsel %vm1231, %v1184, %v1235
      %1237 = vst [vmem:[%s364 + $0xc] sm:$0x8] %v1236
      %v1238 = vld [vmem:[%s364 + $0x14] sm:$0x8]
      %v1239 = vsel %vm1231, %v1186, %v1238
      %1240 = vst [vmem:[%s364 + $0x14] sm:$0x8] %v1239
      %v1241 = vld [vmem:[%s364 + $0x1c] sm:$0x8]
      %v1242 = vsel %vm1231, %v1188, %v1241
      %1243 = vst [vmem:[%s364 + $0x1c] sm:$0x8] %v1242
      %v1244 = vld [vmem:[%s364 + $0x24] sm:$0x8]
      %v1245 = vsel %vm1231, %v1190, %v1244
      %1246 = vst [vmem:[%s364 + $0x24] sm:$0x8] %v1245
      %v1247 = vld [vmem:[%s364 + $0x2c] sm:$0x8]
      %v1248 = vsel %vm1231, %v1192, %v1247
      %1249 = vst [vmem:[%s364 + $0x2c] sm:$0x8] %v1248
      %v1250 = vld [vmem:[%s364 + $0x34] sm:$0x8]
      %v1251 = vsel %vm1231, %v1194, %v1250
      %1252 = vst [vmem:[%s364 + $0x34] sm:$0x8] %v1251
      %v1253 = vld [vmem:[%s364 + $0x3c] sm:$0x8]
      %v1254 = vsel %vm1231, %v1196, %v1253
      %1255 = vst [vmem:[%s364 + $0x3c] sm:$0x8] %v1254
      %v1256 = vld [vmem:[%s364 + $0x44] sm:$0x8]
      %v1257 = vsel %vm1231, %v1198, %v1256
      %1258 = vst [vmem:[%s364 + $0x44] sm:$0x8] %v1257
      %v1259 = vld [vmem:[%s364 + $0x4c] sm:$0x8]
      %v1260 = vsel %vm1231, %v1200, %v1259
      %1261 = vst [vmem:[%s364 + $0x4c] sm:$0x8] %v1260
      %v1262 = vld [vmem:[%s364 + $0x54] sm:$0x8]
      %v1263 = vsel %vm1231, %v1202, %v1262
      %1264 = vst [vmem:[%s364 + $0x54] sm:$0x8] %v1263
      %v1265 = vld [vmem:[%s364 + $0x5c] sm:$0x8]
      %v1266 = vsel %vm1231, %v1204, %v1265
      %1267 = vst [vmem:[%s364 + $0x5c] sm:$0x8] %v1266
      %v1268 = vld [vmem:[%s364 + $0x64] sm:$0x8]
      %v1269 = vsel %vm1231, %v1206, %v1268
      %1270 = vst [vmem:[%s364 + $0x64] sm:$0x8] %v1269
      %v1271 = vld [vmem:[%s364 + $0x6c] sm:$0x8]
      %v1272 = vsel %vm1231, %v1208, %v1271
      %1273 = vst [vmem:[%s364 + $0x6c] sm:$0x8] %v1272
      %v1274 = vld [vmem:[%s364 + $0x74] sm:$0x8]
      %v1275 = vsel %vm1231, %v1210, %v1274
      %1276 = vst [vmem:[%s364 + $0x74] sm:$0x8] %v1275
      %v1277 = vld [vmem:[%s364 + $0x7c] sm:$0x8]
      %v1278 = vsel %vm1231, %v1212, %v1277
      %1279 = vst [vmem:[%s364 + $0x7c] sm:$0x8] %v1278
      %s1280 = scalar_lea.vmem [#allocation2], 16
      %v1281 = vld [vmem:[%s1280] sm:$0xf]
      %v1282 = vld [vmem:[%s1280 + $0x4] sm:$0xf]
      %vm1283 = vcmask 93184
      %1284 = vst.msk [vmem:[#allocation2] sm:$0xf] %vm1283, %v1281
      %1285 = vst.msk [vmem:[#allocation2 + $0x4] sm:$0xf] %vm1283, %v1282
      %s1286 = scalar_lea.vmem [#allocation2], 120
      %v1287 = vld [vmem:[%s1286] sm:$0xf]
      %v1288 = vld [vmem:[%s1286 + $0x4] sm:$0xf]
      %s1289 = scalar_lea.vmem [#allocation2], 136
      %1290 = vst.msk [vmem:[%s1289] sm:$0xf] %vm1283, %v1287
      %1291 = vst.msk [vmem:[%s1289 + $0x4] sm:$0xf] %vm1283, %v1288
      %v1292 = vld [vmem:[#allocation2] sm:$0xf]
      %v1293 = vld [vmem:[#allocation2 + $0x4] sm:$0xf]
      %v1294 = vld [vmem:[#allocation2 + $0x8] sm:$0xf]
      %v1295 = vld [vmem:[#allocation2 + $0xc] sm:$0xf]
      %v1296 = vld [vmem:[#allocation2 + $0x10] sm:$0xf]
      %v1297 = vld [vmem:[#allocation2 + $0x14] sm:$0xf]
      %v1298 = vld [vmem:[#allocation2 + $0x18] sm:$0xf]
      %v1299 = vld [vmem:[#allocation2 + $0x1c] sm:$0xf]
      %v1300 = vld [vmem:[#allocation2 + $0x20] sm:$0xf]
      %v1301 = vld [vmem:[#allocation2 + $0x24] sm:$0xf]
      %v1302 = vld [vmem:[#allocation2 + $0x28] sm:$0xf]
      %v1303 = vld [vmem:[#allocation2 + $0x2c] sm:$0xf]
      %v1304 = vld [vmem:[#allocation2 + $0x30] sm:$0xf]
      %v1305 = vld [vmem:[#allocation2 + $0x34] sm:$0xf]
      %v1306 = vld [vmem:[#allocation2 + $0x38] sm:$0xf]
      %v1307 = vld [vmem:[#allocation2 + $0x3c] sm:$0xf]
      %v1308 = vld [vmem:[#allocation2 + $0x40] sm:$0xf]
      %v1309 = vld [vmem:[#allocation2 + $0x44] sm:$0xf]
      %v1310 = vld [vmem:[#allocation2 + $0x48] sm:$0xf]
      %v1311 = vld [vmem:[#allocation2 + $0x4c] sm:$0xf]
      %v1312 = vld [vmem:[#allocation2 + $0x50] sm:$0xf]
      %v1313 = vld [vmem:[#allocation2 + $0x54] sm:$0xf]
      %v1314 = vld [vmem:[#allocation2 + $0x58] sm:$0xf]
      %v1315 = vld [vmem:[#allocation2 + $0x5c] sm:$0xf]
      %v1316 = vld [vmem:[#allocation2 + $0x60] sm:$0xf]
      %v1317 = vld [vmem:[#allocation2 + $0x64] sm:$0xf]
      %v1318 = vld [vmem:[#allocation2 + $0x68] sm:$0xf]
      %v1319 = vld [vmem:[#allocation2 + $0x6c] sm:$0xf]
      %v1320 = vld [vmem:[#allocation2 + $0x70] sm:$0xf]
      %v1321 = vld [vmem:[#allocation2 + $0x74] sm:$0xf]
      %v1322 = vld [vmem:[#allocation2 + $0x78] sm:$0xf]
      %v1323 = vld [vmem:[#allocation2 + $0x7c] sm:$0xf]
      %v1324 = vld [vmem:[%s1] sm:$0xf]
      %v1325 = vld [vmem:[%s1 + $0x4] sm:$0x3]
      %v1358 = vunpack.c.l.b16 %v1292
      %v1359 = vunpack.c.l.b16 %v1293
      %v1360 = vunpack.c.l.b16 %v1294
      %v1361 = vunpack.c.l.b16 %v1295
      %v1362 = vunpack.c.l.b16 %v1296
      %v1363 = vunpack.c.l.b16 %v1297
      %v1364 = vunpack.c.l.b16 %v1298
      %v1365 = vunpack.c.l.b16 %v1299
      %v1366 = vunpack.c.l.b16 %v1300
      %v1367 = vunpack.c.l.b16 %v1301
      %v1368 = vunpack.c.l.b16 %v1302
      %v1369 = vunpack.c.l.b16 %v1303
      %v1370 = vunpack.c.l.b16 %v1304
      %v1371 = vunpack.c.l.b16 %v1305
      %v1372 = vunpack.c.l.b16 %v1306
      %v1373 = vunpack.c.l.b16 %v1307
      %v1374 = vunpack.c.l.b16 %v1308
      %v1375 = vunpack.c.l.b16 %v1309
      %v1376 = vunpack.c.l.b16 %v1310
      %v1377 = vunpack.c.l.b16 %v1311
      %v1378 = vunpack.c.l.b16 %v1312
      %v1379 = vunpack.c.l.b16 %v1313
      %v1380 = vunpack.c.l.b16 %v1314
      %v1381 = vunpack.c.l.b16 %v1315
      %v1382 = vunpack.c.l.b16 %v1316
      %v1383 = vunpack.c.l.b16 %v1317
      %v1384 = vunpack.c.l.b16 %v1318
      %v1385 = vunpack.c.l.b16 %v1319
      %v1386 = vunpack.c.l.b16 %v1320
      %v1387 = vunpack.c.l.b16 %v1321
      %v1388 = vunpack.c.l.b16 %v1322
      %v1389 = vunpack.c.l.b16 %v1323
      %v1390 = vpack.c.b16 %v1359, %v1358
      %v1391 = vpack.c.b16 %v1361, %v1360
      %v1392 = vpack.c.b16 %v1363, %v1362
      %v1393 = vpack.c.b16 %v1365, %v1364
      %v1394 = vpack.c.b16 %v1367, %v1366
      %v1395 = vpack.c.b16 %v1369, %v1368
      %v1396 = vpack.c.b16 %v1371, %v1370
      %v1397 = vpack.c.b16 %v1373, %v1372
      %v1398 = vpack.c.b16 %v1375, %v1374
      %v1399 = vpack.c.b16 %v1377, %v1376
      %v1400 = vpack.c.b16 %v1379, %v1378
      %v1401 = vpack.c.b16 %v1381, %v1380
      %v1402 = vpack.c.b16 %v1383, %v1382
      %v1403 = vpack.c.b16 %v1385, %v1384
      %v1404 = vpack.c.b16 %v1387, %v1386
      %v1405 = vpack.c.b16 %v1389, %v1388
      %v1408 = vunpack.c.l.b16 %v1324
      %v1409 = vunpack.c.l.b16 %v1325
      %v1410 = vpack.c.b16 %v1409, %v1408
      %vm1411 = vcmask 97280
      %v1413 = vsel %vm1411, %v1390, 0
      %v1416 = vsel %vm1411, %v1391, 0
      %v1419 = vsel %vm1411, %v1392, 0
      %v1422 = vsel %vm1411, %v1393, 0
      %v1425 = vsel %vm1411, %v1394, 0
      %v1428 = vsel %vm1411, %v1395, 0
      %v1431 = vsel %vm1411, %v1396, 0
      %v1434 = vsel %vm1411, %v1397, 0
      %v1437 = vsel %vm1411, %v1398, 0
      %v1440 = vsel %vm1411, %v1399, 0
      %v1443 = vsel %vm1411, %v1400, 0
      %v1446 = vsel %vm1411, %v1401, 0
      %v1449 = vsel %vm1411, %v1402, 0
      %v1452 = vsel %vm1411, %v1403, 0
      %v1455 = vsel %vm1411, %v1404, 0
      %v1458 = vsel %vm1411, %v1405, 0
      %vm1460 = vcmask 1045504
      %v1462 = vsel %vm1460, %v1410, 0
      %1464 = vmatprep.subr.bf16.mxu0 0
      %1465 = vmatpush1.bf16.msra.mxu0 0
      %1466 = vmatprep.subr.bf16.mxu0 0
      %1467 = vmatpush1.bf16.msra.mxu0 0
      %1468 = vmatprep.subr.bf16.mxu0 0
      %1469 = vmatpush1.bf16.msra.mxu0 0
      %1470 = vmatprep.subr.bf16.mxu0 0
      %1471 = vmatpush1.bf16.msra.mxu0 0
      %1472 = vmatprep.subr.bf16.mxu0 0
      %1473 = vmatpush1.bf16.msra.mxu0 0
      %1474 = vmatprep.subr.bf16.mxu0 0
      %1475 = vmatpush1.bf16.msra.mxu0 0
      %1476 = vmatprep.subr.bf16.mxu0 0
      %1477 = vmatpush1.bf16.msra.mxu0 0
      %1478 = vmatprep.subr.bf16.mxu0 0
      %1479 = vmatpush1.bf16.msra.mxu0 %v1462
      %1480 = vmatprep.subr.bf16.mxu0 0
      %1481 = vmatpush2.bf16.msra.mxu0 0
      %1482 = vmatprep.subr.bf16.mxu0 0
      %1483 = vmatpush2.bf16.msra.mxu0 0
      %1484 = vmatprep.subr.bf16.mxu0 0
      %1485 = vmatpush2.bf16.msra.mxu0 0
      %1486 = vmatprep.subr.bf16.mxu0 0
      %1487 = vmatpush2.bf16.msra.mxu0 0
      %1488 = vmatprep.subr.bf16.mxu0 0
      %1489 = vmatpush2.bf16.msra.mxu0 0
      %1490 = vmatprep.subr.bf16.mxu0 0
      %1491 = vmatpush2.bf16.msra.mxu0 0
      %1492 = vmatprep.subr.bf16.mxu0 0
      %1493 = vmatpush2.bf16.msra.mxu0 0
      %1494 = vmatprep.subr.bf16.mxu0 0
      %1495 = vmatpush2.bf16.msra.mxu0 0
      %1496 = vmatprep.mubr.bf16.mxu0 0
      %1497 = vmatmul.mubr.bf16.gmra.mxu0 %v1413
      %v1498 = vpop.f32.mrf.mxu0
      %v1499 = vadd.f32 0.0, %v1498
      %v1500 = vpop.f32.mrf.mxu0
      %v1501 = vpop.f32.mrf.mxu0
      %v1502 = vadd.f32 0.0, %v1501
      %v1503 = vpop.f32.mrf.mxu0
      %1504 = vmatprep.mubr.bf16.mxu0 0
      %1505 = vmatmul.mubr.bf16.gmra.mxu0 %v1416
      %v1506 = vpop.f32.mrf.mxu0
      %v1507 = vadd.f32 0.0, %v1506
      %v1508 = vpop.f32.mrf.mxu0
      %v1509 = vpop.f32.mrf.mxu0
      %v1510 = vadd.f32 0.0, %v1509
      %v1511 = vpop.f32.mrf.mxu0
      %1512 = vmatprep.mubr.bf16.mxu0 0
      %1513 = vmatmul.mubr.bf16.gmra.mxu0 %v1419
      %v1514 = vpop.f32.mrf.mxu0
      %v1515 = vadd.f32 0.0, %v1514
      %v1516 = vpop.f32.mrf.mxu0
      %v1517 = vpop.f32.mrf.mxu0
      %v1518 = vadd.f32 0.0, %v1517
      %v1519 = vpop.f32.mrf.mxu0
      %1520 = vmatprep.mubr.bf16.mxu0 0
      %1521 = vmatmul.mubr.bf16.gmra.mxu0 %v1422
      %v1522 = vpop.f32.mrf.mxu0
      %v1523 = vadd.f32 0.0, %v1522
      %v1524 = vpop.f32.mrf.mxu0
      %v1525 = vpop.f32.mrf.mxu0
      %v1526 = vadd.f32 0.0, %v1525
      %v1527 = vpop.f32.mrf.mxu0
      %1528 = vmatprep.mubr.bf16.mxu0 0
      %1529 = vmatmul.mubr.bf16.gmra.mxu0 %v1425
      %v1530 = vpop.f32.mrf.mxu0
      %v1531 = vadd.f32 0.0, %v1530
      %v1532 = vpop.f32.mrf.mxu0
      %v1533 = vpop.f32.mrf.mxu0
      %v1534 = vadd.f32 0.0, %v1533
      %v1535 = vpop.f32.mrf.mxu0
      %1536 = vmatprep.mubr.bf16.mxu0 0
      %1537 = vmatmul.mubr.bf16.gmra.mxu0 %v1428
      %v1538 = vpop.f32.mrf.mxu0
      %v1539 = vadd.f32 0.0, %v1538
      %v1540 = vpop.f32.mrf.mxu0
      %v1541 = vpop.f32.mrf.mxu0
      %v1542 = vadd.f32 0.0, %v1541
      %v1543 = vpop.f32.mrf.mxu0
      %1544 = vmatprep.mubr.bf16.mxu0 0
      %1545 = vmatmul.mubr.bf16.gmra.mxu0 %v1431
      %v1546 = vpop.f32.mrf.mxu0
      %v1547 = vadd.f32 0.0, %v1546
      %v1548 = vpop.f32.mrf.mxu0
      %v1549 = vpop.f32.mrf.mxu0
      %v1550 = vadd.f32 0.0, %v1549
      %v1551 = vpop.f32.mrf.mxu0
      %1552 = vmatprep.mubr.bf16.mxu0 0
      %1553 = vmatmul.mubr.bf16.gmra.mxu0 %v1434
      %v1554 = vpop.f32.mrf.mxu0
      %v1555 = vadd.f32 0.0, %v1554
      %v1556 = vpop.f32.mrf.mxu0
      %v1557 = vpop.f32.mrf.mxu0
      %v1558 = vadd.f32 0.0, %v1557
      %v1559 = vpop.f32.mrf.mxu0
      %1560 = vmatprep.mubr.bf16.mxu0 0
      %1561 = vmatmul.mubr.bf16.gmra.mxu0 %v1437
      %v1562 = vpop.f32.mrf.mxu0
      %v1563 = vadd.f32 0.0, %v1562
      %v1564 = vpop.f32.mrf.mxu0
      %v1565 = vpop.f32.mrf.mxu0
      %v1566 = vadd.f32 0.0, %v1565
      %v1567 = vpop.f32.mrf.mxu0
      %1568 = vmatprep.mubr.bf16.mxu0 0
      %1569 = vmatmul.mubr.bf16.gmra.mxu0 %v1440
      %v1570 = vpop.f32.mrf.mxu0
      %v1571 = vadd.f32 0.0, %v1570
      %v1572 = vpop.f32.mrf.mxu0
      %v1573 = vpop.f32.mrf.mxu0
      %v1574 = vadd.f32 0.0, %v1573
      %v1575 = vpop.f32.mrf.mxu0
      %1576 = vmatprep.mubr.bf16.mxu0 0
      %1577 = vmatmul.mubr.bf16.gmra.mxu0 %v1443
      %v1578 = vpop.f32.mrf.mxu0
      %v1579 = vadd.f32 0.0, %v1578
      %v1580 = vpop.f32.mrf.mxu0
      %v1581 = vpop.f32.mrf.mxu0
      %v1582 = vadd.f32 0.0, %v1581
      %v1583 = vpop.f32.mrf.mxu0
      %1584 = vmatprep.mubr.bf16.mxu0 0
      %1585 = vmatmul.mubr.bf16.gmra.mxu0 %v1446
      %v1586 = vpop.f32.mrf.mxu0
      %v1587 = vadd.f32 0.0, %v1586
      %v1588 = vpop.f32.mrf.mxu0
      %v1589 = vpop.f32.mrf.mxu0
      %v1590 = vadd.f32 0.0, %v1589
      %v1591 = vpop.f32.mrf.mxu0
      %1592 = vmatprep.mubr.bf16.mxu0 0
      %1593 = vmatmul.mubr.bf16.gmra.mxu0 %v1449
      %v1594 = vpop.f32.mrf.mxu0
      %v1595 = vadd.f32 0.0, %v1594
      %v1596 = vpop.f32.mrf.mxu0
      %v1597 = vpop.f32.mrf.mxu0
      %v1598 = vadd.f32 0.0, %v1597
      %v1599 = vpop.f32.mrf.mxu0
      %1600 = vmatprep.mubr.bf16.mxu0 0
      %1601 = vmatmul.mubr.bf16.gmra.mxu0 %v1452
      %v1602 = vpop.f32.mrf.mxu0
      %v1603 = vadd.f32 0.0, %v1602
      %v1604 = vpop.f32.mrf.mxu0
      %v1605 = vpop.f32.mrf.mxu0
      %v1606 = vadd.f32 0.0, %v1605
      %v1607 = vpop.f32.mrf.mxu0
      %1608 = vmatprep.mubr.bf16.mxu0 0
      %1609 = vmatmul.mubr.bf16.gmra.mxu0 %v1455
      %v1610 = vpop.f32.mrf.mxu0
      %v1611 = vadd.f32 0.0, %v1610
      %v1612 = vpop.f32.mrf.mxu0
      %v1613 = vpop.f32.mrf.mxu0
      %v1614 = vadd.f32 0.0, %v1613
      %v1615 = vpop.f32.mrf.mxu0
      %1616 = vmatprep.mubr.bf16.mxu0 0
      %1617 = vmatmul.mubr.bf16.gmra.mxu0 %v1458
      %v1618 = vpop.f32.mrf.mxu0
      %v1619 = vadd.f32 0.0, %v1618
      %v1620 = vpop.f32.mrf.mxu0
      %v1621 = vpop.f32.mrf.mxu0
      %v1622 = vadd.f32 0.0, %v1621
      %v1623 = vpop.f32.mrf.mxu0
      %1624 = vdwg.mxu0
      %vm1625 = vcmask 31744
      %1626 = vst.msk [vmem:[#allocation3] sm:$0xff] %vm1625, %v1499
      %1627 = vst.msk [vmem:[#allocation3 + $0x8] sm:$0xff] %vm1625, %v1502
      %1628 = vst.msk [vmem:[#allocation3 + $0x10] sm:$0xff] %vm1625, %v1507
      %1629 = vst.msk [vmem:[#allocation3 + $0x18] sm:$0xff] %vm1625, %v1510
      %1630 = vst.msk [vmem:[#allocation3 + $0x20] sm:$0xff] %vm1625, %v1515
      %1631 = vst.msk [vmem:[#allocation3 + $0x28] sm:$0xff] %vm1625, %v1518
      %1632 = vst.msk [vmem:[#allocation3 + $0x30] sm:$0xff] %vm1625, %v1523
      %1633 = vst.msk [vmem:[#allocation3 + $0x38] sm:$0xff] %vm1625, %v1526
      %1634 = vst.msk [vmem:[#allocation3 + $0x40] sm:$0xff] %vm1625, %v1531
      %1635 = vst.msk [vmem:[#allocation3 + $0x48] sm:$0xff] %vm1625, %v1534
      %1636 = vst.msk [vmem:[#allocation3 + $0x50] sm:$0xff] %vm1625, %v1539
      %1637 = vst.msk [vmem:[#allocation3 + $0x58] sm:$0xff] %vm1625, %v1542
      %1638 = vst.msk [vmem:[#allocation3 + $0x60] sm:$0xff] %vm1625, %v1547
      %1639 = vst.msk [vmem:[#allocation3 + $0x68] sm:$0xff] %vm1625, %v1550
      %1640 = vst.msk [vmem:[#allocation3 + $0x70] sm:$0xff] %vm1625, %v1555
      %1641 = vst.msk [vmem:[#allocation3 + $0x78] sm:$0xff] %vm1625, %v1558
      %1642 = vst.msk [vmem:[#allocation3 + $0x80] sm:$0xff] %vm1625, %v1563
      %1643 = vst.msk [vmem:[#allocation3 + $0x88] sm:$0xff] %vm1625, %v1566
      %1644 = vst.msk [vmem:[#allocation3 + $0x90] sm:$0xff] %vm1625, %v1571
      %1645 = vst.msk [vmem:[#allocation3 + $0x98] sm:$0xff] %vm1625, %v1574
      %1646 = vst.msk [vmem:[#allocation3 + $0xa0] sm:$0xff] %vm1625, %v1579
      %1647 = vst.msk [vmem:[#allocation3 + $0xa8] sm:$0xff] %vm1625, %v1582
      %1648 = vst.msk [vmem:[#allocation3 + $0xb0] sm:$0xff] %vm1625, %v1587
      %1649 = vst.msk [vmem:[#allocation3 + $0xb8] sm:$0xff] %vm1625, %v1590
      %1650 = vst.msk [vmem:[#allocation3 + $0xc0] sm:$0xff] %vm1625, %v1595
      %1651 = vst.msk [vmem:[#allocation3 + $0xc8] sm:$0xff] %vm1625, %v1598
      %1652 = vst.msk [vmem:[#allocation3 + $0xd0] sm:$0xff] %vm1625, %v1603
      %1653 = vst.msk [vmem:[#allocation3 + $0xd8] sm:$0xff] %vm1625, %v1606
      %1654 = vst.msk [vmem:[#allocation3 + $0xe0] sm:$0xff] %vm1625, %v1611
      %1655 = vst.msk [vmem:[#allocation3 + $0xe8] sm:$0xff] %vm1625, %v1614
      %1656 = vst.msk [vmem:[#allocation3 + $0xf0] sm:$0xff] %vm1625, %v1619
      %1657 = vst.msk [vmem:[#allocation3 + $0xf8] sm:$0xff] %vm1625, %v1622
      %v1658 = vld [vmem:[%s364] sm:$0xf]
      %v1659 = vld [vmem:[%s364 + $0x4] sm:$0xf]
      %v1660 = vld [vmem:[%s364 + $0x8] sm:$0xf]
      %v1661 = vld [vmem:[%s364 + $0xc] sm:$0xf]
      %v1662 = vld [vmem:[%s364 + $0x10] sm:$0xf]
      %v1663 = vld [vmem:[%s364 + $0x14] sm:$0xf]
      %v1664 = vld [vmem:[%s364 + $0x18] sm:$0xf]
      %v1665 = vld [vmem:[%s364 + $0x1c] sm:$0xf]
      %v1666 = vld [vmem:[%s364 + $0x20] sm:$0xf]
      %v1667 = vld [vmem:[%s364 + $0x24] sm:$0xf]
      %v1668 = vld [vmem:[%s364 + $0x28] sm:$0xf]
      %v1669 = vld [vmem:[%s364 + $0x2c] sm:$0xf]
      %v1670 = vld [vmem:[%s364 + $0x30] sm:$0xf]
      %v1671 = vld [vmem:[%s364 + $0x34] sm:$0xf]
      %v1672 = vld [vmem:[%s364 + $0x38] sm:$0xf]
      %v1673 = vld [vmem:[%s364 + $0x3c] sm:$0xf]
      %v1674 = vld [vmem:[%s364 + $0x40] sm:$0xf]
      %v1675 = vld [vmem:[%s364 + $0x44] sm:$0xf]
      %v1676 = vld [vmem:[%s364 + $0x48] sm:$0xf]
      %v1677 = vld [vmem:[%s364 + $0x4c] sm:$0xf]
      %v1678 = vld [vmem:[%s364 + $0x50] sm:$0xf]
      %v1679 = vld [vmem:[%s364 + $0x54] sm:$0xf]
      %v1680 = vld [vmem:[%s364 + $0x58] sm:$0xf]
      %v1681 = vld [vmem:[%s364 + $0x5c] sm:$0xf]
      %v1682 = vld [vmem:[%s364 + $0x60] sm:$0xf]
      %v1683 = vld [vmem:[%s364 + $0x64] sm:$0xf]
      %v1684 = vld [vmem:[%s364 + $0x68] sm:$0xf]
      %v1685 = vld [vmem:[%s364 + $0x6c] sm:$0xf]
      %v1686 = vld [vmem:[%s364 + $0x70] sm:$0xf]
      %v1687 = vld [vmem:[%s364 + $0x74] sm:$0xf]
      %v1688 = vld [vmem:[%s364 + $0x78] sm:$0xf]
      %v1689 = vld [vmem:[%s364 + $0x7c] sm:$0xf]
      %s1690 = scalar_lea.vmem %s1, 8
      %v1691 = vld [vmem:[%s1690] sm:$0xf]
      %v1692 = vld [vmem:[%s1690 + $0x4] sm:$0x3]
      %v1725 = vunpack.c.l.b16 %v1658
      %v1726 = vunpack.c.l.b16 %v1659
      %v1727 = vunpack.c.l.b16 %v1660
      %v1728 = vunpack.c.l.b16 %v1661
      %v1729 = vunpack.c.l.b16 %v1662
      %v1730 = vunpack.c.l.b16 %v1663
      %v1731 = vunpack.c.l.b16 %v1664
      %v1732 = vunpack.c.l.b16 %v1665
      %v1733 = vunpack.c.l.b16 %v1666
      %v1734 = vunpack.c.l.b16 %v1667
      %v1735 = vunpack.c.l.b16 %v1668
      %v1736 = vunpack.c.l.b16 %v1669
      %v1737 = vunpack.c.l.b16 %v1670
      %v1738 = vunpack.c.l.b16 %v1671
      %v1739 = vunpack.c.l.b16 %v1672
      %v1740 = vunpack.c.l.b16 %v1673
      %v1741 = vunpack.c.l.b16 %v1674
      %v1742 = vunpack.c.l.b16 %v1675
      %v1743 = vunpack.c.l.b16 %v1676
      %v1744 = vunpack.c.l.b16 %v1677
      %v1745 = vunpack.c.l.b16 %v1678
      %v1746 = vunpack.c.l.b16 %v1679
      %v1747 = vunpack.c.l.b16 %v1680
      %v1748 = vunpack.c.l.b16 %v1681
      %v1749 = vunpack.c.l.b16 %v1682
      %v1750 = vunpack.c.l.b16 %v1683
      %v1751 = vunpack.c.l.b16 %v1684
      %v1752 = vunpack.c.l.b16 %v1685
      %v1753 = vunpack.c.l.b16 %v1686
      %v1754 = vunpack.c.l.b16 %v1687
      %v1755 = vunpack.c.l.b16 %v1688
      %v1756 = vunpack.c.l.b16 %v1689
      %v1757 = vpack.c.b16 %v1726, %v1725
      %v1758 = vpack.c.b16 %v1728, %v1727
      %v1759 = vpack.c.b16 %v1730, %v1729
      %v1760 = vpack.c.b16 %v1732, %v1731
      %v1761 = vpack.c.b16 %v1734, %v1733
      %v1762 = vpack.c.b16 %v1736, %v1735
      %v1763 = vpack.c.b16 %v1738, %v1737
      %v1764 = vpack.c.b16 %v1740, %v1739
      %v1765 = vpack.c.b16 %v1742, %v1741
      %v1766 = vpack.c.b16 %v1744, %v1743
      %v1767 = vpack.c.b16 %v1746, %v1745
      %v1768 = vpack.c.b16 %v1748, %v1747
      %v1769 = vpack.c.b16 %v1750, %v1749
      %v1770 = vpack.c.b16 %v1752, %v1751
      %v1771 = vpack.c.b16 %v1754, %v1753
      %v1772 = vpack.c.b16 %v1756, %v1755
      %v1775 = vunpack.c.l.b16 %v1691
      %v1776 = vunpack.c.l.b16 %v1692
      %v1777 = vpack.c.b16 %v1776, %v1775
      %v1779 = vsel %vm1411, %v1757, 0
      %v1782 = vsel %vm1411, %v1758, 0
      %v1785 = vsel %vm1411, %v1759, 0
      %v1788 = vsel %vm1411, %v1760, 0
      %v1791 = vsel %vm1411, %v1761, 0
      %v1794 = vsel %vm1411, %v1762, 0
      %v1797 = vsel %vm1411, %v1763, 0
      %v1800 = vsel %vm1411, %v1764, 0
      %v1803 = vsel %vm1411, %v1765, 0
      %v1806 = vsel %vm1411, %v1766, 0
      %v1809 = vsel %vm1411, %v1767, 0
      %v1812 = vsel %vm1411, %v1768, 0
      %v1815 = vsel %vm1411, %v1769, 0
      %v1818 = vsel %vm1411, %v1770, 0
      %v1821 = vsel %vm1411, %v1771, 0
      %v1824 = vsel %vm1411, %v1772, 0
      %v1827 = vsel %vm1460, %v1777, 0
      %1829 = vmatprep.subr.bf16.mxu0 0
      %1830 = vmatpush1.bf16.msra.mxu0 0
      %1831 = vmatprep.subr.bf16.mxu0 0
      %1832 = vmatpush1.bf16.msra.mxu0 0
      %1833 = vmatprep.subr.bf16.mxu0 0
      %1834 = vmatpush1.bf16.msra.mxu0 0
      %1835 = vmatprep.subr.bf16.mxu0 0
      %1836 = vmatpush1.bf16.msra.mxu0 0
      %1837 = vmatprep.subr.bf16.mxu0 0
      %1838 = vmatpush1.bf16.msra.mxu0 0
      %1839 = vmatprep.subr.bf16.mxu0 0
      %1840 = vmatpush1.bf16.msra.mxu0 0
      %1841 = vmatprep.subr.bf16.mxu0 0
      %1842 = vmatpush1.bf16.msra.mxu0 0
      %1843 = vmatprep.subr.bf16.mxu0 0
      %1844 = vmatpush1.bf16.msra.mxu0 %v1827
      %1845 = vmatprep.subr.bf16.mxu0 0
      %1846 = vmatpush2.bf16.msra.mxu0 0
      %1847 = vmatprep.subr.bf16.mxu0 0
      %1848 = vmatpush2.bf16.msra.mxu0 0
      %1849 = vmatprep.subr.bf16.mxu0 0
      %1850 = vmatpush2.bf16.msra.mxu0 0
      %1851 = vmatprep.subr.bf16.mxu0 0
      %1852 = vmatpush2.bf16.msra.mxu0 0
      %1853 = vmatprep.subr.bf16.mxu0 0
      %1854 = vmatpush2.bf16.msra.mxu0 0
      %1855 = vmatprep.subr.bf16.mxu0 0
      %1856 = vmatpush2.bf16.msra.mxu0 0
      %1857 = vmatprep.subr.bf16.mxu0 0
      %1858 = vmatpush2.bf16.msra.mxu0 0
      %1859 = vmatprep.subr.bf16.mxu0 0
      %1860 = vmatpush2.bf16.msra.mxu0 0
      %1861 = vmatprep.mubr.bf16.mxu0 0
      %1862 = vmatmul.mubr.bf16.gmra.mxu0 %v1779
      %v1863 = vpop.f32.mrf.mxu0
      %v1864 = vadd.f32 0.0, %v1863
      %v1865 = vpop.f32.mrf.mxu0
      %v1866 = vpop.f32.mrf.mxu0
      %v1867 = vadd.f32 0.0, %v1866
      %v1868 = vpop.f32.mrf.mxu0
      %1869 = vmatprep.mubr.bf16.mxu0 0
      %1870 = vmatmul.mubr.bf16.gmra.mxu0 %v1782
      %v1871 = vpop.f32.mrf.mxu0
      %v1872 = vadd.f32 0.0, %v1871
      %v1873 = vpop.f32.mrf.mxu0
      %v1874 = vpop.f32.mrf.mxu0
      %v1875 = vadd.f32 0.0, %v1874
      %v1876 = vpop.f32.mrf.mxu0
      %1877 = vmatprep.mubr.bf16.mxu0 0
      %1878 = vmatmul.mubr.bf16.gmra.mxu0 %v1785
      %v1879 = vpop.f32.mrf.mxu0
      %v1880 = vadd.f32 0.0, %v1879
      %v1881 = vpop.f32.mrf.mxu0
      %v1882 = vpop.f32.mrf.mxu0
      %v1883 = vadd.f32 0.0, %v1882
      %v1884 = vpop.f32.mrf.mxu0
      %1885 = vmatprep.mubr.bf16.mxu0 0
      %1886 = vmatmul.mubr.bf16.gmra.mxu0 %v1788
      %v1887 = vpop.f32.mrf.mxu0
      %v1888 = vadd.f32 0.0, %v1887
      %v1889 = vpop.f32.mrf.mxu0
      %v1890 = vpop.f32.mrf.mxu0
      %v1891 = vadd.f32 0.0, %v1890
      %v1892 = vpop.f32.mrf.mxu0
      %1893 = vmatprep.mubr.bf16.mxu0 0
      %1894 = vmatmul.mubr.bf16.gmra.mxu0 %v1791
      %v1895 = vpop.f32.mrf.mxu0
      %v1896 = vadd.f32 0.0, %v1895
      %v1897 = vpop.f32.mrf.mxu0
      %v1898 = vpop.f32.mrf.mxu0
      %v1899 = vadd.f32 0.0, %v1898
      %v1900 = vpop.f32.mrf.mxu0
      %1901 = vmatprep.mubr.bf16.mxu0 0
      %1902 = vmatmul.mubr.bf16.gmra.mxu0 %v1794
      %v1903 = vpop.f32.mrf.mxu0
      %v1904 = vadd.f32 0.0, %v1903
      %v1905 = vpop.f32.mrf.mxu0
      %v1906 = vpop.f32.mrf.mxu0
      %v1907 = vadd.f32 0.0, %v1906
      %v1908 = vpop.f32.mrf.mxu0
      %1909 = vmatprep.mubr.bf16.mxu0 0
      %1910 = vmatmul.mubr.bf16.gmra.mxu0 %v1797
      %v1911 = vpop.f32.mrf.mxu0
      %v1912 = vadd.f32 0.0, %v1911
      %v1913 = vpop.f32.mrf.mxu0
      %v1914 = vpop.f32.mrf.mxu0
      %v1915 = vadd.f32 0.0, %v1914
      %v1916 = vpop.f32.mrf.mxu0
      %1917 = vmatprep.mubr.bf16.mxu0 0
      %1918 = vmatmul.mubr.bf16.gmra.mxu0 %v1800
      %v1919 = vpop.f32.mrf.mxu0
      %v1920 = vadd.f32 0.0, %v1919
      %v1921 = vpop.f32.mrf.mxu0
      %v1922 = vpop.f32.mrf.mxu0
      %v1923 = vadd.f32 0.0, %v1922
      %v1924 = vpop.f32.mrf.mxu0
      %1925 = vmatprep.mubr.bf16.mxu0 0
      %1926 = vmatmul.mubr.bf16.gmra.mxu0 %v1803
      %v1927 = vpop.f32.mrf.mxu0
      %v1928 = vadd.f32 0.0, %v1927
      %v1929 = vpop.f32.mrf.mxu0
      %v1930 = vpop.f32.mrf.mxu0
      %v1931 = vadd.f32 0.0, %v1930
      %v1932 = vpop.f32.mrf.mxu0
      %1933 = vmatprep.mubr.bf16.mxu0 0
      %1934 = vmatmul.mubr.bf16.gmra.mxu0 %v1806
      %v1935 = vpop.f32.mrf.mxu0
      %v1936 = vadd.f32 0.0, %v1935
      %v1937 = vpop.f32.mrf.mxu0
      %v1938 = vpop.f32.mrf.mxu0
      %v1939 = vadd.f32 0.0, %v1938
      %v1940 = vpop.f32.mrf.mxu0
      %1941 = vmatprep.mubr.bf16.mxu0 0
      %1942 = vmatmul.mubr.bf16.gmra.mxu0 %v1809
      %v1943 = vpop.f32.mrf.mxu0
      %v1944 = vadd.f32 0.0, %v1943
      %v1945 = vpop.f32.mrf.mxu0
      %v1946 = vpop.f32.mrf.mxu0
      %v1947 = vadd.f32 0.0, %v1946
      %v1948 = vpop.f32.mrf.mxu0
      %1949 = vmatprep.mubr.bf16.mxu0 0
      %1950 = vmatmul.mubr.bf16.gmra.mxu0 %v1812
      %v1951 = vpop.f32.mrf.mxu0
      %v1952 = vadd.f32 0.0, %v1951
      %v1953 = vpop.f32.mrf.mxu0
      %v1954 = vpop.f32.mrf.mxu0
      %v1955 = vadd.f32 0.0, %v1954
      %v1956 = vpop.f32.mrf.mxu0
      %1957 = vmatprep.mubr.bf16.mxu0 0
      %1958 = vmatmul.mubr.bf16.gmra.mxu0 %v1815
      %v1959 = vpop.f32.mrf.mxu0
      %v1960 = vadd.f32 0.0, %v1959
      %v1961 = vpop.f32.mrf.mxu0
      %v1962 = vpop.f32.mrf.mxu0
      %v1963 = vadd.f32 0.0, %v1962
      %v1964 = vpop.f32.mrf.mxu0
      %1965 = vmatprep.mubr.bf16.mxu0 0
      %1966 = vmatmul.mubr.bf16.gmra.mxu0 %v1818
      %v1967 = vpop.f32.mrf.mxu0
      %v1968 = vadd.f32 0.0, %v1967
      %v1969 = vpop.f32.mrf.mxu0
      %v1970 = vpop.f32.mrf.mxu0
      %v1971 = vadd.f32 0.0, %v1970
      %v1972 = vpop.f32.mrf.mxu0
      %1973 = vmatprep.mubr.bf16.mxu0 0
      %1974 = vmatmul.mubr.bf16.gmra.mxu0 %v1821
      %v1975 = vpop.f32.mrf.mxu0
      %v1976 = vadd.f32 0.0, %v1975
      %v1977 = vpop.f32.mrf.mxu0
      %v1978 = vpop.f32.mrf.mxu0
      %v1979 = vadd.f32 0.0, %v1978
      %v1980 = vpop.f32.mrf.mxu0
      %1981 = vmatprep.mubr.bf16.mxu0 0
      %1982 = vmatmul.mubr.bf16.gmra.mxu0 %v1824
      %v1983 = vpop.f32.mrf.mxu0
      %v1984 = vadd.f32 0.0, %v1983
      %v1985 = vpop.f32.mrf.mxu0
      %v1986 = vpop.f32.mrf.mxu0
      %v1987 = vadd.f32 0.0, %v1986
      %v1988 = vpop.f32.mrf.mxu0
      %1989 = vdwg.mxu0
      %v1990 = vld [vmem:[#allocation3] sm:$0xff]
      %v1991 = vld [vmem:[#allocation3 + $0x8] sm:$0xff]
      %v1992 = vld [vmem:[#allocation3 + $0x10] sm:$0xff]
      %v1993 = vld [vmem:[#allocation3 + $0x18] sm:$0xff]
      %v1994 = vld [vmem:[#allocation3 + $0x20] sm:$0xff]
      %v1995 = vld [vmem:[#allocation3 + $0x28] sm:$0xff]
      %v1996 = vld [vmem:[#allocation3 + $0x30] sm:$0xff]
      %v1997 = vld [vmem:[#allocation3 + $0x38] sm:$0xff]
      %v1998 = vld [vmem:[#allocation3 + $0x40] sm:$0xff]
      %v1999 = vld [vmem:[#allocation3 + $0x48] sm:$0xff]
      %v2000 = vld [vmem:[#allocation3 + $0x50] sm:$0xff]
      %v2001 = vld [vmem:[#allocation3 + $0x58] sm:$0xff]
      %v2002 = vld [vmem:[#allocation3 + $0x60] sm:$0xff]
      %v2003 = vld [vmem:[#allocation3 + $0x68] sm:$0xff]
      %v2004 = vld [vmem:[#allocation3 + $0x70] sm:$0xff]
      %v2005 = vld [vmem:[#allocation3 + $0x78] sm:$0xff]
      %v2006 = vld [vmem:[#allocation3 + $0x80] sm:$0xff]
      %v2007 = vld [vmem:[#allocation3 + $0x88] sm:$0xff]
      %v2008 = vld [vmem:[#allocation3 + $0x90] sm:$0xff]
      %v2009 = vld [vmem:[#allocation3 + $0x98] sm:$0xff]
      %v2010 = vld [vmem:[#allocation3 + $0xa0] sm:$0xff]
      %v2011 = vld [vmem:[#allocation3 + $0xa8] sm:$0xff]
      %v2012 = vld [vmem:[#allocation3 + $0xb0] sm:$0xff]
      %v2013 = vld [vmem:[#allocation3 + $0xb8] sm:$0xff]
      %v2014 = vld [vmem:[#allocation3 + $0xc0] sm:$0xff]
      %v2015 = vld [vmem:[#allocation3 + $0xc8] sm:$0xff]
      %v2016 = vld [vmem:[#allocation3 + $0xd0] sm:$0xff]
      %v2017 = vld [vmem:[#allocation3 + $0xd8] sm:$0xff]
      %v2018 = vld [vmem:[#allocation3 + $0xe0] sm:$0xff]
      %v2019 = vld [vmem:[#allocation3 + $0xe8] sm:$0xff]
      %v2020 = vld [vmem:[#allocation3 + $0xf0] sm:$0xff]
      %v2021 = vld [vmem:[#allocation3 + $0xf8] sm:$0xff]
      %v2022 = vadd.f32 %v1990, %v1864
      %v2023 = vadd.f32 %v1991, %v1867
      %v2024 = vadd.f32 %v1992, %v1872
      %v2025 = vadd.f32 %v1993, %v1875
      %v2026 = vadd.f32 %v1994, %v1880
      %v2027 = vadd.f32 %v1995, %v1883
      %v2028 = vadd.f32 %v1996, %v1888
      %v2029 = vadd.f32 %v1997, %v1891
      %v2030 = vadd.f32 %v1998, %v1896
      %v2031 = vadd.f32 %v1999, %v1899
      %v2032 = vadd.f32 %v2000, %v1904
      %v2033 = vadd.f32 %v2001, %v1907
      %v2034 = vadd.f32 %v2002, %v1912
      %v2035 = vadd.f32 %v2003, %v1915
      %v2036 = vadd.f32 %v2004, %v1920
      %v2037 = vadd.f32 %v2005, %v1923
      %v2038 = vadd.f32 %v2006, %v1928
      %v2039 = vadd.f32 %v2007, %v1931
      %v2040 = vadd.f32 %v2008, %v1936
      %v2041 = vadd.f32 %v2009, %v1939
      %v2042 = vadd.f32 %v2010, %v1944
      %v2043 = vadd.f32 %v2011, %v1947
      %v2044 = vadd.f32 %v2012, %v1952
      %v2045 = vadd.f32 %v2013, %v1955
      %v2046 = vadd.f32 %v2014, %v1960
      %v2047 = vadd.f32 %v2015, %v1963
      %v2048 = vadd.f32 %v2016, %v1968
      %v2049 = vadd.f32 %v2017, %v1971
      %v2050 = vadd.f32 %v2018, %v1976
      %v2051 = vadd.f32 %v2019, %v1979
      %v2052 = vadd.f32 %v2020, %v1984
      %v2053 = vadd.f32 %v2021, %v1987
      %2054 = vst.msk [vmem:[#allocation3] sm:$0xff] %vm1625, %v2022
      %2055 = vst.msk [vmem:[#allocation3 + $0x8] sm:$0xff] %vm1625, %v2023
      %2056 = vst.msk [vmem:[#allocation3 + $0x10] sm:$0xff] %vm1625, %v2024
      %2057 = vst.msk [vmem:[#allocation3 + $0x18] sm:$0xff] %vm1625, %v2025
      %2058 = vst.msk [vmem:[#allocation3 + $0x20] sm:$0xff] %vm1625, %v2026
      %2059 = vst.msk [vmem:[#allocation3 + $0x28] sm:$0xff] %vm1625, %v2027
      %2060 = vst.msk [vmem:[#allocation3 + $0x30] sm:$0xff] %vm1625, %v2028
      %2061 = vst.msk [vmem:[#allocation3 + $0x38] sm:$0xff] %vm1625, %v2029
      %2062 = vst.msk [vmem:[#allocation3 + $0x40] sm:$0xff] %vm1625, %v2030
      %2063 = vst.msk [vmem:[#allocation3 + $0x48] sm:$0xff] %vm1625, %v2031
      %2064 = vst.msk [vmem:[#allocation3 + $0x50] sm:$0xff] %vm1625, %v2032
      %2065 = vst.msk [vmem:[#allocation3 + $0x58] sm:$0xff] %vm1625, %v2033
      %2066 = vst.msk [vmem:[#allocation3 + $0x60] sm:$0xff] %vm1625, %v2034
      %2067 = vst.msk [vmem:[#allocation3 + $0x68] sm:$0xff] %vm1625, %v2035
      %2068 = vst.msk [vmem:[#allocation3 + $0x70] sm:$0xff] %vm1625, %v2036
      %2069 = vst.msk [vmem:[#allocation3 + $0x78] sm:$0xff] %vm1625, %v2037
      %2070 = vst.msk [vmem:[#allocation3 + $0x80] sm:$0xff] %vm1625, %v2038
      %2071 = vst.msk [vmem:[#allocation3 + $0x88] sm:$0xff] %vm1625, %v2039
      %2072 = vst.msk [vmem:[#allocation3 + $0x90] sm:$0xff] %vm1625, %v2040
      %2073 = vst.msk [vmem:[#allocation3 + $0x98] sm:$0xff] %vm1625, %v2041
      %2074 = vst.msk [vmem:[#allocation3 + $0xa0] sm:$0xff] %vm1625, %v2042
      %2075 = vst.msk [vmem:[#allocation3 + $0xa8] sm:$0xff] %vm1625, %v2043
      %2076 = vst.msk [vmem:[#allocation3 + $0xb0] sm:$0xff] %vm1625, %v2044
      %2077 = vst.msk [vmem:[#allocation3 + $0xb8] sm:$0xff] %vm1625, %v2045
      %2078 = vst.msk [vmem:[#allocation3 + $0xc0] sm:$0xff] %vm1625, %v2046
      %2079 = vst.msk [vmem:[#allocation3 + $0xc8] sm:$0xff] %vm1625, %v2047
      %2080 = vst.msk [vmem:[#allocation3 + $0xd0] sm:$0xff] %vm1625, %v2048
      %2081 = vst.msk [vmem:[#allocation3 + $0xd8] sm:$0xff] %vm1625, %v2049
      %2082 = vst.msk [vmem:[#allocation3 + $0xe0] sm:$0xff] %vm1625, %v2050
      %2083 = vst.msk [vmem:[#allocation3 + $0xe8] sm:$0xff] %vm1625, %v2051
      %2084 = vst.msk [vmem:[#allocation3 + $0xf0] sm:$0xff] %vm1625, %v2052
      %2085 = vst.msk [vmem:[#allocation3 + $0xf8] sm:$0xff] %vm1625, %v2053
      %v2086 = vld [vmem:[%s1280] sm:$0xf]
      %v2087 = vld [vmem:[%s1280 + $0x4] sm:$0xf]
      %v2088 = vld [vmem:[%s1280 + $0x8] sm:$0xf]
      %v2089 = vld [vmem:[%s1280 + $0xc] sm:$0xf]
      %v2090 = vld [vmem:[%s1280 + $0x10] sm:$0xf]
      %v2091 = vld [vmem:[%s1280 + $0x14] sm:$0xf]
      %v2092 = vld [vmem:[%s1280 + $0x18] sm:$0xf]
      %v2093 = vld [vmem:[%s1280 + $0x1c] sm:$0xf]
      %v2094 = vld [vmem:[%s1280 + $0x20] sm:$0xf]
      %v2095 = vld [vmem:[%s1280 + $0x24] sm:$0xf]
      %v2096 = vld [vmem:[%s1280 + $0x28] sm:$0xf]
      %v2097 = vld [vmem:[%s1280 + $0x2c] sm:$0xf]
      %v2098 = vld [vmem:[%s1280 + $0x30] sm:$0xf]
      %v2099 = vld [vmem:[%s1280 + $0x34] sm:$0xf]
      %v2100 = vld [vmem:[%s1280 + $0x38] sm:$0xf]
      %v2101 = vld [vmem:[%s1280 + $0x3c] sm:$0xf]
      %v2102 = vld [vmem:[%s1280 + $0x40] sm:$0xf]
      %v2103 = vld [vmem:[%s1280 + $0x44] sm:$0xf]
      %v2104 = vld [vmem:[%s1280 + $0x48] sm:$0xf]
      %v2105 = vld [vmem:[%s1280 + $0x4c] sm:$0xf]
      %v2106 = vld [vmem:[%s1280 + $0x50] sm:$0xf]
      %v2107 = vld [vmem:[%s1280 + $0x54] sm:$0xf]
      %v2108 = vld [vmem:[%s1280 + $0x58] sm:$0xf]
      %v2109 = vld [vmem:[%s1280 + $0x5c] sm:$0xf]
      %v2110 = vld [vmem:[%s1280 + $0x60] sm:$0xf]
      %v2111 = vld [vmem:[%s1280 + $0x64] sm:$0xf]
      %v2112 = vld [vmem:[%s1280 + $0x68] sm:$0xf]
      %v2113 = vld [vmem:[%s1280 + $0x6c] sm:$0xf]
      %v2114 = vld [vmem:[%s1280 + $0x70] sm:$0xf]
      %v2115 = vld [vmem:[%s1280 + $0x74] sm:$0xf]
      %v2116 = vld [vmem:[%s1280 + $0x78] sm:$0xf]
      %v2117 = vld [vmem:[%s1280 + $0x7c] sm:$0xf]
      %s2118 = scalar_lea.vmem %s1, 16
      %v2119 = vld [vmem:[%s2118] sm:$0xf]
      %v2120 = vld [vmem:[%s2118 + $0x4] sm:$0x3]
      %v2153 = vunpack.c.l.b16 %v2086
      %v2154 = vunpack.c.l.b16 %v2087
      %v2155 = vunpack.c.l.b16 %v2088
      %v2156 = vunpack.c.l.b16 %v2089
      %v2157 = vunpack.c.l.b16 %v2090
      %v2158 = vunpack.c.l.b16 %v2091
      %v2159 = vunpack.c.l.b16 %v2092
      %v2160 = vunpack.c.l.b16 %v2093
      %v2161 = vunpack.c.l.b16 %v2094
      %v2162 = vunpack.c.l.b16 %v2095
      %v2163 = vunpack.c.l.b16 %v2096
      %v2164 = vunpack.c.l.b16 %v2097
      %v2165 = vunpack.c.l.b16 %v2098
      %v2166 = vunpack.c.l.b16 %v2099
      %v2167 = vunpack.c.l.b16 %v2100
      %v2168 = vunpack.c.l.b16 %v2101
      %v2169 = vunpack.c.l.b16 %v2102
      %v2170 = vunpack.c.l.b16 %v2103
      %v2171 = vunpack.c.l.b16 %v2104
      %v2172 = vunpack.c.l.b16 %v2105
      %v2173 = vunpack.c.l.b16 %v2106
      %v2174 = vunpack.c.l.b16 %v2107
      %v2175 = vunpack.c.l.b16 %v2108
      %v2176 = vunpack.c.l.b16 %v2109
      %v2177 = vunpack.c.l.b16 %v2110
      %v2178 = vunpack.c.l.b16 %v2111
      %v2179 = vunpack.c.l.b16 %v2112
      %v2180 = vunpack.c.l.b16 %v2113
      %v2181 = vunpack.c.l.b16 %v2114
      %v2182 = vunpack.c.l.b16 %v2115
      %v2183 = vunpack.c.l.b16 %v2116
      %v2184 = vunpack.c.l.b16 %v2117
      %v2185 = vpack.c.b16 %v2154, %v2153
      %v2186 = vpack.c.b16 %v2156, %v2155
      %v2187 = vpack.c.b16 %v2158, %v2157
      %v2188 = vpack.c.b16 %v2160, %v2159
      %v2189 = vpack.c.b16 %v2162, %v2161
      %v2190 = vpack.c.b16 %v2164, %v2163
      %v2191 = vpack.c.b16 %v2166, %v2165
      %v2192 = vpack.c.b16 %v2168, %v2167
      %v2193 = vpack.c.b16 %v2170, %v2169
      %v2194 = vpack.c.b16 %v2172, %v2171
      %v2195 = vpack.c.b16 %v2174, %v2173
      %v2196 = vpack.c.b16 %v2176, %v2175
      %v2197 = vpack.c.b16 %v2178, %v2177
      %v2198 = vpack.c.b16 %v2180, %v2179
      %v2199 = vpack.c.b16 %v2182, %v2181
      %v2200 = vpack.c.b16 %v2184, %v2183
      %v2203 = vunpack.c.l.b16 %v2119
      %v2204 = vunpack.c.l.b16 %v2120
      %v2205 = vpack.c.b16 %v2204, %v2203
      %v2207 = vsel %vm1411, %v2185, 0
      %v2210 = vsel %vm1411, %v2186, 0
      %v2213 = vsel %vm1411, %v2187, 0
      %v2216 = vsel %vm1411, %v2188, 0
      %v2219 = vsel %vm1411, %v2189, 0
      %v2222 = vsel %vm1411, %v2190, 0
      %v2225 = vsel %vm1411, %v2191, 0
      %v2228 = vsel %vm1411, %v2192, 0
      %v2231 = vsel %vm1411, %v2193, 0
      %v2234 = vsel %vm1411, %v2194, 0
      %v2237 = vsel %vm1411, %v2195, 0
      %v2240 = vsel %vm1411, %v2196, 0
      %v2243 = vsel %vm1411, %v2197, 0
      %v2246 = vsel %vm1411, %v2198, 0
      %v2249 = vsel %vm1411, %v2199, 0
      %v2252 = vsel %vm1411, %v2200, 0
      %v2255 = vsel %vm1460, %v2205, 0
      %2257 = vmatprep.subr.bf16.mxu0 0
      %2258 = vmatpush1.bf16.msra.mxu0 0
      %2259 = vmatprep.subr.bf16.mxu0 0
      %2260 = vmatpush1.bf16.msra.mxu0 0
      %2261 = vmatprep.subr.bf16.mxu0 0
      %2262 = vmatpush1.bf16.msra.mxu0 0
      %2263 = vmatprep.subr.bf16.mxu0 0
      %2264 = vmatpush1.bf16.msra.mxu0 0
      %2265 = vmatprep.subr.bf16.mxu0 0
      %2266 = vmatpush1.bf16.msra.mxu0 0
      %2267 = vmatprep.subr.bf16.mxu0 0
      %2268 = vmatpush1.bf16.msra.mxu0 0
      %2269 = vmatprep.subr.bf16.mxu0 0
      %2270 = vmatpush1.bf16.msra.mxu0 0
      %2271 = vmatprep.subr.bf16.mxu0 0
      %2272 = vmatpush1.bf16.msra.mxu0 %v2255
      %2273 = vmatprep.subr.bf16.mxu0 0
      %2274 = vmatpush2.bf16.msra.mxu0 0
      %2275 = vmatprep.subr.bf16.mxu0 0
      %2276 = vmatpush2.bf16.msra.mxu0 0
      %2277 = vmatprep.subr.bf16.mxu0 0
      %2278 = vmatpush2.bf16.msra.mxu0 0
      %2279 = vmatprep.subr.bf16.mxu0 0
      %2280 = vmatpush2.bf16.msra.mxu0 0
      %2281 = vmatprep.subr.bf16.mxu0 0
      %2282 = vmatpush2.bf16.msra.mxu0 0
      %2283 = vmatprep.subr.bf16.mxu0 0
      %2284 = vmatpush2.bf16.msra.mxu0 0
      %2285 = vmatprep.subr.bf16.mxu0 0
      %2286 = vmatpush2.bf16.msra.mxu0 0
      %2287 = vmatprep.subr.bf16.mxu0 0
      %2288 = vmatpush2.bf16.msra.mxu0 0
      %2289 = vmatprep.mubr.bf16.mxu0 0
      %2290 = vmatmul.mubr.bf16.gmra.mxu0 %v2207
      %v2291 = vpop.f32.mrf.mxu0
      %v2292 = vadd.f32 0.0, %v2291
      %v2293 = vpop.f32.mrf.mxu0
      %v2294 = vpop.f32.mrf.mxu0
      %v2295 = vadd.f32 0.0, %v2294
      %v2296 = vpop.f32.mrf.mxu0
      %2297 = vmatprep.mubr.bf16.mxu0 0
      %2298 = vmatmul.mubr.bf16.gmra.mxu0 %v2210
      %v2299 = vpop.f32.mrf.mxu0
      %v2300 = vadd.f32 0.0, %v2299
      %v2301 = vpop.f32.mrf.mxu0
      %v2302 = vpop.f32.mrf.mxu0
      %v2303 = vadd.f32 0.0, %v2302
      %v2304 = vpop.f32.mrf.mxu0
      %2305 = vmatprep.mubr.bf16.mxu0 0
      %2306 = vmatmul.mubr.bf16.gmra.mxu0 %v2213
      %v2307 = vpop.f32.mrf.mxu0
      %v2308 = vadd.f32 0.0, %v2307
      %v2309 = vpop.f32.mrf.mxu0
      %v2310 = vpop.f32.mrf.mxu0
      %v2311 = vadd.f32 0.0, %v2310
      %v2312 = vpop.f32.mrf.mxu0
      %2313 = vmatprep.mubr.bf16.mxu0 0
      %2314 = vmatmul.mubr.bf16.gmra.mxu0 %v2216
      %v2315 = vpop.f32.mrf.mxu0
      %v2316 = vadd.f32 0.0, %v2315
      %v2317 = vpop.f32.mrf.mxu0
      %v2318 = vpop.f32.mrf.mxu0
      %v2319 = vadd.f32 0.0, %v2318
      %v2320 = vpop.f32.mrf.mxu0
      %2321 = vmatprep.mubr.bf16.mxu0 0
      %2322 = vmatmul.mubr.bf16.gmra.mxu0 %v2219
      %v2323 = vpop.f32.mrf.mxu0
      %v2324 = vadd.f32 0.0, %v2323
      %v2325 = vpop.f32.mrf.mxu0
      %v2326 = vpop.f32.mrf.mxu0
      %v2327 = vadd.f32 0.0, %v2326
      %v2328 = vpop.f32.mrf.mxu0
      %2329 = vmatprep.mubr.bf16.mxu0 0
      %2330 = vmatmul.mubr.bf16.gmra.mxu0 %v2222
      %v2331 = vpop.f32.mrf.mxu0
      %v2332 = vadd.f32 0.0, %v2331
      %v2333 = vpop.f32.mrf.mxu0
      %v2334 = vpop.f32.mrf.mxu0
      %v2335 = vadd.f32 0.0, %v2334
      %v2336 = vpop.f32.mrf.mxu0
      %2337 = vmatprep.mubr.bf16.mxu0 0
      %2338 = vmatmul.mubr.bf16.gmra.mxu0 %v2225
      %v2339 = vpop.f32.mrf.mxu0
      %v2340 = vadd.f32 0.0, %v2339
      %v2341 = vpop.f32.mrf.mxu0
      %v2342 = vpop.f32.mrf.mxu0
      %v2343 = vadd.f32 0.0, %v2342
      %v2344 = vpop.f32.mrf.mxu0
      %2345 = vmatprep.mubr.bf16.mxu0 0
      %2346 = vmatmul.mubr.bf16.gmra.mxu0 %v2228
      %v2347 = vpop.f32.mrf.mxu0
      %v2348 = vadd.f32 0.0, %v2347
      %v2349 = vpop.f32.mrf.mxu0
      %v2350 = vpop.f32.mrf.mxu0
      %v2351 = vadd.f32 0.0, %v2350
      %v2352 = vpop.f32.mrf.mxu0
      %2353 = vmatprep.mubr.bf16.mxu0 0
      %2354 = vmatmul.mubr.bf16.gmra.mxu0 %v2231
      %v2355 = vpop.f32.mrf.mxu0
      %v2356 = vadd.f32 0.0, %v2355
      %v2357 = vpop.f32.mrf.mxu0
      %v2358 = vpop.f32.mrf.mxu0
      %v2359 = vadd.f32 0.0, %v2358
      %v2360 = vpop.f32.mrf.mxu0
      %2361 = vmatprep.mubr.bf16.mxu0 0
      %2362 = vmatmul.mubr.bf16.gmra.mxu0 %v2234
      %v2363 = vpop.f32.mrf.mxu0
      %v2364 = vadd.f32 0.0, %v2363
      %v2365 = vpop.f32.mrf.mxu0
      %v2366 = vpop.f32.mrf.mxu0
      %v2367 = vadd.f32 0.0, %v2366
      %v2368 = vpop.f32.mrf.mxu0
      %2369 = vmatprep.mubr.bf16.mxu0 0
      %2370 = vmatmul.mubr.bf16.gmra.mxu0 %v2237
      %v2371 = vpop.f32.mrf.mxu0
      %v2372 = vadd.f32 0.0, %v2371
      %v2373 = vpop.f32.mrf.mxu0
      %v2374 = vpop.f32.mrf.mxu0
      %v2375 = vadd.f32 0.0, %v2374
      %v2376 = vpop.f32.mrf.mxu0
      %2377 = vmatprep.mubr.bf16.mxu0 0
      %2378 = vmatmul.mubr.bf16.gmra.mxu0 %v2240
      %v2379 = vpop.f32.mrf.mxu0
      %v2380 = vadd.f32 0.0, %v2379
      %v2381 = vpop.f32.mrf.mxu0
      %v2382 = vpop.f32.mrf.mxu0
      %v2383 = vadd.f32 0.0, %v2382
      %v2384 = vpop.f32.mrf.mxu0
      %2385 = vmatprep.mubr.bf16.mxu0 0
      %2386 = vmatmul.mubr.bf16.gmra.mxu0 %v2243
      %v2387 = vpop.f32.mrf.mxu0
      %v2388 = vadd.f32 0.0, %v2387
      %v2389 = vpop.f32.mrf.mxu0
      %v2390 = vpop.f32.mrf.mxu0
      %v2391 = vadd.f32 0.0, %v2390
      %v2392 = vpop.f32.mrf.mxu0
      %2393 = vmatprep.mubr.bf16.mxu0 0
      %2394 = vmatmul.mubr.bf16.gmra.mxu0 %v2246
      %v2395 = vpop.f32.mrf.mxu0
      %v2396 = vadd.f32 0.0, %v2395
      %v2397 = vpop.f32.mrf.mxu0
      %v2398 = vpop.f32.mrf.mxu0
      %v2399 = vadd.f32 0.0, %v2398
      %v2400 = vpop.f32.mrf.mxu0
      %2401 = vmatprep.mubr.bf16.mxu0 0
      %2402 = vmatmul.mubr.bf16.gmra.mxu0 %v2249
      %v2403 = vpop.f32.mrf.mxu0
      %v2404 = vadd.f32 0.0, %v2403
      %v2405 = vpop.f32.mrf.mxu0
      %v2406 = vpop.f32.mrf.mxu0
      %v2407 = vadd.f32 0.0, %v2406
      %v2408 = vpop.f32.mrf.mxu0
      %2409 = vmatprep.mubr.bf16.mxu0 0
      %2410 = vmatmul.mubr.bf16.gmra.mxu0 %v2252
      %v2411 = vpop.f32.mrf.mxu0
      %v2412 = vadd.f32 0.0, %v2411
      %v2413 = vpop.f32.mrf.mxu0
      %v2414 = vpop.f32.mrf.mxu0
      %v2415 = vadd.f32 0.0, %v2414
      %v2416 = vpop.f32.mrf.mxu0
      %2417 = vdwg.mxu0
      %v2418 = vld [vmem:[#allocation3] sm:$0xff]
      %v2419 = vld [vmem:[#allocation3 + $0x8] sm:$0xff]
      %v2420 = vld [vmem:[#allocation3 + $0x10] sm:$0xff]
      %v2421 = vld [vmem:[#allocation3 + $0x18] sm:$0xff]
      %v2422 = vld [vmem:[#allocation3 + $0x20] sm:$0xff]
      %v2423 = vld [vmem:[#allocation3 + $0x28] sm:$0xff]
      %v2424 = vld [vmem:[#allocation3 + $0x30] sm:$0xff]
      %v2425 = vld [vmem:[#allocation3 + $0x38] sm:$0xff]
      %v2426 = vld [vmem:[#allocation3 + $0x40] sm:$0xff]
      %v2427 = vld [vmem:[#allocation3 + $0x48] sm:$0xff]
      %v2428 = vld [vmem:[#allocation3 + $0x50] sm:$0xff]
      %v2429 = vld [vmem:[#allocation3 + $0x58] sm:$0xff]
      %v2430 = vld [vmem:[#allocation3 + $0x60] sm:$0xff]
      %v2431 = vld [vmem:[#allocation3 + $0x68] sm:$0xff]
      %v2432 = vld [vmem:[#allocation3 + $0x70] sm:$0xff]
      %v2433 = vld [vmem:[#allocation3 + $0x78] sm:$0xff]
      %v2434 = vld [vmem:[#allocation3 + $0x80] sm:$0xff]
      %v2435 = vld [vmem:[#allocation3 + $0x88] sm:$0xff]
      %v2436 = vld [vmem:[#allocation3 + $0x90] sm:$0xff]
      %v2437 = vld [vmem:[#allocation3 + $0x98] sm:$0xff]
      %v2438 = vld [vmem:[#allocation3 + $0xa0] sm:$0xff]
      %v2439 = vld [vmem:[#allocation3 + $0xa8] sm:$0xff]
      %v2440 = vld [vmem:[#allocation3 + $0xb0] sm:$0xff]
      %v2441 = vld [vmem:[#allocation3 + $0xb8] sm:$0xff]
      %v2442 = vld [vmem:[#allocation3 + $0xc0] sm:$0xff]
      %v2443 = vld [vmem:[#allocation3 + $0xc8] sm:$0xff]
      %v2444 = vld [vmem:[#allocation3 + $0xd0] sm:$0xff]
      %v2445 = vld [vmem:[#allocation3 + $0xd8] sm:$0xff]
      %v2446 = vld [vmem:[#allocation3 + $0xe0] sm:$0xff]
      %v2447 = vld [vmem:[#allocation3 + $0xe8] sm:$0xff]
      %v2448 = vld [vmem:[#allocation3 + $0xf0] sm:$0xff]
      %v2449 = vld [vmem:[#allocation3 + $0xf8] sm:$0xff]
      %v2450 = vadd.f32 %v2418, %v2292
      %v2451 = vadd.f32 %v2419, %v2295
      %v2452 = vadd.f32 %v2420, %v2300
      %v2453 = vadd.f32 %v2421, %v2303
      %v2454 = vadd.f32 %v2422, %v2308
      %v2455 = vadd.f32 %v2423, %v2311
      %v2456 = vadd.f32 %v2424, %v2316
      %v2457 = vadd.f32 %v2425, %v2319
      %v2458 = vadd.f32 %v2426, %v2324
      %v2459 = vadd.f32 %v2427, %v2327
      %v2460 = vadd.f32 %v2428, %v2332
      %v2461 = vadd.f32 %v2429, %v2335
      %v2462 = vadd.f32 %v2430, %v2340
      %v2463 = vadd.f32 %v2431, %v2343
      %v2464 = vadd.f32 %v2432, %v2348
      %v2465 = vadd.f32 %v2433, %v2351
      %v2466 = vadd.f32 %v2434, %v2356
      %v2467 = vadd.f32 %v2435, %v2359
      %v2468 = vadd.f32 %v2436, %v2364
      %v2469 = vadd.f32 %v2437, %v2367
      %v2470 = vadd.f32 %v2438, %v2372
      %v2471 = vadd.f32 %v2439, %v2375
      %v2472 = vadd.f32 %v2440, %v2380
      %v2473 = vadd.f32 %v2441, %v2383
      %v2474 = vadd.f32 %v2442, %v2388
      %v2475 = vadd.f32 %v2443, %v2391
      %v2476 = vadd.f32 %v2444, %v2396
      %v2477 = vadd.f32 %v2445, %v2399
      %v2478 = vadd.f32 %v2446, %v2404
      %v2479 = vadd.f32 %v2447, %v2407
      %v2480 = vadd.f32 %v2448, %v2412
      %v2481 = vadd.f32 %v2449, %v2415
      %2482 = vst.msk [vmem:[#allocation3] sm:$0xff] %vm1625, %v2450
      %2483 = vst.msk [vmem:[#allocation3 + $0x8] sm:$0xff] %vm1625, %v2451
      %2484 = vst.msk [vmem:[#allocation3 + $0x10] sm:$0xff] %vm1625, %v2452
      %2485 = vst.msk [vmem:[#allocation3 + $0x18] sm:$0xff] %vm1625, %v2453
      %2486 = vst.msk [vmem:[#allocation3 + $0x20] sm:$0xff] %vm1625, %v2454
      %2487 = vst.msk [vmem:[#allocation3 + $0x28] sm:$0xff] %vm1625, %v2455
      %2488 = vst.msk [vmem:[#allocation3 + $0x30] sm:$0xff] %vm1625, %v2456
      %2489 = vst.msk [vmem:[#allocation3 + $0x38] sm:$0xff] %vm1625, %v2457
      %2490 = vst.msk [vmem:[#allocation3 + $0x40] sm:$0xff] %vm1625, %v2458
      %2491 = vst.msk [vmem:[#allocation3 + $0x48] sm:$0xff] %vm1625, %v2459
      %2492 = vst.msk [vmem:[#allocation3 + $0x50] sm:$0xff] %vm1625, %v2460
      %2493 = vst.msk [vmem:[#allocation3 + $0x58] sm:$0xff] %vm1625, %v2461
      %2494 = vst.msk [vmem:[#allocation3 + $0x60] sm:$0xff] %vm1625, %v2462
      %2495 = vst.msk [vmem:[#allocation3 + $0x68] sm:$0xff] %vm1625, %v2463
      %2496 = vst.msk [vmem:[#allocation3 + $0x70] sm:$0xff] %vm1625, %v2464
      %2497 = vst.msk [vmem:[#allocation3 + $0x78] sm:$0xff] %vm1625, %v2465
      %2498 = vst.msk [vmem:[#allocation3 + $0x80] sm:$0xff] %vm1625, %v2466
      %2499 = vst.msk [vmem:[#allocation3 + $0x88] sm:$0xff] %vm1625, %v2467
      %2500 = vst.msk [vmem:[#allocation3 + $0x90] sm:$0xff] %vm1625, %v2468
      %2501 = vst.msk [vmem:[#allocation3 + $0x98] sm:$0xff] %vm1625, %v2469
      %2502 = vst.msk [vmem:[#allocation3 + $0xa0] sm:$0xff] %vm1625, %v2470
      %2503 = vst.msk [vmem:[#allocation3 + $0xa8] sm:$0xff] %vm1625, %v2471
      %2504 = vst.msk [vmem:[#allocation3 + $0xb0] sm:$0xff] %vm1625, %v2472
      %2505 = vst.msk [vmem:[#allocation3 + $0xb8] sm:$0xff] %vm1625, %v2473
      %2506 = vst.msk [vmem:[#allocation3 + $0xc0] sm:$0xff] %vm1625, %v2474
      %2507 = vst.msk [vmem:[#allocation3 + $0xc8] sm:$0xff] %vm1625, %v2475
      %2508 = vst.msk [vmem:[#allocation3 + $0xd0] sm:$0xff] %vm1625, %v2476
      %2509 = vst.msk [vmem:[#allocation3 + $0xd8] sm:$0xff] %vm1625, %v2477
      %2510 = vst.msk [vmem:[#allocation3 + $0xe0] sm:$0xff] %vm1625, %v2478
      %2511 = vst.msk [vmem:[#allocation3 + $0xe8] sm:$0xff] %vm1625, %v2479
      %2512 = vst.msk [vmem:[#allocation3 + $0xf0] sm:$0xff] %vm1625, %v2480
      %2513 = vst.msk [vmem:[#allocation3 + $0xf8] sm:$0xff] %vm1625, %v2481
      %v2514 = vld [vmem:[#allocation3] sm:$0xff]
      %v2515 = vld [vmem:[#allocation3 + $0x8] sm:$0xff]
      %v2516 = vld [vmem:[#allocation3 + $0x10] sm:$0xff]
      %v2517 = vld [vmem:[#allocation3 + $0x18] sm:$0xff]
      %v2518 = vld [vmem:[#allocation3 + $0x20] sm:$0xff]
      %v2519 = vld [vmem:[#allocation3 + $0x28] sm:$0xff]
      %v2520 = vld [vmem:[#allocation3 + $0x30] sm:$0xff]
      %v2521 = vld [vmem:[#allocation3 + $0x38] sm:$0xff]
      %v2522 = vld [vmem:[#allocation3 + $0x40] sm:$0xff]
      %v2523 = vld [vmem:[#allocation3 + $0x48] sm:$0xff]
      %v2524 = vld [vmem:[#allocation3 + $0x50] sm:$0xff]
      %v2525 = vld [vmem:[#allocation3 + $0x58] sm:$0xff]
      %v2526 = vld [vmem:[#allocation3 + $0x60] sm:$0xff]
      %v2527 = vld [vmem:[#allocation3 + $0x68] sm:$0xff]
      %v2528 = vld [vmem:[#allocation3 + $0x70] sm:$0xff]
      %v2529 = vld [vmem:[#allocation3 + $0x78] sm:$0xff]
      %v2530 = vld [vmem:[#allocation3 + $0x80] sm:$0xff]
      %v2531 = vld [vmem:[#allocation3 + $0x88] sm:$0xff]
      %v2532 = vld [vmem:[#allocation3 + $0x90] sm:$0xff]
      %v2533 = vld [vmem:[#allocation3 + $0x98] sm:$0xff]
      %v2534 = vld [vmem:[#allocation3 + $0xa0] sm:$0xff]
      %v2535 = vld [vmem:[#allocation3 + $0xa8] sm:$0xff]
      %v2536 = vld [vmem:[#allocation3 + $0xb0] sm:$0xff]
      %v2537 = vld [vmem:[#allocation3 + $0xb8] sm:$0xff]
      %v2538 = vld [vmem:[#allocation3 + $0xc0] sm:$0xff]
      %v2539 = vld [vmem:[#allocation3 + $0xc8] sm:$0xff]
      %v2540 = vld [vmem:[#allocation3 + $0xd0] sm:$0xff]
      %v2541 = vld [vmem:[#allocation3 + $0xd8] sm:$0xff]
      %v2542 = vld [vmem:[#allocation3 + $0xe0] sm:$0xff]
      %v2543 = vld [vmem:[#allocation3 + $0xe8] sm:$0xff]
      %v2544 = vld [vmem:[#allocation3 + $0xf0] sm:$0xff]
      %v2545 = vld [vmem:[#allocation3 + $0xf8] sm:$0xff]
      %v2546 = vsel %vm1625, %v2514, 0.0
      %v2547 = vsel %vm1625, %v2516, 0.0
      %v2548 = vadd.f32 %v2546, %v2547
      %v2549 = vsel %vm1625, %v2518, 0.0
      %v2550 = vadd.f32 %v2548, %v2549
      %v2551 = vsel %vm1625, %v2520, 0.0
      %v2552 = vadd.f32 %v2550, %v2551
      %v2553 = vsel %vm1625, %v2522, 0.0
      %v2554 = vadd.f32 %v2552, %v2553
      %v2555 = vsel %vm1625, %v2524, 0.0
      %v2556 = vadd.f32 %v2554, %v2555
      %v2557 = vsel %vm1625, %v2526, 0.0
      %v2558 = vadd.f32 %v2556, %v2557
      %v2559 = vsel %vm1625, %v2528, 0.0
      %v2560 = vadd.f32 %v2558, %v2559
      %v2561 = vsel %vm1625, %v2530, 0.0
      %v2562 = vadd.f32 %v2560, %v2561
      %v2563 = vsel %vm1625, %v2532, 0.0
      %v2564 = vadd.f32 %v2562, %v2563
      %v2565 = vsel %vm1625, %v2534, 0.0
      %v2566 = vadd.f32 %v2564, %v2565
      %v2567 = vsel %vm1625, %v2536, 0.0
      %v2568 = vadd.f32 %v2566, %v2567
      %v2569 = vsel %vm1625, %v2538, 0.0
      %v2570 = vadd.f32 %v2568, %v2569
      %v2571 = vsel %vm1625, %v2540, 0.0
      %v2572 = vadd.f32 %v2570, %v2571
      %v2573 = vsel %vm1625, %v2542, 0.0
      %v2574 = vadd.f32 %v2572, %v2573
      %v2575 = vsel %vm1625, %v2544, 0.0
      %v2576 = vadd.f32 %v2574, %v2575
      %v2577 = vsel %vm1625, %v2515, 0.0
      %v2578 = vsel %vm1625, %v2517, 0.0
      %v2579 = vadd.f32 %v2577, %v2578
      %v2580 = vsel %vm1625, %v2519, 0.0
      %v2581 = vadd.f32 %v2579, %v2580
      %v2582 = vsel %vm1625, %v2521, 0.0
      %v2583 = vadd.f32 %v2581, %v2582
      %v2584 = vsel %vm1625, %v2523, 0.0
      %v2585 = vadd.f32 %v2583, %v2584
      %v2586 = vsel %vm1625, %v2525, 0.0
      %v2587 = vadd.f32 %v2585, %v2586
      %v2588 = vsel %vm1625, %v2527, 0.0
      %v2589 = vadd.f32 %v2587, %v2588
      %v2590 = vsel %vm1625, %v2529, 0.0
      %v2591 = vadd.f32 %v2589, %v2590
      %v2592 = vsel %vm1625, %v2531, 0.0
      %v2593 = vadd.f32 %v2591, %v2592
      %v2594 = vsel %vm1625, %v2533, 0.0
      %v2595 = vadd.f32 %v2593, %v2594
      %v2596 = vsel %vm1625, %v2535, 0.0
      %v2597 = vadd.f32 %v2595, %v2596
      %v2598 = vsel %vm1625, %v2537, 0.0
      %v2599 = vadd.f32 %v2597, %v2598
      %v2600 = vsel %vm1625, %v2539, 0.0
      %v2601 = vadd.f32 %v2599, %v2600
      %v2602 = vsel %vm1625, %v2541, 0.0
      %v2603 = vadd.f32 %v2601, %v2602
      %v2604 = vsel %vm1625, %v2543, 0.0
      %v2605 = vadd.f32 %v2603, %v2604
      %v2606 = vsel %vm1625, %v2545, 0.0
      %v2607 = vadd.f32 %v2605, %v2606
      %v2608 = vsel %vm1625, %v2576, 0.0
      %v2609 = vsel %vm1625, %v2607, 0.0
      %v2610 = vadd.f32 %v2608, %v2609
      %v2611 = vrot.slane %v2610, 4
      %v2612 = vadd.f32 %v2610, %v2611
      %v2613 = vrot.slane %v2612, 2
      %v2614 = vadd.f32 %v2612, %v2613
      %v2615 = vrot.slane %v2614, 1
      %v2616 = vadd.f32 %v2614, %v2615
      %v2617 = vmul.f32 %v2514, %v2514
      %v2618 = vmul.f32 %v2515, %v2515
      %v2619 = vmul.f32 %v2516, %v2516
      %v2620 = vmul.f32 %v2517, %v2517
      %v2621 = vmul.f32 %v2518, %v2518
      %v2622 = vmul.f32 %v2519, %v2519
      %v2623 = vmul.f32 %v2520, %v2520
      %v2624 = vmul.f32 %v2521, %v2521
      %v2625 = vmul.f32 %v2522, %v2522
      %v2626 = vmul.f32 %v2523, %v2523
      %v2627 = vmul.f32 %v2524, %v2524
      %v2628 = vmul.f32 %v2525, %v2525
      %v2629 = vmul.f32 %v2526, %v2526
      %v2630 = vmul.f32 %v2527, %v2527
      %v2631 = vmul.f32 %v2528, %v2528
      %v2632 = vmul.f32 %v2529, %v2529
      %v2633 = vmul.f32 %v2530, %v2530
      %v2634 = vmul.f32 %v2531, %v2531
      %v2635 = vmul.f32 %v2532, %v2532
      %v2636 = vmul.f32 %v2533, %v2533
      %v2637 = vmul.f32 %v2534, %v2534
      %v2638 = vmul.f32 %v2535, %v2535
      %v2639 = vmul.f32 %v2536, %v2536
      %v2640 = vmul.f32 %v2537, %v2537
      %v2641 = vmul.f32 %v2538, %v2538
      %v2642 = vmul.f32 %v2539, %v2539
      %v2643 = vmul.f32 %v2540, %v2540
      %v2644 = vmul.f32 %v2541, %v2541
      %v2645 = vmul.f32 %v2542, %v2542
      %v2646 = vmul.f32 %v2543, %v2543
      %v2647 = vmul.f32 %v2544, %v2544
      %v2648 = vmul.f32 %v2545, %v2545
      %v2649 = vsel %vm1625, %v2617, 0.0
      %v2650 = vsel %vm1625, %v2619, 0.0
      %v2651 = vadd.f32 %v2649, %v2650
      %v2652 = vsel %vm1625, %v2621, 0.0
      %v2653 = vadd.f32 %v2651, %v2652
      %v2654 = vsel %vm1625, %v2623, 0.0
      %v2655 = vadd.f32 %v2653, %v2654
      %v2656 = vsel %vm1625, %v2625, 0.0
      %v2657 = vadd.f32 %v2655, %v2656
      %v2658 = vsel %vm1625, %v2627, 0.0
      %v2659 = vadd.f32 %v2657, %v2658
      %v2660 = vsel %vm1625, %v2629, 0.0
      %v2661 = vadd.f32 %v2659, %v2660
      %v2662 = vsel %vm1625, %v2631, 0.0
      %v2663 = vadd.f32 %v2661, %v2662
      %v2664 = vsel %vm1625, %v2633, 0.0
      %v2665 = vadd.f32 %v2663, %v2664
      %v2666 = vsel %vm1625, %v2635, 0.0
      %v2667 = vadd.f32 %v2665, %v2666
      %v2668 = vsel %vm1625, %v2637, 0.0
      %v2669 = vadd.f32 %v2667, %v2668
      %v2670 = vsel %vm1625, %v2639, 0.0
      %v2671 = vadd.f32 %v2669, %v2670
      %v2672 = vsel %vm1625, %v2641, 0.0
      %v2673 = vadd.f32 %v2671, %v2672
      %v2674 = vsel %vm1625, %v2643, 0.0
      %v2675 = vadd.f32 %v2673, %v2674
      %v2676 = vsel %vm1625, %v2645, 0.0
      %v2677 = vadd.f32 %v2675, %v2676
      %v2678 = vsel %vm1625, %v2647, 0.0
      %v2679 = vadd.f32 %v2677, %v2678
      %v2680 = vsel %vm1625, %v2618, 0.0
      %v2681 = vsel %vm1625, %v2620, 0.0
      %v2682 = vadd.f32 %v2680, %v2681
      %v2683 = vsel %vm1625, %v2622, 0.0
      %v2684 = vadd.f32 %v2682, %v2683
      %v2685 = vsel %vm1625, %v2624, 0.0
      %v2686 = vadd.f32 %v2684, %v2685
      %v2687 = vsel %vm1625, %v2626, 0.0
      %v2688 = vadd.f32 %v2686, %v2687
      %v2689 = vsel %vm1625, %v2628, 0.0
      %v2690 = vadd.f32 %v2688, %v2689
      %v2691 = vsel %vm1625, %v2630, 0.0
      %v2692 = vadd.f32 %v2690, %v2691
      %v2693 = vsel %vm1625, %v2632, 0.0
      %v2694 = vadd.f32 %v2692, %v2693
      %v2695 = vsel %vm1625, %v2634, 0.0
      %v2696 = vadd.f32 %v2694, %v2695
      %v2697 = vsel %vm1625, %v2636, 0.0
      %v2698 = vadd.f32 %v2696, %v2697
      %v2699 = vsel %vm1625, %v2638, 0.0
      %v2700 = vadd.f32 %v2698, %v2699
      %v2701 = vsel %vm1625, %v2640, 0.0
      %v2702 = vadd.f32 %v2700, %v2701
      %v2703 = vsel %vm1625, %v2642, 0.0
      %v2704 = vadd.f32 %v2702, %v2703
      %v2705 = vsel %vm1625, %v2644, 0.0
      %v2706 = vadd.f32 %v2704, %v2705
      %v2707 = vsel %vm1625, %v2646, 0.0
      %v2708 = vadd.f32 %v2706, %v2707
      %v2709 = vsel %vm1625, %v2648, 0.0
      %v2710 = vadd.f32 %v2708, %v2709
      %v2711 = vsel %vm1625, %v2679, 0.0
      %v2712 = vsel %vm1625, %v2710, 0.0
      %v2713 = vadd.f32 %v2711, %v2712
      %v2714 = vrot.slane %v2713, 4
      %v2715 = vadd.f32 %v2713, %v2714
      %v2716 = vrot.slane %v2715, 2
      %v2717 = vadd.f32 %v2715, %v2716
      %v2718 = vrot.slane %v2717, 1
      %v2719 = vadd.f32 %v2717, %v2718
      %v2720 = vmul.f32 %v2616, 0.00390625
      %v2721 = vmul.f32 %v2719, 0.00390625
      %v2722 = vmul.f32 %v2720, %v2720
      %v2723 = vsub.f32 %v2721, %v2722
      %v2724 = vmax.f32 %v2723, 0.0
      %v2725 = vsub.f32 %v2514, %v2720
      %v2726 = vsub.f32 %v2515, %v2720
      %v2727 = vsub.f32 %v2516, %v2720
      %v2728 = vsub.f32 %v2517, %v2720
      %v2729 = vsub.f32 %v2518, %v2720
      %v2730 = vsub.f32 %v2519, %v2720
      %v2731 = vsub.f32 %v2520, %v2720
      %v2732 = vsub.f32 %v2521, %v2720
      %v2733 = vsub.f32 %v2522, %v2720
      %v2734 = vsub.f32 %v2523, %v2720
      %v2735 = vsub.f32 %v2524, %v2720
      %v2736 = vsub.f32 %v2525, %v2720
      %v2737 = vsub.f32 %v2526, %v2720
      %v2738 = vsub.f32 %v2527, %v2720
      %v2739 = vsub.f32 %v2528, %v2720
      %v2740 = vsub.f32 %v2529, %v2720
      %v2741 = vsub.f32 %v2530, %v2720
      %v2742 = vsub.f32 %v2531, %v2720
      %v2743 = vsub.f32 %v2532, %v2720
      %v2744 = vsub.f32 %v2533, %v2720
      %v2745 = vsub.f32 %v2534, %v2720
      %v2746 = vsub.f32 %v2535, %v2720
      %v2747 = vsub.f32 %v2536, %v2720
      %v2748 = vsub.f32 %v2537, %v2720
      %v2749 = vsub.f32 %v2538, %v2720
      %v2750 = vsub.f32 %v2539, %v2720
      %v2751 = vsub.f32 %v2540, %v2720
      %v2752 = vsub.f32 %v2541, %v2720
      %v2753 = vsub.f32 %v2542, %v2720
      %v2754 = vsub.f32 %v2543, %v2720
      %v2755 = vsub.f32 %v2544, %v2720
      %v2756 = vsub.f32 %v2545, %v2720
      %v2757 = vadd.f32 %v2724, 1e-05
      %v2758 = vrsqrt.pop %v2757
      %v2759 = vmul.f32 %v2725, %v2758
      %v2760 = vmul.f32 %v2726, %v2758
      %v2761 = vmul.f32 %v2727, %v2758
      %v2762 = vmul.f32 %v2728, %v2758
      %v2763 = vmul.f32 %v2729, %v2758
      %v2764 = vmul.f32 %v2730, %v2758
      %v2765 = vmul.f32 %v2731, %v2758
      %v2766 = vmul.f32 %v2732, %v2758
      %v2767 = vmul.f32 %v2733, %v2758
      %v2768 = vmul.f32 %v2734, %v2758
      %v2769 = vmul.f32 %v2735, %v2758
      %v2770 = vmul.f32 %v2736, %v2758
      %v2771 = vmul.f32 %v2737, %v2758
      %v2772 = vmul.f32 %v2738, %v2758
      %v2773 = vmul.f32 %v2739, %v2758
      %v2774 = vmul.f32 %v2740, %v2758
      %v2775 = vmul.f32 %v2741, %v2758
      %v2776 = vmul.f32 %v2742, %v2758
      %v2777 = vmul.f32 %v2743, %v2758
      %v2778 = vmul.f32 %v2744, %v2758
      %v2779 = vmul.f32 %v2745, %v2758
      %v2780 = vmul.f32 %v2746, %v2758
      %v2781 = vmul.f32 %v2747, %v2758
      %v2782 = vmul.f32 %v2748, %v2758
      %v2783 = vmul.f32 %v2749, %v2758
      %v2784 = vmul.f32 %v2750, %v2758
      %v2785 = vmul.f32 %v2751, %v2758
      %v2786 = vmul.f32 %v2752, %v2758
      %v2787 = vmul.f32 %v2753, %v2758
      %v2788 = vmul.f32 %v2754, %v2758
      %v2789 = vmul.f32 %v2755, %v2758
      %v2790 = vmul.f32 %v2756, %v2758
      %v2791 = vmax.f32 %v2759, 0.0
      %v2792 = vmax.f32 %v2760, 0.0
      %v2793 = vmax.f32 %v2761, 0.0
      %v2794 = vmax.f32 %v2762, 0.0
      %v2795 = vmax.f32 %v2763, 0.0
      %v2796 = vmax.f32 %v2764, 0.0
      %v2797 = vmax.f32 %v2765, 0.0
      %v2798 = vmax.f32 %v2766, 0.0
      %v2799 = vmax.f32 %v2767, 0.0
      %v2800 = vmax.f32 %v2768, 0.0
      %v2801 = vmax.f32 %v2769, 0.0
      %v2802 = vmax.f32 %v2770, 0.0
      %v2803 = vmax.f32 %v2771, 0.0
      %v2804 = vmax.f32 %v2772, 0.0
      %v2805 = vmax.f32 %v2773, 0.0
      %v2806 = vmax.f32 %v2774, 0.0
      %v2807 = vmax.f32 %v2775, 0.0
      %v2808 = vmax.f32 %v2776, 0.0
      %v2809 = vmax.f32 %v2777, 0.0
      %v2810 = vmax.f32 %v2778, 0.0
      %v2811 = vmax.f32 %v2779, 0.0
      %v2812 = vmax.f32 %v2780, 0.0
      %v2813 = vmax.f32 %v2781, 0.0
      %v2814 = vmax.f32 %v2782, 0.0
      %v2815 = vmax.f32 %v2783, 0.0
      %v2816 = vmax.f32 %v2784, 0.0
      %v2817 = vmax.f32 %v2785, 0.0
      %v2818 = vmax.f32 %v2786, 0.0
      %v2819 = vmax.f32 %v2787, 0.0
      %v2820 = vmax.f32 %v2788, 0.0
      %v2821 = vmax.f32 %v2789, 0.0
      %v2822 = vmax.f32 %v2790, 0.0
      %v2823 = vpack.c.bf16 %v2792, %v2791
      %v2824 = vpack.c.bf16 %v2794, %v2793
      %v2825 = vpack.c.bf16 %v2796, %v2795
      %v2826 = vpack.c.bf16 %v2798, %v2797
      %v2827 = vpack.c.bf16 %v2800, %v2799
      %v2828 = vpack.c.bf16 %v2802, %v2801
      %v2829 = vpack.c.bf16 %v2804, %v2803
      %v2830 = vpack.c.bf16 %v2806, %v2805
      %v2831 = vpack.c.bf16 %v2808, %v2807
      %v2832 = vpack.c.bf16 %v2810, %v2809
      %v2833 = vpack.c.bf16 %v2812, %v2811
      %v2834 = vpack.c.bf16 %v2814, %v2813
      %v2835 = vpack.c.bf16 %v2816, %v2815
      %v2836 = vpack.c.bf16 %v2818, %v2817
      %v2837 = vpack.c.bf16 %v2820, %v2819
      %v2838 = vpack.c.bf16 %v2822, %v2821
      %v2855 = vunpack.c.l.b16 %v2823
      %v2856 = vunpack.c.l.b16 %v2824
      %v2857 = vunpack.c.l.b16 %v2825
      %v2858 = vunpack.c.l.b16 %v2826
      %v2859 = vunpack.c.l.b16 %v2827
      %v2860 = vunpack.c.l.b16 %v2828
      %v2861 = vunpack.c.l.b16 %v2829
      %v2862 = vunpack.c.l.b16 %v2830
      %v2863 = vunpack.c.l.b16 %v2831
      %v2864 = vunpack.c.l.b16 %v2832
      %v2865 = vunpack.c.l.b16 %v2833
      %v2866 = vunpack.c.l.b16 %v2834
      %v2867 = vunpack.c.l.b16 %v2835
      %v2868 = vunpack.c.l.b16 %v2836
      %v2869 = vunpack.c.l.b16 %v2837
      %v2870 = vunpack.c.l.b16 %v2838
      %v2871 = vpack.c.b16 %v2855, %v2855
      %v2872 = vpack.c.b16 %v2856, %v2856
      %v2873 = vpack.c.b16 %v2857, %v2857
      %v2874 = vpack.c.b16 %v2858, %v2858
      %v2875 = vpack.c.b16 %v2859, %v2859
      %v2876 = vpack.c.b16 %v2860, %v2860
      %v2877 = vpack.c.b16 %v2861, %v2861
      %v2878 = vpack.c.b16 %v2862, %v2862
      %v2879 = vpack.c.b16 %v2863, %v2863
      %v2880 = vpack.c.b16 %v2864, %v2864
      %v2881 = vpack.c.b16 %v2865, %v2865
      %v2882 = vpack.c.b16 %v2866, %v2866
      %v2883 = vpack.c.b16 %v2867, %v2867
      %v2884 = vpack.c.b16 %v2868, %v2868
      %v2885 = vpack.c.b16 %v2869, %v2869
      %v2886 = vpack.c.b16 %v2870, %v2870
      %v2888 = vshrl.u32 %v2871, 16
      %v2890 = vrot.slane %v2888, 4
      %v2891 = vrot.slane %v2890, 4
      %v2893 = vshrl.u32 %v2872, 16
      %v2895 = vrot.slane %v2893, 4
      %v2896 = vrot.slane %v2895, 4
      %v2898 = vshrl.u32 %v2873, 16
      %v2900 = vrot.slane %v2898, 4
      %v2901 = vrot.slane %v2900, 4
      %v2903 = vshrl.u32 %v2874, 16
      %v2905 = vrot.slane %v2903, 4
      %v2906 = vrot.slane %v2905, 4
      %v2908 = vshrl.u32 %v2875, 16
      %v2910 = vrot.slane %v2908, 4
      %v2911 = vrot.slane %v2910, 4
      %v2913 = vshrl.u32 %v2876, 16
      %v2915 = vrot.slane %v2913, 4
      %v2916 = vrot.slane %v2915, 4
      %v2918 = vshrl.u32 %v2877, 16
      %v2920 = vrot.slane %v2918, 4
      %v2921 = vrot.slane %v2920, 4
      %v2923 = vshrl.u32 %v2878, 16
      %v2925 = vrot.slane %v2923, 4
      %v2926 = vrot.slane %v2925, 4
      %v2928 = vshrl.u32 %v2879, 16
      %v2930 = vrot.slane %v2928, 4
      %v2931 = vrot.slane %v2930, 4
      %v2933 = vshrl.u32 %v2880, 16
      %v2935 = vrot.slane %v2933, 4
      %v2936 = vrot.slane %v2935, 4
      %v2938 = vshrl.u32 %v2881, 16
      %v2940 = vrot.slane %v2938, 4
      %v2941 = vrot.slane %v2940, 4
      %v2943 = vshrl.u32 %v2882, 16
      %v2945 = vrot.slane %v2943, 4
      %v2946 = vrot.slane %v2945, 4
      %v2948 = vshrl.u32 %v2883, 16
      %v2950 = vrot.slane %v2948, 4
      %v2951 = vrot.slane %v2950, 4
      %v2953 = vshrl.u32 %v2884, 16
      %v2955 = vrot.slane %v2953, 4
      %v2956 = vrot.slane %v2955, 4
      %v2958 = vshrl.u32 %v2885, 16
      %v2960 = vrot.slane %v2958, 4
      %v2961 = vrot.slane %v2960, 4
      %v2963 = vshrl.u32 %v2886, 16
      %v2965 = vrot.slane %v2963, 4
      %v2966 = vrot.slane %v2965, 4
      %v2983 = vld [vmem:[%s364] sm:$0x1]
      %v2984 = vsel %vm367, %v2891, %v2983
      %2985 = vst [vmem:[%s364] sm:$0x1] %v2984
      %v2986 = vld [vmem:[%s364 + $0x8] sm:$0x1]
      %v2987 = vsel %vm367, %v2896, %v2986
      %2988 = vst [vmem:[%s364 + $0x8] sm:$0x1] %v2987
      %v2989 = vld [vmem:[%s364 + $0x10] sm:$0x1]
      %v2990 = vsel %vm367, %v2901, %v2989
      %2991 = vst [vmem:[%s364 + $0x10] sm:$0x1] %v2990
      %v2992 = vld [vmem:[%s364 + $0x18] sm:$0x1]
      %v2993 = vsel %vm367, %v2906, %v2992
      %2994 = vst [vmem:[%s364 + $0x18] sm:$0x1] %v2993
      %v2995 = vld [vmem:[%s364 + $0x20] sm:$0x1]
      %v2996 = vsel %vm367, %v2911, %v2995
      %2997 = vst [vmem:[%s364 + $0x20] sm:$0x1] %v2996
      %v2998 = vld [vmem:[%s364 + $0x28] sm:$0x1]
      %v2999 = vsel %vm367, %v2916, %v2998
      %3000 = vst [vmem:[%s364 + $0x28] sm:$0x1] %v2999
      %v3001 = vld [vmem:[%s364 + $0x30] sm:$0x1]
      %v3002 = vsel %vm367, %v2921, %v3001
      %3003 = vst [vmem:[%s364 + $0x30] sm:$0x1] %v3002
      %v3004 = vld [vmem:[%s364 + $0x38] sm:$0x1]
      %v3005 = vsel %vm367, %v2926, %v3004
      %3006 = vst [vmem:[%s364 + $0x38] sm:$0x1] %v3005
      %v3007 = vld [vmem:[%s364 + $0x40] sm:$0x1]
      %v3008 = vsel %vm367, %v2931, %v3007
      %3009 = vst [vmem:[%s364 + $0x40] sm:$0x1] %v3008
      %v3010 = vld [vmem:[%s364 + $0x48] sm:$0x1]
      %v3011 = vsel %vm367, %v2936, %v3010
      %3012 = vst [vmem:[%s364 + $0x48] sm:$0x1] %v3011
      %v3013 = vld [vmem:[%s364 + $0x50] sm:$0x1]
      %v3014 = vsel %vm367, %v2941, %v3013
      %3015 = vst [vmem:[%s364 + $0x50] sm:$0x1] %v3014
      %v3016 = vld [vmem:[%s364 + $0x58] sm:$0x1]
      %v3017 = vsel %vm367, %v2946, %v3016
      %3018 = vst [vmem:[%s364 + $0x58] sm:$0x1] %v3017
      %v3019 = vld [vmem:[%s364 + $0x60] sm:$0x1]
      %v3020 = vsel %vm367, %v2951, %v3019
      %3021 = vst [vmem:[%s364 + $0x60] sm:$0x1] %v3020
      %v3022 = vld [vmem:[%s364 + $0x68] sm:$0x1]
      %v3023 = vsel %vm367, %v2956, %v3022
      %3024 = vst [vmem:[%s364 + $0x68] sm:$0x1] %v3023
      %v3025 = vld [vmem:[%s364 + $0x70] sm:$0x1]
      %v3026 = vsel %vm367, %v2961, %v3025
      %3027 = vst [vmem:[%s364 + $0x70] sm:$0x1] %v3026
      %v3028 = vld [vmem:[%s364 + $0x78] sm:$0x1]
      %v3029 = vsel %vm367, %v2966, %v3028
      %3030 = vst [vmem:[%s364 + $0x78] sm:$0x1] %v3029
      %v3031 = vunpack.c.h.b16 %v2823
      %v3032 = vunpack.c.h.b16 %v2824
      %v3033 = vunpack.c.h.b16 %v2825
      %v3034 = vunpack.c.h.b16 %v2826
      %v3035 = vunpack.c.h.b16 %v2827
      %v3036 = vunpack.c.h.b16 %v2828
      %v3037 = vunpack.c.h.b16 %v2829
      %v3038 = vunpack.c.h.b16 %v2830
      %v3039 = vunpack.c.h.b16 %v2831
      %v3040 = vunpack.c.h.b16 %v2832
      %v3041 = vunpack.c.h.b16 %v2833
      %v3042 = vunpack.c.h.b16 %v2834
      %v3043 = vunpack.c.h.b16 %v2835
      %v3044 = vunpack.c.h.b16 %v2836
      %v3045 = vunpack.c.h.b16 %v2837
      %v3046 = vunpack.c.h.b16 %v2838
      %v3047 = vpack.c.b16 %v3031, %v3031
      %v3048 = vpack.c.b16 %v3032, %v3032
      %v3049 = vpack.c.b16 %v3033, %v3033
      %v3050 = vpack.c.b16 %v3034, %v3034
      %v3051 = vpack.c.b16 %v3035, %v3035
      %v3052 = vpack.c.b16 %v3036, %v3036
      %v3053 = vpack.c.b16 %v3037, %v3037
      %v3054 = vpack.c.b16 %v3038, %v3038
      %v3055 = vpack.c.b16 %v3039, %v3039
      %v3056 = vpack.c.b16 %v3040, %v3040
      %v3057 = vpack.c.b16 %v3041, %v3041
      %v3058 = vpack.c.b16 %v3042, %v3042
      %v3059 = vpack.c.b16 %v3043, %v3043
      %v3060 = vpack.c.b16 %v3044, %v3044
      %v3061 = vpack.c.b16 %v3045, %v3045
      %v3062 = vpack.c.b16 %v3046, %v3046
      %v3063 = vrot.slane %v2888, 7
      %v3064 = vshll.u32 %v2871, 16
      %v3066 = vor.u32 %v3063, %v3064
      %v3067 = vrot.slane %v3063, 4
      %v3069 = vshrl.u32 %v3047, 16
      %v3071 = vrot.slane %v3069, 7
      %v3072 = vshll.u32 %v3047, 16
      %v3074 = vor.u32 %v3071, %v3072
      %v3075 = vsel %vm449, %v3067, %v3074
      %v3076 = vrot.slane %v2893, 7
      %v3077 = vshll.u32 %v2872, 16
      %v3079 = vor.u32 %v3076, %v3077
      %v3080 = vrot.slane %v3076, 4
      %v3082 = vshrl.u32 %v3048, 16
      %v3084 = vrot.slane %v3082, 7
      %v3085 = vshll.u32 %v3048, 16
      %v3087 = vor.u32 %v3084, %v3085
      %v3088 = vsel %vm449, %v3080, %v3087
      %v3089 = vrot.slane %v2898, 7
      %v3090 = vshll.u32 %v2873, 16
      %v3092 = vor.u32 %v3089, %v3090
      %v3093 = vrot.slane %v3089, 4
      %v3095 = vshrl.u32 %v3049, 16
      %v3097 = vrot.slane %v3095, 7
      %v3098 = vshll.u32 %v3049, 16
      %v3100 = vor.u32 %v3097, %v3098
      %v3101 = vsel %vm449, %v3093, %v3100
      %v3102 = vrot.slane %v2903, 7
      %v3103 = vshll.u32 %v2874, 16
      %v3105 = vor.u32 %v3102, %v3103
      %v3106 = vrot.slane %v3102, 4
      %v3108 = vshrl.u32 %v3050, 16
      %v3110 = vrot.slane %v3108, 7
      %v3111 = vshll.u32 %v3050, 16
      %v3113 = vor.u32 %v3110, %v3111
      %v3114 = vsel %vm449, %v3106, %v3113
      %v3115 = vrot.slane %v2908, 7
      %v3116 = vshll.u32 %v2875, 16
      %v3118 = vor.u32 %v3115, %v3116
      %v3119 = vrot.slane %v3115, 4
      %v3121 = vshrl.u32 %v3051, 16
      %v3123 = vrot.slane %v3121, 7
      %v3124 = vshll.u32 %v3051, 16
      %v3126 = vor.u32 %v3123, %v3124
      %v3127 = vsel %vm449, %v3119, %v3126
      %v3128 = vrot.slane %v2913, 7
      %v3129 = vshll.u32 %v2876, 16
      %v3131 = vor.u32 %v3128, %v3129
      %v3132 = vrot.slane %v3128, 4
      %v3134 = vshrl.u32 %v3052, 16
      %v3136 = vrot.slane %v3134, 7
      %v3137 = vshll.u32 %v3052, 16
      %v3139 = vor.u32 %v3136, %v3137
      %v3140 = vsel %vm449, %v3132, %v3139
      %v3141 = vrot.slane %v2918, 7
      %v3142 = vshll.u32 %v2877, 16
      %v3144 = vor.u32 %v3141, %v3142
      %v3145 = vrot.slane %v3141, 4
      %v3147 = vshrl.u32 %v3053, 16
      %v3149 = vrot.slane %v3147, 7
      %v3150 = vshll.u32 %v3053, 16
      %v3152 = vor.u32 %v3149, %v3150
      %v3153 = vsel %vm449, %v3145, %v3152
      %v3154 = vrot.slane %v2923, 7
      %v3155 = vshll.u32 %v2878, 16
      %v3157 = vor.u32 %v3154, %v3155
      %v3158 = vrot.slane %v3154, 4
      %v3160 = vshrl.u32 %v3054, 16
      %v3162 = vrot.slane %v3160, 7
      %v3163 = vshll.u32 %v3054, 16
      %v3165 = vor.u32 %v3162, %v3163
      %v3166 = vsel %vm449, %v3158, %v3165
      %v3167 = vrot.slane %v2928, 7
      %v3168 = vshll.u32 %v2879, 16
      %v3170 = vor.u32 %v3167, %v3168
      %v3171 = vrot.slane %v3167, 4
      %v3173 = vshrl.u32 %v3055, 16
      %v3175 = vrot.slane %v3173, 7
      %v3176 = vshll.u32 %v3055, 16
      %v3178 = vor.u32 %v3175, %v3176
      %v3179 = vsel %vm449, %v3171, %v3178
      %v3180 = vrot.slane %v2933, 7
      %v3181 = vshll.u32 %v2880, 16
      %v3183 = vor.u32 %v3180, %v3181
      %v3184 = vrot.slane %v3180, 4
      %v3186 = vshrl.u32 %v3056, 16
      %v3188 = vrot.slane %v3186, 7
      %v3189 = vshll.u32 %v3056, 16
      %v3191 = vor.u32 %v3188, %v3189
      %v3192 = vsel %vm449, %v3184, %v3191
      %v3193 = vrot.slane %v2938, 7
      %v3194 = vshll.u32 %v2881, 16
      %v3196 = vor.u32 %v3193, %v3194
      %v3197 = vrot.slane %v3193, 4
      %v3199 = vshrl.u32 %v3057, 16
      %v3201 = vrot.slane %v3199, 7
      %v3202 = vshll.u32 %v3057, 16
      %v3204 = vor.u32 %v3201, %v3202
      %v3205 = vsel %vm449, %v3197, %v3204
      %v3206 = vrot.slane %v2943, 7
      %v3207 = vshll.u32 %v2882, 16
      %v3209 = vor.u32 %v3206, %v3207
      %v3210 = vrot.slane %v3206, 4
      %v3212 = vshrl.u32 %v3058, 16
      %v3214 = vrot.slane %v3212, 7
      %v3215 = vshll.u32 %v3058, 16
      %v3217 = vor.u32 %v3214, %v3215
      %v3218 = vsel %vm449, %v3210, %v3217
      %v3219 = vrot.slane %v2948, 7
      %v3220 = vshll.u32 %v2883, 16
      %v3222 = vor.u32 %v3219, %v3220
      %v3223 = vrot.slane %v3219, 4
      %v3225 = vshrl.u32 %v3059, 16
      %v3227 = vrot.slane %v3225, 7
      %v3228 = vshll.u32 %v3059, 16
      %v3230 = vor.u32 %v3227, %v3228
      %v3231 = vsel %vm449, %v3223, %v3230
      %v3232 = vrot.slane %v2953, 7
      %v3233 = vshll.u32 %v2884, 16
      %v3235 = vor.u32 %v3232, %v3233
      %v3236 = vrot.slane %v3232, 4
      %v3238 = vshrl.u32 %v3060, 16
      %v3240 = vrot.slane %v3238, 7
      %v3241 = vshll.u32 %v3060, 16
      %v3243 = vor.u32 %v3240, %v3241
      %v3244 = vsel %vm449, %v3236, %v3243
      %v3245 = vrot.slane %v2958, 7
      %v3246 = vshll.u32 %v2885, 16
      %v3248 = vor.u32 %v3245, %v3246
      %v3249 = vrot.slane %v3245, 4
      %v3251 = vshrl.u32 %v3061, 16
      %v3253 = vrot.slane %v3251, 7
      %v3254 = vshll.u32 %v3061, 16
      %v3256 = vor.u32 %v3253, %v3254
      %v3257 = vsel %vm449, %v3249, %v3256
      %v3258 = vrot.slane %v2963, 7
      %v3259 = vshll.u32 %v2886, 16
      %v3261 = vor.u32 %v3258, %v3259
      %v3262 = vrot.slane %v3258, 4
      %v3264 = vshrl.u32 %v3062, 16
      %v3266 = vrot.slane %v3264, 7
      %v3267 = vshll.u32 %v3062, 16
      %v3269 = vor.u32 %v3266, %v3267
      %v3270 = vsel %vm449, %v3262, %v3269
      %v3303 = vld [vmem:[%s364] sm:$0xf]
      %v3304 = vsel %vm692, %v3066, %v3303
      %3305 = vst [vmem:[%s364] sm:$0xf] %v3304
      %3306 = vst.msk [vmem:[%s364 + $0x4] sm:$0xf] %vm696, %v3075
      %v3307 = vld [vmem:[%s364 + $0x8] sm:$0xf]
      %v3308 = vsel %vm692, %v3079, %v3307
      %3309 = vst [vmem:[%s364 + $0x8] sm:$0xf] %v3308
      %3310 = vst.msk [vmem:[%s364 + $0xc] sm:$0xf] %vm696, %v3088
      %v3311 = vld [vmem:[%s364 + $0x10] sm:$0xf]
      %v3312 = vsel %vm692, %v3092, %v3311
      %3313 = vst [vmem:[%s364 + $0x10] sm:$0xf] %v3312
      %3314 = vst.msk [vmem:[%s364 + $0x14] sm:$0xf] %vm696, %v3101
      %v3315 = vld [vmem:[%s364 + $0x18] sm:$0xf]
      %v3316 = vsel %vm692, %v3105, %v3315
      %3317 = vst [vmem:[%s364 + $0x18] sm:$0xf] %v3316
      %3318 = vst.msk [vmem:[%s364 + $0x1c] sm:$0xf] %vm696, %v3114
      %v3319 = vld [vmem:[%s364 + $0x20] sm:$0xf]
      %v3320 = vsel %vm692, %v3118, %v3319
      %3321 = vst [vmem:[%s364 + $0x20] sm:$0xf] %v3320
      %3322 = vst.msk [vmem:[%s364 + $0x24] sm:$0xf] %vm696, %v3127
      %v3323 = vld [vmem:[%s364 + $0x28] sm:$0xf]
      %v3324 = vsel %vm692, %v3131, %v3323
      %3325 = vst [vmem:[%s364 + $0x28] sm:$0xf] %v3324
      %3326 = vst.msk [vmem:[%s364 + $0x2c] sm:$0xf] %vm696, %v3140
      %v3327 = vld [vmem:[%s364 + $0x30] sm:$0xf]
      %v3328 = vsel %vm692, %v3144, %v3327
      %3329 = vst [vmem:[%s364 + $0x30] sm:$0xf] %v3328
      %3330 = vst.msk [vmem:[%s364 + $0x34] sm:$0xf] %vm696, %v3153
      %v3331 = vld [vmem:[%s364 + $0x38] sm:$0xf]
      %v3332 = vsel %vm692, %v3157, %v3331
      %3333 = vst [vmem:[%s364 + $0x38] sm:$0xf] %v3332
      %3334 = vst.msk [vmem:[%s364 + $0x3c] sm:$0xf] %vm696, %v3166
      %v3335 = vld [vmem:[%s364 + $0x40] sm:$0xf]
      %v3336 = vsel %vm692, %v3170, %v3335
      %3337 = vst [vmem:[%s364 + $0x40] sm:$0xf] %v3336
      %3338 = vst.msk [vmem:[%s364 + $0x44] sm:$0xf] %vm696, %v3179
      %v3339 = vld [vmem:[%s364 + $0x48] sm:$0xf]
      %v3340 = vsel %vm692, %v3183, %v3339
      %3341 = vst [vmem:[%s364 + $0x48] sm:$0xf] %v3340
      %3342 = vst.msk [vmem:[%s364 + $0x4c] sm:$0xf] %vm696, %v3192
      %v3343 = vld [vmem:[%s364 + $0x50] sm:$0xf]
      %v3344 = vsel %vm692, %v3196, %v3343
      %3345 = vst [vmem:[%s364 + $0x50] sm:$0xf] %v3344
      %3346 = vst.msk [vmem:[%s364 + $0x54] sm:$0xf] %vm696, %v3205
      %v3347 = vld [vmem:[%s364 + $0x58] sm:$0xf]
      %v3348 = vsel %vm692, %v3209, %v3347
      %3349 = vst [vmem:[%s364 + $0x58] sm:$0xf] %v3348
      %3350 = vst.msk [vmem:[%s364 + $0x5c] sm:$0xf] %vm696, %v3218
      %v3351 = vld [vmem:[%s364 + $0x60] sm:$0xf]
      %v3352 = vsel %vm692, %v3222, %v3351
      %3353 = vst [vmem:[%s364 + $0x60] sm:$0xf] %v3352
      %3354 = vst.msk [vmem:[%s364 + $0x64] sm:$0xf] %vm696, %v3231
      %v3355 = vld [vmem:[%s364 + $0x68] sm:$0xf]
      %v3356 = vsel %vm692, %v3235, %v3355
      %3357 = vst [vmem:[%s364 + $0x68] sm:$0xf] %v3356
      %3358 = vst.msk [vmem:[%s364 + $0x6c] sm:$0xf] %vm696, %v3244
      %v3359 = vld [vmem:[%s364 + $0x70] sm:$0xf]
      %v3360 = vsel %vm692, %v3248, %v3359
      %3361 = vst [vmem:[%s364 + $0x70] sm:$0xf] %v3360
      %3362 = vst.msk [vmem:[%s364 + $0x74] sm:$0xf] %vm696, %v3257
      %v3363 = vld [vmem:[%s364 + $0x78] sm:$0xf]
      %v3364 = vsel %vm692, %v3261, %v3363
      %3365 = vst [vmem:[%s364 + $0x78] sm:$0xf] %v3364
      %3366 = vst.msk [vmem:[%s364 + $0x7c] sm:$0xf] %vm696, %v3270
      %3367 = vrot.lane.b32.xlu0 %v2871, 4
      %v3368 = vpop.permute.xlu0 %3367
      %3369 = vrot.lane.b32.xlu0 %v3047, 4
      %v3370 = vpop.permute.xlu0 %3369
      %3371 = vrot.lane.b32.xlu0 %v2872, 4
      %v3372 = vpop.permute.xlu0 %3371
      %3373 = vrot.lane.b32.xlu0 %v3048, 4
      %v3374 = vpop.permute.xlu0 %3373
      %3375 = vrot.lane.b32.xlu0 %v2873, 4
      %v3376 = vpop.permute.xlu0 %3375
      %3377 = vrot.lane.b32.xlu0 %v3049, 4
      %v3378 = vpop.permute.xlu0 %3377
      %3379 = vrot.lane.b32.xlu0 %v2874, 4
      %v3380 = vpop.permute.xlu0 %3379
      %3381 = vrot.lane.b32.xlu0 %v3050, 4
      %v3382 = vpop.permute.xlu0 %3381
      %3383 = vrot.lane.b32.xlu0 %v2875, 4
      %v3384 = vpop.permute.xlu0 %3383
      %3385 = vrot.lane.b32.xlu0 %v3051, 4
      %v3386 = vpop.permute.xlu0 %3385
      %3387 = vrot.lane.b32.xlu0 %v2876, 4
      %v3388 = vpop.permute.xlu0 %3387
      %3389 = vrot.lane.b32.xlu0 %v3052, 4
      %v3390 = vpop.permute.xlu0 %3389
      %3391 = vrot.lane.b32.xlu0 %v2877, 4
      %v3392 = vpop.permute.xlu0 %3391
      %3393 = vrot.lane.b32.xlu0 %v3053, 4
      %v3394 = vpop.permute.xlu0 %3393
      %3395 = vrot.lane.b32.xlu0 %v2878, 4
      %v3396 = vpop.permute.xlu0 %3395
      %3397 = vrot.lane.b32.xlu0 %v3054, 4
      %v3398 = vpop.permute.xlu0 %3397
      %3399 = vrot.lane.b32.xlu0 %v2879, 4
      %v3400 = vpop.permute.xlu0 %3399
      %3401 = vrot.lane.b32.xlu0 %v3055, 4
      %v3402 = vpop.permute.xlu0 %3401
      %3403 = vrot.lane.b32.xlu0 %v2880, 4
      %v3404 = vpop.permute.xlu0 %3403
      %3405 = vrot.lane.b32.xlu0 %v3056, 4
      %v3406 = vpop.permute.xlu0 %3405
      %3407 = vrot.lane.b32.xlu0 %v2881, 4
      %v3408 = vpop.permute.xlu0 %3407
      %3409 = vrot.lane.b32.xlu0 %v3057, 4
      %v3410 = vpop.permute.xlu0 %3409
      %3411 = vrot.lane.b32.xlu0 %v2882, 4
      %v3412 = vpop.permute.xlu0 %3411
      %3413 = vrot.lane.b32.xlu0 %v3058, 4
      %v3414 = vpop.permute.xlu0 %3413
      %3415 = vrot.lane.b32.xlu0 %v2883, 4
      %v3416 = vpop.permute.xlu0 %3415
      %3417 = vrot.lane.b32.xlu0 %v3059, 4
      %v3418 = vpop.permute.xlu0 %3417
      %3419 = vrot.lane.b32.xlu0 %v2884, 4
      %v3420 = vpop.permute.xlu0 %3419
      %3421 = vrot.lane.b32.xlu0 %v3060, 4
      %v3422 = vpop.permute.xlu0 %3421
      %3423 = vrot.lane.b32.xlu0 %v2885, 4
      %v3424 = vpop.permute.xlu0 %3423
      %3425 = vrot.lane.b32.xlu0 %v3061, 4
      %v3426 = vpop.permute.xlu0 %3425
      %3427 = vrot.lane.b32.xlu0 %v2886, 4
      %v3428 = vpop.permute.xlu0 %3427
      %3429 = vrot.lane.b32.xlu0 %v3062, 4
      %v3430 = vpop.permute.xlu0 %3429
      %3463 = vst.msk [vmem:[%s364] sm:$0xf] %vm854, %v3368
      %3464 = vst.msk [vmem:[%s364 + $0x4] sm:$0xf] %vm854, %v3370
      %3465 = vst.msk [vmem:[%s364 + $0x8] sm:$0xf] %vm854, %v3372
      %3466 = vst.msk [vmem:[%s364 + $0xc] sm:$0xf] %vm854, %v3374
      %3467 = vst.msk [vmem:[%s364 + $0x10] sm:$0xf] %vm854, %v3376
      %3468 = vst.msk [vmem:[%s364 + $0x14] sm:$0xf] %vm854, %v3378
      %3469 = vst.msk [vmem:[%s364 + $0x18] sm:$0xf] %vm854, %v3380
      %3470 = vst.msk [vmem:[%s364 + $0x1c] sm:$0xf] %vm854, %v3382
      %3471 = vst.msk [vmem:[%s364 + $0x20] sm:$0xf] %vm854, %v3384
      %3472 = vst.msk [vmem:[%s364 + $0x24] sm:$0xf] %vm854, %v3386
      %3473 = vst.msk [vmem:[%s364 + $0x28] sm:$0xf] %vm854, %v3388
      %3474 = vst.msk [vmem:[%s364 + $0x2c] sm:$0xf] %vm854, %v3390
      %3475 = vst.msk [vmem:[%s364 + $0x30] sm:$0xf] %vm854, %v3392
      %3476 = vst.msk [vmem:[%s364 + $0x34] sm:$0xf] %vm854, %v3394
      %3477 = vst.msk [vmem:[%s364 + $0x38] sm:$0xf] %vm854, %v3396
      %3478 = vst.msk [vmem:[%s364 + $0x3c] sm:$0xf] %vm854, %v3398
      %3479 = vst.msk [vmem:[%s364 + $0x40] sm:$0xf] %vm854, %v3400
      %3480 = vst.msk [vmem:[%s364 + $0x44] sm:$0xf] %vm854, %v3402
      %3481 = vst.msk [vmem:[%s364 + $0x48] sm:$0xf] %vm854, %v3404
      %3482 = vst.msk [vmem:[%s364 + $0x4c] sm:$0xf] %vm854, %v3406
      %3483 = vst.msk [vmem:[%s364 + $0x50] sm:$0xf] %vm854, %v3408
      %3484 = vst.msk [vmem:[%s364 + $0x54] sm:$0xf] %vm854, %v3410
      %3485 = vst.msk [vmem:[%s364 + $0x58] sm:$0xf] %vm854, %v3412
      %3486 = vst.msk [vmem:[%s364 + $0x5c] sm:$0xf] %vm854, %v3414
      %3487 = vst.msk [vmem:[%s364 + $0x60] sm:$0xf] %vm854, %v3416
      %3488 = vst.msk [vmem:[%s364 + $0x64] sm:$0xf] %vm854, %v3418
      %3489 = vst.msk [vmem:[%s364 + $0x68] sm:$0xf] %vm854, %v3420
      %3490 = vst.msk [vmem:[%s364 + $0x6c] sm:$0xf] %vm854, %v3422
      %3491 = vst.msk [vmem:[%s364 + $0x70] sm:$0xf] %vm854, %v3424
      %3492 = vst.msk [vmem:[%s364 + $0x74] sm:$0xf] %vm854, %v3426
      %3493 = vst.msk [vmem:[%s364 + $0x78] sm:$0xf] %vm854, %v3428
      %3494 = vst.msk [vmem:[%s364 + $0x7c] sm:$0xf] %vm854, %v3430
      %v3495 = vrot.slane %v3064, 5
      %v3496 = vor.u32 %v2890, %v3495
      %v3497 = vrot.slane %v3496, 4
      %v3498 = vrot.slane %v3072, 5
      %v3499 = vsel %vm889, %v3497, %v3498
      %v3500 = vrot.slane %v3069, 4
      %v3501 = vor.u32 %v3500, %v3498
      %v3502 = vrot.slane %v3501, 4
      %v3503 = vrot.slane %v3077, 5
      %v3504 = vor.u32 %v2895, %v3503
      %v3505 = vrot.slane %v3504, 4
      %v3506 = vrot.slane %v3085, 5
      %v3507 = vsel %vm889, %v3505, %v3506
      %v3508 = vrot.slane %v3082, 4
      %v3509 = vor.u32 %v3508, %v3506
      %v3510 = vrot.slane %v3509, 4
      %v3511 = vrot.slane %v3090, 5
      %v3512 = vor.u32 %v2900, %v3511
      %v3513 = vrot.slane %v3512, 4
      %v3514 = vrot.slane %v3098, 5
      %v3515 = vsel %vm889, %v3513, %v3514
      %v3516 = vrot.slane %v3095, 4
      %v3517 = vor.u32 %v3516, %v3514
      %v3518 = vrot.slane %v3517, 4
      %v3519 = vrot.slane %v3103, 5
      %v3520 = vor.u32 %v2905, %v3519
      %v3521 = vrot.slane %v3520, 4
      %v3522 = vrot.slane %v3111, 5
      %v3523 = vsel %vm889, %v3521, %v3522
      %v3524 = vrot.slane %v3108, 4
      %v3525 = vor.u32 %v3524, %v3522
      %v3526 = vrot.slane %v3525, 4
      %v3527 = vrot.slane %v3116, 5
      %v3528 = vor.u32 %v2910, %v3527
      %v3529 = vrot.slane %v3528, 4
      %v3530 = vrot.slane %v3124, 5
      %v3531 = vsel %vm889, %v3529, %v3530
      %v3532 = vrot.slane %v3121, 4
      %v3533 = vor.u32 %v3532, %v3530
      %v3534 = vrot.slane %v3533, 4
      %v3535 = vrot.slane %v3129, 5
      %v3536 = vor.u32 %v2915, %v3535
      %v3537 = vrot.slane %v3536, 4
      %v3538 = vrot.slane %v3137, 5
      %v3539 = vsel %vm889, %v3537, %v3538
      %v3540 = vrot.slane %v3134, 4
      %v3541 = vor.u32 %v3540, %v3538
      %v3542 = vrot.slane %v3541, 4
      %v3543 = vrot.slane %v3142, 5
      %v3544 = vor.u32 %v2920, %v3543
      %v3545 = vrot.slane %v3544, 4
      %v3546 = vrot.slane %v3150, 5
      %v3547 = vsel %vm889, %v3545, %v3546
      %v3548 = vrot.slane %v3147, 4
      %v3549 = vor.u32 %v3548, %v3546
      %v3550 = vrot.slane %v3549, 4
      %v3551 = vrot.slane %v3155, 5
      %v3552 = vor.u32 %v2925, %v3551
      %v3553 = vrot.slane %v3552, 4
      %v3554 = vrot.slane %v3163, 5
      %v3555 = vsel %vm889, %v3553, %v3554
      %v3556 = vrot.slane %v3160, 4
      %v3557 = vor.u32 %v3556, %v3554
      %v3558 = vrot.slane %v3557, 4
      %v3559 = vrot.slane %v3168, 5
      %v3560 = vor.u32 %v2930, %v3559
      %v3561 = vrot.slane %v3560, 4
      %v3562 = vrot.slane %v3176, 5
      %v3563 = vsel %vm889, %v3561, %v3562
      %v3564 = vrot.slane %v3173, 4
      %v3565 = vor.u32 %v3564, %v3562
      %v3566 = vrot.slane %v3565, 4
      %v3567 = vrot.slane %v3181, 5
      %v3568 = vor.u32 %v2935, %v3567
      %v3569 = vrot.slane %v3568, 4
      %v3570 = vrot.slane %v3189, 5
      %v3571 = vsel %vm889, %v3569, %v3570
      %v3572 = vrot.slane %v3186, 4
      %v3573 = vor.u32 %v3572, %v3570
      %v3574 = vrot.slane %v3573, 4
      %v3575 = vrot.slane %v3194, 5
      %v3576 = vor.u32 %v2940, %v3575
      %v3577 = vrot.slane %v3576, 4
      %v3578 = vrot.slane %v3202, 5
      %v3579 = vsel %vm889, %v3577, %v3578
      %v3580 = vrot.slane %v3199, 4
      %v3581 = vor.u32 %v3580, %v3578
      %v3582 = vrot.slane %v3581, 4
      %v3583 = vrot.slane %v3207, 5
      %v3584 = vor.u32 %v2945, %v3583
      %v3585 = vrot.slane %v3584, 4
      %v3586 = vrot.slane %v3215, 5
      %v3587 = vsel %vm889, %v3585, %v3586
      %v3588 = vrot.slane %v3212, 4
      %v3589 = vor.u32 %v3588, %v3586
      %v3590 = vrot.slane %v3589, 4
      %v3591 = vrot.slane %v3220, 5
      %v3592 = vor.u32 %v2950, %v3591
      %v3593 = vrot.slane %v3592, 4
      %v3594 = vrot.slane %v3228, 5
      %v3595 = vsel %vm889, %v3593, %v3594
      %v3596 = vrot.slane %v3225, 4
      %v3597 = vor.u32 %v3596, %v3594
      %v3598 = vrot.slane %v3597, 4
      %v3599 = vrot.slane %v3233, 5
      %v3600 = vor.u32 %v2955, %v3599
      %v3601 = vrot.slane %v3600, 4
      %v3602 = vrot.slane %v3241, 5
      %v3603 = vsel %vm889, %v3601, %v3602
      %v3604 = vrot.slane %v3238, 4
      %v3605 = vor.u32 %v3604, %v3602
      %v3606 = vrot.slane %v3605, 4
      %v3607 = vrot.slane %v3246, 5
      %v3608 = vor.u32 %v2960, %v3607
      %v3609 = vrot.slane %v3608, 4
      %v3610 = vrot.slane %v3254, 5
      %v3611 = vsel %vm889, %v3609, %v3610
      %v3612 = vrot.slane %v3251, 4
      %v3613 = vor.u32 %v3612, %v3610
      %v3614 = vrot.slane %v3613, 4
      %v3615 = vrot.slane %v3259, 5
      %v3616 = vor.u32 %v2965, %v3615
      %v3617 = vrot.slane %v3616, 4
      %v3618 = vrot.slane %v3267, 5
      %v3619 = vsel %vm889, %v3617, %v3618
      %v3620 = vrot.slane %v3264, 4
      %v3621 = vor.u32 %v3620, %v3618
      %v3622 = vrot.slane %v3621, 4
      %3623 = vrot.lane.b32.xlu0 %v3499, 8
      %v3624 = vpop.permute.xlu0 %3623
      %3625 = vrot.lane.b32.xlu0 %v3502, 8
      %v3626 = vpop.permute.xlu0 %3625
      %3627 = vrot.lane.b32.xlu0 %v3507, 8
      %v3628 = vpop.permute.xlu0 %3627
      %3629 = vrot.lane.b32.xlu0 %v3510, 8
      %v3630 = vpop.permute.xlu0 %3629
      %3631 = vrot.lane.b32.xlu0 %v3515, 8
      %v3632 = vpop.permute.xlu0 %3631
      %3633 = vrot.lane.b32.xlu0 %v3518, 8
      %v3634 = vpop.permute.xlu0 %3633
      %3635 = vrot.lane.b32.xlu0 %v3523, 8
      %v3636 = vpop.permute.xlu0 %3635
      %3637 = vrot.lane.b32.xlu0 %v3526, 8
      %v3638 = vpop.permute.xlu0 %3637
      %3639 = vrot.lane.b32.xlu0 %v3531, 8
      %v3640 = vpop.permute.xlu0 %3639
      %3641 = vrot.lane.b32.xlu0 %v3534, 8
      %v3642 = vpop.permute.xlu0 %3641
      %3643 = vrot.lane.b32.xlu0 %v3539, 8
      %v3644 = vpop.permute.xlu0 %3643
      %3645 = vrot.lane.b32.xlu0 %v3542, 8
      %v3646 = vpop.permute.xlu0 %3645
      %3647 = vrot.lane.b32.xlu0 %v3547, 8
      %v3648 = vpop.permute.xlu0 %3647
      %3649 = vrot.lane.b32.xlu0 %v3550, 8
      %v3650 = vpop.permute.xlu0 %3649
      %3651 = vrot.lane.b32.xlu0 %v3555, 8
      %v3652 = vpop.permute.xlu0 %3651
      %3653 = vrot.lane.b32.xlu0 %v3558, 8
      %v3654 = vpop.permute.xlu0 %3653
      %3655 = vrot.lane.b32.xlu0 %v3563, 8
      %v3656 = vpop.permute.xlu0 %3655
      %3657 = vrot.lane.b32.xlu0 %v3566, 8
      %v3658 = vpop.permute.xlu0 %3657
      %3659 = vrot.lane.b32.xlu0 %v3571, 8
      %v3660 = vpop.permute.xlu0 %3659
      %3661 = vrot.lane.b32.xlu0 %v3574, 8
      %v3662 = vpop.permute.xlu0 %3661
      %3663 = vrot.lane.b32.xlu0 %v3579, 8
      %v3664 = vpop.permute.xlu0 %3663
      %3665 = vrot.lane.b32.xlu0 %v3582, 8
      %v3666 = vpop.permute.xlu0 %3665
      %3667 = vrot.lane.b32.xlu0 %v3587, 8
      %v3668 = vpop.permute.xlu0 %3667
      %3669 = vrot.lane.b32.xlu0 %v3590, 8
      %v3670 = vpop.permute.xlu0 %3669
      %3671 = vrot.lane.b32.xlu0 %v3595, 8
      %v3672 = vpop.permute.xlu0 %3671
      %3673 = vrot.lane.b32.xlu0 %v3598, 8
      %v3674 = vpop.permute.xlu0 %3673
      %3675 = vrot.lane.b32.xlu0 %v3603, 8
      %v3676 = vpop.permute.xlu0 %3675
      %3677 = vrot.lane.b32.xlu0 %v3606, 8
      %v3678 = vpop.permute.xlu0 %3677
      %3679 = vrot.lane.b32.xlu0 %v3611, 8
      %v3680 = vpop.permute.xlu0 %3679
      %3681 = vrot.lane.b32.xlu0 %v3614, 8
      %v3682 = vpop.permute.xlu0 %3681
      %3683 = vrot.lane.b32.xlu0 %v3619, 8
      %v3684 = vpop.permute.xlu0 %3683
      %3685 = vrot.lane.b32.xlu0 %v3622, 8
      %v3686 = vpop.permute.xlu0 %3685
      %3719 = vst.msk [vmem:[%s364] sm:$0xf] %vm1114, %v3624
      %v3720 = vld [vmem:[%s364 + $0x4] sm:$0xf]
      %v3721 = vsel %vm1117, %v3626, %v3720
      %3722 = vst [vmem:[%s364 + $0x4] sm:$0xf] %v3721
      %3723 = vst.msk [vmem:[%s364 + $0x8] sm:$0xf] %vm1114, %v3628
      %v3724 = vld [vmem:[%s364 + $0xc] sm:$0xf]
      %v3725 = vsel %vm1117, %v3630, %v3724
      %3726 = vst [vmem:[%s364 + $0xc] sm:$0xf] %v3725
      %3727 = vst.msk [vmem:[%s364 + $0x10] sm:$0xf] %vm1114, %v3632
      %v3728 = vld [vmem:[%s364 + $0x14] sm:$0xf]
      %v3729 = vsel %vm1117, %v3634, %v3728
      %3730 = vst [vmem:[%s364 + $0x14] sm:$0xf] %v3729
      %3731 = vst.msk [vmem:[%s364 + $0x18] sm:$0xf] %vm1114, %v3636
      %v3732 = vld [vmem:[%s364 + $0x1c] sm:$0xf]
      %v3733 = vsel %vm1117, %v3638, %v3732
      %3734 = vst [vmem:[%s364 + $0x1c] sm:$0xf] %v3733
      %3735 = vst.msk [vmem:[%s364 + $0x20] sm:$0xf] %vm1114, %v3640
      %v3736 = vld [vmem:[%s364 + $0x24] sm:$0xf]
      %v3737 = vsel %vm1117, %v3642, %v3736
      %3738 = vst [vmem:[%s364 + $0x24] sm:$0xf] %v3737
      %3739 = vst.msk [vmem:[%s364 + $0x28] sm:$0xf] %vm1114, %v3644
      %v3740 = vld [vmem:[%s364 + $0x2c] sm:$0xf]
      %v3741 = vsel %vm1117, %v3646, %v3740
      %3742 = vst [vmem:[%s364 + $0x2c] sm:$0xf] %v3741
      %3743 = vst.msk [vmem:[%s364 + $0x30] sm:$0xf] %vm1114, %v3648
      %v3744 = vld [vmem:[%s364 + $0x34] sm:$0xf]
      %v3745 = vsel %vm1117, %v3650, %v3744
      %3746 = vst [vmem:[%s364 + $0x34] sm:$0xf] %v3745
      %3747 = vst.msk [vmem:[%s364 + $0x38] sm:$0xf] %vm1114, %v3652
      %v3748 = vld [vmem:[%s364 + $0x3c] sm:$0xf]
      %v3749 = vsel %vm1117, %v3654, %v3748
      %3750 = vst [vmem:[%s364 + $0x3c] sm:$0xf] %v3749
      %3751 = vst.msk [vmem:[%s364 + $0x40] sm:$0xf] %vm1114, %v3656
      %v3752 = vld [vmem:[%s364 + $0x44] sm:$0xf]
      %v3753 = vsel %vm1117, %v3658, %v3752
      %3754 = vst [vmem:[%s364 + $0x44] sm:$0xf] %v3753
      %3755 = vst.msk [vmem:[%s364 + $0x48] sm:$0xf] %vm1114, %v3660
      %v3756 = vld [vmem:[%s364 + $0x4c] sm:$0xf]
      %v3757 = vsel %vm1117, %v3662, %v3756
      %3758 = vst [vmem:[%s364 + $0x4c] sm:$0xf] %v3757
      %3759 = vst.msk [vmem:[%s364 + $0x50] sm:$0xf] %vm1114, %v3664
      %v3760 = vld [vmem:[%s364 + $0x54] sm:$0xf]
      %v3761 = vsel %vm1117, %v3666, %v3760
      %3762 = vst [vmem:[%s364 + $0x54] sm:$0xf] %v3761
      %3763 = vst.msk [vmem:[%s364 + $0x58] sm:$0xf] %vm1114, %v3668
      %v3764 = vld [vmem:[%s364 + $0x5c] sm:$0xf]
      %v3765 = vsel %vm1117, %v3670, %v3764
      %3766 = vst [vmem:[%s364 + $0x5c] sm:$0xf] %v3765
      %3767 = vst.msk [vmem:[%s364 + $0x60] sm:$0xf] %vm1114, %v3672
      %v3768 = vld [vmem:[%s364 + $0x64] sm:$0xf]
      %v3769 = vsel %vm1117, %v3674, %v3768
      %3770 = vst [vmem:[%s364 + $0x64] sm:$0xf] %v3769
      %3771 = vst.msk [vmem:[%s364 + $0x68] sm:$0xf] %vm1114, %v3676
      %v3772 = vld [vmem:[%s364 + $0x6c] sm:$0xf]
      %v3773 = vsel %vm1117, %v3678, %v3772
      %3774 = vst [vmem:[%s364 + $0x6c] sm:$0xf] %v3773
      %3775 = vst.msk [vmem:[%s364 + $0x70] sm:$0xf] %vm1114, %v3680
      %v3776 = vld [vmem:[%s364 + $0x74] sm:$0xf]
      %v3777 = vsel %vm1117, %v3682, %v3776
      %3778 = vst [vmem:[%s364 + $0x74] sm:$0xf] %v3777
      %3779 = vst.msk [vmem:[%s364 + $0x78] sm:$0xf] %vm1114, %v3684
      %v3780 = vld [vmem:[%s364 + $0x7c] sm:$0xf]
      %v3781 = vsel %vm1117, %v3686, %v3780
      %3782 = vst [vmem:[%s364 + $0x7c] sm:$0xf] %v3781
      %3783 = vrot.lane.b32.xlu0 %v3072, 8
      %v3784 = vpop.permute.xlu0 %3783
      %3785 = vrot.lane.b32.xlu0 %v3085, 8
      %v3786 = vpop.permute.xlu0 %3785
      %3787 = vrot.lane.b32.xlu0 %v3098, 8
      %v3788 = vpop.permute.xlu0 %3787
      %3789 = vrot.lane.b32.xlu0 %v3111, 8
      %v3790 = vpop.permute.xlu0 %3789
      %3791 = vrot.lane.b32.xlu0 %v3124, 8
      %v3792 = vpop.permute.xlu0 %3791
      %3793 = vrot.lane.b32.xlu0 %v3137, 8
      %v3794 = vpop.permute.xlu0 %3793
      %3795 = vrot.lane.b32.xlu0 %v3150, 8
      %v3796 = vpop.permute.xlu0 %3795
      %3797 = vrot.lane.b32.xlu0 %v3163, 8
      %v3798 = vpop.permute.xlu0 %3797
      %3799 = vrot.lane.b32.xlu0 %v3176, 8
      %v3800 = vpop.permute.xlu0 %3799
      %3801 = vrot.lane.b32.xlu0 %v3189, 8
      %v3802 = vpop.permute.xlu0 %3801
      %3803 = vrot.lane.b32.xlu0 %v3202, 8
      %v3804 = vpop.permute.xlu0 %3803
      %3805 = vrot.lane.b32.xlu0 %v3215, 8
      %v3806 = vpop.permute.xlu0 %3805
      %3807 = vrot.lane.b32.xlu0 %v3228, 8
      %v3808 = vpop.permute.xlu0 %3807
      %3809 = vrot.lane.b32.xlu0 %v3241, 8
      %v3810 = vpop.permute.xlu0 %3809
      %3811 = vrot.lane.b32.xlu0 %v3254, 8
      %v3812 = vpop.permute.xlu0 %3811
      %3813 = vrot.lane.b32.xlu0 %v3267, 8
      %v3814 = vpop.permute.xlu0 %3813
      %v3831 = vld [vmem:[%s364 + $0x4] sm:$0x8]
      %v3832 = vsel %vm1231, %v3784, %v3831
      %3833 = vst [vmem:[%s364 + $0x4] sm:$0x8] %v3832
      %v3834 = vld [vmem:[%s364 + $0xc] sm:$0x8]
      %v3835 = vsel %vm1231, %v3786, %v3834
      %3836 = vst [vmem:[%s364 + $0xc] sm:$0x8] %v3835
      %v3837 = vld [vmem:[%s364 + $0x14] sm:$0x8]
      %v3838 = vsel %vm1231, %v3788, %v3837
      %3839 = vst [vmem:[%s364 + $0x14] sm:$0x8] %v3838
      %v3840 = vld [vmem:[%s364 + $0x1c] sm:$0x8]
      %v3841 = vsel %vm1231, %v3790, %v3840
      %3842 = vst [vmem:[%s364 + $0x1c] sm:$0x8] %v3841
      %v3843 = vld [vmem:[%s364 + $0x24] sm:$0x8]
      %v3844 = vsel %vm1231, %v3792, %v3843
      %3845 = vst [vmem:[%s364 + $0x24] sm:$0x8] %v3844
      %v3846 = vld [vmem:[%s364 + $0x2c] sm:$0x8]
      %v3847 = vsel %vm1231, %v3794, %v3846
      %3848 = vst [vmem:[%s364 + $0x2c] sm:$0x8] %v3847
      %v3849 = vld [vmem:[%s364 + $0x34] sm:$0x8]
      %v3850 = vsel %vm1231, %v3796, %v3849
      %3851 = vst [vmem:[%s364 + $0x34] sm:$0x8] %v3850
      %v3852 = vld [vmem:[%s364 + $0x3c] sm:$0x8]
      %v3853 = vsel %vm1231, %v3798, %v3852
      %3854 = vst [vmem:[%s364 + $0x3c] sm:$0x8] %v3853
      %v3855 = vld [vmem:[%s364 + $0x44] sm:$0x8]
      %v3856 = vsel %vm1231, %v3800, %v3855
      %3857 = vst [vmem:[%s364 + $0x44] sm:$0x8] %v3856
      %v3858 = vld [vmem:[%s364 + $0x4c] sm:$0x8]
      %v3859 = vsel %vm1231, %v3802, %v3858
      %3860 = vst [vmem:[%s364 + $0x4c] sm:$0x8] %v3859
      %v3861 = vld [vmem:[%s364 + $0x54] sm:$0x8]
      %v3862 = vsel %vm1231, %v3804, %v3861
      %3863 = vst [vmem:[%s364 + $0x54] sm:$0x8] %v3862
      %v3864 = vld [vmem:[%s364 + $0x5c] sm:$0x8]
      %v3865 = vsel %vm1231, %v3806, %v3864
      %3866 = vst [vmem:[%s364 + $0x5c] sm:$0x8] %v3865
      %v3867 = vld [vmem:[%s364 + $0x64] sm:$0x8]
      %v3868 = vsel %vm1231, %v3808, %v3867
      %3869 = vst [vmem:[%s364 + $0x64] sm:$0x8] %v3868
      %v3870 = vld [vmem:[%s364 + $0x6c] sm:$0x8]
      %v3871 = vsel %vm1231, %v3810, %v3870
      %3872 = vst [vmem:[%s364 + $0x6c] sm:$0x8] %v3871
      %v3873 = vld [vmem:[%s364 + $0x74] sm:$0x8]
      %v3874 = vsel %vm1231, %v3812, %v3873
      %3875 = vst [vmem:[%s364 + $0x74] sm:$0x8] %v3874
      %v3876 = vld [vmem:[%s364 + $0x7c] sm:$0x8]
      %v3877 = vsel %vm1231, %v3814, %v3876
      %3878 = vst [vmem:[%s364 + $0x7c] sm:$0x8] %v3877
      %v3879 = vld [vmem:[%s1280] sm:$0xf]
      %v3880 = vld [vmem:[%s1280 + $0x4] sm:$0xf]
      %3881 = vst.msk [vmem:[#allocation2] sm:$0xf] %vm1283, %v3879
      %3882 = vst.msk [vmem:[#allocation2 + $0x4] sm:$0xf] %vm1283, %v3880
      %v3883 = vld [vmem:[%s1286] sm:$0xf]
      %v3884 = vld [vmem:[%s1286 + $0x4] sm:$0xf]
      %3885 = vst.msk [vmem:[%s1289] sm:$0xf] %vm1283, %v3883
      %3886 = vst.msk [vmem:[%s1289 + $0x4] sm:$0xf] %vm1283, %v3884
      %v3887 = vld [vmem:[#allocation2] sm:$0xf]
      %v3888 = vld [vmem:[#allocation2 + $0x4] sm:$0xf]
      %v3889 = vld [vmem:[#allocation2 + $0x8] sm:$0xf]
      %v3890 = vld [vmem:[#allocation2 + $0xc] sm:$0xf]
      %v3891 = vld [vmem:[#allocation2 + $0x10] sm:$0xf]
      %v3892 = vld [vmem:[#allocation2 + $0x14] sm:$0xf]
      %v3893 = vld [vmem:[#allocation2 + $0x18] sm:$0xf]
      %v3894 = vld [vmem:[#allocation2 + $0x1c] sm:$0xf]
      %v3895 = vld [vmem:[#allocation2 + $0x20] sm:$0xf]
      %v3896 = vld [vmem:[#allocation2 + $0x24] sm:$0xf]
      %v3897 = vld [vmem:[#allocation2 + $0x28] sm:$0xf]
      %v3898 = vld [vmem:[#allocation2 + $0x2c] sm:$0xf]
      %v3899 = vld [vmem:[#allocation2 + $0x30] sm:$0xf]
      %v3900 = vld [vmem:[#allocation2 + $0x34] sm:$0xf]
      %v3901 = vld [vmem:[#allocation2 + $0x38] sm:$0xf]
      %v3902 = vld [vmem:[#allocation2 + $0x3c] sm:$0xf]
      %v3903 = vld [vmem:[#allocation2 + $0x40] sm:$0xf]
      %v3904 = vld [vmem:[#allocation2 + $0x44] sm:$0xf]
      %v3905 = vld [vmem:[#allocation2 + $0x48] sm:$0xf]
      %v3906 = vld [vmem:[#allocation2 + $0x4c] sm:$0xf]
      %v3907 = vld [vmem:[#allocation2 + $0x50] sm:$0xf]
      %v3908 = vld [vmem:[#allocation2 + $0x54] sm:$0xf]
      %v3909 = vld [vmem:[#allocation2 + $0x58] sm:$0xf]
      %v3910 = vld [vmem:[#allocation2 + $0x5c] sm:$0xf]
      %v3911 = vld [vmem:[#allocation2 + $0x60] sm:$0xf]
      %v3912 = vld [vmem:[#allocation2 + $0x64] sm:$0xf]
      %v3913 = vld [vmem:[#allocation2 + $0x68] sm:$0xf]
      %v3914 = vld [vmem:[#allocation2 + $0x6c] sm:$0xf]
      %v3915 = vld [vmem:[#allocation2 + $0x70] sm:$0xf]
      %v3916 = vld [vmem:[#allocation2 + $0x74] sm:$0xf]
      %v3917 = vld [vmem:[#allocation2 + $0x78] sm:$0xf]
      %v3918 = vld [vmem:[#allocation2 + $0x7c] sm:$0xf]
      %v3919 = vld [vmem:[%s2] sm:$0xf]
      %v3920 = vld [vmem:[%s2 + $0x4] sm:$0x3]
      %v3953 = vunpack.c.l.b16 %v3887
      %v3954 = vunpack.c.l.b16 %v3888
      %v3955 = vunpack.c.l.b16 %v3889
      %v3956 = vunpack.c.l.b16 %v3890
      %v3957 = vunpack.c.l.b16 %v3891
      %v3958 = vunpack.c.l.b16 %v3892
      %v3959 = vunpack.c.l.b16 %v3893
      %v3960 = vunpack.c.l.b16 %v3894
      %v3961 = vunpack.c.l.b16 %v3895
      %v3962 = vunpack.c.l.b16 %v3896
      %v3963 = vunpack.c.l.b16 %v3897
      %v3964 = vunpack.c.l.b16 %v3898
      %v3965 = vunpack.c.l.b16 %v3899
      %v3966 = vunpack.c.l.b16 %v3900
      %v3967 = vunpack.c.l.b16 %v3901
      %v3968 = vunpack.c.l.b16 %v3902
      %v3969 = vunpack.c.l.b16 %v3903
      %v3970 = vunpack.c.l.b16 %v3904
      %v3971 = vunpack.c.l.b16 %v3905
      %v3972 = vunpack.c.l.b16 %v3906
      %v3973 = vunpack.c.l.b16 %v3907
      %v3974 = vunpack.c.l.b16 %v3908
      %v3975 = vunpack.c.l.b16 %v3909
      %v3976 = vunpack.c.l.b16 %v3910
      %v3977 = vunpack.c.l.b16 %v3911
      %v3978 = vunpack.c.l.b16 %v3912
      %v3979 = vunpack.c.l.b16 %v3913
      %v3980 = vunpack.c.l.b16 %v3914
      %v3981 = vunpack.c.l.b16 %v3915
      %v3982 = vunpack.c.l.b16 %v3916
      %v3983 = vunpack.c.l.b16 %v3917
      %v3984 = vunpack.c.l.b16 %v3918
      %v3985 = vpack.c.b16 %v3954, %v3953
      %v3986 = vpack.c.b16 %v3956, %v3955
      %v3987 = vpack.c.b16 %v3958, %v3957
      %v3988 = vpack.c.b16 %v3960, %v3959
      %v3989 = vpack.c.b16 %v3962, %v3961
      %v3990 = vpack.c.b16 %v3964, %v3963
      %v3991 = vpack.c.b16 %v3966, %v3965
      %v3992 = vpack.c.b16 %v3968, %v3967
      %v3993 = vpack.c.b16 %v3970, %v3969
      %v3994 = vpack.c.b16 %v3972, %v3971
      %v3995 = vpack.c.b16 %v3974, %v3973
      %v3996 = vpack.c.b16 %v3976, %v3975
      %v3997 = vpack.c.b16 %v3978, %v3977
      %v3998 = vpack.c.b16 %v3980, %v3979
      %v3999 = vpack.c.b16 %v3982, %v3981
      %v4000 = vpack.c.b16 %v3984, %v3983
      %v4003 = vunpack.c.l.b16 %v3919
      %v4004 = vunpack.c.l.b16 %v3920
      %v4005 = vpack.c.b16 %v4004, %v4003
      %v4007 = vsel %vm1411, %v3985, 0
      %v4010 = vsel %vm1411, %v3986, 0
      %v4013 = vsel %vm1411, %v3987, 0
      %v4016 = vsel %vm1411, %v3988, 0
      %v4019 = vsel %vm1411, %v3989, 0
      %v4022 = vsel %vm1411, %v3990, 0
      %v4025 = vsel %vm1411, %v3991, 0
      %v4028 = vsel %vm1411, %v3992, 0
      %v4031 = vsel %vm1411, %v3993, 0
      %v4034 = vsel %vm1411, %v3994, 0
      %v4037 = vsel %vm1411, %v3995, 0
      %v4040 = vsel %vm1411, %v3996, 0
      %v4043 = vsel %vm1411, %v3997, 0
      %v4046 = vsel %vm1411, %v3998, 0
      %v4049 = vsel %vm1411, %v3999, 0
      %v4052 = vsel %vm1411, %v4000, 0
      %v4055 = vsel %vm1460, %v4005, 0
      %4057 = vmatprep.subr.bf16.mxu0 0
      %4058 = vmatpush1.bf16.msra.mxu0 0
      %4059 = vmatprep.subr.bf16.mxu0 0
      %4060 = vmatpush1.bf16.msra.mxu0 0
      %4061 = vmatprep.subr.bf16.mxu0 0
      %4062 = vmatpush1.bf16.msra.mxu0 0
      %4063 = vmatprep.subr.bf16.mxu0 0
      %4064 = vmatpush1.bf16.msra.mxu0 0
      %4065 = vmatprep.subr.bf16.mxu0 0
      %4066 = vmatpush1.bf16.msra.mxu0 0
      %4067 = vmatprep.subr.bf16.mxu0 0
      %4068 = vmatpush1.bf16.msra.mxu0 0
      %4069 = vmatprep.subr.bf16.mxu0 0
      %4070 = vmatpush1.bf16.msra.mxu0 0
      %4071 = vmatprep.subr.bf16.mxu0 0
      %4072 = vmatpush1.bf16.msra.mxu0 %v4055
      %4073 = vmatprep.subr.bf16.mxu0 0
      %4074 = vmatpush2.bf16.msra.mxu0 0
      %4075 = vmatprep.subr.bf16.mxu0 0
      %4076 = vmatpush2.bf16.msra.mxu0 0
      %4077 = vmatprep.subr.bf16.mxu0 0
      %4078 = vmatpush2.bf16.msra.mxu0 0
      %4079 = vmatprep.subr.bf16.mxu0 0
      %4080 = vmatpush2.bf16.msra.mxu0 0
      %4081 = vmatprep.subr.bf16.mxu0 0
      %4082 = vmatpush2.bf16.msra.mxu0 0
      %4083 = vmatprep.subr.bf16.mxu0 0
      %4084 = vmatpush2.bf16.msra.mxu0 0
      %4085 = vmatprep.subr.bf16.mxu0 0
      %4086 = vmatpush2.bf16.msra.mxu0 0
      %4087 = vmatprep.subr.bf16.mxu0 0
      %4088 = vmatpush2.bf16.msra.mxu0 0
      %4089 = vmatprep.mubr.bf16.mxu0 0
      %4090 = vmatmul.mubr.bf16.gmra.mxu0 %v4007
      %v4091 = vpop.f32.mrf.mxu0
      %v4092 = vadd.f32 0.0, %v4091
      %v4093 = vpop.f32.mrf.mxu0
      %v4094 = vpop.f32.mrf.mxu0
      %v4095 = vadd.f32 0.0, %v4094
      %v4096 = vpop.f32.mrf.mxu0
      %4097 = vmatprep.mubr.bf16.mxu0 0
      %4098 = vmatmul.mubr.bf16.gmra.mxu0 %v4010
      %v4099 = vpop.f32.mrf.mxu0
      %v4100 = vadd.f32 0.0, %v4099
      %v4101 = vpop.f32.mrf.mxu0
      %v4102 = vpop.f32.mrf.mxu0
      %v4103 = vadd.f32 0.0, %v4102
      %v4104 = vpop.f32.mrf.mxu0
      %4105 = vmatprep.mubr.bf16.mxu0 0
      %4106 = vmatmul.mubr.bf16.gmra.mxu0 %v4013
      %v4107 = vpop.f32.mrf.mxu0
      %v4108 = vadd.f32 0.0, %v4107
      %v4109 = vpop.f32.mrf.mxu0
      %v4110 = vpop.f32.mrf.mxu0
      %v4111 = vadd.f32 0.0, %v4110
      %v4112 = vpop.f32.mrf.mxu0
      %4113 = vmatprep.mubr.bf16.mxu0 0
      %4114 = vmatmul.mubr.bf16.gmra.mxu0 %v4016
      %v4115 = vpop.f32.mrf.mxu0
      %v4116 = vadd.f32 0.0, %v4115
      %v4117 = vpop.f32.mrf.mxu0
      %v4118 = vpop.f32.mrf.mxu0
      %v4119 = vadd.f32 0.0, %v4118
      %v4120 = vpop.f32.mrf.mxu0
      %4121 = vmatprep.mubr.bf16.mxu0 0
      %4122 = vmatmul.mubr.bf16.gmra.mxu0 %v4019
      %v4123 = vpop.f32.mrf.mxu0
      %v4124 = vadd.f32 0.0, %v4123
      %v4125 = vpop.f32.mrf.mxu0
      %v4126 = vpop.f32.mrf.mxu0
      %v4127 = vadd.f32 0.0, %v4126
      %v4128 = vpop.f32.mrf.mxu0
      %4129 = vmatprep.mubr.bf16.mxu0 0
      %4130 = vmatmul.mubr.bf16.gmra.mxu0 %v4022
      %v4131 = vpop.f32.mrf.mxu0
      %v4132 = vadd.f32 0.0, %v4131
      %v4133 = vpop.f32.mrf.mxu0
      %v4134 = vpop.f32.mrf.mxu0
      %v4135 = vadd.f32 0.0, %v4134
      %v4136 = vpop.f32.mrf.mxu0
      %4137 = vmatprep.mubr.bf16.mxu0 0
      %4138 = vmatmul.mubr.bf16.gmra.mxu0 %v4025
      %v4139 = vpop.f32.mrf.mxu0
      %v4140 = vadd.f32 0.0, %v4139
      %v4141 = vpop.f32.mrf.mxu0
      %v4142 = vpop.f32.mrf.mxu0
      %v4143 = vadd.f32 0.0, %v4142
      %v4144 = vpop.f32.mrf.mxu0
      %4145 = vmatprep.mubr.bf16.mxu0 0
      %4146 = vmatmul.mubr.bf16.gmra.mxu0 %v4028
      %v4147 = vpop.f32.mrf.mxu0
      %v4148 = vadd.f32 0.0, %v4147
      %v4149 = vpop.f32.mrf.mxu0
      %v4150 = vpop.f32.mrf.mxu0
      %v4151 = vadd.f32 0.0, %v4150
      %v4152 = vpop.f32.mrf.mxu0
      %4153 = vmatprep.mubr.bf16.mxu0 0
      %4154 = vmatmul.mubr.bf16.gmra.mxu0 %v4031
      %v4155 = vpop.f32.mrf.mxu0
      %v4156 = vadd.f32 0.0, %v4155
      %v4157 = vpop.f32.mrf.mxu0
      %v4158 = vpop.f32.mrf.mxu0
      %v4159 = vadd.f32 0.0, %v4158
      %v4160 = vpop.f32.mrf.mxu0
      %4161 = vmatprep.mubr.bf16.mxu0 0
      %4162 = vmatmul.mubr.bf16.gmra.mxu0 %v4034
      %v4163 = vpop.f32.mrf.mxu0
      %v4164 = vadd.f32 0.0, %v4163
      %v4165 = vpop.f32.mrf.mxu0
      %v4166 = vpop.f32.mrf.mxu0
      %v4167 = vadd.f32 0.0, %v4166
      %v4168 = vpop.f32.mrf.mxu0
      %4169 = vmatprep.mubr.bf16.mxu0 0
      %4170 = vmatmul.mubr.bf16.gmra.mxu0 %v4037
      %v4171 = vpop.f32.mrf.mxu0
      %v4172 = vadd.f32 0.0, %v4171
      %v4173 = vpop.f32.mrf.mxu0
      %v4174 = vpop.f32.mrf.mxu0
      %v4175 = vadd.f32 0.0, %v4174
      %v4176 = vpop.f32.mrf.mxu0
      %4177 = vmatprep.mubr.bf16.mxu0 0
      %4178 = vmatmul.mubr.bf16.gmra.mxu0 %v4040
      %v4179 = vpop.f32.mrf.mxu0
      %v4180 = vadd.f32 0.0, %v4179
      %v4181 = vpop.f32.mrf.mxu0
      %v4182 = vpop.f32.mrf.mxu0
      %v4183 = vadd.f32 0.0, %v4182
      %v4184 = vpop.f32.mrf.mxu0
      %4185 = vmatprep.mubr.bf16.mxu0 0
      %4186 = vmatmul.mubr.bf16.gmra.mxu0 %v4043
      %v4187 = vpop.f32.mrf.mxu0
      %v4188 = vadd.f32 0.0, %v4187
      %v4189 = vpop.f32.mrf.mxu0
      %v4190 = vpop.f32.mrf.mxu0
      %v4191 = vadd.f32 0.0, %v4190
      %v4192 = vpop.f32.mrf.mxu0
      %4193 = vmatprep.mubr.bf16.mxu0 0
      %4194 = vmatmul.mubr.bf16.gmra.mxu0 %v4046
      %v4195 = vpop.f32.mrf.mxu0
      %v4196 = vadd.f32 0.0, %v4195
      %v4197 = vpop.f32.mrf.mxu0
      %v4198 = vpop.f32.mrf.mxu0
      %v4199 = vadd.f32 0.0, %v4198
      %v4200 = vpop.f32.mrf.mxu0
      %4201 = vmatprep.mubr.bf16.mxu0 0
      %4202 = vmatmul.mubr.bf16.gmra.mxu0 %v4049
      %v4203 = vpop.f32.mrf.mxu0
      %v4204 = vadd.f32 0.0, %v4203
      %v4205 = vpop.f32.mrf.mxu0
      %v4206 = vpop.f32.mrf.mxu0
      %v4207 = vadd.f32 0.0, %v4206
      %v4208 = vpop.f32.mrf.mxu0
      %4209 = vmatprep.mubr.bf16.mxu0 0
      %4210 = vmatmul.mubr.bf16.gmra.mxu0 %v4052
      %v4211 = vpop.f32.mrf.mxu0
      %v4212 = vadd.f32 0.0, %v4211
      %v4213 = vpop.f32.mrf.mxu0
      %v4214 = vpop.f32.mrf.mxu0
      %v4215 = vadd.f32 0.0, %v4214
      %v4216 = vpop.f32.mrf.mxu0
      %4217 = vdwg.mxu0
      %4218 = vst.msk [vmem:[#allocation3] sm:$0xff] %vm1625, %v4092
      %4219 = vst.msk [vmem:[#allocation3 + $0x8] sm:$0xff] %vm1625, %v4095
      %4220 = vst.msk [vmem:[#allocation3 + $0x10] sm:$0xff] %vm1625, %v4100
      %4221 = vst.msk [vmem:[#allocation3 + $0x18] sm:$0xff] %vm1625, %v4103
      %4222 = vst.msk [vmem:[#allocation3 + $0x20] sm:$0xff] %vm1625, %v4108
      %4223 = vst.msk [vmem:[#allocation3 + $0x28] sm:$0xff] %vm1625, %v4111
      %4224 = vst.msk [vmem:[#allocation3 + $0x30] sm:$0xff] %vm1625, %v4116
      %4225 = vst.msk [vmem:[#allocation3 + $0x38] sm:$0xff] %vm1625, %v4119
      %4226 = vst.msk [vmem:[#allocation3 + $0x40] sm:$0xff] %vm1625, %v4124
      %4227 = vst.msk [vmem:[#allocation3 + $0x48] sm:$0xff] %vm1625, %v4127
      %4228 = vst.msk [vmem:[#allocation3 + $0x50] sm:$0xff] %vm1625, %v4132
      %4229 = vst.msk [vmem:[#allocation3 + $0x58] sm:$0xff] %vm1625, %v4135
      %4230 = vst.msk [vmem:[#allocation3 + $0x60] sm:$0xff] %vm1625, %v4140
      %4231 = vst.msk [vmem:[#allocation3 + $0x68] sm:$0xff] %vm1625, %v4143
      %4232 = vst.msk [vmem:[#allocation3 + $0x70] sm:$0xff] %vm1625, %v4148
      %4233 = vst.msk [vmem:[#allocation3 + $0x78] sm:$0xff] %vm1625, %v4151
      %4234 = vst.msk [vmem:[#allocation3 + $0x80] sm:$0xff] %vm1625, %v4156
      %4235 = vst.msk [vmem:[#allocation3 + $0x88] sm:$0xff] %vm1625, %v4159
      %4236 = vst.msk [vmem:[#allocation3 + $0x90] sm:$0xff] %vm1625, %v4164
      %4237 = vst.msk [vmem:[#allocation3 + $0x98] sm:$0xff] %vm1625, %v4167
      %4238 = vst.msk [vmem:[#allocation3 + $0xa0] sm:$0xff] %vm1625, %v4172
      %4239 = vst.msk [vmem:[#allocation3 + $0xa8] sm:$0xff] %vm1625, %v4175
      %4240 = vst.msk [vmem:[#allocation3 + $0xb0] sm:$0xff] %vm1625, %v4180
      %4241 = vst.msk [vmem:[#allocation3 + $0xb8] sm:$0xff] %vm1625, %v4183
      %4242 = vst.msk [vmem:[#allocation3 + $0xc0] sm:$0xff] %vm1625, %v4188
      %4243 = vst.msk [vmem:[#allocation3 + $0xc8] sm:$0xff] %vm1625, %v4191
      %4244 = vst.msk [vmem:[#allocation3 + $0xd0] sm:$0xff] %vm1625, %v4196
      %4245 = vst.msk [vmem:[#allocation3 + $0xd8] sm:$0xff] %vm1625, %v4199
      %4246 = vst.msk [vmem:[#allocation3 + $0xe0] sm:$0xff] %vm1625, %v4204
      %4247 = vst.msk [vmem:[#allocation3 + $0xe8] sm:$0xff] %vm1625, %v4207
      %4248 = vst.msk [vmem:[#allocation3 + $0xf0] sm:$0xff] %vm1625, %v4212
      %4249 = vst.msk [vmem:[#allocation3 + $0xf8] sm:$0xff] %vm1625, %v4215
      %v4250 = vld [vmem:[%s364] sm:$0xf]
      %v4251 = vld [vmem:[%s364 + $0x4] sm:$0xf]
      %v4252 = vld [vmem:[%s364 + $0x8] sm:$0xf]
      %v4253 = vld [vmem:[%s364 + $0xc] sm:$0xf]
      %v4254 = vld [vmem:[%s364 + $0x10] sm:$0xf]
      %v4255 = vld [vmem:[%s364 + $0x14] sm:$0xf]
      %v4256 = vld [vmem:[%s364 + $0x18] sm:$0xf]
      %v4257 = vld [vmem:[%s364 + $0x1c] sm:$0xf]
      %v4258 = vld [vmem:[%s364 + $0x20] sm:$0xf]
      %v4259 = vld [vmem:[%s364 + $0x24] sm:$0xf]
      %v4260 = vld [vmem:[%s364 + $0x28] sm:$0xf]
      %v4261 = vld [vmem:[%s364 + $0x2c] sm:$0xf]
      %v4262 = vld [vmem:[%s364 + $0x30] sm:$0xf]
      %v4263 = vld [vmem:[%s364 + $0x34] sm:$0xf]
      %v4264 = vld [vmem:[%s364 + $0x38] sm:$0xf]
      %v4265 = vld [vmem:[%s364 + $0x3c] sm:$0xf]
      %v4266 = vld [vmem:[%s364 + $0x40] sm:$0xf]
      %v4267 = vld [vmem:[%s364 + $0x44] sm:$0xf]
      %v4268 = vld [vmem:[%s364 + $0x48] sm:$0xf]
      %v4269 = vld [vmem:[%s364 + $0x4c] sm:$0xf]
      %v4270 = vld [vmem:[%s364 + $0x50] sm:$0xf]
      %v4271 = vld [vmem:[%s364 + $0x54] sm:$0xf]
      %v4272 = vld [vmem:[%s364 + $0x58] sm:$0xf]
      %v4273 = vld [vmem:[%s364 + $0x5c] sm:$0xf]
      %v4274 = vld [vmem:[%s364 + $0x60] sm:$0xf]
      %v4275 = vld [vmem:[%s364 + $0x64] sm:$0xf]
      %v4276 = vld [vmem:[%s364 + $0x68] sm:$0xf]
      %v4277 = vld [vmem:[%s364 + $0x6c] sm:$0xf]
      %v4278 = vld [vmem:[%s364 + $0x70] sm:$0xf]
      %v4279 = vld [vmem:[%s364 + $0x74] sm:$0xf]
      %v4280 = vld [vmem:[%s364 + $0x78] sm:$0xf]
      %v4281 = vld [vmem:[%s364 + $0x7c] sm:$0xf]
      %s4282 = scalar_lea.vmem %s2, 8
      %v4283 = vld [vmem:[%s4282] sm:$0xf]
      %v4284 = vld [vmem:[%s4282 + $0x4] sm:$0x3]
      %v4317 = vunpack.c.l.b16 %v4250
      %v4318 = vunpack.c.l.b16 %v4251
      %v4319 = vunpack.c.l.b16 %v4252
      %v4320 = vunpack.c.l.b16 %v4253
      %v4321 = vunpack.c.l.b16 %v4254
      %v4322 = vunpack.c.l.b16 %v4255
      %v4323 = vunpack.c.l.b16 %v4256
      %v4324 = vunpack.c.l.b16 %v4257
      %v4325 = vunpack.c.l.b16 %v4258
      %v4326 = vunpack.c.l.b16 %v4259
      %v4327 = vunpack.c.l.b16 %v4260
      %v4328 = vunpack.c.l.b16 %v4261
      %v4329 = vunpack.c.l.b16 %v4262
      %v4330 = vunpack.c.l.b16 %v4263
      %v4331 = vunpack.c.l.b16 %v4264
      %v4332 = vunpack.c.l.b16 %v4265
      %v4333 = vunpack.c.l.b16 %v4266
      %v4334 = vunpack.c.l.b16 %v4267
      %v4335 = vunpack.c.l.b16 %v4268
      %v4336 = vunpack.c.l.b16 %v4269
      %v4337 = vunpack.c.l.b16 %v4270
      %v4338 = vunpack.c.l.b16 %v4271
      %v4339 = vunpack.c.l.b16 %v4272
      %v4340 = vunpack.c.l.b16 %v4273
      %v4341 = vunpack.c.l.b16 %v4274
      %v4342 = vunpack.c.l.b16 %v4275
      %v4343 = vunpack.c.l.b16 %v4276
      %v4344 = vunpack.c.l.b16 %v4277
      %v4345 = vunpack.c.l.b16 %v4278
      %v4346 = vunpack.c.l.b16 %v4279
      %v4347 = vunpack.c.l.b16 %v4280
      %v4348 = vunpack.c.l.b16 %v4281
      %v4349 = vpack.c.b16 %v4318, %v4317
      %v4350 = vpack.c.b16 %v4320, %v4319
      %v4351 = vpack.c.b16 %v4322, %v4321
      %v4352 = vpack.c.b16 %v4324, %v4323
      %v4353 = vpack.c.b16 %v4326, %v4325
      %v4354 = vpack.c.b16 %v4328, %v4327
      %v4355 = vpack.c.b16 %v4330, %v4329
      %v4356 = vpack.c.b16 %v4332, %v4331
      %v4357 = vpack.c.b16 %v4334, %v4333
      %v4358 = vpack.c.b16 %v4336, %v4335
      %v4359 = vpack.c.b16 %v4338, %v4337
      %v4360 = vpack.c.b16 %v4340, %v4339
      %v4361 = vpack.c.b16 %v4342, %v4341
      %v4362 = vpack.c.b16 %v4344, %v4343
      %v4363 = vpack.c.b16 %v4346, %v4345
      %v4364 = vpack.c.b16 %v4348, %v4347
      %v4367 = vunpack.c.l.b16 %v4283
      %v4368 = vunpack.c.l.b16 %v4284
      %v4369 = vpack.c.b16 %v4368, %v4367
      %v4371 = vsel %vm1411, %v4349, 0
      %v4374 = vsel %vm1411, %v4350, 0
      %v4377 = vsel %vm1411, %v4351, 0
      %v4380 = vsel %vm1411, %v4352, 0
      %v4383 = vsel %vm1411, %v4353, 0
      %v4386 = vsel %vm1411, %v4354, 0
      %v4389 = vsel %vm1411, %v4355, 0
      %v4392 = vsel %vm1411, %v4356, 0
      %v4395 = vsel %vm1411, %v4357, 0
      %v4398 = vsel %vm1411, %v4358, 0
      %v4401 = vsel %vm1411, %v4359, 0
      %v4404 = vsel %vm1411, %v4360, 0
      %v4407 = vsel %vm1411, %v4361, 0
      %v4410 = vsel %vm1411, %v4362, 0
      %v4413 = vsel %vm1411, %v4363, 0
      %v4416 = vsel %vm1411, %v4364, 0
      %v4419 = vsel %vm1460, %v4369, 0
      %4421 = vmatprep.subr.bf16.mxu0 0
      %4422 = vmatpush1.bf16.msra.mxu0 0
      %4423 = vmatprep.subr.bf16.mxu0 0
      %4424 = vmatpush1.bf16.msra.mxu0 0
      %4425 = vmatprep.subr.bf16.mxu0 0
      %4426 = vmatpush1.bf16.msra.mxu0 0
      %4427 = vmatprep.subr.bf16.mxu0 0
      %4428 = vmatpush1.bf16.msra.mxu0 0
      %4429 = vmatprep.subr.bf16.mxu0 0
      %4430 = vmatpush1.bf16.msra.mxu0 0
      %4431 = vmatprep.subr.bf16.mxu0 0
      %4432 = vmatpush1.bf16.msra.mxu0 0
      %4433 = vmatprep.subr.bf16.mxu0 0
      %4434 = vmatpush1.bf16.msra.mxu0 0
      %4435 = vmatprep.subr.bf16.mxu0 0
      %4436 = vmatpush1.bf16.msra.mxu0 %v4419
      %4437 = vmatprep.subr.bf16.mxu0 0
      %4438 = vmatpush2.bf16.msra.mxu0 0
      %4439 = vmatprep.subr.bf16.mxu0 0
      %4440 = vmatpush2.bf16.msra.mxu0 0
      %4441 = vmatprep.subr.bf16.mxu0 0
      %4442 = vmatpush2.bf16.msra.mxu0 0
      %4443 = vmatprep.subr.bf16.mxu0 0
      %4444 = vmatpush2.bf16.msra.mxu0 0
      %4445 = vmatprep.subr.bf16.mxu0 0
      %4446 = vmatpush2.bf16.msra.mxu0 0
      %4447 = vmatprep.subr.bf16.mxu0 0
      %4448 = vmatpush2.bf16.msra.mxu0 0
      %4449 = vmatprep.subr.bf16.mxu0 0
      %4450 = vmatpush2.bf16.msra.mxu0 0
      %4451 = vmatprep.subr.bf16.mxu0 0
      %4452 = vmatpush2.bf16.msra.mxu0 0
      %4453 = vmatprep.mubr.bf16.mxu0 0
      %4454 = vmatmul.mubr.bf16.gmra.mxu0 %v4371
      %v4455 = vpop.f32.mrf.mxu0
      %v4456 = vadd.f32 0.0, %v4455
      %v4457 = vpop.f32.mrf.mxu0
      %v4458 = vpop.f32.mrf.mxu0
      %v4459 = vadd.f32 0.0, %v4458
      %v4460 = vpop.f32.mrf.mxu0
      %4461 = vmatprep.mubr.bf16.mxu0 0
      %4462 = vmatmul.mubr.bf16.gmra.mxu0 %v4374
      %v4463 = vpop.f32.mrf.mxu0
      %v4464 = vadd.f32 0.0, %v4463
      %v4465 = vpop.f32.mrf.mxu0
      %v4466 = vpop.f32.mrf.mxu0
      %v4467 = vadd.f32 0.0, %v4466
      %v4468 = vpop.f32.mrf.mxu0
      %4469 = vmatprep.mubr.bf16.mxu0 0
      %4470 = vmatmul.mubr.bf16.gmra.mxu0 %v4377
      %v4471 = vpop.f32.mrf.mxu0
      %v4472 = vadd.f32 0.0, %v4471
      %v4473 = vpop.f32.mrf.mxu0
      %v4474 = vpop.f32.mrf.mxu0
      %v4475 = vadd.f32 0.0, %v4474
      %v4476 = vpop.f32.mrf.mxu0
      %4477 = vmatprep.mubr.bf16.mxu0 0
      %4478 = vmatmul.mubr.bf16.gmra.mxu0 %v4380
      %v4479 = vpop.f32.mrf.mxu0
      %v4480 = vadd.f32 0.0, %v4479
      %v4481 = vpop.f32.mrf.mxu0
      %v4482 = vpop.f32.mrf.mxu0
      %v4483 = vadd.f32 0.0, %v4482
      %v4484 = vpop.f32.mrf.mxu0
      %4485 = vmatprep.mubr.bf16.mxu0 0
      %4486 = vmatmul.mubr.bf16.gmra.mxu0 %v4383
      %v4487 = vpop.f32.mrf.mxu0
      %v4488 = vadd.f32 0.0, %v4487
      %v4489 = vpop.f32.mrf.mxu0
      %v4490 = vpop.f32.mrf.mxu0
      %v4491 = vadd.f32 0.0, %v4490
      %v4492 = vpop.f32.mrf.mxu0
      %4493 = vmatprep.mubr.bf16.mxu0 0
      %4494 = vmatmul.mubr.bf16.gmra.mxu0 %v4386
      %v4495 = vpop.f32.mrf.mxu0
      %v4496 = vadd.f32 0.0, %v4495
      %v4497 = vpop.f32.mrf.mxu0
      %v4498 = vpop.f32.mrf.mxu0
      %v4499 = vadd.f32 0.0, %v4498
      %v4500 = vpop.f32.mrf.mxu0
      %4501 = vmatprep.mubr.bf16.mxu0 0
      %4502 = vmatmul.mubr.bf16.gmra.mxu0 %v4389
      %v4503 = vpop.f32.mrf.mxu0
      %v4504 = vadd.f32 0.0, %v4503
      %v4505 = vpop.f32.mrf.mxu0
      %v4506 = vpop.f32.mrf.mxu0
      %v4507 = vadd.f32 0.0, %v4506
      %v4508 = vpop.f32.mrf.mxu0
      %4509 = vmatprep.mubr.bf16.mxu0 0
      %4510 = vmatmul.mubr.bf16.gmra.mxu0 %v4392
      %v4511 = vpop.f32.mrf.mxu0
      %v4512 = vadd.f32 0.0, %v4511
      %v4513 = vpop.f32.mrf.mxu0
      %v4514 = vpop.f32.mrf.mxu0
      %v4515 = vadd.f32 0.0, %v4514
      %v4516 = vpop.f32.mrf.mxu0
      %4517 = vmatprep.mubr.bf16.mxu0 0
      %4518 = vmatmul.mubr.bf16.gmra.mxu0 %v4395
      %v4519 = vpop.f32.mrf.mxu0
      %v4520 = vadd.f32 0.0, %v4519
      %v4521 = vpop.f32.mrf.mxu0
      %v4522 = vpop.f32.mrf.mxu0
      %v4523 = vadd.f32 0.0, %v4522
      %v4524 = vpop.f32.mrf.mxu0
      %4525 = vmatprep.mubr.bf16.mxu0 0
      %4526 = vmatmul.mubr.bf16.gmra.mxu0 %v4398
      %v4527 = vpop.f32.mrf.mxu0
      %v4528 = vadd.f32 0.0, %v4527
      %v4529 = vpop.f32.mrf.mxu0
      %v4530 = vpop.f32.mrf.mxu0
      %v4531 = vadd.f32 0.0, %v4530
      %v4532 = vpop.f32.mrf.mxu0
      %4533 = vmatprep.mubr.bf16.mxu0 0
      %4534 = vmatmul.mubr.bf16.gmra.mxu0 %v4401
      %v4535 = vpop.f32.mrf.mxu0
      %v4536 = vadd.f32 0.0, %v4535
      %v4537 = vpop.f32.mrf.mxu0
      %v4538 = vpop.f32.mrf.mxu0
      %v4539 = vadd.f32 0.0, %v4538
      %v4540 = vpop.f32.mrf.mxu0
      %4541 = vmatprep.mubr.bf16.mxu0 0
      %4542 = vmatmul.mubr.bf16.gmra.mxu0 %v4404
      %v4543 = vpop.f32.mrf.mxu0
      %v4544 = vadd.f32 0.0, %v4543
      %v4545 = vpop.f32.mrf.mxu0
      %v4546 = vpop.f32.mrf.mxu0
      %v4547 = vadd.f32 0.0, %v4546
      %v4548 = vpop.f32.mrf.mxu0
      %4549 = vmatprep.mubr.bf16.mxu0 0
      %4550 = vmatmul.mubr.bf16.gmra.mxu0 %v4407
      %v4551 = vpop.f32.mrf.mxu0
      %v4552 = vadd.f32 0.0, %v4551
      %v4553 = vpop.f32.mrf.mxu0
      %v4554 = vpop.f32.mrf.mxu0
      %v4555 = vadd.f32 0.0, %v4554
      %v4556 = vpop.f32.mrf.mxu0
      %4557 = vmatprep.mubr.bf16.mxu0 0
      %4558 = vmatmul.mubr.bf16.gmra.mxu0 %v4410
      %v4559 = vpop.f32.mrf.mxu0
      %v4560 = vadd.f32 0.0, %v4559
      %v4561 = vpop.f32.mrf.mxu0
      %v4562 = vpop.f32.mrf.mxu0
      %v4563 = vadd.f32 0.0, %v4562
      %v4564 = vpop.f32.mrf.mxu0
      %4565 = vmatprep.mubr.bf16.mxu0 0
      %4566 = vmatmul.mubr.bf16.gmra.mxu0 %v4413
      %v4567 = vpop.f32.mrf.mxu0
      %v4568 = vadd.f32 0.0, %v4567
      %v4569 = vpop.f32.mrf.mxu0
      %v4570 = vpop.f32.mrf.mxu0
      %v4571 = vadd.f32 0.0, %v4570
      %v4572 = vpop.f32.mrf.mxu0
      %4573 = vmatprep.mubr.bf16.mxu0 0
      %4574 = vmatmul.mubr.bf16.gmra.mxu0 %v4416
      %v4575 = vpop.f32.mrf.mxu0
      %v4576 = vadd.f32 0.0, %v4575
      %v4577 = vpop.f32.mrf.mxu0
      %v4578 = vpop.f32.mrf.mxu0
      %v4579 = vadd.f32 0.0, %v4578
      %v4580 = vpop.f32.mrf.mxu0
      %4581 = vdwg.mxu0
      %v4582 = vld [vmem:[#allocation3] sm:$0xff]
      %v4583 = vld [vmem:[#allocation3 + $0x8] sm:$0xff]
      %v4584 = vld [vmem:[#allocation3 + $0x10] sm:$0xff]
      %v4585 = vld [vmem:[#allocation3 + $0x18] sm:$0xff]
      %v4586 = vld [vmem:[#allocation3 + $0x20] sm:$0xff]
      %v4587 = vld [vmem:[#allocation3 + $0x28] sm:$0xff]
      %v4588 = vld [vmem:[#allocation3 + $0x30] sm:$0xff]
      %v4589 = vld [vmem:[#allocation3 + $0x38] sm:$0xff]
      %v4590 = vld [vmem:[#allocation3 + $0x40] sm:$0xff]
      %v4591 = vld [vmem:[#allocation3 + $0x48] sm:$0xff]
      %v4592 = vld [vmem:[#allocation3 + $0x50] sm:$0xff]
      %v4593 = vld [vmem:[#allocation3 + $0x58] sm:$0xff]
      %v4594 = vld [vmem:[#allocation3 + $0x60] sm:$0xff]
      %v4595 = vld [vmem:[#allocation3 + $0x68] sm:$0xff]
      %v4596 = vld [vmem:[#allocation3 + $0x70] sm:$0xff]
      %v4597 = vld [vmem:[#allocation3 + $0x78] sm:$0xff]
      %v4598 = vld [vmem:[#allocation3 + $0x80] sm:$0xff]
      %v4599 = vld [vmem:[#allocation3 + $0x88] sm:$0xff]
      %v4600 = vld [vmem:[#allocation3 + $0x90] sm:$0xff]
      %v4601 = vld [vmem:[#allocation3 + $0x98] sm:$0xff]
      %v4602 = vld [vmem:[#allocation3 + $0xa0] sm:$0xff]
      %v4603 = vld [vmem:[#allocation3 + $0xa8] sm:$0xff]
      %v4604 = vld [vmem:[#allocation3 + $0xb0] sm:$0xff]
      %v4605 = vld [vmem:[#allocation3 + $0xb8] sm:$0xff]
      %v4606 = vld [vmem:[#allocation3 + $0xc0] sm:$0xff]
      %v4607 = vld [vmem:[#allocation3 + $0xc8] sm:$0xff]
      %v4608 = vld [vmem:[#allocation3 + $0xd0] sm:$0xff]
      %v4609 = vld [vmem:[#allocation3 + $0xd8] sm:$0xff]
      %v4610 = vld [vmem:[#allocation3 + $0xe0] sm:$0xff]
      %v4611 = vld [vmem:[#allocation3 + $0xe8] sm:$0xff]
      %v4612 = vld [vmem:[#allocation3 + $0xf0] sm:$0xff]
      %v4613 = vld [vmem:[#allocation3 + $0xf8] sm:$0xff]
      %v4614 = vadd.f32 %v4582, %v4456
      %v4615 = vadd.f32 %v4583, %v4459
      %v4616 = vadd.f32 %v4584, %v4464
      %v4617 = vadd.f32 %v4585, %v4467
      %v4618 = vadd.f32 %v4586, %v4472
      %v4619 = vadd.f32 %v4587, %v4475
      %v4620 = vadd.f32 %v4588, %v4480
      %v4621 = vadd.f32 %v4589, %v4483
      %v4622 = vadd.f32 %v4590, %v4488
      %v4623 = vadd.f32 %v4591, %v4491
      %v4624 = vadd.f32 %v4592, %v4496
      %v4625 = vadd.f32 %v4593, %v4499
      %v4626 = vadd.f32 %v4594, %v4504
      %v4627 = vadd.f32 %v4595, %v4507
      %v4628 = vadd.f32 %v4596, %v4512
      %v4629 = vadd.f32 %v4597, %v4515
      %v4630 = vadd.f32 %v4598, %v4520
      %v4631 = vadd.f32 %v4599, %v4523
      %v4632 = vadd.f32 %v4600, %v4528
      %v4633 = vadd.f32 %v4601, %v4531
      %v4634 = vadd.f32 %v4602, %v4536
      %v4635 = vadd.f32 %v4603, %v4539
      %v4636 = vadd.f32 %v4604, %v4544
      %v4637 = vadd.f32 %v4605, %v4547
      %v4638 = vadd.f32 %v4606, %v4552
      %v4639 = vadd.f32 %v4607, %v4555
      %v4640 = vadd.f32 %v4608, %v4560
      %v4641 = vadd.f32 %v4609, %v4563
      %v4642 = vadd.f32 %v4610, %v4568
      %v4643 = vadd.f32 %v4611, %v4571
      %v4644 = vadd.f32 %v4612, %v4576
      %v4645 = vadd.f32 %v4613, %v4579
      %4646 = vst.msk [vmem:[#allocation3] sm:$0xff] %vm1625, %v4614
      %4647 = vst.msk [vmem:[#allocation3 + $0x8] sm:$0xff] %vm1625, %v4615
      %4648 = vst.msk [vmem:[#allocation3 + $0x10] sm:$0xff] %vm1625, %v4616
      %4649 = vst.msk [vmem:[#allocation3 + $0x18] sm:$0xff] %vm1625, %v4617
      %4650 = vst.msk [vmem:[#allocation3 + $0x20] sm:$0xff] %vm1625, %v4618
      %4651 = vst.msk [vmem:[#allocation3 + $0x28] sm:$0xff] %vm1625, %v4619
      %4652 = vst.msk [vmem:[#allocation3 + $0x30] sm:$0xff] %vm1625, %v4620
      %4653 = vst.msk [vmem:[#allocation3 + $0x38] sm:$0xff] %vm1625, %v4621
      %4654 = vst.msk [vmem:[#allocation3 + $0x40] sm:$0xff] %vm1625, %v4622
      %4655 = vst.msk [vmem:[#allocation3 + $0x48] sm:$0xff] %vm1625, %v4623
      %4656 = vst.msk [vmem:[#allocation3 + $0x50] sm:$0xff] %vm1625, %v4624
      %4657 = vst.msk [vmem:[#allocation3 + $0x58] sm:$0xff] %vm1625, %v4625
      %4658 = vst.msk [vmem:[#allocation3 + $0x60] sm:$0xff] %vm1625, %v4626
      %4659 = vst.msk [vmem:[#allocation3 + $0x68] sm:$0xff] %vm1625, %v4627
      %4660 = vst.msk [vmem:[#allocation3 + $0x70] sm:$0xff] %vm1625, %v4628
      %4661 = vst.msk [vmem:[#allocation3 + $0x78] sm:$0xff] %vm1625, %v4629
      %4662 = vst.msk [vmem:[#allocation3 + $0x80] sm:$0xff] %vm1625, %v4630
      %4663 = vst.msk [vmem:[#allocation3 + $0x88] sm:$0xff] %vm1625, %v4631
      %4664 = vst.msk [vmem:[#allocation3 + $0x90] sm:$0xff] %vm1625, %v4632
      %4665 = vst.msk [vmem:[#allocation3 + $0x98] sm:$0xff] %vm1625, %v4633
      %4666 = vst.msk [vmem:[#allocation3 + $0xa0] sm:$0xff] %vm1625, %v4634
      %4667 = vst.msk [vmem:[#allocation3 + $0xa8] sm:$0xff] %vm1625, %v4635
      %4668 = vst.msk [vmem:[#allocation3 + $0xb0] sm:$0xff] %vm1625, %v4636
      %4669 = vst.msk [vmem:[#allocation3 + $0xb8] sm:$0xff] %vm1625, %v4637
      %4670 = vst.msk [vmem:[#allocation3 + $0xc0] sm:$0xff] %vm1625, %v4638
      %4671 = vst.msk [vmem:[#allocation3 + $0xc8] sm:$0xff] %vm1625, %v4639
      %4672 = vst.msk [vmem:[#allocation3 + $0xd0] sm:$0xff] %vm1625, %v4640
      %4673 = vst.msk [vmem:[#allocation3 + $0xd8] sm:$0xff] %vm1625, %v4641
      %4674 = vst.msk [vmem:[#allocation3 + $0xe0] sm:$0xff] %vm1625, %v4642
      %4675 = vst.msk [vmem:[#allocation3 + $0xe8] sm:$0xff] %vm1625, %v4643
      %4676 = vst.msk [vmem:[#allocation3 + $0xf0] sm:$0xff] %vm1625, %v4644
      %4677 = vst.msk [vmem:[#allocation3 + $0xf8] sm:$0xff] %vm1625, %v4645
      %v4678 = vld [vmem:[%s1280] sm:$0xf]
      %v4679 = vld [vmem:[%s1280 + $0x4] sm:$0xf]
      %v4680 = vld [vmem:[%s1280 + $0x8] sm:$0xf]
      %v4681 = vld [vmem:[%s1280 + $0xc] sm:$0xf]
      %v4682 = vld [vmem:[%s1280 + $0x10] sm:$0xf]
      %v4683 = vld [vmem:[%s1280 + $0x14] sm:$0xf]
      %v4684 = vld [vmem:[%s1280 + $0x18] sm:$0xf]
      %v4685 = vld [vmem:[%s1280 + $0x1c] sm:$0xf]
      %v4686 = vld [vmem:[%s1280 + $0x20] sm:$0xf]
      %v4687 = vld [vmem:[%s1280 + $0x24] sm:$0xf]
      %v4688 = vld [vmem:[%s1280 + $0x28] sm:$0xf]
      %v4689 = vld [vmem:[%s1280 + $0x2c] sm:$0xf]
      %v4690 = vld [vmem:[%s1280 + $0x30] sm:$0xf]
      %v4691 = vld [vmem:[%s1280 + $0x34] sm:$0xf]
      %v4692 = vld [vmem:[%s1280 + $0x38] sm:$0xf]
      %v4693 = vld [vmem:[%s1280 + $0x3c] sm:$0xf]
      %v4694 = vld [vmem:[%s1280 + $0x40] sm:$0xf]
      %v4695 = vld [vmem:[%s1280 + $0x44] sm:$0xf]
      %v4696 = vld [vmem:[%s1280 + $0x48] sm:$0xf]
      %v4697 = vld [vmem:[%s1280 + $0x4c] sm:$0xf]
      %v4698 = vld [vmem:[%s1280 + $0x50] sm:$0xf]
      %v4699 = vld [vmem:[%s1280 + $0x54] sm:$0xf]
      %v4700 = vld [vmem:[%s1280 + $0x58] sm:$0xf]
      %v4701 = vld [vmem:[%s1280 + $0x5c] sm:$0xf]
      %v4702 = vld [vmem:[%s1280 + $0x60] sm:$0xf]
      %v4703 = vld [vmem:[%s1280 + $0x64] sm:$0xf]
      %v4704 = vld [vmem:[%s1280 + $0x68] sm:$0xf]
      %v4705 = vld [vmem:[%s1280 + $0x6c] sm:$0xf]
      %v4706 = vld [vmem:[%s1280 + $0x70] sm:$0xf]
      %v4707 = vld [vmem:[%s1280 + $0x74] sm:$0xf]
      %v4708 = vld [vmem:[%s1280 + $0x78] sm:$0xf]
      %v4709 = vld [vmem:[%s1280 + $0x7c] sm:$0xf]
      %s4710 = scalar_lea.vmem %s2, 16
      %v4711 = vld [vmem:[%s4710] sm:$0xf]
      %v4712 = vld [vmem:[%s4710 + $0x4] sm:$0x3]
      %v4745 = vunpack.c.l.b16 %v4678
      %v4746 = vunpack.c.l.b16 %v4679
      %v4747 = vunpack.c.l.b16 %v4680
      %v4748 = vunpack.c.l.b16 %v4681
      %v4749 = vunpack.c.l.b16 %v4682
      %v4750 = vunpack.c.l.b16 %v4683
      %v4751 = vunpack.c.l.b16 %v4684
      %v4752 = vunpack.c.l.b16 %v4685
      %v4753 = vunpack.c.l.b16 %v4686
      %v4754 = vunpack.c.l.b16 %v4687
      %v4755 = vunpack.c.l.b16 %v4688
      %v4756 = vunpack.c.l.b16 %v4689
      %v4757 = vunpack.c.l.b16 %v4690
      %v4758 = vunpack.c.l.b16 %v4691
      %v4759 = vunpack.c.l.b16 %v4692
      %v4760 = vunpack.c.l.b16 %v4693
      %v4761 = vunpack.c.l.b16 %v4694
      %v4762 = vunpack.c.l.b16 %v4695
      %v4763 = vunpack.c.l.b16 %v4696
      %v4764 = vunpack.c.l.b16 %v4697
      %v4765 = vunpack.c.l.b16 %v4698
      %v4766 = vunpack.c.l.b16 %v4699
      %v4767 = vunpack.c.l.b16 %v4700
      %v4768 = vunpack.c.l.b16 %v4701
      %v4769 = vunpack.c.l.b16 %v4702
      %v4770 = vunpack.c.l.b16 %v4703
      %v4771 = vunpack.c.l.b16 %v4704
      %v4772 = vunpack.c.l.b16 %v4705
      %v4773 = vunpack.c.l.b16 %v4706
      %v4774 = vunpack.c.l.b16 %v4707
      %v4775 = vunpack.c.l.b16 %v4708
      %v4776 = vunpack.c.l.b16 %v4709
      %v4777 = vpack.c.b16 %v4746, %v4745
      %v4778 = vpack.c.b16 %v4748, %v4747
      %v4779 = vpack.c.b16 %v4750, %v4749
      %v4780 = vpack.c.b16 %v4752, %v4751
      %v4781 = vpack.c.b16 %v4754, %v4753
      %v4782 = vpack.c.b16 %v4756, %v4755
      %v4783 = vpack.c.b16 %v4758, %v4757
      %v4784 = vpack.c.b16 %v4760, %v4759
      %v4785 = vpack.c.b16 %v4762, %v4761
      %v4786 = vpack.c.b16 %v4764, %v4763
      %v4787 = vpack.c.b16 %v4766, %v4765
      %v4788 = vpack.c.b16 %v4768, %v4767
      %v4789 = vpack.c.b16 %v4770, %v4769
      %v4790 = vpack.c.b16 %v4772, %v4771
      %v4791 = vpack.c.b16 %v4774, %v4773
      %v4792 = vpack.c.b16 %v4776, %v4775
      %v4795 = vunpack.c.l.b16 %v4711
      %v4796 = vunpack.c.l.b16 %v4712
      %v4797 = vpack.c.b16 %v4796, %v4795
      %v4799 = vsel %vm1411, %v4777, 0
      %v4802 = vsel %vm1411, %v4778, 0
      %v4805 = vsel %vm1411, %v4779, 0
      %v4808 = vsel %vm1411, %v4780, 0
      %v4811 = vsel %vm1411, %v4781, 0
      %v4814 = vsel %vm1411, %v4782, 0
      %v4817 = vsel %vm1411, %v4783, 0
      %v4820 = vsel %vm1411, %v4784, 0
      %v4823 = vsel %vm1411, %v4785, 0
      %v4826 = vsel %vm1411, %v4786, 0
      %v4829 = vsel %vm1411, %v4787, 0
      %v4832 = vsel %vm1411, %v4788, 0
      %v4835 = vsel %vm1411, %v4789, 0
      %v4838 = vsel %vm1411, %v4790, 0
      %v4841 = vsel %vm1411, %v4791, 0
      %v4844 = vsel %vm1411, %v4792, 0
      %v4847 = vsel %vm1460, %v4797, 0
      %4849 = vmatprep.subr.bf16.mxu0 0
      %4850 = vmatpush1.bf16.msra.mxu0 0
      %4851 = vmatprep.subr.bf16.mxu0 0
      %4852 = vmatpush1.bf16.msra.mxu0 0
      %4853 = vmatprep.subr.bf16.mxu0 0
      %4854 = vmatpush1.bf16.msra.mxu0 0
      %4855 = vmatprep.subr.bf16.mxu0 0
      %4856 = vmatpush1.bf16.msra.mxu0 0
      %4857 = vmatprep.subr.bf16.mxu0 0
      %4858 = vmatpush1.bf16.msra.mxu0 0
      %4859 = vmatprep.subr.bf16.mxu0 0
      %4860 = vmatpush1.bf16.msra.mxu0 0
      %4861 = vmatprep.subr.bf16.mxu0 0
      %4862 = vmatpush1.bf16.msra.mxu0 0
      %4863 = vmatprep.subr.bf16.mxu0 0
      %4864 = vmatpush1.bf16.msra.mxu0 %v4847
      %4865 = vmatprep.subr.bf16.mxu0 0
      %4866 = vmatpush2.bf16.msra.mxu0 0
      %4867 = vmatprep.subr.bf16.mxu0 0
      %4868 = vmatpush2.bf16.msra.mxu0 0
      %4869 = vmatprep.subr.bf16.mxu0 0
      %4870 = vmatpush2.bf16.msra.mxu0 0
      %4871 = vmatprep.subr.bf16.mxu0 0
      %4872 = vmatpush2.bf16.msra.mxu0 0
      %4873 = vmatprep.subr.bf16.mxu0 0
      %4874 = vmatpush2.bf16.msra.mxu0 0
      %4875 = vmatprep.subr.bf16.mxu0 0
      %4876 = vmatpush2.bf16.msra.mxu0 0
      %4877 = vmatprep.subr.bf16.mxu0 0
      %4878 = vmatpush2.bf16.msra.mxu0 0
      %4879 = vmatprep.subr.bf16.mxu0 0
      %4880 = vmatpush2.bf16.msra.mxu0 0
      %4881 = vmatprep.mubr.bf16.mxu0 0
      %4882 = vmatmul.mubr.bf16.gmra.mxu0 %v4799
      %v4883 = vpop.f32.mrf.mxu0
      %v4884 = vadd.f32 0.0, %v4883
      %v4885 = vpop.f32.mrf.mxu0
      %v4886 = vpop.f32.mrf.mxu0
      %v4887 = vadd.f32 0.0, %v4886
      %v4888 = vpop.f32.mrf.mxu0
      %4889 = vmatprep.mubr.bf16.mxu0 0
      %4890 = vmatmul.mubr.bf16.gmra.mxu0 %v4802
      %v4891 = vpop.f32.mrf.mxu0
      %v4892 = vadd.f32 0.0, %v4891
      %v4893 = vpop.f32.mrf.mxu0
      %v4894 = vpop.f32.mrf.mxu0
      %v4895 = vadd.f32 0.0, %v4894
      %v4896 = vpop.f32.mrf.mxu0
      %4897 = vmatprep.mubr.bf16.mxu0 0
      %4898 = vmatmul.mubr.bf16.gmra.mxu0 %v4805
      %v4899 = vpop.f32.mrf.mxu0
      %v4900 = vadd.f32 0.0, %v4899
      %v4901 = vpop.f32.mrf.mxu0
      %v4902 = vpop.f32.mrf.mxu0
      %v4903 = vadd.f32 0.0, %v4902
      %v4904 = vpop.f32.mrf.mxu0
      %4905 = vmatprep.mubr.bf16.mxu0 0
      %4906 = vmatmul.mubr.bf16.gmra.mxu0 %v4808
      %v4907 = vpop.f32.mrf.mxu0
      %v4908 = vadd.f32 0.0, %v4907
      %v4909 = vpop.f32.mrf.mxu0
      %v4910 = vpop.f32.mrf.mxu0
      %v4911 = vadd.f32 0.0, %v4910
      %v4912 = vpop.f32.mrf.mxu0
      %4913 = vmatprep.mubr.bf16.mxu0 0
      %4914 = vmatmul.mubr.bf16.gmra.mxu0 %v4811
      %v4915 = vpop.f32.mrf.mxu0
      %v4916 = vadd.f32 0.0, %v4915
      %v4917 = vpop.f32.mrf.mxu0
      %v4918 = vpop.f32.mrf.mxu0
      %v4919 = vadd.f32 0.0, %v4918
      %v4920 = vpop.f32.mrf.mxu0
      %4921 = vmatprep.mubr.bf16.mxu0 0
      %4922 = vmatmul.mubr.bf16.gmra.mxu0 %v4814
      %v4923 = vpop.f32.mrf.mxu0
      %v4924 = vadd.f32 0.0, %v4923
      %v4925 = vpop.f32.mrf.mxu0
      %v4926 = vpop.f32.mrf.mxu0
      %v4927 = vadd.f32 0.0, %v4926
      %v4928 = vpop.f32.mrf.mxu0
      %4929 = vmatprep.mubr.bf16.mxu0 0
      %4930 = vmatmul.mubr.bf16.gmra.mxu0 %v4817
      %v4931 = vpop.f32.mrf.mxu0
      %v4932 = vadd.f32 0.0, %v4931
      %v4933 = vpop.f32.mrf.mxu0
      %v4934 = vpop.f32.mrf.mxu0
      %v4935 = vadd.f32 0.0, %v4934
      %v4936 = vpop.f32.mrf.mxu0
      %4937 = vmatprep.mubr.bf16.mxu0 0
      %4938 = vmatmul.mubr.bf16.gmra.mxu0 %v4820
      %v4939 = vpop.f32.mrf.mxu0
      %v4940 = vadd.f32 0.0, %v4939
      %v4941 = vpop.f32.mrf.mxu0
      %v4942 = vpop.f32.mrf.mxu0
      %v4943 = vadd.f32 0.0, %v4942
      %v4944 = vpop.f32.mrf.mxu0
      %4945 = vmatprep.mubr.bf16.mxu0 0
      %4946 = vmatmul.mubr.bf16.gmra.mxu0 %v4823
      %v4947 = vpop.f32.mrf.mxu0
      %v4948 = vadd.f32 0.0, %v4947
      %v4949 = vpop.f32.mrf.mxu0
      %v4950 = vpop.f32.mrf.mxu0
      %v4951 = vadd.f32 0.0, %v4950
      %v4952 = vpop.f32.mrf.mxu0
      %4953 = vmatprep.mubr.bf16.mxu0 0
      %4954 = vmatmul.mubr.bf16.gmra.mxu0 %v4826
      %v4955 = vpop.f32.mrf.mxu0
      %v4956 = vadd.f32 0.0, %v4955
      %v4957 = vpop.f32.mrf.mxu0
      %v4958 = vpop.f32.mrf.mxu0
      %v4959 = vadd.f32 0.0, %v4958
      %v4960 = vpop.f32.mrf.mxu0
      %4961 = vmatprep.mubr.bf16.mxu0 0
      %4962 = vmatmul.mubr.bf16.gmra.mxu0 %v4829
      %v4963 = vpop.f32.mrf.mxu0
      %v4964 = vadd.f32 0.0, %v4963
      %v4965 = vpop.f32.mrf.mxu0
      %v4966 = vpop.f32.mrf.mxu0
      %v4967 = vadd.f32 0.0, %v4966
      %v4968 = vpop.f32.mrf.mxu0
      %4969 = vmatprep.mubr.bf16.mxu0 0
      %4970 = vmatmul.mubr.bf16.gmra.mxu0 %v4832
      %v4971 = vpop.f32.mrf.mxu0
      %v4972 = vadd.f32 0.0, %v4971
      %v4973 = vpop.f32.mrf.mxu0
      %v4974 = vpop.f32.mrf.mxu0
      %v4975 = vadd.f32 0.0, %v4974
      %v4976 = vpop.f32.mrf.mxu0
      %4977 = vmatprep.mubr.bf16.mxu0 0
      %4978 = vmatmul.mubr.bf16.gmra.mxu0 %v4835
      %v4979 = vpop.f32.mrf.mxu0
      %v4980 = vadd.f32 0.0, %v4979
      %v4981 = vpop.f32.mrf.mxu0
      %v4982 = vpop.f32.mrf.mxu0
      %v4983 = vadd.f32 0.0, %v4982
      %v4984 = vpop.f32.mrf.mxu0
      %4985 = vmatprep.mubr.bf16.mxu0 0
      %4986 = vmatmul.mubr.bf16.gmra.mxu0 %v4838
      %v4987 = vpop.f32.mrf.mxu0
      %v4988 = vadd.f32 0.0, %v4987
      %v4989 = vpop.f32.mrf.mxu0
      %v4990 = vpop.f32.mrf.mxu0
      %v4991 = vadd.f32 0.0, %v4990
      %v4992 = vpop.f32.mrf.mxu0
      %4993 = vmatprep.mubr.bf16.mxu0 0
      %4994 = vmatmul.mubr.bf16.gmra.mxu0 %v4841
      %v4995 = vpop.f32.mrf.mxu0
      %v4996 = vadd.f32 0.0, %v4995
      %v4997 = vpop.f32.mrf.mxu0
      %v4998 = vpop.f32.mrf.mxu0
      %v4999 = vadd.f32 0.0, %v4998
      %v5000 = vpop.f32.mrf.mxu0
      %5001 = vmatprep.mubr.bf16.mxu0 0
      %5002 = vmatmul.mubr.bf16.gmra.mxu0 %v4844
      %v5003 = vpop.f32.mrf.mxu0
      %v5004 = vadd.f32 0.0, %v5003
      %v5005 = vpop.f32.mrf.mxu0
      %v5006 = vpop.f32.mrf.mxu0
      %v5007 = vadd.f32 0.0, %v5006
      %v5008 = vpop.f32.mrf.mxu0
      %5009 = vdwg.mxu0
      %v5010 = vld [vmem:[#allocation3] sm:$0xff]
      %v5011 = vld [vmem:[#allocation3 + $0x8] sm:$0xff]
      %v5012 = vld [vmem:[#allocation3 + $0x10] sm:$0xff]
      %v5013 = vld [vmem:[#allocation3 + $0x18] sm:$0xff]
      %v5014 = vld [vmem:[#allocation3 + $0x20] sm:$0xff]
      %v5015 = vld [vmem:[#allocation3 + $0x28] sm:$0xff]
      %v5016 = vld [vmem:[#allocation3 + $0x30] sm:$0xff]
      %v5017 = vld [vmem:[#allocation3 + $0x38] sm:$0xff]
      %v5018 = vld [vmem:[#allocation3 + $0x40] sm:$0xff]
      %v5019 = vld [vmem:[#allocation3 + $0x48] sm:$0xff]
      %v5020 = vld [vmem:[#allocation3 + $0x50] sm:$0xff]
      %v5021 = vld [vmem:[#allocation3 + $0x58] sm:$0xff]
      %v5022 = vld [vmem:[#allocation3 + $0x60] sm:$0xff]
      %v5023 = vld [vmem:[#allocation3 + $0x68] sm:$0xff]
      %v5024 = vld [vmem:[#allocation3 + $0x70] sm:$0xff]
      %v5025 = vld [vmem:[#allocation3 + $0x78] sm:$0xff]
      %v5026 = vld [vmem:[#allocation3 + $0x80] sm:$0xff]
      %v5027 = vld [vmem:[#allocation3 + $0x88] sm:$0xff]
      %v5028 = vld [vmem:[#allocation3 + $0x90] sm:$0xff]
      %v5029 = vld [vmem:[#allocation3 + $0x98] sm:$0xff]
      %v5030 = vld [vmem:[#allocation3 + $0xa0] sm:$0xff]
      %v5031 = vld [vmem:[#allocation3 + $0xa8] sm:$0xff]
      %v5032 = vld [vmem:[#allocation3 + $0xb0] sm:$0xff]
      %v5033 = vld [vmem:[#allocation3 + $0xb8] sm:$0xff]
      %v5034 = vld [vmem:[#allocation3 + $0xc0] sm:$0xff]
      %v5035 = vld [vmem:[#allocation3 + $0xc8] sm:$0xff]
      %v5036 = vld [vmem:[#allocation3 + $0xd0] sm:$0xff]
      %v5037 = vld [vmem:[#allocation3 + $0xd8] sm:$0xff]
      %v5038 = vld [vmem:[#allocation3 + $0xe0] sm:$0xff]
      %v5039 = vld [vmem:[#allocation3 + $0xe8] sm:$0xff]
      %v5040 = vld [vmem:[#allocation3 + $0xf0] sm:$0xff]
      %v5041 = vld [vmem:[#allocation3 + $0xf8] sm:$0xff]
      %v5042 = vadd.f32 %v5010, %v4884
      %v5043 = vadd.f32 %v5011, %v4887
      %v5044 = vadd.f32 %v5012, %v4892
      %v5045 = vadd.f32 %v5013, %v4895
      %v5046 = vadd.f32 %v5014, %v4900
      %v5047 = vadd.f32 %v5015, %v4903
      %v5048 = vadd.f32 %v5016, %v4908
      %v5049 = vadd.f32 %v5017, %v4911
      %v5050 = vadd.f32 %v5018, %v4916
      %v5051 = vadd.f32 %v5019, %v4919
      %v5052 = vadd.f32 %v5020, %v4924
      %v5053 = vadd.f32 %v5021, %v4927
      %v5054 = vadd.f32 %v5022, %v4932
      %v5055 = vadd.f32 %v5023, %v4935
      %v5056 = vadd.f32 %v5024, %v4940
      %v5057 = vadd.f32 %v5025, %v4943
      %v5058 = vadd.f32 %v5026, %v4948
      %v5059 = vadd.f32 %v5027, %v4951
      %v5060 = vadd.f32 %v5028, %v4956
      %v5061 = vadd.f32 %v5029, %v4959
      %v5062 = vadd.f32 %v5030, %v4964
      %v5063 = vadd.f32 %v5031, %v4967
      %v5064 = vadd.f32 %v5032, %v4972
      %v5065 = vadd.f32 %v5033, %v4975
      %v5066 = vadd.f32 %v5034, %v4980
      %v5067 = vadd.f32 %v5035, %v4983
      %v5068 = vadd.f32 %v5036, %v4988
      %v5069 = vadd.f32 %v5037, %v4991
      %v5070 = vadd.f32 %v5038, %v4996
      %v5071 = vadd.f32 %v5039, %v4999
      %v5072 = vadd.f32 %v5040, %v5004
      %v5073 = vadd.f32 %v5041, %v5007
      %5074 = vst.msk [vmem:[#allocation3] sm:$0xff] %vm1625, %v5042
      %5075 = vst.msk [vmem:[#allocation3 + $0x8] sm:$0xff] %vm1625, %v5043
      %5076 = vst.msk [vmem:[#allocation3 + $0x10] sm:$0xff] %vm1625, %v5044
      %5077 = vst.msk [vmem:[#allocation3 + $0x18] sm:$0xff] %vm1625, %v5045
      %5078 = vst.msk [vmem:[#allocation3 + $0x20] sm:$0xff] %vm1625, %v5046
      %5079 = vst.msk [vmem:[#allocation3 + $0x28] sm:$0xff] %vm1625, %v5047
      %5080 = vst.msk [vmem:[#allocation3 + $0x30] sm:$0xff] %vm1625, %v5048
      %5081 = vst.msk [vmem:[#allocation3 + $0x38] sm:$0xff] %vm1625, %v5049
      %5082 = vst.msk [vmem:[#allocation3 + $0x40] sm:$0xff] %vm1625, %v5050
      %5083 = vst.msk [vmem:[#allocation3 + $0x48] sm:$0xff] %vm1625, %v5051
      %5084 = vst.msk [vmem:[#allocation3 + $0x50] sm:$0xff] %vm1625, %v5052
      %5085 = vst.msk [vmem:[#allocation3 + $0x58] sm:$0xff] %vm1625, %v5053
      %5086 = vst.msk [vmem:[#allocation3 + $0x60] sm:$0xff] %vm1625, %v5054
      %5087 = vst.msk [vmem:[#allocation3 + $0x68] sm:$0xff] %vm1625, %v5055
      %5088 = vst.msk [vmem:[#allocation3 + $0x70] sm:$0xff] %vm1625, %v5056
      %5089 = vst.msk [vmem:[#allocation3 + $0x78] sm:$0xff] %vm1625, %v5057
      %5090 = vst.msk [vmem:[#allocation3 + $0x80] sm:$0xff] %vm1625, %v5058
      %5091 = vst.msk [vmem:[#allocation3 + $0x88] sm:$0xff] %vm1625, %v5059
      %5092 = vst.msk [vmem:[#allocation3 + $0x90] sm:$0xff] %vm1625, %v5060
      %5093 = vst.msk [vmem:[#allocation3 + $0x98] sm:$0xff] %vm1625, %v5061
      %5094 = vst.msk [vmem:[#allocation3 + $0xa0] sm:$0xff] %vm1625, %v5062
      %5095 = vst.msk [vmem:[#allocation3 + $0xa8] sm:$0xff] %vm1625, %v5063
      %5096 = vst.msk [vmem:[#allocation3 + $0xb0] sm:$0xff] %vm1625, %v5064
      %5097 = vst.msk [vmem:[#allocation3 + $0xb8] sm:$0xff] %vm1625, %v5065
      %5098 = vst.msk [vmem:[#allocation3 + $0xc0] sm:$0xff] %vm1625, %v5066
      %5099 = vst.msk [vmem:[#allocation3 + $0xc8] sm:$0xff] %vm1625, %v5067
      %5100 = vst.msk [vmem:[#allocation3 + $0xd0] sm:$0xff] %vm1625, %v5068
      %5101 = vst.msk [vmem:[#allocation3 + $0xd8] sm:$0xff] %vm1625, %v5069
      %5102 = vst.msk [vmem:[#allocation3 + $0xe0] sm:$0xff] %vm1625, %v5070
      %5103 = vst.msk [vmem:[#allocation3 + $0xe8] sm:$0xff] %vm1625, %v5071
      %5104 = vst.msk [vmem:[#allocation3 + $0xf0] sm:$0xff] %vm1625, %v5072
      %5105 = vst.msk [vmem:[#allocation3 + $0xf8] sm:$0xff] %vm1625, %v5073
      %v5106 = vld [vmem:[#allocation3] sm:$0xff]
      %v5107 = vld [vmem:[#allocation3 + $0x8] sm:$0xff]
      %v5108 = vld [vmem:[#allocation3 + $0x10] sm:$0xff]
      %v5109 = vld [vmem:[#allocation3 + $0x18] sm:$0xff]
      %v5110 = vld [vmem:[#allocation3 + $0x20] sm:$0xff]
      %v5111 = vld [vmem:[#allocation3 + $0x28] sm:$0xff]
      %v5112 = vld [vmem:[#allocation3 + $0x30] sm:$0xff]
      %v5113 = vld [vmem:[#allocation3 + $0x38] sm:$0xff]
      %v5114 = vld [vmem:[#allocation3 + $0x40] sm:$0xff]
      %v5115 = vld [vmem:[#allocation3 + $0x48] sm:$0xff]
      %v5116 = vld [vmem:[#allocation3 + $0x50] sm:$0xff]
      %v5117 = vld [vmem:[#allocation3 + $0x58] sm:$0xff]
      %v5118 = vld [vmem:[#allocation3 + $0x60] sm:$0xff]
      %v5119 = vld [vmem:[#allocation3 + $0x68] sm:$0xff]
      %v5120 = vld [vmem:[#allocation3 + $0x70] sm:$0xff]
      %v5121 = vld [vmem:[#allocation3 + $0x78] sm:$0xff]
      %v5122 = vld [vmem:[#allocation3 + $0x80] sm:$0xff]
      %v5123 = vld [vmem:[#allocation3 + $0x88] sm:$0xff]
      %v5124 = vld [vmem:[#allocation3 + $0x90] sm:$0xff]
      %v5125 = vld [vmem:[#allocation3 + $0x98] sm:$0xff]
      %v5126 = vld [vmem:[#allocation3 + $0xa0] sm:$0xff]
      %v5127 = vld [vmem:[#allocation3 + $0xa8] sm:$0xff]
      %v5128 = vld [vmem:[#allocation3 + $0xb0] sm:$0xff]
      %v5129 = vld [vmem:[#allocation3 + $0xb8] sm:$0xff]
      %v5130 = vld [vmem:[#allocation3 + $0xc0] sm:$0xff]
      %v5131 = vld [vmem:[#allocation3 + $0xc8] sm:$0xff]
      %v5132 = vld [vmem:[#allocation3 + $0xd0] sm:$0xff]
      %v5133 = vld [vmem:[#allocation3 + $0xd8] sm:$0xff]
      %v5134 = vld [vmem:[#allocation3 + $0xe0] sm:$0xff]
      %v5135 = vld [vmem:[#allocation3 + $0xe8] sm:$0xff]
      %v5136 = vld [vmem:[#allocation3 + $0xf0] sm:$0xff]
      %v5137 = vld [vmem:[#allocation3 + $0xf8] sm:$0xff]
      %v5138 = vsel %vm1625, %v5106, 0.0
      %v5139 = vsel %vm1625, %v5108, 0.0
      %v5140 = vadd.f32 %v5138, %v5139
      %v5141 = vsel %vm1625, %v5110, 0.0
      %v5142 = vadd.f32 %v5140, %v5141
      %v5143 = vsel %vm1625, %v5112, 0.0
      %v5144 = vadd.f32 %v5142, %v5143
      %v5145 = vsel %vm1625, %v5114, 0.0
      %v5146 = vadd.f32 %v5144, %v5145
      %v5147 = vsel %vm1625, %v5116, 0.0
      %v5148 = vadd.f32 %v5146, %v5147
      %v5149 = vsel %vm1625, %v5118, 0.0
      %v5150 = vadd.f32 %v5148, %v5149
      %v5151 = vsel %vm1625, %v5120, 0.0
      %v5152 = vadd.f32 %v5150, %v5151
      %v5153 = vsel %vm1625, %v5122, 0.0
      %v5154 = vadd.f32 %v5152, %v5153
      %v5155 = vsel %vm1625, %v5124, 0.0
      %v5156 = vadd.f32 %v5154, %v5155
      %v5157 = vsel %vm1625, %v5126, 0.0
      %v5158 = vadd.f32 %v5156, %v5157
      %v5159 = vsel %vm1625, %v5128, 0.0
      %v5160 = vadd.f32 %v5158, %v5159
      %v5161 = vsel %vm1625, %v5130, 0.0
      %v5162 = vadd.f32 %v5160, %v5161
      %v5163 = vsel %vm1625, %v5132, 0.0
      %v5164 = vadd.f32 %v5162, %v5163
      %v5165 = vsel %vm1625, %v5134, 0.0
      %v5166 = vadd.f32 %v5164, %v5165
      %v5167 = vsel %vm1625, %v5136, 0.0
      %v5168 = vadd.f32 %v5166, %v5167
      %v5169 = vsel %vm1625, %v5107, 0.0
      %v5170 = vsel %vm1625, %v5109, 0.0
      %v5171 = vadd.f32 %v5169, %v5170
      %v5172 = vsel %vm1625, %v5111, 0.0
      %v5173 = vadd.f32 %v5171, %v5172
      %v5174 = vsel %vm1625, %v5113, 0.0
      %v5175 = vadd.f32 %v5173, %v5174
      %v5176 = vsel %vm1625, %v5115, 0.0
      %v5177 = vadd.f32 %v5175, %v5176
      %v5178 = vsel %vm1625, %v5117, 0.0
      %v5179 = vadd.f32 %v5177, %v5178
      %v5180 = vsel %vm1625, %v5119, 0.0
      %v5181 = vadd.f32 %v5179, %v5180
      %v5182 = vsel %vm1625, %v5121, 0.0
      %v5183 = vadd.f32 %v5181, %v5182
      %v5184 = vsel %vm1625, %v5123, 0.0
      %v5185 = vadd.f32 %v5183, %v5184
      %v5186 = vsel %vm1625, %v5125, 0.0
      %v5187 = vadd.f32 %v5185, %v5186
      %v5188 = vsel %vm1625, %v5127, 0.0
      %v5189 = vadd.f32 %v5187, %v5188
      %v5190 = vsel %vm1625, %v5129, 0.0
      %v5191 = vadd.f32 %v5189, %v5190
      %v5192 = vsel %vm1625, %v5131, 0.0
      %v5193 = vadd.f32 %v5191, %v5192
      %v5194 = vsel %vm1625, %v5133, 0.0
      %v5195 = vadd.f32 %v5193, %v5194
      %v5196 = vsel %vm1625, %v5135, 0.0
      %v5197 = vadd.f32 %v5195, %v5196
      %v5198 = vsel %vm1625, %v5137, 0.0
      %v5199 = vadd.f32 %v5197, %v5198
      %v5200 = vsel %vm1625, %v5168, 0.0
      %v5201 = vsel %vm1625, %v5199, 0.0
      %v5202 = vadd.f32 %v5200, %v5201
      %v5203 = vrot.slane %v5202, 4
      %v5204 = vadd.f32 %v5202, %v5203
      %v5205 = vrot.slane %v5204, 2
      %v5206 = vadd.f32 %v5204, %v5205
      %v5207 = vrot.slane %v5206, 1
      %v5208 = vadd.f32 %v5206, %v5207
      %v5209 = vmul.f32 %v5106, %v5106
      %v5210 = vmul.f32 %v5107, %v5107
      %v5211 = vmul.f32 %v5108, %v5108
      %v5212 = vmul.f32 %v5109, %v5109
      %v5213 = vmul.f32 %v5110, %v5110
      %v5214 = vmul.f32 %v5111, %v5111
      %v5215 = vmul.f32 %v5112, %v5112
      %v5216 = vmul.f32 %v5113, %v5113
      %v5217 = vmul.f32 %v5114, %v5114
      %v5218 = vmul.f32 %v5115, %v5115
      %v5219 = vmul.f32 %v5116, %v5116
      %v5220 = vmul.f32 %v5117, %v5117
      %v5221 = vmul.f32 %v5118, %v5118
      %v5222 = vmul.f32 %v5119, %v5119
      %v5223 = vmul.f32 %v5120, %v5120
      %v5224 = vmul.f32 %v5121, %v5121
      %v5225 = vmul.f32 %v5122, %v5122
      %v5226 = vmul.f32 %v5123, %v5123
      %v5227 = vmul.f32 %v5124, %v5124
      %v5228 = vmul.f32 %v5125, %v5125
      %v5229 = vmul.f32 %v5126, %v5126
      %v5230 = vmul.f32 %v5127, %v5127
      %v5231 = vmul.f32 %v5128, %v5128
      %v5232 = vmul.f32 %v5129, %v5129
      %v5233 = vmul.f32 %v5130, %v5130
      %v5234 = vmul.f32 %v5131, %v5131
      %v5235 = vmul.f32 %v5132, %v5132
      %v5236 = vmul.f32 %v5133, %v5133
      %v5237 = vmul.f32 %v5134, %v5134
      %v5238 = vmul.f32 %v5135, %v5135
      %v5239 = vmul.f32 %v5136, %v5136
      %v5240 = vmul.f32 %v5137, %v5137
      %v5241 = vsel %vm1625, %v5209, 0.0
      %v5242 = vsel %vm1625, %v5211, 0.0
      %v5243 = vadd.f32 %v5241, %v5242
      %v5244 = vsel %vm1625, %v5213, 0.0
      %v5245 = vadd.f32 %v5243, %v5244
      %v5246 = vsel %vm1625, %v5215, 0.0
      %v5247 = vadd.f32 %v5245, %v5246
      %v5248 = vsel %vm1625, %v5217, 0.0
      %v5249 = vadd.f32 %v5247, %v5248
      %v5250 = vsel %vm1625, %v5219, 0.0
      %v5251 = vadd.f32 %v5249, %v5250
      %v5252 = vsel %vm1625, %v5221, 0.0
      %v5253 = vadd.f32 %v5251, %v5252
      %v5254 = vsel %vm1625, %v5223, 0.0
      %v5255 = vadd.f32 %v5253, %v5254
      %v5256 = vsel %vm1625, %v5225, 0.0
      %v5257 = vadd.f32 %v5255, %v5256
      %v5258 = vsel %vm1625, %v5227, 0.0
      %v5259 = vadd.f32 %v5257, %v5258
      %v5260 = vsel %vm1625, %v5229, 0.0
      %v5261 = vadd.f32 %v5259, %v5260
      %v5262 = vsel %vm1625, %v5231, 0.0
      %v5263 = vadd.f32 %v5261, %v5262
      %v5264 = vsel %vm1625, %v5233, 0.0
      %v5265 = vadd.f32 %v5263, %v5264
      %v5266 = vsel %vm1625, %v5235, 0.0
      %v5267 = vadd.f32 %v5265, %v5266
      %v5268 = vsel %vm1625, %v5237, 0.0
      %v5269 = vadd.f32 %v5267, %v5268
      %v5270 = vsel %vm1625, %v5239, 0.0
      %v5271 = vadd.f32 %v5269, %v5270
      %v5272 = vsel %vm1625, %v5210, 0.0
      %v5273 = vsel %vm1625, %v5212, 0.0
      %v5274 = vadd.f32 %v5272, %v5273
      %v5275 = vsel %vm1625, %v5214, 0.0
      %v5276 = vadd.f32 %v5274, %v5275
      %v5277 = vsel %vm1625, %v5216, 0.0
      %v5278 = vadd.f32 %v5276, %v5277
      %v5279 = vsel %vm1625, %v5218, 0.0
      %v5280 = vadd.f32 %v5278, %v5279
      %v5281 = vsel %vm1625, %v5220, 0.0
      %v5282 = vadd.f32 %v5280, %v5281
      %v5283 = vsel %vm1625, %v5222, 0.0
      %v5284 = vadd.f32 %v5282, %v5283
      %v5285 = vsel %vm1625, %v5224, 0.0
      %v5286 = vadd.f32 %v5284, %v5285
      %v5287 = vsel %vm1625, %v5226, 0.0
      %v5288 = vadd.f32 %v5286, %v5287
      %v5289 = vsel %vm1625, %v5228, 0.0
      %v5290 = vadd.f32 %v5288, %v5289
      %v5291 = vsel %vm1625, %v5230, 0.0
      %v5292 = vadd.f32 %v5290, %v5291
      %v5293 = vsel %vm1625, %v5232, 0.0
      %v5294 = vadd.f32 %v5292, %v5293
      %v5295 = vsel %vm1625, %v5234, 0.0
      %v5296 = vadd.f32 %v5294, %v5295
      %v5297 = vsel %vm1625, %v5236, 0.0
      %v5298 = vadd.f32 %v5296, %v5297
      %v5299 = vsel %vm1625, %v5238, 0.0
      %v5300 = vadd.f32 %v5298, %v5299
      %v5301 = vsel %vm1625, %v5240, 0.0
      %v5302 = vadd.f32 %v5300, %v5301
      %v5303 = vsel %vm1625, %v5271, 0.0
      %v5304 = vsel %vm1625, %v5302, 0.0
      %v5305 = vadd.f32 %v5303, %v5304
      %v5306 = vrot.slane %v5305, 4
      %v5307 = vadd.f32 %v5305, %v5306
      %v5308 = vrot.slane %v5307, 2
      %v5309 = vadd.f32 %v5307, %v5308
      %v5310 = vrot.slane %v5309, 1
      %v5311 = vadd.f32 %v5309, %v5310
      %v5312 = vmul.f32 %v5208, 0.00390625
      %v5313 = vmul.f32 %v5311, 0.00390625
      %v5314 = vmul.f32 %v5312, %v5312
      %v5315 = vsub.f32 %v5313, %v5314
      %v5316 = vmax.f32 %v5315, 0.0
      %v5317 = vsub.f32 %v5106, %v5312
      %v5318 = vsub.f32 %v5107, %v5312
      %v5319 = vsub.f32 %v5108, %v5312
      %v5320 = vsub.f32 %v5109, %v5312
      %v5321 = vsub.f32 %v5110, %v5312
      %v5322 = vsub.f32 %v5111, %v5312
      %v5323 = vsub.f32 %v5112, %v5312
      %v5324 = vsub.f32 %v5113, %v5312
      %v5325 = vsub.f32 %v5114, %v5312
      %v5326 = vsub.f32 %v5115, %v5312
      %v5327 = vsub.f32 %v5116, %v5312
      %v5328 = vsub.f32 %v5117, %v5312
      %v5329 = vsub.f32 %v5118, %v5312
      %v5330 = vsub.f32 %v5119, %v5312
      %v5331 = vsub.f32 %v5120, %v5312
      %v5332 = vsub.f32 %v5121, %v5312
      %v5333 = vsub.f32 %v5122, %v5312
      %v5334 = vsub.f32 %v5123, %v5312
      %v5335 = vsub.f32 %v5124, %v5312
      %v5336 = vsub.f32 %v5125, %v5312
      %v5337 = vsub.f32 %v5126, %v5312
      %v5338 = vsub.f32 %v5127, %v5312
      %v5339 = vsub.f32 %v5128, %v5312
      %v5340 = vsub.f32 %v5129, %v5312
      %v5341 = vsub.f32 %v5130, %v5312
      %v5342 = vsub.f32 %v5131, %v5312
      %v5343 = vsub.f32 %v5132, %v5312
      %v5344 = vsub.f32 %v5133, %v5312
      %v5345 = vsub.f32 %v5134, %v5312
      %v5346 = vsub.f32 %v5135, %v5312
      %v5347 = vsub.f32 %v5136, %v5312
      %v5348 = vsub.f32 %v5137, %v5312
      %v5349 = vadd.f32 %v5316, 1e-05
      %v5350 = vrsqrt.pop %v5349
      %v5351 = vmul.f32 %v5317, %v5350
      %v5352 = vmul.f32 %v5318, %v5350
      %v5353 = vmul.f32 %v5319, %v5350
      %v5354 = vmul.f32 %v5320, %v5350
      %v5355 = vmul.f32 %v5321, %v5350
      %v5356 = vmul.f32 %v5322, %v5350
      %v5357 = vmul.f32 %v5323, %v5350
      %v5358 = vmul.f32 %v5324, %v5350
      %v5359 = vmul.f32 %v5325, %v5350
      %v5360 = vmul.f32 %v5326, %v5350
      %v5361 = vmul.f32 %v5327, %v5350
      %v5362 = vmul.f32 %v5328, %v5350
      %v5363 = vmul.f32 %v5329, %v5350
      %v5364 = vmul.f32 %v5330, %v5350
      %v5365 = vmul.f32 %v5331, %v5350
      %v5366 = vmul.f32 %v5332, %v5350
      %v5367 = vmul.f32 %v5333, %v5350
      %v5368 = vmul.f32 %v5334, %v5350
      %v5369 = vmul.f32 %v5335, %v5350
      %v5370 = vmul.f32 %v5336, %v5350
      %v5371 = vmul.f32 %v5337, %v5350
      %v5372 = vmul.f32 %v5338, %v5350
      %v5373 = vmul.f32 %v5339, %v5350
      %v5374 = vmul.f32 %v5340, %v5350
      %v5375 = vmul.f32 %v5341, %v5350
      %v5376 = vmul.f32 %v5342, %v5350
      %v5377 = vmul.f32 %v5343, %v5350
      %v5378 = vmul.f32 %v5344, %v5350
      %v5379 = vmul.f32 %v5345, %v5350
      %v5380 = vmul.f32 %v5346, %v5350
      %v5381 = vmul.f32 %v5347, %v5350
      %v5382 = vmul.f32 %v5348, %v5350
      %v5383 = vld [vmem:[%s165] sm:$0xff]
      %v5384 = vld [vmem:[%s165 + $0x8] sm:$0xff]
      %v5385 = vld [vmem:[%s165 + $0x10] sm:$0xff]
      %v5386 = vld [vmem:[%s165 + $0x18] sm:$0xff]
      %v5387 = vld [vmem:[%s165 + $0x20] sm:$0xff]
      %v5388 = vld [vmem:[%s165 + $0x28] sm:$0xff]
      %v5389 = vld [vmem:[%s165 + $0x30] sm:$0xff]
      %v5390 = vld [vmem:[%s165 + $0x38] sm:$0xff]
      %v5391 = vld [vmem:[%s165 + $0x40] sm:$0xff]
      %v5392 = vld [vmem:[%s165 + $0x48] sm:$0xff]
      %v5393 = vld [vmem:[%s165 + $0x50] sm:$0xff]
      %v5394 = vld [vmem:[%s165 + $0x58] sm:$0xff]
      %v5395 = vld [vmem:[%s165 + $0x60] sm:$0xff]
      %v5396 = vld [vmem:[%s165 + $0x68] sm:$0xff]
      %v5397 = vld [vmem:[%s165 + $0x70] sm:$0xff]
      %v5398 = vld [vmem:[%s165 + $0x78] sm:$0xff]
      %v5399 = vld [vmem:[%s165 + $0x80] sm:$0xff]
      %v5400 = vld [vmem:[%s165 + $0x88] sm:$0xff]
      %v5401 = vld [vmem:[%s165 + $0x90] sm:$0xff]
      %v5402 = vld [vmem:[%s165 + $0x98] sm:$0xff]
      %v5403 = vld [vmem:[%s165 + $0xa0] sm:$0xff]
      %v5404 = vld [vmem:[%s165 + $0xa8] sm:$0xff]
      %v5405 = vld [vmem:[%s165 + $0xb0] sm:$0xff]
      %v5406 = vld [vmem:[%s165 + $0xb8] sm:$0xff]
      %v5407 = vld [vmem:[%s165 + $0xc0] sm:$0xff]
      %v5408 = vld [vmem:[%s165 + $0xc8] sm:$0xff]
      %v5409 = vld [vmem:[%s165 + $0xd0] sm:$0xff]
      %v5410 = vld [vmem:[%s165 + $0xd8] sm:$0xff]
      %v5411 = vld [vmem:[%s165 + $0xe0] sm:$0xff]
      %v5412 = vld [vmem:[%s165 + $0xe8] sm:$0xff]
      %v5413 = vld [vmem:[%s165 + $0xf0] sm:$0xff]
      %v5414 = vld [vmem:[%s165 + $0xf8] sm:$0xff]
      %v5415 = vadd.f32 %v5383, %v5351
      %v5416 = vadd.f32 %v5384, %v5352
      %v5417 = vadd.f32 %v5385, %v5353
      %v5418 = vadd.f32 %v5386, %v5354
      %v5419 = vadd.f32 %v5387, %v5355
      %v5420 = vadd.f32 %v5388, %v5356
      %v5421 = vadd.f32 %v5389, %v5357
      %v5422 = vadd.f32 %v5390, %v5358
      %v5423 = vadd.f32 %v5391, %v5359
      %v5424 = vadd.f32 %v5392, %v5360
      %v5425 = vadd.f32 %v5393, %v5361
      %v5426 = vadd.f32 %v5394, %v5362
      %v5427 = vadd.f32 %v5395, %v5363
      %v5428 = vadd.f32 %v5396, %v5364
      %v5429 = vadd.f32 %v5397, %v5365
      %v5430 = vadd.f32 %v5398, %v5366
      %v5431 = vadd.f32 %v5399, %v5367
      %v5432 = vadd.f32 %v5400, %v5368
      %v5433 = vadd.f32 %v5401, %v5369
      %v5434 = vadd.f32 %v5402, %v5370
      %v5435 = vadd.f32 %v5403, %v5371
      %v5436 = vadd.f32 %v5404, %v5372
      %v5437 = vadd.f32 %v5405, %v5373
      %v5438 = vadd.f32 %v5406, %v5374
      %v5439 = vadd.f32 %v5407, %v5375
      %v5440 = vadd.f32 %v5408, %v5376
      %v5441 = vadd.f32 %v5409, %v5377
      %v5442 = vadd.f32 %v5410, %v5378
      %v5443 = vadd.f32 %v5411, %v5379
      %v5444 = vadd.f32 %v5412, %v5380
      %v5445 = vadd.f32 %v5413, %v5381
      %v5446 = vadd.f32 %v5414, %v5382
      %5447 = vst.msk [vmem:[%s170] sm:$0xff] %vm1625, %v5415
      %5448 = vst.msk [vmem:[%s170 + $0x8] sm:$0xff] %vm1625, %v5416
      %5449 = vst.msk [vmem:[%s170 + $0x10] sm:$0xff] %vm1625, %v5417
      %5450 = vst.msk [vmem:[%s170 + $0x18] sm:$0xff] %vm1625, %v5418
      %5451 = vst.msk [vmem:[%s170 + $0x20] sm:$0xff] %vm1625, %v5419
      %5452 = vst.msk [vmem:[%s170 + $0x28] sm:$0xff] %vm1625, %v5420
      %5453 = vst.msk [vmem:[%s170 + $0x30] sm:$0xff] %vm1625, %v5421
      %5454 = vst.msk [vmem:[%s170 + $0x38] sm:$0xff] %vm1625, %v5422
      %5455 = vst.msk [vmem:[%s170 + $0x40] sm:$0xff] %vm1625, %v5423
      %5456 = vst.msk [vmem:[%s170 + $0x48] sm:$0xff] %vm1625, %v5424
      %5457 = vst.msk [vmem:[%s170 + $0x50] sm:$0xff] %vm1625, %v5425
      %5458 = vst.msk [vmem:[%s170 + $0x58] sm:$0xff] %vm1625, %v5426
      %5459 = vst.msk [vmem:[%s170 + $0x60] sm:$0xff] %vm1625, %v5427
      %5460 = vst.msk [vmem:[%s170 + $0x68] sm:$0xff] %vm1625, %v5428
      %5461 = vst.msk [vmem:[%s170 + $0x70] sm:$0xff] %vm1625, %v5429
      %5462 = vst.msk [vmem:[%s170 + $0x78] sm:$0xff] %vm1625, %v5430
      %5463 = vst.msk [vmem:[%s170 + $0x80] sm:$0xff] %vm1625, %v5431
      %5464 = vst.msk [vmem:[%s170 + $0x88] sm:$0xff] %vm1625, %v5432
      %5465 = vst.msk [vmem:[%s170 + $0x90] sm:$0xff] %vm1625, %v5433
      %5466 = vst.msk [vmem:[%s170 + $0x98] sm:$0xff] %vm1625, %v5434
      %5467 = vst.msk [vmem:[%s170 + $0xa0] sm:$0xff] %vm1625, %v5435
      %5468 = vst.msk [vmem:[%s170 + $0xa8] sm:$0xff] %vm1625, %v5436
      %5469 = vst.msk [vmem:[%s170 + $0xb0] sm:$0xff] %vm1625, %v5437
      %5470 = vst.msk [vmem:[%s170 + $0xb8] sm:$0xff] %vm1625, %v5438
      %5471 = vst.msk [vmem:[%s170 + $0xc0] sm:$0xff] %vm1625, %v5439
      %5472 = vst.msk [vmem:[%s170 + $0xc8] sm:$0xff] %vm1625, %v5440
      %5473 = vst.msk [vmem:[%s170 + $0xd0] sm:$0xff] %vm1625, %v5441
      %5474 = vst.msk [vmem:[%s170 + $0xd8] sm:$0xff] %vm1625, %v5442
      %5475 = vst.msk [vmem:[%s170 + $0xe0] sm:$0xff] %vm1625, %v5443
      %5476 = vst.msk [vmem:[%s170 + $0xe8] sm:$0xff] %vm1625, %v5444
      %5477 = vst.msk [vmem:[%s170 + $0xf0] sm:$0xff] %vm1625, %v5445
      %5478 = vst.msk [vmem:[%s170 + $0xf8] sm:$0xff] %vm1625, %v5446
      %p5479 = scmp.lt.s32.totalorder %s14, 1
      %s5480 = scalar_select %p5479, %s14, 1
      %s5481 = smul.addr %s5480, 32
      %s5482 = smul.addr %s5481, 8
      %s5483 = scalar_lea.vmem %s3, %s5482
      // Predicated region
      $region33: #{tpu_custom_call.1} parent=31 // pred_check
        %p5484 = pneg %p100
      $region34: #{tpu_custom_call.1} parent=31 // pred_check_branch
        %5486 = sbr.rel (%p5484) target = $region36
      $region35: #{tpu_custom_call.1} parent=31 // pred_region
        _
      $region36: #{tpu_custom_call.1} parent=31 // pred_fallthru
        _
    $region32: #{tpu_custom_call.1} parent=5 // pred_fallthru
      _
    %p5487 = scmp.le.s32.totalorder 2, %s9
    // Predicated region
    $region37: #{tpu_custom_call.1} parent=5 // pred_check
      %p5488 = pneg %p5487
    $region38: #{tpu_custom_call.1} parent=5 // pred_check_branch
      %5490 = sbr.rel (%p5488) target = $region40
    $region39: #{tpu_custom_call.1} parent=5 // pred_region
      %s5491 = ssub.s32 %s9, 2
      // Predicated region
      $region41: #{tpu_custom_call.1} parent=39 // pred_check
        %p5492 = pneg %p106
      $region42: #{tpu_custom_call.1} parent=39 // pred_check_branch
        %5494 = sbr.rel (%p5492) target = $region44
      $region43: #{tpu_custom_call.1} parent=39 // pred_region
        %p5495 = scmp.lt.s32.totalorder %s15, 1
        %s5496 = scalar_select %p5495, %s15, 1
        %s5497 = smul.addr %s5496, 32
        %s5498 = smul.addr %s5497, 8
        %s5499 = scalar_lea.vmem %s3, %s5498
      $region44: #{tpu_custom_call.1} parent=39 // pred_fallthru
        _
    $region40: #{tpu_custom_call.1} parent=5 // pred_fallthru
      _
  $region6: #{tpu_custom_call.1} parent=0 // loop_footer
    %s13 = sadd.s32 1, %s9
  $region7: #{tpu_custom_call.1} parent=0 // loop_footer_branch
    %8 = sbr.rel target = $region3
  $region8: #{tpu_custom_call.1} parent=0 // loop_exit
    _

// kernel: tpu_custom_call.1
$region0: #{tpu_custom_call.1}
  #allocation0 [shape = 'u32[]', space=smem, size = 0x4, offset = 0x4, fixed_abs, tag = 'smem constant byte address 0x4 - core index']
  #allocation1 [shape = 'u32[144,128]{1,0:T(1,128)}', space=vmem, size = 0x12000, scoped, tag = 'internal scratch']
  #allocation2 [shape = 'bf16[18,16,12]{2,1,0:T(8,128)(2,1)}', space=vmem, size = 0x12000, scoped, tag = 'scratch operand']
  #allocation3 [shape = 'f32[16,16,4]{2,1,0:T(8,128)}', space=vmem, size = 0x20000, scoped, tag = 'scratch operand']
  %s0 = inlined_call_operand.vmem [shape: f32[2,16,16,4], index: 0, kind: input, shape index: {}]
  %s1 = inlined_call_operand.vmem [shape: bf16[3,12,4], index: 1, kind: input, shape index: {}]
  %s2 = inlined_call_operand.vmem [shape: bf16[3,12,4], index: 2, kind: input, shape index: {}]
  %s3 = inlined_call_operand.vmem [shape: f32[2,16,16,4], index: 3, kind: output, shape index: {}]
  %s4 = sld [smem:[#allocation0]]
  $region45: #{tpu_custom_call.1} parent=0
    _
  %s6 = ssub.s32 1, %s4
  %s7 = scalar_select 0, %s6, %s4
  loop: start=0, step=1, limit=4
  $region2: #{tpu_custom_call.1} parent=0 // loop_pre_header
    _
  $region3: #{tpu_custom_call.1} parent=0 // loop_header
    %s9 = sphi 0, %s13
    %p10 = scmp.ge.s32.totalorder %s9, 4
    %s19 = sphi 0, %s21
    %s22 = sphi 0, %s19
    %s23 = sphi 0, %s22
    %s39 = sphi 0, %s23
    %s43 = sphi 0, %s43
    %s45 = sphi 0, %s43
    %s46 = sphi 0, %s45
    %s60 = sphi 0, %s46
    %s64 = sphi 0, %s64
    %s66 = sphi 0, %s64
    %s67 = sphi 0, %s66
    %s81 = sphi 0, %s67
    %s87 = sphi 0, %s89
    %s90 = sphi 0, %s87
    %s91 = sphi 0, %s90
    %s107 = sphi 0, %s91
  $region4: #{tpu_custom_call.1} parent=0 // loop_header_branch
    %12 = sbr.rel (%p10) target = $region8
  $region5: #{tpu_custom_call.1} parent=0 // loop_body
    %s14 = ssub.s32 %s9, 1
    %s15 = ssub.s32 %s9, 2
    %s16 = sadd.s32 %s9, 1
    %s17 = ssub.s32 %s9, %s16
    %p18 = scmp.eq.s32.totalorder %s17, 0
    %s20 = sadd.s32 %s19, 1
    %s21 = scalar_select %p18, %s19, %s20
    %p24 = pneg %p18
    %p25 = scmp.eq.s32.totalorder %s9, 1
    %p26 = por %p24, %p25
    %p27 = scmp.ne.s32.totalorder %s19, %s22
    %p28 = scmp.eq.s32.totalorder %s9, 0
    %p29 = por %p27, %p28
    %p30 = scmp.ne.s32.totalorder %s19, %s22
    %p31 = scmp.eq.s32.totalorder %s14, 1
    %p32 = por %p30, %p31
    %p33 = scmp.ne.s32.totalorder %s22, %s23
    %p34 = scmp.eq.s32.totalorder %s14, 0
    %p35 = por %p33, %p34
    %p36 = scmp.ne.s32.totalorder %s22, %s23
    %p37 = scmp.eq.s32.totalorder %s15, 1
    %p38 = por %p36, %p37
    %p40 = scmp.ne.s32.totalorder %s23, %s39
    %p41 = scmp.eq.s32.totalorder %s15, 0
    %p42 = por %p40, %p41
    %s44 = sadd.s32 %s43, 1
    %p47 = scmp.eq.s32.totalorder %s9, 1
    %p48 = scmp.ne.s32.totalorder %s43, %s45
    %p49 = scmp.eq.s32.totalorder %s9, 0
    %p50 = por %p48, %p49
    %p51 = scmp.ne.s32.totalorder %s43, %s45
    %p52 = scmp.eq.s32.totalorder %s14, 1
    %p53 = por %p51, %p52
    %p54 = scmp.ne.s32.totalorder %s45, %s46
    %p55 = scmp.eq.s32.totalorder %s14, 0
    %p56 = por %p54, %p55
    %p57 = scmp.ne.s32.totalorder %s45, %s46
    %p58 = scmp.eq.s32.totalorder %s15, 1
    %p59 = por %p57, %p58
    %p61 = scmp.ne.s32.totalorder %s46, %s60
    %p62 = scmp.eq.s32.totalorder %s15, 0
    %p63 = por %p61, %p62
    %s65 = sadd.s32 %s64, 1
    %p68 = scmp.eq.s32.totalorder %s9, 1
    %p69 = scmp.ne.s32.totalorder %s64, %s66
    %p70 = scmp.eq.s32.totalorder %s9, 0
    %p71 = por %p69, %p70
    %p72 = scmp.ne.s32.totalorder %s64, %s66
    %p73 = scmp.eq.s32.totalorder %s14, 1
    %p74 = por %p72, %p73
    %p75 = scmp.ne.s32.totalorder %s66, %s67
    %p76 = scmp.eq.s32.totalorder %s14, 0
    %p77 = por %p75, %p76
    %p78 = scmp.ne.s32.totalorder %s66, %s67
    %p79 = scmp.eq.s32.totalorder %s15, 1
    %p80 = por %p78, %p79
    %p82 = scmp.ne.s32.totalorder %s67, %s81
    %p83 = scmp.eq.s32.totalorder %s15, 0
    %p84 = por %p82, %p83
    %s85 = ssub.s32 %s9, %s16
    %p86 = scmp.eq.s32.totalorder %s85, 0
    %s88 = sadd.s32 %s87, 1
    %s89 = scalar_select %p86, %s87, %s88
    %p92 = pneg %p86
    %p93 = scmp.eq.s32.totalorder %s9, 1
    %p94 = por %p92, %p93
    %p95 = scmp.ne.s32.totalorder %s87, %s90
    %p96 = scmp.eq.s32.totalorder %s9, 0
    %p97 = por %p95, %p96
    %p98 = scmp.ne.s32.totalorder %s87, %s90
    %p99 = scmp.eq.s32.totalorder %s14, 1
    %p100 = por %p98, %p99
    %p101 = scmp.ne.s32.totalorder %s90, %s91
    %p102 = scmp.eq.s32.totalorder %s14, 0
    %p103 = por %p101, %p102
    %p104 = scmp.ne.s32.totalorder %s90, %s91
    %p105 = scmp.eq.s32.totalorder %s15, 1
    %p106 = por %p104, %p105
    %p108 = scmp.ne.s32.totalorder %s91, %s107
    %p109 = scmp.eq.s32.totalorder %s15, 0
    %p110 = por %p108, %p109
    %p111 = scmp.le.s32.totalorder 1, %s9
    %p112 = scmp.lt.s32.totalorder %s9, 3
    %p113 = pnand %p111, %p112
    %p114 = pneg %p113
    // Predicated region
    $region9: #{tpu_custom_call.1} parent=5 // pred_check
      _
    $region10: #{tpu_custom_call.1} parent=5 // pred_check_branch
      %116 = sbr.rel (%p113) target = $region12
    $region11: #{tpu_custom_call.1} parent=5 // pred_region
      %s117 = ssub.s32 %s9, 1
      // Predicated region
      $region13: #{tpu_custom_call.1} parent=11 // pred_check
        %p118 = pneg %p56
      $region14: #{tpu_custom_call.1} parent=11 // pred_check_branch
        %120 = sbr.rel (%p118) target = $region16
      $region15: #{tpu_custom_call.1} parent=11 // pred_region
        _
      $region16: #{tpu_custom_call.1} parent=11 // pred_fallthru
        _
      // Predicated region
      $region17: #{tpu_custom_call.1} parent=11 // pred_check
        %p121 = pneg %p77
      $region18: #{tpu_custom_call.1} parent=11 // pred_check_branch
        %123 = sbr.rel (%p121) target = $region20
      $region19: #{tpu_custom_call.1} parent=11 // pred_region
        _
      $region20: #{tpu_custom_call.1} parent=11 // pred_fallthru
        _
    $region12: #{tpu_custom_call.1} parent=5 // pred_fallthru
      _
    %p124 = scmp.lt.s32.totalorder %s9, 2
    // Predicated region
    $region21: #{tpu_custom_call.1} parent=5 // pred_check
      %p125 = pneg %p124
    $region22: #{tpu_custom_call.1} parent=5 // pred_check_branch
      %127 = sbr.rel (%p125) target = $region24
    $region23: #{tpu_custom_call.1} parent=5 // pred_region
      // Predicated region
      $region25: #{tpu_custom_call.1} parent=23 // pred_check
        %p128 = pneg %p29
      $region26: #{tpu_custom_call.1} parent=23 // pred_check_branch
        %130 = sbr.rel (%p128) target = $region28
      $region27: #{tpu_custom_call.1} parent=23 // pred_region
        %p131 = scmp.lt.s32.totalorder %s9, 1
        %s132 = scalar_select %p131, %s9, 1
        %s133 = smul.addr %s132, 32
        %s134 = smul.addr %s133, 8
        %s135 = scalar_lea.vmem %s0, %s134
      $region28: #{tpu_custom_call.1} parent=23 // pred_fallthru
        _
    $region24: #{tpu_custom_call.1} parent=5 // pred_fallthru
      _
    %p136 = scmp.le.s32.totalorder 1, %s9
    %p137 = scmp.lt.s32.totalorder %s9, 3
    %p138 = pnand %p136, %p137
    %p139 = pneg %p138
    // Predicated region
    $region29: #{tpu_custom_call.1} parent=5 // pred_check
      _
    $region30: #{tpu_custom_call.1} parent=5 // pred_check_branch
      %141 = sbr.rel (%p138) target = $region32
    $region31: #{tpu_custom_call.1} parent=5 // pred_region
      %s142 = ssub.s32 %s9, 1
      %p143 = scmp.lt.s32.totalorder %s14, 1
      %s144 = scalar_select %p143, %s14, 1
      %s145 = smul.addr %s144, 32
      %s146 = smul.addr %s145, 8
      %s147 = scalar_lea.vmem %s0, %s146
      %p148 = pneg %p35
      %p149 = pneg %p32
      %p150 = pneg %p56
      %p151 = pneg %p53
      %p152 = pneg %p77
      %p153 = pneg %p74
      %p154 = pneg %p103
      %p155 = pneg %p100
      %p156 = scmp.lt.s32.totalorder %s14, 1
      %s157 = scalar_select %p156, %s14, 1
      %s158 = smul.addr %s157, 32
      %s159 = smul.addr %s158, 8
      %s160 = scalar_lea.vmem %s3, %s159
      %p161 = scmp.lt.s32.totalorder %s14, 1
      %s162 = scalar_select %p161, %s14, 1
      %s163 = smul.addr %s162, 32
      %s164 = smul.addr %s163, 8
      %s165 = scalar_lea.vmem %s0, %s164
      %p166 = scmp.lt.s32.totalorder %s14, 1
      %s167 = scalar_select %p166, %s14, 1
      %s168 = smul.addr %s167, 32
      %s169 = smul.addr %s168, 8
      %s170 = scalar_lea.vmem %s3, %s169
      %v172 = vld [vmem:[%s165] sm:$0xff]
      %v173 = vld [vmem:[%s165 + $0x8] sm:$0xff]
      %v174 = vld [vmem:[%s165 + $0x10] sm:$0xff]
      %v175 = vld [vmem:[%s165 + $0x18] sm:$0xff]
      %v176 = vld [vmem:[%s165 + $0x20] sm:$0xff]
      %v177 = vld [vmem:[%s165 + $0x28] sm:$0xff]
      %v178 = vld [vmem:[%s165 + $0x30] sm:$0xff]
      %v179 = vld [vmem:[%s165 + $0x38] sm:$0xff]
      %v180 = vld [vmem:[%s165 + $0x40] sm:$0xff]
      %v181 = vld [vmem:[%s165 + $0x48] sm:$0xff]
      %v182 = vld [vmem:[%s165 + $0x50] sm:$0xff]
      %v183 = vld [vmem:[%s165 + $0x58] sm:$0xff]
      %v184 = vld [vmem:[%s165 + $0x60] sm:$0xff]
      %v185 = vld [vmem:[%s165 + $0x68] sm:$0xff]
      %v186 = vld [vmem:[%s165 + $0x70] sm:$0xff]
      %v187 = vld [vmem:[%s165 + $0x78] sm:$0xff]
      %v188 = vld [vmem:[%s165 + $0x80] sm:$0xff]
      %v189 = vld [vmem:[%s165 + $0x88] sm:$0xff]
      %v190 = vld [vmem:[%s165 + $0x90] sm:$0xff]
      %v191 = vld [vmem:[%s165 + $0x98] sm:$0xff]
      %v192 = vld [vmem:[%s165 + $0xa0] sm:$0xff]
      %v193 = vld [vmem:[%s165 + $0xa8] sm:$0xff]
      %v194 = vld [vmem:[%s165 + $0xb0] sm:$0xff]
      %v195 = vld [vmem:[%s165 + $0xb8] sm:$0xff]
      %v196 = vld [vmem:[%s165 + $0xc0] sm:$0xff]
      %v197 = vld [vmem:[%s165 + $0xc8] sm:$0xff]
      %v198 = vld [vmem:[%s165 + $0xd0] sm:$0xff]
      %v199 = vld [vmem:[%s165 + $0xd8] sm:$0xff]
      %v200 = vld [vmem:[%s165 + $0xe0] sm:$0xff]
      %v201 = vld [vmem:[%s165 + $0xe8] sm:$0xff]
      %v202 = vld [vmem:[%s165 + $0xf0] sm:$0xff]
      %v203 = vld [vmem:[%s165 + $0xf8] sm:$0xff]
      %v204 = vpack.c.bf16 %v173, %v172
      %v205 = vpack.c.bf16 %v175, %v174
      %v206 = vpack.c.bf16 %v177, %v176
      %v207 = vpack.c.bf16 %v179, %v178
      %v208 = vpack.c.bf16 %v181, %v180
      %v209 = vpack.c.bf16 %v183, %v182
      %v210 = vpack.c.bf16 %v185, %v184
      %v211 = vpack.c.bf16 %v187, %v186
      %v212 = vpack.c.bf16 %v189, %v188
      %v213 = vpack.c.bf16 %v191, %v190
      %v214 = vpack.c.bf16 %v193, %v192
      %v215 = vpack.c.bf16 %v195, %v194
      %v216 = vpack.c.bf16 %v197, %v196
      %v217 = vpack.c.bf16 %v199, %v198
      %v218 = vpack.c.bf16 %v201, %v200
      %v219 = vpack.c.bf16 %v203, %v202
      %v236 = vunpack.c.l.b16 %v204
      %v237 = vunpack.c.l.b16 %v205
      %v238 = vunpack.c.l.b16 %v206
      %v239 = vunpack.c.l.b16 %v207
      %v240 = vunpack.c.l.b16 %v208
      %v241 = vunpack.c.l.b16 %v209
      %v242 = vunpack.c.l.b16 %v210
      %v243 = vunpack.c.l.b16 %v211
      %v244 = vunpack.c.l.b16 %v212
      %v245 = vunpack.c.l.b16 %v213
      %v246 = vunpack.c.l.b16 %v214
      %v247 = vunpack.c.l.b16 %v215
      %v248 = vunpack.c.l.b16 %v216
      %v249 = vunpack.c.l.b16 %v217
      %v250 = vunpack.c.l.b16 %v218
      %v251 = vunpack.c.l.b16 %v219
      %v252 = vpack.c.b16 %v236, %v236
      %v253 = vpack.c.b16 %v237, %v237
      %v254 = vpack.c.b16 %v238, %v238
      %v255 = vpack.c.b16 %v239, %v239
      %v256 = vpack.c.b16 %v240, %v240
      %v257 = vpack.c.b16 %v241, %v241
      %v258 = vpack.c.b16 %v242, %v242
      %v259 = vpack.c.b16 %v243, %v243
      %v260 = vpack.c.b16 %v244, %v244
      %v261 = vpack.c.b16 %v245, %v245
      %v262 = vpack.c.b16 %v246, %v246
      %v263 = vpack.c.b16 %v247, %v247
      %v264 = vpack.c.b16 %v248, %v248
      %v265 = vpack.c.b16 %v249, %v249
      %v266 = vpack.c.b16 %v250, %v250
      %v267 = vpack.c.b16 %v251, %v251
      %v269 = vshrl.u32 %v252, 16
      %v271 = vrot.slane %v269, 4
      %v272 = vrot.slane %v271, 4
      %v274 = vshrl.u32 %v253, 16
      %v276 = vrot.slane %v274, 4
      %v277 = vrot.slane %v276, 4
      %v279 = vshrl.u32 %v254, 16
      %v281 = vrot.slane %v279, 4
      %v282 = vrot.slane %v281, 4
      %v284 = vshrl.u32 %v255, 16
      %v286 = vrot.slane %v284, 4
      %v287 = vrot.slane %v286, 4
      %v289 = vshrl.u32 %v256, 16
      %v291 = vrot.slane %v289, 4
      %v292 = vrot.slane %v291, 4
      %v294 = vshrl.u32 %v257, 16
      %v296 = vrot.slane %v294, 4
      %v297 = vrot.slane %v296, 4
      %v299 = vshrl.u32 %v258, 16
      %v301 = vrot.slane %v299, 4
      %v302 = vrot.slane %v301, 4
      %v304 = vshrl.u32 %v259, 16
      %v306 = vrot.slane %v304, 4
      %v307 = vrot.slane %v306, 4
      %v309 = vshrl.u32 %v260, 16
      %v311 = vrot.slane %v309, 4
      %v312 = vrot.slane %v311, 4
      %v314 = vshrl.u32 %v261, 16
      %v316 = vrot.slane %v314, 4
      %v317 = vrot.slane %v316, 4
      %v319 = vshrl.u32 %v262, 16
      %v321 = vrot.slane %v319, 4
      %v322 = vrot.slane %v321, 4
      %v324 = vshrl.u32 %v263, 16
      %v326 = vrot.slane %v324, 4
      %v327 = vrot.slane %v326, 4
      %v329 = vshrl.u32 %v264, 16
      %v331 = vrot.slane %v329, 4
      %v332 = vrot.slane %v331, 4
      %v334 = vshrl.u32 %v265, 16
      %v336 = vrot.slane %v334, 4
      %v337 = vrot.slane %v336, 4
      %v339 = vshrl.u32 %v266, 16
      %v341 = vrot.slane %v339, 4
      %v342 = vrot.slane %v341, 4
      %v344 = vshrl.u32 %v267, 16
      %v346 = vrot.slane %v344, 4
      %v347 = vrot.slane %v346, 4
      %s364 = scalar_lea.vmem [#allocation2], 8
      %vm365 = vcmask 24576
      %vm366 = vsmask.f32 256
      %vm367 = vmand %vm365, %vm366
      %v368 = vld [vmem:[%s364] sm:$0x1]
      %v369 = vsel %vm367, %v272, %v368
      %370 = vst [vmem:[%s364] sm:$0x1] %v369
      %v371 = vld [vmem:[%s364 + $0x8] sm:$0x1]
      %v372 = vsel %vm367, %v277, %v371
      %373 = vst [vmem:[%s364 + $0x8] sm:$0x1] %v372
      %v374 = vld [vmem:[%s364 + $0x10] sm:$0x1]
      %v375 = vsel %vm367, %v282, %v374
      %376 = vst [vmem:[%s364 + $0x10] sm:$0x1] %v375
      %v377 = vld [vmem:[%s364 + $0x18] sm:$0x1]
      %v378 = vsel %vm367, %v287, %v377
      %379 = vst [vmem:[%s364 + $0x18] sm:$0x1] %v378
      %v380 = vld [vmem:[%s364 + $0x20] sm:$0x1]
      %v381 = vsel %vm367, %v292, %v380
      %382 = vst [vmem:[%s364 + $0x20] sm:$0x1] %v381
      %v383 = vld [vmem:[%s364 + $0x28] sm:$0x1]
      %v384 = vsel %vm367, %v297, %v383
      %385 = vst [vmem:[%s364 + $0x28] sm:$0x1] %v384
      %v386 = vld [vmem:[%s364 + $0x30] sm:$0x1]
      %v387 = vsel %vm367, %v302, %v386
      %388 = vst [vmem:[%s364 + $0x30] sm:$0x1] %v387
      %v389 = vld [vmem:[%s364 + $0x38] sm:$0x1]
      %v390 = vsel %vm367, %v307, %v389
      %391 = vst [vmem:[%s364 + $0x38] sm:$0x1] %v390
      %v392 = vld [vmem:[%s364 + $0x40] sm:$0x1]
      %v393 = vsel %vm367, %v312, %v392
      %394 = vst [vmem:[%s364 + $0x40] sm:$0x1] %v393
      %v395 = vld [vmem:[%s364 + $0x48] sm:$0x1]
      %v396 = vsel %vm367, %v317, %v395
      %397 = vst [vmem:[%s364 + $0x48] sm:$0x1] %v396
      %v398 = vld [vmem:[%s364 + $0x50] sm:$0x1]
      %v399 = vsel %vm367, %v322, %v398
      %400 = vst [vmem:[%s364 + $0x50] sm:$0x1] %v399
      %v401 = vld [vmem:[%s364 + $0x58] sm:$0x1]
      %v402 = vsel %vm367, %v327, %v401
      %403 = vst [vmem:[%s364 + $0x58] sm:$0x1] %v402
      %v404 = vld [vmem:[%s364 + $0x60] sm:$0x1]
      %v405 = vsel %vm367, %v332, %v404
      %406 = vst [vmem:[%s364 + $0x60] sm:$0x1] %v405
      %v407 = vld [vmem:[%s364 + $0x68] sm:$0x1]
      %v408 = vsel %vm367, %v337, %v407
      %409 = vst [vmem:[%s364 + $0x68] sm:$0x1] %v408
      %v410 = vld [vmem:[%s364 + $0x70] sm:$0x1]
      %v411 = vsel %vm367, %v342, %v410
      %412 = vst [vmem:[%s364 + $0x70] sm:$0x1] %v411
      %v413 = vld [vmem:[%s364 + $0x78] sm:$0x1]
      %v414 = vsel %vm367, %v347, %v413
      %415 = vst [vmem:[%s364 + $0x78] sm:$0x1] %v414
      %v416 = vunpack.c.h.b16 %v204
      %v417 = vunpack.c.h.b16 %v205
      %v418 = vunpack.c.h.b16 %v206
      %v419 = vunpack.c.h.b16 %v207
      %v420 = vunpack.c.h.b16 %v208
      %v421 = vunpack.c.h.b16 %v209
      %v422 = vunpack.c.h.b16 %v210
      %v423 = vunpack.c.h.b16 %v211
      %v424 = vunpack.c.h.b16 %v212
      %v425 = vunpack.c.h.b16 %v213
      %v426 = vunpack.c.h.b16 %v214
      %v427 = vunpack.c.h.b16 %v215
      %v428 = vunpack.c.h.b16 %v216
      %v429 = vunpack.c.h.b16 %v217
      %v430 = vunpack.c.h.b16 %v218
      %v431 = vunpack.c.h.b16 %v219
      %v432 = vpack.c.b16 %v416, %v416
      %v433 = vpack.c.b16 %v417, %v417
      %v434 = vpack.c.b16 %v418, %v418
      %v435 = vpack.c.b16 %v419, %v419
      %v436 = vpack.c.b16 %v420, %v420
      %v437 = vpack.c.b16 %v421, %v421
      %v438 = vpack.c.b16 %v422, %v422
      %v439 = vpack.c.b16 %v423, %v423
      %v440 = vpack.c.b16 %v424, %v424
      %v441 = vpack.c.b16 %v425, %v425
      %v442 = vpack.c.b16 %v426, %v426
      %v443 = vpack.c.b16 %v427, %v427
      %v444 = vpack.c.b16 %v428, %v428
      %v445 = vpack.c.b16 %v429, %v429
      %v446 = vpack.c.b16 %v430, %v430
      %v447 = vpack.c.b16 %v431, %v431
      %vm448 = vsmask.f32 4368
      %vm449 = vmor %vm366, %vm448
      %v450 = vrot.slane %v269, 7
      %v451 = vshll.u32 %v252, 16
      %v453 = vor.u32 %v450, %v451
      %v454 = vrot.slane %v450, 4
      %v456 = vshrl.u32 %v432, 16
      %v458 = vrot.slane %v456, 7
      %v459 = vshll.u32 %v432, 16
      %v461 = vor.u32 %v458, %v459
      %v462 = vsel %vm449, %v454, %v461
      %v463 = vrot.slane %v274, 7
      %v464 = vshll.u32 %v253, 16
      %v466 = vor.u32 %v463, %v464
      %v467 = vrot.slane %v463, 4
      %v469 = vshrl.u32 %v433, 16
      %v471 = vrot.slane %v469, 7
      %v472 = vshll.u32 %v433, 16
      %v474 = vor.u32 %v471, %v472
      %v475 = vsel %vm449, %v467, %v474
      %v476 = vrot.slane %v279, 7
      %v477 = vshll.u32 %v254, 16
      %v479 = vor.u32 %v476, %v477
      %v480 = vrot.slane %v476, 4
      %v482 = vshrl.u32 %v434, 16
      %v484 = vrot.slane %v482, 7
      %v485 = vshll.u32 %v434, 16
      %v487 = vor.u32 %v484, %v485
      %v488 = vsel %vm449, %v480, %v487
      %v489 = vrot.slane %v284, 7
      %v490 = vshll.u32 %v255, 16
      %v492 = vor.u32 %v489, %v490
      %v493 = vrot.slane %v489, 4
      %v495 = vshrl.u32 %v435, 16
      %v497 = vrot.slane %v495, 7
      %v498 = vshll.u32 %v435, 16
      %v500 = vor.u32 %v497, %v498
      %v501 = vsel %vm449, %v493, %v500
      %v502 = vrot.slane %v289, 7
      %v503 = vshll.u32 %v256, 16
      %v505 = vor.u32 %v502, %v503
      %v506 = vrot.slane %v502, 4
      %v508 = vshrl.u32 %v436, 16
      %v510 = vrot.slane %v508, 7
      %v511 = vshll.u32 %v436, 16
      %v513 = vor.u32 %v510, %v511
      %v514 = vsel %vm449, %v506, %v513
      %v515 = vrot.slane %v294, 7
      %v516 = vshll.u32 %v257, 16
      %v518 = vor.u32 %v515, %v516
      %v519 = vrot.slane %v515, 4
      %v521 = vshrl.u32 %v437, 16
      %v523 = vrot.slane %v521, 7
      %v524 = vshll.u32 %v437, 16
      %v526 = vor.u32 %v523, %v524
      %v527 = vsel %vm449, %v519, %v526
      %v528 = vrot.slane %v299, 7
      %v529 = vshll.u32 %v258, 16
      %v531 = vor.u32 %v528, %v529
      %v532 = vrot.slane %v528, 4
      %v534 = vshrl.u32 %v438, 16
      %v536 = vrot.slane %v534, 7
      %v537 = vshll.u32 %v438, 16
      %v539 = vor.u32 %v536, %v537
      %v540 = vsel %vm449, %v532, %v539
      %v541 = vrot.slane %v304, 7
      %v542 = vshll.u32 %v259, 16
      %v544 = vor.u32 %v541, %v542
      %v545 = vrot.slane %v541, 4
      %v547 = vshrl.u32 %v439, 16
      %v549 = vrot.slane %v547, 7
      %v550 = vshll.u32 %v439, 16
      %v552 = vor.u32 %v549, %v550
      %v553 = vsel %vm449, %v545, %v552
      %v554 = vrot.slane %v309, 7
      %v555 = vshll.u32 %v260, 16
      %v557 = vor.u32 %v554, %v555
      %v558 = vrot.slane %v554, 4
      %v560 = vshrl.u32 %v440, 16
      %v562 = vrot.slane %v560, 7
      %v563 = vshll.u32 %v440, 16
      %v565 = vor.u32 %v562, %v563
      %v566 = vsel %vm449, %v558, %v565
      %v567 = vrot.slane %v314, 7
      %v568 = vshll.u32 %v261, 16
      %v570 = vor.u32 %v567, %v568
      %v571 = vrot.slane %v567, 4
      %v573 = vshrl.u32 %v441, 16
      %v575 = vrot.slane %v573, 7
      %v576 = vshll.u32 %v441, 16
      %v578 = vor.u32 %v575, %v576
      %v579 = vsel %vm449, %v571, %v578
      %v580 = vrot.slane %v319, 7
      %v581 = vshll.u32 %v262, 16
      %v583 = vor.u32 %v580, %v581
      %v584 = vrot.slane %v580, 4
      %v586 = vshrl.u32 %v442, 16
      %v588 = vrot.slane %v586, 7
      %v589 = vshll.u32 %v442, 16
      %v591 = vor.u32 %v588, %v589
      %v592 = vsel %vm449, %v584, %v591
      %v593 = vrot.slane %v324, 7
      %v594 = vshll.u32 %v263, 16
      %v596 = vor.u32 %v593, %v594
      %v597 = vrot.slane %v593, 4
      %v599 = vshrl.u32 %v443, 16
      %v601 = vrot.slane %v599, 7
      %v602 = vshll.u32 %v443, 16
      %v604 = vor.u32 %v601, %v602
      %v605 = vsel %vm449, %v597, %v604
      %v606 = vrot.slane %v329, 7
      %v607 = vshll.u32 %v264, 16
      %v609 = vor.u32 %v606, %v607
      %v610 = vrot.slane %v606, 4
      %v612 = vshrl.u32 %v444, 16
      %v614 = vrot.slane %v612, 7
      %v615 = vshll.u32 %v444, 16
      %v617 = vor.u32 %v614, %v615
      %v618 = vsel %vm449, %v610, %v617
      %v619 = vrot.slane %v334, 7
      %v620 = vshll.u32 %v265, 16
      %v622 = vor.u32 %v619, %v620
      %v623 = vrot.slane %v619, 4
      %v625 = vshrl.u32 %v445, 16
      %v627 = vrot.slane %v625, 7
      %v628 = vshll.u32 %v445, 16
      %v630 = vor.u32 %v627, %v628
      %v631 = vsel %vm449, %v623, %v630
      %v632 = vrot.slane %v339, 7
      %v633 = vshll.u32 %v266, 16
      %v635 = vor.u32 %v632, %v633
      %v636 = vrot.slane %v632, 4
      %v638 = vshrl.u32 %v446, 16
      %v640 = vrot.slane %v638, 7
      %v641 = vshll.u32 %v446, 16
      %v643 = vor.u32 %v640, %v641
      %v644 = vsel %vm449, %v636, %v643
      %v645 = vrot.slane %v344, 7
      %v646 = vshll.u32 %v267, 16
      %v648 = vor.u32 %v645, %v646
      %v649 = vrot.slane %v645, 4
      %v651 = vshrl.u32 %v447, 16
      %v653 = vrot.slane %v651, 7
      %v654 = vshll.u32 %v447, 16
      %v656 = vor.u32 %v653, %v654
      %v657 = vsel %vm449, %v649, %v656
      %vm690 = vcmask 27648
      %vm691 = vsmask.f32 7938
      %vm692 = vmand %vm690, %vm691
      %v693 = vld [vmem:[%s364] sm:$0xf]
      %v694 = vsel %vm692, %v453, %v693
      %695 = vst [vmem:[%s364] sm:$0xf] %v694
      %vm696 = vcmask 27648
      %697 = vst.msk [vmem:[%s364 + $0x4] sm:$0xf] %vm696, %v462
      %v698 = vld [vmem:[%s364 + $0x8] sm:$0xf]
      %v699 = vsel %vm692, %v466, %v698
      %700 = vst [vmem:[%s364 + $0x8] sm:$0xf] %v699
      %701 = vst.msk [vmem:[%s364 + $0xc] sm:$0xf] %vm696, %v475
      %v702 = vld [vmem:[%s364 + $0x10] sm:$0xf]
      %v703 = vsel %vm692, %v479, %v702
      %704 = vst [vmem:[%s364 + $0x10] sm:$0xf] %v703
      %705 = vst.msk [vmem:[%s364 + $0x14] sm:$0xf] %vm696, %v488
      %v706 = vld [vmem:[%s364 + $0x18] sm:$0xf]
      %v707 = vsel %vm692, %v492, %v706
      %708 = vst [vmem:[%s364 + $0x18] sm:$0xf] %v707
      %709 = vst.msk [vmem:[%s364 + $0x1c] sm:$0xf] %vm696, %v501
      %v710 = vld [vmem:[%s364 + $0x20] sm:$0xf]
      %v711 = vsel %vm692, %v505, %v710
      %712 = vst [vmem:[%s364 + $0x20] sm:$0xf] %v711
      %713 = vst.msk [vmem:[%s364 + $0x24] sm:$0xf] %vm696, %v514
      %v714 = vld [vmem:[%s364 + $0x28] sm:$0xf]
      %v715 = vsel %vm692, %v518, %v714
      %716 = vst [vmem:[%s364 + $0x28] sm:$0xf] %v715
      %717 = vst.msk [vmem:[%s364 + $0x2c] sm:$0xf] %vm696, %v527
      %v718 = vld [vmem:[%s364 + $0x30] sm:$0xf]
      %v719 = vsel %vm692, %v531, %v718
      %720 = vst [vmem:[%s364 + $0x30] sm:$0xf] %v719
      %721 = vst.msk [vmem:[%s364 + $0x34] sm:$0xf] %vm696, %v540
      %v722 = vld [vmem:[%s364 + $0x38] sm:$0xf]
      %v723 = vsel %vm692, %v544, %v722
      %724 = vst [vmem:[%s364 + $0x38] sm:$0xf] %v723
      %725 = vst.msk [vmem:[%s364 + $0x3c] sm:$0xf] %vm696, %v553
      %v726 = vld [vmem:[%s364 + $0x40] sm:$0xf]
      %v727 = vsel %vm692, %v557, %v726
      %728 = vst [vmem:[%s364 + $0x40] sm:$0xf] %v727
      %729 = vst.msk [vmem:[%s364 + $0x44] sm:$0xf] %vm696, %v566
      %v730 = vld [vmem:[%s364 + $0x48] sm:$0xf]
      %v731 = vsel %vm692, %v570, %v730
      %732 = vst [vmem:[%s364 + $0x48] sm:$0xf] %v731
      %733 = vst.msk [vmem:[%s364 + $0x4c] sm:$0xf] %vm696, %v579
      %v734 = vld [vmem:[%s364 + $0x50] sm:$0xf]
      %v735 = vsel %vm692, %v583, %v734
      %736 = vst [vmem:[%s364 + $0x50] sm:$0xf] %v735
      %737 = vst.msk [vmem:[%s364 + $0x54] sm:$0xf] %vm696, %v592
      %v738 = vld [vmem:[%s364 + $0x58] sm:$0xf]
      %v739 = vsel %vm692, %v596, %v738
      %740 = vst [vmem:[%s364 + $0x58] sm:$0xf] %v739
      %741 = vst.msk [vmem:[%s364 + $0x5c] sm:$0xf] %vm696, %v605
      %v742 = vld [vmem:[%s364 + $0x60] sm:$0xf]
      %v743 = vsel %vm692, %v609, %v742
      %744 = vst [vmem:[%s364 + $0x60] sm:$0xf] %v743
      %745 = vst.msk [vmem:[%s364 + $0x64] sm:$0xf] %vm696, %v618
      %v746 = vld [vmem:[%s364 + $0x68] sm:$0xf]
      %v747 = vsel %vm692, %v622, %v746
      %748 = vst [vmem:[%s364 + $0x68] sm:$0xf] %v747
      %749 = vst.msk [vmem:[%s364 + $0x6c] sm:$0xf] %vm696, %v631
      %v750 = vld [vmem:[%s364 + $0x70] sm:$0xf]
      %v751 = vsel %vm692, %v635, %v750
      %752 = vst [vmem:[%s364 + $0x70] sm:$0xf] %v751
      %753 = vst.msk [vmem:[%s364 + $0x74] sm:$0xf] %vm696, %v644
      %v754 = vld [vmem:[%s364 + $0x78] sm:$0xf]
      %v755 = vsel %vm692, %v648, %v754
      %756 = vst [vmem:[%s364 + $0x78] sm:$0xf] %v755
      %757 = vst.msk [vmem:[%s364 + $0x7c] sm:$0xf] %vm696, %v657
      %758 = vrot.lane.b32.xlu0 %v252, 4
      %v759 = vpop.permute.xlu0 %758
      %760 = vrot.lane.b32.xlu0 %v432, 4
      %v761 = vpop.permute.xlu0 %760
      %762 = vrot.lane.b32.xlu0 %v253, 4
      %v763 = vpop.permute.xlu0 %762
      %764 = vrot.lane.b32.xlu0 %v433, 4
      %v765 = vpop.permute.xlu0 %764
      %766 = vrot.lane.b32.xlu0 %v254, 4
      %v767 = vpop.permute.xlu0 %766
      %768 = vrot.lane.b32.xlu0 %v434, 4
      %v769 = vpop.permute.xlu0 %768
      %770 = vrot.lane.b32.xlu0 %v255, 4
      %v771 = vpop.permute.xlu0 %770
      %772 = vrot.lane.b32.xlu0 %v435, 4
      %v773 = vpop.permute.xlu0 %772
      %774 = vrot.lane.b32.xlu0 %v256, 4
      %v775 = vpop.permute.xlu0 %774
      %776 = vrot.lane.b32.xlu0 %v436, 4
      %v777 = vpop.permute.xlu0 %776
      %778 = vrot.lane.b32.xlu0 %v257, 4
      %v779 = vpop.permute.xlu0 %778
      %780 = vrot.lane.b32.xlu0 %v437, 4
      %v781 = vpop.permute.xlu0 %780
      %782 = vrot.lane.b32.xlu0 %v258, 4
      %v783 = vpop.permute.xlu0 %782
      %784 = vrot.lane.b32.xlu0 %v438, 4
      %v785 = vpop.permute.xlu0 %784
      %786 = vrot.lane.b32.xlu0 %v259, 4
      %v787 = vpop.permute.xlu0 %786
      %788 = vrot.lane.b32.xlu0 %v439, 4
      %v789 = vpop.permute.xlu0 %788
      %790 = vrot.lane.b32.xlu0 %v260, 4
      %v791 = vpop.permute.xlu0 %790
      %792 = vrot.lane.b32.xlu0 %v440, 4
      %v793 = vpop.permute.xlu0 %792
      %794 = vrot.lane.b32.xlu0 %v261, 4
      %v795 = vpop.permute.xlu0 %794
      %796 = vrot.lane.b32.xlu0 %v441, 4
      %v797 = vpop.permute.xlu0 %796
      %798 = vrot.lane.b32.xlu0 %v262, 4
      %v799 = vpop.permute.xlu0 %798
      %800 = vrot.lane.b32.xlu0 %v442, 4
      %v801 = vpop.permute.xlu0 %800
      %802 = vrot.lane.b32.xlu0 %v263, 4
      %v803 = vpop.permute.xlu0 %802
      %804 = vrot.lane.b32.xlu0 %v443, 4
      %v805 = vpop.permute.xlu0 %804
      %806 = vrot.lane.b32.xlu0 %v264, 4
      %v807 = vpop.permute.xlu0 %806
      %808 = vrot.lane.b32.xlu0 %v444, 4
      %v809 = vpop.permute.xlu0 %808
      %810 = vrot.lane.b32.xlu0 %v265, 4
      %v811 = vpop.permute.xlu0 %810
      %812 = vrot.lane.b32.xlu0 %v445, 4
      %v813 = vpop.permute.xlu0 %812
      %814 = vrot.lane.b32.xlu0 %v266, 4
      %v815 = vpop.permute.xlu0 %814
      %816 = vrot.lane.b32.xlu0 %v446, 4
      %v817 = vpop.permute.xlu0 %816
      %818 = vrot.lane.b32.xlu0 %v267, 4
      %v819 = vpop.permute.xlu0 %818
      %820 = vrot.lane.b32.xlu0 %v447, 4
      %v821 = vpop.permute.xlu0 %820
      %vm854 = vcmask 60448
      %855 = vst.msk [vmem:[%s364] sm:$0xf] %vm854, %v759
      %856 = vst.msk [vmem:[%s364 + $0x4] sm:$0xf] %vm854, %v761
      %857 = vst.msk [vmem:[%s364 + $0x8] sm:$0xf] %vm854, %v763
      %858 = vst.msk [vmem:[%s364 + $0xc] sm:$0xf] %vm854, %v765
      %859 = vst.msk [vmem:[%s364 + $0x10] sm:$0xf] %vm854, %v767
      %860 = vst.msk [vmem:[%s364 + $0x14] sm:$0xf] %vm854, %v769
      %861 = vst.msk [vmem:[%s364 + $0x18] sm:$0xf] %vm854, %v771
      %862 = vst.msk [vmem:[%s364 + $0x1c] sm:$0xf] %vm854, %v773
      %863 = vst.msk [vmem:[%s364 + $0x20] sm:$0xf] %vm854, %v775
      %864 = vst.msk [vmem:[%s364 + $0x24] sm:$0xf] %vm854, %v777
      %865 = vst.msk [vmem:[%s364 + $0x28] sm:$0xf] %vm854, %v779
      %866 = vst.msk [vmem:[%s364 + $0x2c] sm:$0xf] %vm854, %v781
      %867 = vst.msk [vmem:[%s364 + $0x30] sm:$0xf] %vm854, %v783
      %868 = vst.msk [vmem:[%s364 + $0x34] sm:$0xf] %vm854, %v785
      %869 = vst.msk [vmem:[%s364 + $0x38] sm:$0xf] %vm854, %v787
      %870 = vst.msk [vmem:[%s364 + $0x3c] sm:$0xf] %vm854, %v789
      %871 = vst.msk [vmem:[%s364 + $0x40] sm:$0xf] %vm854, %v791
      %872 = vst.msk [vmem:[%s364 + $0x44] sm:$0xf] %vm854, %v793
      %873 = vst.msk [vmem:[%s364 + $0x48] sm:$0xf] %vm854, %v795
      %874 = vst.msk [vmem:[%s364 + $0x4c] sm:$0xf] %vm854, %v797
      %875 = vst.msk [vmem:[%s364 + $0x50] sm:$0xf] %vm854, %v799
      %876 = vst.msk [vmem:[%s364 + $0x54] sm:$0xf] %vm854, %v801
      %877 = vst.msk [vmem:[%s364 + $0x58] sm:$0xf] %vm854, %v803
      %878 = vst.msk [vmem:[%s364 + $0x5c] sm:$0xf] %vm854, %v805
      %879 = vst.msk [vmem:[%s364 + $0x60] sm:$0xf] %vm854, %v807
      %880 = vst.msk [vmem:[%s364 + $0x64] sm:$0xf] %vm854, %v809
      %881 = vst.msk [vmem:[%s364 + $0x68] sm:$0xf] %vm854, %v811
      %882 = vst.msk [vmem:[%s364 + $0x6c] sm:$0xf] %vm854, %v813
      %883 = vst.msk [vmem:[%s364 + $0x70] sm:$0xf] %vm854, %v815
      %884 = vst.msk [vmem:[%s364 + $0x74] sm:$0xf] %vm854, %v817
      %885 = vst.msk [vmem:[%s364 + $0x78] sm:$0xf] %vm854, %v819
      %886 = vst.msk [vmem:[%s364 + $0x7c] sm:$0xf] %vm854, %v821
      %vm887 = vsmask.f32 3328
      %vm888 = vsmask.f32 7440
      %vm889 = vmor %vm887, %vm888
      %v890 = vrot.slane %v451, 5
      %v891 = vor.u32 %v271, %v890
      %v892 = vrot.slane %v891, 4
      %v893 = vrot.slane %v459, 5
      %v894 = vsel %vm889, %v892, %v893
      %v895 = vrot.slane %v456, 4
      %v896 = vor.u32 %v895, %v893
      %v897 = vrot.slane %v896, 4
      %v898 = vrot.slane %v464, 5
      %v899 = vor.u32 %v276, %v898
      %v900 = vrot.slane %v899, 4
      %v901 = vrot.slane %v472, 5
      %v902 = vsel %vm889, %v900, %v901
      %v903 = vrot.slane %v469, 4
      %v904 = vor.u32 %v903, %v901
      %v905 = vrot.slane %v904, 4
      %v906 = vrot.slane %v477, 5
      %v907 = vor.u32 %v281, %v906
      %v908 = vrot.slane %v907, 4
      %v909 = vrot.slane %v485, 5
      %v910 = vsel %vm889, %v908, %v909
      %v911 = vrot.slane %v482, 4
      %v912 = vor.u32 %v911, %v909
      %v913 = vrot.slane %v912, 4
      %v914 = vrot.slane %v490, 5
      %v915 = vor.u32 %v286, %v914
      %v916 = vrot.slane %v915, 4
      %v917 = vrot.slane %v498, 5
      %v918 = vsel %vm889, %v916, %v917
      %v919 = vrot.slane %v495, 4
      %v920 = vor.u32 %v919, %v917
      %v921 = vrot.slane %v920, 4
      %v922 = vrot.slane %v503, 5
      %v923 = vor.u32 %v291, %v922
      %v924 = vrot.slane %v923, 4
      %v925 = vrot.slane %v511, 5
      %v926 = vsel %vm889, %v924, %v925
      %v927 = vrot.slane %v508, 4
      %v928 = vor.u32 %v927, %v925
      %v929 = vrot.slane %v928, 4
      %v930 = vrot.slane %v516, 5
      %v931 = vor.u32 %v296, %v930
      %v932 = vrot.slane %v931, 4
      %v933 = vrot.slane %v524, 5
      %v934 = vsel %vm889, %v932, %v933
      %v935 = vrot.slane %v521, 4
      %v936 = vor.u32 %v935, %v933
      %v937 = vrot.slane %v936, 4
      %v938 = vrot.slane %v529, 5
      %v939 = vor.u32 %v301, %v938
      %v940 = vrot.slane %v939, 4
      %v941 = vrot.slane %v537, 5
      %v942 = vsel %vm889, %v940, %v941
      %v943 = vrot.slane %v534, 4
      %v944 = vor.u32 %v943, %v941
      %v945 = vrot.slane %v944, 4
      %v946 = vrot.slane %v542, 5
      %v947 = vor.u32 %v306, %v946
      %v948 = vrot.slane %v947, 4
      %v949 = vrot.slane %v550, 5
      %v950 = vsel %vm889, %v948, %v949
      %v951 = vrot.slane %v547, 4
      %v952 = vor.u32 %v951, %v949
      %v953 = vrot.slane %v952, 4
      %v954 = vrot.slane %v555, 5
      %v955 = vor.u32 %v311, %v954
      %v956 = vrot.slane %v955, 4
      %v957 = vrot.slane %v563, 5
      %v958 = vsel %vm889, %v956, %v957
      %v959 = vrot.slane %v560, 4
      %v960 = vor.u32 %v959, %v957
      %v961 = vrot.slane %v960, 4
      %v962 = vrot.slane %v568, 5
      %v963 = vor.u32 %v316, %v962
      %v964 = vrot.slane %v963, 4
      %v965 = vrot.slane %v576, 5
      %v966 = vsel %vm889, %v964, %v965
      %v967 = vrot.slane %v573, 4
      %v968 = vor.u32 %v967, %v965
      %v969 = vrot.slane %v968, 4
      %v970 = vrot.slane %v581, 5
      %v971 = vor.u32 %v321, %v970
      %v972 = vrot.slane %v971, 4
      %v973 = vrot.slane %v589, 5
      %v974 = vsel %vm889, %v972, %v973
      %v975 = vrot.slane %v586, 4
      %v976 = vor.u32 %v975, %v973
      %v977 = vrot.slane %v976, 4
      %v978 = vrot.slane %v594, 5
      %v979 = vor.u32 %v326, %v978
      %v980 = vrot.slane %v979, 4
      %v981 = vrot.slane %v602, 5
      %v982 = vsel %vm889, %v980, %v981
      %v983 = vrot.slane %v599, 4
      %v984 = vor.u32 %v983, %v981
      %v985 = vrot.slane %v984, 4
      %v986 = vrot.slane %v607, 5
      %v987 = vor.u32 %v331, %v986
      %v988 = vrot.slane %v987, 4
      %v989 = vrot.slane %v615, 5
      %v990 = vsel %vm889, %v988, %v989
      %v991 = vrot.slane %v612, 4
      %v992 = vor.u32 %v991, %v989
      %v993 = vrot.slane %v992, 4
      %v994 = vrot.slane %v620, 5
      %v995 = vor.u32 %v336, %v994
      %v996 = vrot.slane %v995, 4
      %v997 = vrot.slane %v628, 5
      %v998 = vsel %vm889, %v996, %v997
      %v999 = vrot.slane %v625, 4
      %v1000 = vor.u32 %v999, %v997
      %v1001 = vrot.slane %v1000, 4
      %v1002 = vrot.slane %v633, 5
      %v1003 = vor.u32 %v341, %v1002
      %v1004 = vrot.slane %v1003, 4
      %v1005 = vrot.slane %v641, 5
      %v1006 = vsel %vm889, %v1004, %v1005
      %v1007 = vrot.slane %v638, 4
      %v1008 = vor.u32 %v1007, %v1005
      %v1009 = vrot.slane %v1008, 4
      %v1010 = vrot.slane %v646, 5
      %v1011 = vor.u32 %v346, %v1010
      %v1012 = vrot.slane %v1011, 4
      %v1013 = vrot.slane %v654, 5
      %v1014 = vsel %vm889, %v1012, %v1013
      %v1015 = vrot.slane %v651, 4
      %v1016 = vor.u32 %v1015, %v1013
      %v1017 = vrot.slane %v1016, 4
      %1018 = vrot.lane.b32.xlu0 %v894, 8
      %v1019 = vpop.permute.xlu0 %1018
      %1020 = vrot.lane.b32.xlu0 %v897, 8
      %v1021 = vpop.permute.xlu0 %1020
      %1022 = vrot.lane.b32.xlu0 %v902, 8
      %v1023 = vpop.permute.xlu0 %1022
      %1024 = vrot.lane.b32.xlu0 %v905, 8
      %v1025 = vpop.permute.xlu0 %1024
      %1026 = vrot.lane.b32.xlu0 %v910, 8
      %v1027 = vpop.permute.xlu0 %1026
      %1028 = vrot.lane.b32.xlu0 %v913, 8
      %v1029 = vpop.permute.xlu0 %1028
      %1030 = vrot.lane.b32.xlu0 %v918, 8
      %v1031 = vpop.permute.xlu0 %1030
      %1032 = vrot.lane.b32.xlu0 %v921, 8
      %v1033 = vpop.permute.xlu0 %1032
      %1034 = vrot.lane.b32.xlu0 %v926, 8
      %v1035 = vpop.permute.xlu0 %1034
      %1036 = vrot.lane.b32.xlu0 %v929, 8
      %v1037 = vpop.permute.xlu0 %1036
      %1038 = vrot.lane.b32.xlu0 %v934, 8
      %v1039 = vpop.permute.xlu0 %1038
      %1040 = vrot.lane.b32.xlu0 %v937, 8
      %v1041 = vpop.permute.xlu0 %1040
      %1042 = vrot.lane.b32.xlu0 %v942, 8
      %v1043 = vpop.permute.xlu0 %1042
      %1044 = vrot.lane.b32.xlu0 %v945, 8
      %v1045 = vpop.permute.xlu0 %1044
      %1046 = vrot.lane.b32.xlu0 %v950, 8
      %v1047 = vpop.permute.xlu0 %1046
      %1048 = vrot.lane.b32.xlu0 %v953, 8
      %v1049 = vpop.permute.xlu0 %1048
      %1050 = vrot.lane.b32.xlu0 %v958, 8
      %v1051 = vpop.permute.xlu0 %1050
      %1052 = vrot.lane.b32.xlu0 %v961, 8
      %v1053 = vpop.permute.xlu0 %1052
      %1054 = vrot.lane.b32.xlu0 %v966, 8
      %v1055 = vpop.permute.xlu0 %1054
      %1056 = vrot.lane.b32.xlu0 %v969, 8
      %v1057 = vpop.permute.xlu0 %1056
      %1058 = vrot.lane.b32.xlu0 %v974, 8
      %v1059 = vpop.permute.xlu0 %1058
      %1060 = vrot.lane.b32.xlu0 %v977, 8
      %v1061 = vpop.permute.xlu0 %1060
      %1062 = vrot.lane.b32.xlu0 %v982, 8
      %v1063 = vpop.permute.xlu0 %1062
      %1064 = vrot.lane.b32.xlu0 %v985, 8
      %v1065 = vpop.permute.xlu0 %1064
      %1066 = vrot.lane.b32.xlu0 %v990, 8
      %v1067 = vpop.permute.xlu0 %1066
      %1068 = vrot.lane.b32.xlu0 %v993, 8
      %v1069 = vpop.permute.xlu0 %1068
      %1070 = vrot.lane.b32.xlu0 %v998, 8
      %v1071 = vpop.permute.xlu0 %1070
      %1072 = vrot.lane.b32.xlu0 %v1001, 8
      %v1073 = vpop.permute.xlu0 %1072
      %1074 = vrot.lane.b32.xlu0 %v1006, 8
      %v1075 = vpop.permute.xlu0 %1074
      %1076 = vrot.lane.b32.xlu0 %v1009, 8
      %v1077 = vpop.permute.xlu0 %1076
      %1078 = vrot.lane.b32.xlu0 %v1014, 8
      %v1079 = vpop.permute.xlu0 %1078
      %1080 = vrot.lane.b32.xlu0 %v1017, 8
      %v1081 = vpop.permute.xlu0 %1080
      %vm1114 = vcmask 93248
      %1115 = vst.msk [vmem:[%s364] sm:$0xf] %vm1114, %v1019
      %vm1116 = vcmask 93248
      %vm1117 = vmand %vm1116, %vm887
      %v1118 = vld [vmem:[%s364 + $0x4] sm:$0xf]
      %v1119 = vsel %vm1117, %v1021, %v1118
      %1120 = vst [vmem:[%s364 + $0x4] sm:$0xf] %v1119
      %1121 = vst.msk [vmem:[%s364 + $0x8] sm:$0xf] %vm1114, %v1023
      %v1122 = vld [vmem:[%s364 + $0xc] sm:$0xf]
      %v1123 = vsel %vm1117, %v1025, %v1122
      %1124 = vst [vmem:[%s364 + $0xc] sm:$0xf] %v1123
      %1125 = vst.msk [vmem:[%s364 + $0x10] sm:$0xf] %vm1114, %v1027
      %v1126 = vld [vmem:[%s364 + $0x14] sm:$0xf]
      %v1127 = vsel %vm1117, %v1029, %v1126
      %1128 = vst [vmem:[%s364 + $0x14] sm:$0xf] %v1127
      %1129 = vst.msk [vmem:[%s364 + $0x18] sm:$0xf] %vm1114, %v1031
      %v1130 = vld [vmem:[%s364 + $0x1c] sm:$0xf]
      %v1131 = vsel %vm1117, %v1033, %v1130
      %1132 = vst [vmem:[%s364 + $0x1c] sm:$0xf] %v1131
      %1133 = vst.msk [vmem:[%s364 + $0x20] sm:$0xf] %vm1114, %v1035
      %v1134 = vld [vmem:[%s364 + $0x24] sm:$0xf]
      %v1135 = vsel %vm1117, %v1037, %v1134
      %1136 = vst [vmem:[%s364 + $0x24] sm:$0xf] %v1135
      %1137 = vst.msk [vmem:[%s364 + $0x28] sm:$0xf] %vm1114, %v1039
      %v1138 = vld [vmem:[%s364 + $0x2c] sm:$0xf]
      %v1139 = vsel %vm1117, %v1041, %v1138
      %1140 = vst [vmem:[%s364 + $0x2c] sm:$0xf] %v1139
      %1141 = vst.msk [vmem:[%s364 + $0x30] sm:$0xf] %vm1114, %v1043
      %v1142 = vld [vmem:[%s364 + $0x34] sm:$0xf]
      %v1143 = vsel %vm1117, %v1045, %v1142
      %1144 = vst [vmem:[%s364 + $0x34] sm:$0xf] %v1143
      %1145 = vst.msk [vmem:[%s364 + $0x38] sm:$0xf] %vm1114, %v1047
      %v1146 = vld [vmem:[%s364 + $0x3c] sm:$0xf]
      %v1147 = vsel %vm1117, %v1049, %v1146
      %1148 = vst [vmem:[%s364 + $0x3c] sm:$0xf] %v1147
      %1149 = vst.msk [vmem:[%s364 + $0x40] sm:$0xf] %vm1114, %v1051
      %v1150 = vld [vmem:[%s364 + $0x44] sm:$0xf]
      %v1151 = vsel %vm1117, %v1053, %v1150
      %1152 = vst [vmem:[%s364 + $0x44] sm:$0xf] %v1151
      %1153 = vst.msk [vmem:[%s364 + $0x48] sm:$0xf] %vm1114, %v1055
      %v1154 = vld [vmem:[%s364 + $0x4c] sm:$0xf]
      %v1155 = vsel %vm1117, %v1057, %v1154
      %1156 = vst [vmem:[%s364 + $0x4c] sm:$0xf] %v1155
      %1157 = vst.msk [vmem:[%s364 + $0x50] sm:$0xf] %vm1114, %v1059
      %v1158 = vld [vmem:[%s364 + $0x54] sm:$0xf]
      %v1159 = vsel %vm1117, %v1061, %v1158
      %1160 = vst [vmem:[%s364 + $0x54] sm:$0xf] %v1159
      %1161 = vst.msk [vmem:[%s364 + $0x58] sm:$0xf] %vm1114, %v1063
      %v1162 = vld [vmem:[%s364 + $0x5c] sm:$0xf]
      %v1163 = vsel %vm1117, %v1065, %v1162
      %1164 = vst [vmem:[%s364 + $0x5c] sm:$0xf] %v1163
      %1165 = vst.msk [vmem:[%s364 + $0x60] sm:$0xf] %vm1114, %v1067
      %v1166 = vld [vmem:[%s364 + $0x64] sm:$0xf]
      %v1167 = vsel %vm1117, %v1069, %v1166
      %1168 = vst [vmem:[%s364 + $0x64] sm:$0xf] %v1167
      %1169 = vst.msk [vmem:[%s364 + $0x68] sm:$0xf] %vm1114, %v1071
      %v1170 = vld [vmem:[%s364 + $0x6c] sm:$0xf]
      %v1171 = vsel %vm1117, %v1073, %v1170
      %1172 = vst [vmem:[%s364 + $0x6c] sm:$0xf] %v1171
      %1173 = vst.msk [vmem:[%s364 + $0x70] sm:$0xf] %vm1114, %v1075
      %v1174 = vld [vmem:[%s364 + $0x74] sm:$0xf]
      %v1175 = vsel %vm1117, %v1077, %v1174
      %1176 = vst [vmem:[%s364 + $0x74] sm:$0xf] %v1175
      %1177 = vst.msk [vmem:[%s364 + $0x78] sm:$0xf] %vm1114, %v1079
      %v1178 = vld [vmem:[%s364 + $0x7c] sm:$0xf]
      %v1179 = vsel %vm1117, %v1081, %v1178
      %1180 = vst [vmem:[%s364 + $0x7c] sm:$0xf] %v1179
      %1181 = vrot.lane.b32.xlu0 %v459, 8
      %v1182 = vpop.permute.xlu0 %1181
      %1183 = vrot.lane.b32.xlu0 %v472, 8
      %v1184 = vpop.permute.xlu0 %1183
      %1185 = vrot.lane.b32.xlu0 %v485, 8
      %v1186 = vpop.permute.xlu0 %1185
      %1187 = vrot.lane.b32.xlu0 %v498, 8
      %v1188 = vpop.permute.xlu0 %1187
      %1189 = vrot.lane.b32.xlu0 %v511, 8
      %v1190 = vpop.permute.xlu0 %1189
      %1191 = vrot.lane.b32.xlu0 %v524, 8
      %v1192 = vpop.permute.xlu0 %1191
      %1193 = vrot.lane.b32.xlu0 %v537, 8
      %v1194 = vpop.permute.xlu0 %1193
      %1195 = vrot.lane.b32.xlu0 %v550, 8
      %v1196 = vpop.permute.xlu0 %1195
      %1197 = vrot.lane.b32.xlu0 %v563, 8
      %v1198 = vpop.permute.xlu0 %1197
      %1199 = vrot.lane.b32.xlu0 %v576, 8
      %v1200 = vpop.permute.xlu0 %1199
      %1201 = vrot.lane.b32.xlu0 %v589, 8
      %v1202 = vpop.permute.xlu0 %1201
      %1203 = vrot.lane.b32.xlu0 %v602, 8
      %v1204 = vpop.permute.xlu0 %1203
      %1205 = vrot.lane.b32.xlu0 %v615, 8
      %v1206 = vpop.permute.xlu0 %1205
      %1207 = vrot.lane.b32.xlu0 %v628, 8
      %v1208 = vpop.permute.xlu0 %1207
      %1209 = vrot.lane.b32.xlu0 %v641, 8
      %v1210 = vpop.permute.xlu0 %1209
      %1211 = vrot.lane.b32.xlu0 %v654, 8
      %v1212 = vpop.permute.xlu0 %1211
      %vm1229 = vcmask 93251
      %vm1230 = vsmask.f32 7950
      %vm1231 = vmand %vm1229, %vm1230
      %v1232 = vld [vmem:[%s364 + $0x4] sm:$0x8]
      %v1233 = vsel %vm1231, %v1182, %v1232
      %1234 = vst [vmem:[%s364 + $0x4] sm:$0x8] %v1233
      %v1235 = vld [vmem:[%s364 + $0xc] sm:$0x8]
      %v1236 = vsel %vm1231, %v1184, %v1235
      %1237 = vst [vmem:[%s364 + $0xc] sm:$0x8] %v1236
      %v1238 = vld [vmem:[%s364 + $0x14] sm:$0x8]
      %v1239 = vsel %vm1231, %v1186, %v1238
      %1240 = vst [vmem:[%s364 + $0x14] sm:$0x8] %v1239
      %v1241 = vld [vmem:[%s364 + $0x1c] sm:$0x8]
      %v1242 = vsel %vm1231, %v1188, %v1241
      %1243 = vst [vmem:[%s364 + $0x1c] sm:$0x8] %v1242
      %v1244 = vld [vmem:[%s364 + $0x24] sm:$0x8]
      %v1245 = vsel %vm1231, %v1190, %v1244
      %1246 = vst [vmem:[%s364 + $0x24] sm:$0x8] %v1245
      %v1247 = vld [vmem:[%s364 + $0x2c] sm:$0x8]
      %v1248 = vsel %vm1231, %v1192, %v1247
      %1249 = vst [vmem:[%s364 + $0x2c] sm:$0x8] %v1248
      %v1250 = vld [vmem:[%s364 + $0x34] sm:$0x8]
      %v1251 = vsel %vm1231, %v1194, %v1250
      %1252 = vst [vmem:[%s364 + $0x34] sm:$0x8] %v1251
      %v1253 = vld [vmem:[%s364 + $0x3c] sm:$0x8]
      %v1254 = vsel %vm1231, %v1196, %v1253
      %1255 = vst [vmem:[%s364 + $0x3c] sm:$0x8] %v1254
      %v1256 = vld [vmem:[%s364 + $0x44] sm:$0x8]
      %v1257 = vsel %vm1231, %v1198, %v1256
      %1258 = vst [vmem:[%s364 + $0x44] sm:$0x8] %v1257
      %v1259 = vld [vmem:[%s364 + $0x4c] sm:$0x8]
      %v1260 = vsel %vm1231, %v1200, %v1259
      %1261 = vst [vmem:[%s364 + $0x4c] sm:$0x8] %v1260
      %v1262 = vld [vmem:[%s364 + $0x54] sm:$0x8]
      %v1263 = vsel %vm1231, %v1202, %v1262
      %1264 = vst [vmem:[%s364 + $0x54] sm:$0x8] %v1263
      %v1265 = vld [vmem:[%s364 + $0x5c] sm:$0x8]
      %v1266 = vsel %vm1231, %v1204, %v1265
      %1267 = vst [vmem:[%s364 + $0x5c] sm:$0x8] %v1266
      %v1268 = vld [vmem:[%s364 + $0x64] sm:$0x8]
      %v1269 = vsel %vm1231, %v1206, %v1268
      %1270 = vst [vmem:[%s364 + $0x64] sm:$0x8] %v1269
      %v1271 = vld [vmem:[%s364 + $0x6c] sm:$0x8]
      %v1272 = vsel %vm1231, %v1208, %v1271
      %1273 = vst [vmem:[%s364 + $0x6c] sm:$0x8] %v1272
      %v1274 = vld [vmem:[%s364 + $0x74] sm:$0x8]
      %v1275 = vsel %vm1231, %v1210, %v1274
      %1276 = vst [vmem:[%s364 + $0x74] sm:$0x8] %v1275
      %v1277 = vld [vmem:[%s364 + $0x7c] sm:$0x8]
      %v1278 = vsel %vm1231, %v1212, %v1277
      %1279 = vst [vmem:[%s364 + $0x7c] sm:$0x8] %v1278
      %s1280 = scalar_lea.vmem [#allocation2], 16
      %v1281 = vld [vmem:[%s1280] sm:$0xf]
      %v1282 = vld [vmem:[%s1280 + $0x4] sm:$0xf]
      %vm1283 = vcmask 93184
      %1284 = vst.msk [vmem:[#allocation2] sm:$0xf] %vm1283, %v1281
      %1285 = vst.msk [vmem:[#allocation2 + $0x4] sm:$0xf] %vm1283, %v1282
      %s1286 = scalar_lea.vmem [#allocation2], 120
      %v1287 = vld [vmem:[%s1286] sm:$0xf]
      %v1288 = vld [vmem:[%s1286 + $0x4] sm:$0xf]
      %s1289 = scalar_lea.vmem [#allocation2], 136
      %1290 = vst.msk [vmem:[%s1289] sm:$0xf] %vm1283, %v1287
      %1291 = vst.msk [vmem:[%s1289 + $0x4] sm:$0xf] %vm1283, %v1288
      %v1292 = vld [vmem:[#allocation2] sm:$0xf]
      %v1293 = vld [vmem:[#allocation2 + $0x4] sm:$0xf]
      %v1294 = vld [vmem:[#allocation2 + $0x8] sm:$0xf]
      %v1295 = vld [vmem:[#allocation2 + $0xc] sm:$0xf]
      %v1296 = vld [vmem:[#allocation2 + $0x10] sm:$0xf]
      %v1297 = vld [vmem:[#allocation2 + $0x14] sm:$0xf]
      %v1298 = vld [vmem:[#allocation2 + $0x18] sm:$0xf]
      %v1299 = vld [vmem:[#allocation2 + $0x1c] sm:$0xf]
      %v1300 = vld [vmem:[#allocation2 + $0x20] sm:$0xf]
      %v1301 = vld [vmem:[#allocation2 + $0x24] sm:$0xf]
      %v1302 = vld [vmem:[#allocation2 + $0x28] sm:$0xf]
      %v1303 = vld [vmem:[#allocation2 + $0x2c] sm:$0xf]
      %v1304 = vld [vmem:[#allocation2 + $0x30] sm:$0xf]
      %v1305 = vld [vmem:[#allocation2 + $0x34] sm:$0xf]
      %v1306 = vld [vmem:[#allocation2 + $0x38] sm:$0xf]
      %v1307 = vld [vmem:[#allocation2 + $0x3c] sm:$0xf]
      %v1308 = vld [vmem:[#allocation2 + $0x40] sm:$0xf]
      %v1309 = vld [vmem:[#allocation2 + $0x44] sm:$0xf]
      %v1310 = vld [vmem:[#allocation2 + $0x48] sm:$0xf]
      %v1311 = vld [vmem:[#allocation2 + $0x4c] sm:$0xf]
      %v1312 = vld [vmem:[#allocation2 + $0x50] sm:$0xf]
      %v1313 = vld [vmem:[#allocation2 + $0x54] sm:$0xf]
      %v1314 = vld [vmem:[#allocation2 + $0x58] sm:$0xf]
      %v1315 = vld [vmem:[#allocation2 + $0x5c] sm:$0xf]
      %v1316 = vld [vmem:[#allocation2 + $0x60] sm:$0xf]
      %v1317 = vld [vmem:[#allocation2 + $0x64] sm:$0xf]
      %v1318 = vld [vmem:[#allocation2 + $0x68] sm:$0xf]
      %v1319 = vld [vmem:[#allocation2 + $0x6c] sm:$0xf]
      %v1320 = vld [vmem:[#allocation2 + $0x70] sm:$0xf]
      %v1321 = vld [vmem:[#allocation2 + $0x74] sm:$0xf]
      %v1322 = vld [vmem:[#allocation2 + $0x78] sm:$0xf]
      %v1323 = vld [vmem:[#allocation2 + $0x7c] sm:$0xf]
      %v1324 = vld [vmem:[%s1] sm:$0xf]
      %v1325 = vld [vmem:[%s1 + $0x4] sm:$0x3]
      %v1358 = vunpack.c.l.b16 %v1292
      %v1359 = vunpack.c.l.b16 %v1293
      %v1360 = vunpack.c.l.b16 %v1294
      %v1361 = vunpack.c.l.b16 %v1295
      %v1362 = vunpack.c.l.b16 %v1296
      %v1363 = vunpack.c.l.b16 %v1297
      %v1364 = vunpack.c.l.b16 %v1298
      %v1365 = vunpack.c.l.b16 %v1299
      %v1366 = vunpack.c.l.b16 %v1300
      %v1367 = vunpack.c.l.b16 %v1301
      %v1368 = vunpack.c.l.b16 %v1302
      %v1369 = vunpack.c.l.b16 %v1303
      %v1370 = vunpack.c.l.b16 %v1304
      %v1371 = vunpack.c.l.b16 %v1305
      %v1372 = vunpack.c.l.b16 %v1306
      %v1373 = vunpack.c.l.b16 %v1307
      %v1374 = vunpack.c.l.b16 %v1308
      %v1375 = vunpack.c.l.b16 %v1309
      %v1376 = vunpack.c.l.b16 %v1310
      %v1377 = vunpack.c.l.b16 %v1311
      %v1378 = vunpack.c.l.b16 %v1312
      %v1379 = vunpack.c.l.b16 %v1313
      %v1380 = vunpack.c.l.b16 %v1314
      %v1381 = vunpack.c.l.b16 %v1315
      %v1382 = vunpack.c.l.b16 %v1316
      %v1383 = vunpack.c.l.b16 %v1317
      %v1384 = vunpack.c.l.b16 %v1318
      %v1385 = vunpack.c.l.b16 %v1319
      %v1386 = vunpack.c.l.b16 %v1320
      %v1387 = vunpack.c.l.b16 %v1321
      %v1388 = vunpack.c.l.b16 %v1322
      %v1389 = vunpack.c.l.b16 %v1323
      %v1390 = vpack.c.b16 %v1359, %v1358
      %v1391 = vpack.c.b16 %v1361, %v1360
      %v1392 = vpack.c.b16 %v1363, %v1362
      %v1393 = vpack.c.b16 %v1365, %v1364
      %v1394 = vpack.c.b16 %v1367, %v1366
      %v1395 = vpack.c.b16 %v1369, %v1368
      %v1396 = vpack.c.b16 %v1371, %v1370
      %v1397 = vpack.c.b16 %v1373, %v1372
      %v1398 = vpack.c.b16 %v1375, %v1374
      %v1399 = vpack.c.b16 %v1377, %v1376
      %v1400 = vpack.c.b16 %v1379, %v1378
      %v1401 = vpack.c.b16 %v1381, %v1380
      %v1402 = vpack.c.b16 %v1383, %v1382
      %v1403 = vpack.c.b16 %v1385, %v1384
      %v1404 = vpack.c.b16 %v1387, %v1386
      %v1405 = vpack.c.b16 %v1389, %v1388
      %v1408 = vunpack.c.l.b16 %v1324
      %v1409 = vunpack.c.l.b16 %v1325
      %v1410 = vpack.c.b16 %v1409, %v1408
      %vm1411 = vcmask 97280
      %v1413 = vsel %vm1411, %v1390, 0
      %v1416 = vsel %vm1411, %v1391, 0
      %v1419 = vsel %vm1411, %v1392, 0
      %v1422 = vsel %vm1411, %v1393, 0
      %v1425 = vsel %vm1411, %v1394, 0
      %v1428 = vsel %vm1411, %v1395, 0
      %v1431 = vsel %vm1411, %v1396, 0
      %v1434 = vsel %vm1411, %v1397, 0
      %v1437 = vsel %vm1411, %v1398, 0
      %v1440 = vsel %vm1411, %v1399, 0
      %v1443 = vsel %vm1411, %v1400, 0
      %v1446 = vsel %vm1411, %v1401, 0
      %v1449 = vsel %vm1411, %v1402, 0
      %v1452 = vsel %vm1411, %v1403, 0
      %v1455 = vsel %vm1411, %v1404, 0
      %v1458 = vsel %vm1411, %v1405, 0
      %vm1460 = vcmask 1045504
      %v1462 = vsel %vm1460, %v1410, 0
      %1464 = vmatprep.subr.bf16.mxu0 0
      %1465 = vmatpush1.bf16.msra.mxu0 0
      %1466 = vmatprep.subr.bf16.mxu0 0
      %1467 = vmatpush1.bf16.msra.mxu0 0
      %1468 = vmatprep.subr.bf16.mxu0 0
      %1469 = vmatpush1.bf16.msra.mxu0 0
      %1470 = vmatprep.subr.bf16.mxu0 0
      %1471 = vmatpush1.bf16.msra.mxu0 0
      %1472 = vmatprep.subr.bf16.mxu0 0
      %1473 = vmatpush1.bf16.msra.mxu0 0
      %1474 = vmatprep.subr.bf16.mxu0 0
      %1475 = vmatpush1.bf16.msra.mxu0 0
      %1476 = vmatprep.subr.bf16.mxu0 0
      %1477 = vmatpush1.bf16.msra.mxu0 0
      %1478 = vmatprep.subr.bf16.mxu0 0
      %1479 = vmatpush1.bf16.msra.mxu0 %v1462
      %1480 = vmatprep.subr.bf16.mxu0 0
      %1481 = vmatpush2.bf16.msra.mxu0 0
      %1482 = vmatprep.subr.bf16.mxu0 0
      %1483 = vmatpush2.bf16.msra.mxu0 0
      %1484 = vmatprep.subr.bf16.mxu0 0
      %1485 = vmatpush2.bf16.msra.mxu0 0
      %1486 = vmatprep.subr.bf16.mxu0 0
      %1487 = vmatpush2.bf16.msra.mxu0 0
      %1488 = vmatprep.subr.bf16.mxu0 0
      %1489 = vmatpush2.bf16.msra.mxu0 0
      %1490 = vmatprep.subr.bf16.mxu0 0
      %1491 = vmatpush2.bf16.msra.mxu0 0
      %1492 = vmatprep.subr.bf16.mxu0 0
      %1493 = vmatpush2.bf16.msra.mxu0 0
      %1494 = vmatprep.subr.bf16.mxu0 0
      %1495 = vmatpush2.bf16.msra.mxu0 0
      %1496 = vmatprep.mubr.bf16.mxu0 0
      %1497 = vmatmul.mubr.bf16.gmra.mxu0 %v1413
      %v1498 = vpop.f32.mrf.mxu0
      %v1499 = vadd.f32 0.0, %v1498
      %v1500 = vpop.f32.mrf.mxu0
      %v1501 = vpop.f32.mrf.mxu0
      %v1502 = vadd.f32 0.0, %v1501
      %v1503 = vpop.f32.mrf.mxu0
      %1504 = vmatprep.mubr.bf16.mxu0 0
      %1505 = vmatmul.mubr.bf16.gmra.mxu0 %v1416
      %v1506 = vpop.f32.mrf.mxu0
      %v1507 = vadd.f32 0.0, %v1506
      %v1508 = vpop.f32.mrf.mxu0
      %v1509 = vpop.f32.mrf.mxu0
      %v1510 = vadd.f32 0.0, %v1509
      %v1511 = vpop.f32.mrf.mxu0
      %1512 = vmatprep.mubr.bf16.mxu0 0
      %1513 = vmatmul.mubr.bf16.gmra.mxu0 %v1419
      %v1514 = vpop.f32.mrf.mxu0
      %v1515 = vadd.f32 0.0, %v1514
      %v1516 = vpop.f32.mrf.mxu0
      %v1517 = vpop.f32.mrf.mxu0
      %v1518 = vadd.f32 0.0, %v1517
      %v1519 = vpop.f32.mrf.mxu0
      %1520 = vmatprep.mubr.bf16.mxu0 0
      %1521 = vmatmul.mubr.bf16.gmra.mxu0 %v1422
      %v1522 = vpop.f32.mrf.mxu0
      %v1523 = vadd.f32 0.0, %v1522
      %v1524 = vpop.f32.mrf.mxu0
      %v1525 = vpop.f32.mrf.mxu0
      %v1526 = vadd.f32 0.0, %v1525
      %v1527 = vpop.f32.mrf.mxu0
      %1528 = vmatprep.mubr.bf16.mxu0 0
      %1529 = vmatmul.mubr.bf16.gmra.mxu0 %v1425
      %v1530 = vpop.f32.mrf.mxu0
      %v1531 = vadd.f32 0.0, %v1530
      %v1532 = vpop.f32.mrf.mxu0
      %v1533 = vpop.f32.mrf.mxu0
      %v1534 = vadd.f32 0.0, %v1533
      %v1535 = vpop.f32.mrf.mxu0
      %1536 = vmatprep.mubr.bf16.mxu0 0
      %1537 = vmatmul.mubr.bf16.gmra.mxu0 %v1428
      %v1538 = vpop.f32.mrf.mxu0
      %v1539 = vadd.f32 0.0, %v1538
      %v1540 = vpop.f32.mrf.mxu0
      %v1541 = vpop.f32.mrf.mxu0
      %v1542 = vadd.f32 0.0, %v1541
      %v1543 = vpop.f32.mrf.mxu0
      %1544 = vmatprep.mubr.bf16.mxu0 0
      %1545 = vmatmul.mubr.bf16.gmra.mxu0 %v1431
      %v1546 = vpop.f32.mrf.mxu0
      %v1547 = vadd.f32 0.0, %v1546
      %v1548 = vpop.f32.mrf.mxu0
      %v1549 = vpop.f32.mrf.mxu0
      %v1550 = vadd.f32 0.0, %v1549
      %v1551 = vpop.f32.mrf.mxu0
      %1552 = vmatprep.mubr.bf16.mxu0 0
      %1553 = vmatmul.mubr.bf16.gmra.mxu0 %v1434
      %v1554 = vpop.f32.mrf.mxu0
      %v1555 = vadd.f32 0.0, %v1554
      %v1556 = vpop.f32.mrf.mxu0
      %v1557 = vpop.f32.mrf.mxu0
      %v1558 = vadd.f32 0.0, %v1557
      %v1559 = vpop.f32.mrf.mxu0
      %1560 = vmatprep.mubr.bf16.mxu0 0
      %1561 = vmatmul.mubr.bf16.gmra.mxu0 %v1437
      %v1562 = vpop.f32.mrf.mxu0
      %v1563 = vadd.f32 0.0, %v1562
      %v1564 = vpop.f32.mrf.mxu0
      %v1565 = vpop.f32.mrf.mxu0
      %v1566 = vadd.f32 0.0, %v1565
      %v1567 = vpop.f32.mrf.mxu0
      %1568 = vmatprep.mubr.bf16.mxu0 0
      %1569 = vmatmul.mubr.bf16.gmra.mxu0 %v1440
      %v1570 = vpop.f32.mrf.mxu0
      %v1571 = vadd.f32 0.0, %v1570
      %v1572 = vpop.f32.mrf.mxu0
      %v1573 = vpop.f32.mrf.mxu0
      %v1574 = vadd.f32 0.0, %v1573
      %v1575 = vpop.f32.mrf.mxu0
      %1576 = vmatprep.mubr.bf16.mxu0 0
      %1577 = vmatmul.mubr.bf16.gmra.mxu0 %v1443
      %v1578 = vpop.f32.mrf.mxu0
      %v1579 = vadd.f32 0.0, %v1578
      %v1580 = vpop.f32.mrf.mxu0
      %v1581 = vpop.f32.mrf.mxu0
      %v1582 = vadd.f32 0.0, %v1581
      %v1583 = vpop.f32.mrf.mxu0
      %1584 = vmatprep.mubr.bf16.mxu0 0
      %1585 = vmatmul.mubr.bf16.gmra.mxu0 %v1446
      %v1586 = vpop.f32.mrf.mxu0
      %v1587 = vadd.f32 0.0, %v1586
      %v1588 = vpop.f32.mrf.mxu0
      %v1589 = vpop.f32.mrf.mxu0
      %v1590 = vadd.f32 0.0, %v1589
      %v1591 = vpop.f32.mrf.mxu0
      %1592 = vmatprep.mubr.bf16.mxu0 0
      %1593 = vmatmul.mubr.bf16.gmra.mxu0 %v1449
      %v1594 = vpop.f32.mrf.mxu0
      %v1595 = vadd.f32 0.0, %v1594
      %v1596 = vpop.f32.mrf.mxu0
      %v1597 = vpop.f32.mrf.mxu0
      %v1598 = vadd.f32 0.0, %v1597
      %v1599 = vpop.f32.mrf.mxu0
      %1600 = vmatprep.mubr.bf16.mxu0 0
      %1601 = vmatmul.mubr.bf16.gmra.mxu0 %v1452
      %v1602 = vpop.f32.mrf.mxu0
      %v1603 = vadd.f32 0.0, %v1602
      %v1604 = vpop.f32.mrf.mxu0
      %v1605 = vpop.f32.mrf.mxu0
      %v1606 = vadd.f32 0.0, %v1605
      %v1607 = vpop.f32.mrf.mxu0
      %1608 = vmatprep.mubr.bf16.mxu0 0
      %1609 = vmatmul.mubr.bf16.gmra.mxu0 %v1455
      %v1610 = vpop.f32.mrf.mxu0
      %v1611 = vadd.f32 0.0, %v1610
      %v1612 = vpop.f32.mrf.mxu0
      %v1613 = vpop.f32.mrf.mxu0
      %v1614 = vadd.f32 0.0, %v1613
      %v1615 = vpop.f32.mrf.mxu0
      %1616 = vmatprep.mubr.bf16.mxu0 0
      %1617 = vmatmul.mubr.bf16.gmra.mxu0 %v1458
      %v1618 = vpop.f32.mrf.mxu0
      %v1619 = vadd.f32 0.0, %v1618
      %v1620 = vpop.f32.mrf.mxu0
      %v1621 = vpop.f32.mrf.mxu0
      %v1622 = vadd.f32 0.0, %v1621
      %v1623 = vpop.f32.mrf.mxu0
      %1624 = vdwg.mxu0
      %vm1625 = vcmask 31744
      %1626 = vst.msk [vmem:[#allocation3] sm:$0xff] %vm1625, %v1499
      %1627 = vst.msk [vmem:[#allocation3 + $0x8] sm:$0xff] %vm1625, %v1502
      %1628 = vst.msk [vmem:[#allocation3 + $0x10] sm:$0xff] %vm1625, %v1507
      %1629 = vst.msk [vmem:[#allocation3 + $0x18] sm:$0xff] %vm1625, %v1510
      %1630 = vst.msk [vmem:[#allocation3 + $0x20] sm:$0xff] %vm1625, %v1515
      %1631 = vst.msk [vmem:[#allocation3 + $0x28] sm:$0xff] %vm1625, %v1518
      %1632 = vst.msk [vmem:[#allocation3 + $0x30] sm:$0xff] %vm1625, %v1523
      %1633 = vst.msk [vmem:[#allocation3 + $0x38] sm:$0xff] %vm1625, %v1526
      %1634 = vst.msk [vmem:[#allocation3 + $0x40] sm:$0xff] %vm1625, %v1531
      %1635 = vst.msk [vmem:[#allocation3 + $0x48] sm:$0xff] %vm1625, %v1534
      %1636 = vst.msk [vmem:[#allocation3 + $0x50] sm:$0xff] %vm1625, %v1539
      %1637 = vst.msk [vmem:[#allocation3 + $0x58] sm:$0xff] %vm1625, %v1542
      %1638 = vst.msk [vmem:[#allocation3 + $0x60] sm:$0xff] %vm1625, %v1547
      %1639 = vst.msk [vmem:[#allocation3 + $0x68] sm:$0xff] %vm1625, %v1550
      %1640 = vst.msk [vmem:[#allocation3 + $0x70] sm:$0xff] %vm1625, %v1555
      %1641 = vst.msk [vmem:[#allocation3 + $0x78] sm:$0xff] %vm1625, %v1558
      %1642 = vst.msk [vmem:[#allocation3 + $0x80] sm:$0xff] %vm1625, %v1563
      %1643 = vst.msk [vmem:[#allocation3 + $0x88] sm:$0xff] %vm1625, %v1566
      %1644 = vst.msk [vmem:[#allocation3 + $0x90] sm:$0xff] %vm1625, %v1571
      %1645 = vst.msk [vmem:[#allocation3 + $0x98] sm:$0xff] %vm1625, %v1574
      %1646 = vst.msk [vmem:[#allocation3 + $0xa0] sm:$0xff] %vm1625, %v1579
      %1647 = vst.msk [vmem:[#allocation3 + $0xa8] sm:$0xff] %vm1625, %v1582
      %1648 = vst.msk [vmem:[#allocation3 + $0xb0] sm:$0xff] %vm1625, %v1587
      %1649 = vst.msk [vmem:[#allocation3 + $0xb8] sm:$0xff] %vm1625, %v1590
      %1650 = vst.msk [vmem:[#allocation3 + $0xc0] sm:$0xff] %vm1625, %v1595
      %1651 = vst.msk [vmem:[#allocation3 + $0xc8] sm:$0xff] %vm1625, %v1598
      %1652 = vst.msk [vmem:[#allocation3 + $0xd0] sm:$0xff] %vm1625, %v1603
      %1653 = vst.msk [vmem:[#allocation3 + $0xd8] sm:$0xff] %vm1625, %v1606
      %1654 = vst.msk [vmem:[#allocation3 + $0xe0] sm:$0xff] %vm1625, %v1611
      %1655 = vst.msk [vmem:[#allocation3 + $0xe8] sm:$0xff] %vm1625, %v1614
      %1656 = vst.msk [vmem:[#allocation3 + $0xf0] sm:$0xff] %vm1625, %v1619
      %1657 = vst.msk [vmem:[#allocation3 + $0xf8] sm:$0xff] %vm1625, %v1622
      %v1658 = vld [vmem:[%s364] sm:$0xf]
      %v1659 = vld [vmem:[%s364 + $0x4] sm:$0xf]
      %v1660 = vld [vmem:[%s364 + $0x8] sm:$0xf]
      %v1661 = vld [vmem:[%s364 + $0xc] sm:$0xf]
      %v1662 = vld [vmem:[%s364 + $0x10] sm:$0xf]
      %v1663 = vld [vmem:[%s364 + $0x14] sm:$0xf]
      %v1664 = vld [vmem:[%s364 + $0x18] sm:$0xf]
      %v1665 = vld [vmem:[%s364 + $0x1c] sm:$0xf]
      %v1666 = vld [vmem:[%s364 + $0x20] sm:$0xf]
      %v1667 = vld [vmem:[%s364 + $0x24] sm:$0xf]
      %v1668 = vld [vmem:[%s364 + $0x28] sm:$0xf]
      %v1669 = vld [vmem:[%s364 + $0x2c] sm:$0xf]
      %v1670 = vld [vmem:[%s364 + $0x30] sm:$0xf]
      %v1671 = vld [vmem:[%s364 + $0x34] sm:$0xf]
      %v1672 = vld [vmem:[%s364 + $0x38] sm:$0xf]
      %v1673 = vld [vmem:[%s364 + $0x3c] sm:$0xf]
      %v1674 = vld [vmem:[%s364 + $0x40] sm:$0xf]
      %v1675 = vld [vmem:[%s364 + $0x44] sm:$0xf]
      %v1676 = vld [vmem:[%s364 + $0x48] sm:$0xf]
      %v1677 = vld [vmem:[%s364 + $0x4c] sm:$0xf]
      %v1678 = vld [vmem:[%s364 + $0x50] sm:$0xf]
      %v1679 = vld [vmem:[%s364 + $0x54] sm:$0xf]
      %v1680 = vld [vmem:[%s364 + $0x58] sm:$0xf]
      %v1681 = vld [vmem:[%s364 + $0x5c] sm:$0xf]
      %v1682 = vld [vmem:[%s364 + $0x60] sm:$0xf]
      %v1683 = vld [vmem:[%s364 + $0x64] sm:$0xf]
      %v1684 = vld [vmem:[%s364 + $0x68] sm:$0xf]
      %v1685 = vld [vmem:[%s364 + $0x6c] sm:$0xf]
      %v1686 = vld [vmem:[%s364 + $0x70] sm:$0xf]
      %v1687 = vld [vmem:[%s364 + $0x74] sm:$0xf]
      %v1688 = vld [vmem:[%s364 + $0x78] sm:$0xf]
      %v1689 = vld [vmem:[%s364 + $0x7c] sm:$0xf]
      %s1690 = scalar_lea.vmem %s1, 8
      %v1691 = vld [vmem:[%s1690] sm:$0xf]
      %v1692 = vld [vmem:[%s1690 + $0x4] sm:$0x3]
      %v1725 = vunpack.c.l.b16 %v1658
      %v1726 = vunpack.c.l.b16 %v1659
      %v1727 = vunpack.c.l.b16 %v1660
      %v1728 = vunpack.c.l.b16 %v1661
      %v1729 = vunpack.c.l.b16 %v1662
      %v1730 = vunpack.c.l.b16 %v1663
      %v1731 = vunpack.c.l.b16 %v1664
      %v1732 = vunpack.c.l.b16 %v1665
      %v1733 = vunpack.c.l.b16 %v1666
      %v1734 = vunpack.c.l.b16 %v1667
      %v1735 = vunpack.c.l.b16 %v1668
      %v1736 = vunpack.c.l.b16 %v1669
      %v1737 = vunpack.c.l.b16 %v1670
      %v1738 = vunpack.c.l.b16 %v1671
      %v1739 = vunpack.c.l.b16 %v1672
      %v1740 = vunpack.c.l.b16 %v1673
      %v1741 = vunpack.c.l.b16 %v1674
      %v1742 = vunpack.c.l.b16 %v1675
      %v1743 = vunpack.c.l.b16 %v1676
      %v1744 = vunpack.c.l.b16 %v1677
      %v1745 = vunpack.c.l.b16 %v1678
      %v1746 = vunpack.c.l.b16 %v1679
      %v1747 = vunpack.c.l.b16 %v1680
      %v1748 = vunpack.c.l.b16 %v1681
      %v1749 = vunpack.c.l.b16 %v1682
      %v1750 = vunpack.c.l.b16 %v1683
      %v1751 = vunpack.c.l.b16 %v1684
      %v1752 = vunpack.c.l.b16 %v1685
      %v1753 = vunpack.c.l.b16 %v1686
      %v1754 = vunpack.c.l.b16 %v1687
      %v1755 = vunpack.c.l.b16 %v1688
      %v1756 = vunpack.c.l.b16 %v1689
      %v1757 = vpack.c.b16 %v1726, %v1725
      %v1758 = vpack.c.b16 %v1728, %v1727
      %v1759 = vpack.c.b16 %v1730, %v1729
      %v1760 = vpack.c.b16 %v1732, %v1731
      %v1761 = vpack.c.b16 %v1734, %v1733
      %v1762 = vpack.c.b16 %v1736, %v1735
      %v1763 = vpack.c.b16 %v1738, %v1737
      %v1764 = vpack.c.b16 %v1740, %v1739
      %v1765 = vpack.c.b16 %v1742, %v1741
      %v1766 = vpack.c.b16 %v1744, %v1743
      %v1767 = vpack.c.b16 %v1746, %v1745
      %v1768 = vpack.c.b16 %v1748, %v1747
      %v1769 = vpack.c.b16 %v1750, %v1749
      %v1770 = vpack.c.b16 %v1752, %v1751
      %v1771 = vpack.c.b16 %v1754, %v1753
      %v1772 = vpack.c.b16 %v1756, %v1755
      %v1775 = vunpack.c.l.b16 %v1691
      %v1776 = vunpack.c.l.b16 %v1692
      %v1777 = vpack.c.b16 %v1776, %v1775
      %v1779 = vsel %vm1411, %v1757, 0
      %v1782 = vsel %vm1411, %v1758, 0
      %v1785 = vsel %vm1411, %v1759, 0
      %v1788 = vsel %vm1411, %v1760, 0
      %v1791 = vsel %vm1411, %v1761, 0
      %v1794 = vsel %vm1411, %v1762, 0
      %v1797 = vsel %vm1411, %v1763, 0
      %v1800 = vsel %vm1411, %v1764, 0
      %v1803 = vsel %vm1411, %v1765, 0
      %v1806 = vsel %vm1411, %v1766, 0
      %v1809 = vsel %vm1411, %v1767, 0
      %v1812 = vsel %vm1411, %v1768, 0
      %v1815 = vsel %vm1411, %v1769, 0
      %v1818 = vsel %vm1411, %v1770, 0
      %v1821 = vsel %vm1411, %v1771, 0
      %v1824 = vsel %vm1411, %v1772, 0
      %v1827 = vsel %vm1460, %v1777, 0
      %1829 = vmatprep.subr.bf16.mxu0 0
      %1830 = vmatpush1.bf16.msra.mxu0 0
      %1831 = vmatprep.subr.bf16.mxu0 0
      %1832 = vmatpush1.bf16.msra.mxu0 0
      %1833 = vmatprep.subr.bf16.mxu0 0
      %1834 = vmatpush1.bf16.msra.mxu0 0
      %1835 = vmatprep.subr.bf16.mxu0 0
      %1836 = vmatpush1.bf16.msra.mxu0 0
      %1837 = vmatprep.subr.bf16.mxu0 0
      %1838 = vmatpush1.bf16.msra.mxu0 0
      %1839 = vmatprep.subr.bf16.mxu0 0
      %1840 = vmatpush1.bf16.msra.mxu0 0
      %1841 = vmatprep.subr.bf16.mxu0 0
      %1842 = vmatpush1.bf16.msra.mxu0 0
      %1843 = vmatprep.subr.bf16.mxu0 0
      %1844 = vmatpush1.bf16.msra.mxu0 %v1827
      %1845 = vmatprep.subr.bf16.mxu0 0
      %1846 = vmatpush2.bf16.msra.mxu0 0
      %1847 = vmatprep.subr.bf16.mxu0 0
      %1848 = vmatpush2.bf16.msra.mxu0 0
      %1849 = vmatprep.subr.bf16.mxu0 0
      %1850 = vmatpush2.bf16.msra.mxu0 0
      %1851 = vmatprep.subr.bf16.mxu0 0
      %1852 = vmatpush2.bf16.msra.mxu0 0
      %1853 = vmatprep.subr.bf16.mxu0 0
      %1854 = vmatpush2.bf16.msra.mxu0 0
      %1855 = vmatprep.subr.bf16.mxu0 0
      %1856 = vmatpush2.bf16.msra.mxu0 0
      %1857 = vmatprep.subr.bf16.mxu0 0
      %1858 = vmatpush2.bf16.msra.mxu0 0
      %1859 = vmatprep.subr.bf16.mxu0 0
      %1860 = vmatpush2.bf16.msra.mxu0 0
      %1861 = vmatprep.mubr.bf16.mxu0 0
      %1862 = vmatmul.mubr.bf16.gmra.mxu0 %v1779
      %v1863 = vpop.f32.mrf.mxu0
      %v1864 = vadd.f32 0.0, %v1863
      %v1865 = vpop.f32.mrf.mxu0
      %v1866 = vpop.f32.mrf.mxu0
      %v1867 = vadd.f32 0.0, %v1866
      %v1868 = vpop.f32.mrf.mxu0
      %1869 = vmatprep.mubr.bf16.mxu0 0
      %1870 = vmatmul.mubr.bf16.gmra.mxu0 %v1782
      %v1871 = vpop.f32.mrf.mxu0
      %v1872 = vadd.f32 0.0, %v1871
      %v1873 = vpop.f32.mrf.mxu0
      %v1874 = vpop.f32.mrf.mxu0
      %v1875 = vadd.f32 0.0, %v1874
      %v1876 = vpop.f32.mrf.mxu0
      %1877 = vmatprep.mubr.bf16.mxu0 0
      %1878 = vmatmul.mubr.bf16.gmra.mxu0 %v1785
      %v1879 = vpop.f32.mrf.mxu0
      %v1880 = vadd.f32 0.0, %v1879
      %v1881 = vpop.f32.mrf.mxu0
      %v1882 = vpop.f32.mrf.mxu0
      %v1883 = vadd.f32 0.0, %v1882
      %v1884 = vpop.f32.mrf.mxu0
      %1885 = vmatprep.mubr.bf16.mxu0 0
      %1886 = vmatmul.mubr.bf16.gmra.mxu0 %v1788
      %v1887 = vpop.f32.mrf.mxu0
      %v1888 = vadd.f32 0.0, %v1887
      %v1889 = vpop.f32.mrf.mxu0
      %v1890 = vpop.f32.mrf.mxu0
      %v1891 = vadd.f32 0.0, %v1890
      %v1892 = vpop.f32.mrf.mxu0
      %1893 = vmatprep.mubr.bf16.mxu0 0
      %1894 = vmatmul.mubr.bf16.gmra.mxu0 %v1791
      %v1895 = vpop.f32.mrf.mxu0
      %v1896 = vadd.f32 0.0, %v1895
      %v1897 = vpop.f32.mrf.mxu0
      %v1898 = vpop.f32.mrf.mxu0
      %v1899 = vadd.f32 0.0, %v1898
      %v1900 = vpop.f32.mrf.mxu0
      %1901 = vmatprep.mubr.bf16.mxu0 0
      %1902 = vmatmul.mubr.bf16.gmra.mxu0 %v1794
      %v1903 = vpop.f32.mrf.mxu0
      %v1904 = vadd.f32 0.0, %v1903
      %v1905 = vpop.f32.mrf.mxu0
      %v1906 = vpop.f32.mrf.mxu0
      %v1907 = vadd.f32 0.0, %v1906
      %v1908 = vpop.f32.mrf.mxu0
      %1909 = vmatprep.mubr.bf16.mxu0 0
      %1910 = vmatmul.mubr.bf16.gmra.mxu0 %v1797
      %v1911 = vpop.f32.mrf.mxu0
      %v1912 = vadd.f32 0.0, %v1911
      %v1913 = vpop.f32.mrf.mxu0
      %v1914 = vpop.f32.mrf.mxu0
      %v1915 = vadd.f32 0.0, %v1914
      %v1916 = vpop.f32.mrf.mxu0
      %1917 = vmatprep.mubr.bf16.mxu0 0
      %1918 = vmatmul.mubr.bf16.gmra.mxu0 %v1800
      %v1919 = vpop.f32.mrf.mxu0
      %v1920 = vadd.f32 0.0, %v1919
      %v1921 = vpop.f32.mrf.mxu0
      %v1922 = vpop.f32.mrf.mxu0
      %v1923 = vadd.f32 0.0, %v1922
      %v1924 = vpop.f32.mrf.mxu0
      %1925 = vmatprep.mubr.bf16.mxu0 0
      %1926 = vmatmul.mubr.bf16.gmra.mxu0 %v1803
      %v1927 = vpop.f32.mrf.mxu0
      %v1928 = vadd.f32 0.0, %v1927
      %v1929 = vpop.f32.mrf.mxu0
      %v1930 = vpop.f32.mrf.mxu0
      %v1931 = vadd.f32 0.0, %v1930
      %v1932 = vpop.f32.mrf.mxu0
      %1933 = vmatprep.mubr.bf16.mxu0 0
      %1934 = vmatmul.mubr.bf16.gmra.mxu0 %v1806
      %v1935 = vpop.f32.mrf.mxu0
      %v1936 = vadd.f32 0.0, %v1935
      %v1937 = vpop.f32.mrf.mxu0
      %v1938 = vpop.f32.mrf.mxu0
      %v1939 = vadd.f32 0.0, %v1938
      %v1940 = vpop.f32.mrf.mxu0
      %1941 = vmatprep.mubr.bf16.mxu0 0
      %1942 = vmatmul.mubr.bf16.gmra.mxu0 %v1809
      %v1943 = vpop.f32.mrf.mxu0
      %v1944 = vadd.f32 0.0, %v1943
      %v1945 = vpop.f32.mrf.mxu0
      %v1946 = vpop.f32.mrf.mxu0
      %v1947 = vadd.f32 0.0, %v1946
      %v1948 = vpop.f32.mrf.mxu0
      %1949 = vmatprep.mubr.bf16.mxu0 0
      %1950 = vmatmul.mubr.bf16.gmra.mxu0 %v1812
      %v1951 = vpop.f32.mrf.mxu0
      %v1952 = vadd.f32 0.0, %v1951
      %v1953 = vpop.f32.mrf.mxu0
      %v1954 = vpop.f32.mrf.mxu0
      %v1955 = vadd.f32 0.0, %v1954
      %v1956 = vpop.f32.mrf.mxu0
      %1957 = vmatprep.mubr.bf16.mxu0 0
      %1958 = vmatmul.mubr.bf16.gmra.mxu0 %v1815
      %v1959 = vpop.f32.mrf.mxu0
      %v1960 = vadd.f32 0.0, %v1959
      %v1961 = vpop.f32.mrf.mxu0
      %v1962 = vpop.f32.mrf.mxu0
      %v1963 = vadd.f32 0.0, %v1962
      %v1964 = vpop.f32.mrf.mxu0
      %1965 = vmatprep.mubr.bf16.mxu0 0
      %1966 = vmatmul.mubr.bf16.gmra.mxu0 %v1818
      %v1967 = vpop.f32.mrf.mxu0
      %v1968 = vadd.f32 0.0, %v1967
      %v1969 = vpop.f32.mrf.mxu0
      %v1970 = vpop.f32.mrf.mxu0
      %v1971 = vadd.f32 0.0, %v1970
      %v1972 = vpop.f32.mrf.mxu0
      %1973 = vmatprep.mubr.bf16.mxu0 0
      %1974 = vmatmul.mubr.bf16.gmra.mxu0 %v1821
      %v1975 = vpop.f32.mrf.mxu0
      %v1976 = vadd.f32 0.0, %v1975
      %v1977 = vpop.f32.mrf.mxu0
      %v1978 = vpop.f32.mrf.mxu0
      %v1979 = vadd.f32 0.0, %v1978
      %v1980 = vpop.f32.mrf.mxu0
      %1981 = vmatprep.mubr.bf16.mxu0 0
      %1982 = vmatmul.mubr.bf16.gmra.mxu0 %v1824
      %v1983 = vpop.f32.mrf.mxu0
      %v1984 = vadd.f32 0.0, %v1983
      %v1985 = vpop.f32.mrf.mxu0
      %v1986 = vpop.f32.mrf.mxu0
      %v1987 = vadd.f32 0.0, %v1986
      %v1988 = vpop.f32.mrf.mxu0
      %1989 = vdwg.mxu0
      %v1990 = vld [vmem:[#allocation3] sm:$0xff]
      %v1991 = vld [vmem:[#allocation3 + $0x8] sm:$0xff]
      %v1992 = vld [vmem:[#allocation3 + $0x10] sm:$0xff]
      %v1993 = vld [vmem:[#allocation3 + $0x18] sm:$0xff]
      %v1994 = vld [vmem:[#allocation3 + $0x20] sm:$0xff]
      %v1995 = vld [vmem:[#allocation3 + $0x28] sm:$0xff]
      %v1996 = vld [vmem:[#allocation3 + $0x30] sm:$0xff]
      %v1997 = vld [vmem:[#allocation3 + $0x38] sm:$0xff]
      %v1998 = vld [vmem:[#allocation3 + $0x40] sm:$0xff]
      %v1999 = vld [vmem:[#allocation3 + $0x48] sm:$0xff]
      %v2000 = vld [vmem:[#allocation3 + $0x50] sm:$0xff]
      %v2001 = vld [vmem:[#allocation3 + $0x58] sm:$0xff]
      %v2002 = vld [vmem:[#allocation3 + $0x60] sm:$0xff]
      %v2003 = vld [vmem:[#allocation3 + $0x68] sm:$0xff]
      %v2004 = vld [vmem:[#allocation3 + $0x70] sm:$0xff]
      %v2005 = vld [vmem:[#allocation3 + $0x78] sm:$0xff]
      %v2006 = vld [vmem:[#allocation3 + $0x80] sm:$0xff]
      %v2007 = vld [vmem:[#allocation3 + $0x88] sm:$0xff]
      %v2008 = vld [vmem:[#allocation3 + $0x90] sm:$0xff]
      %v2009 = vld [vmem:[#allocation3 + $0x98] sm:$0xff]
      %v2010 = vld [vmem:[#allocation3 + $0xa0] sm:$0xff]
      %v2011 = vld [vmem:[#allocation3 + $0xa8] sm:$0xff]
      %v2012 = vld [vmem:[#allocation3 + $0xb0] sm:$0xff]
      %v2013 = vld [vmem:[#allocation3 + $0xb8] sm:$0xff]
      %v2014 = vld [vmem:[#allocation3 + $0xc0] sm:$0xff]
      %v2015 = vld [vmem:[#allocation3 + $0xc8] sm:$0xff]
      %v2016 = vld [vmem:[#allocation3 + $0xd0] sm:$0xff]
      %v2017 = vld [vmem:[#allocation3 + $0xd8] sm:$0xff]
      %v2018 = vld [vmem:[#allocation3 + $0xe0] sm:$0xff]
      %v2019 = vld [vmem:[#allocation3 + $0xe8] sm:$0xff]
      %v2020 = vld [vmem:[#allocation3 + $0xf0] sm:$0xff]
      %v2021 = vld [vmem:[#allocation3 + $0xf8] sm:$0xff]
      %v2022 = vadd.f32 %v1990, %v1864
      %v2023 = vadd.f32 %v1991, %v1867
      %v2024 = vadd.f32 %v1992, %v1872
      %v2025 = vadd.f32 %v1993, %v1875
      %v2026 = vadd.f32 %v1994, %v1880
      %v2027 = vadd.f32 %v1995, %v1883
      %v2028 = vadd.f32 %v1996, %v1888
      %v2029 = vadd.f32 %v1997, %v1891
      %v2030 = vadd.f32 %v1998, %v1896
      %v2031 = vadd.f32 %v1999, %v1899
      %v2032 = vadd.f32 %v2000, %v1904
      %v2033 = vadd.f32 %v2001, %v1907
      %v2034 = vadd.f32 %v2002, %v1912
      %v2035 = vadd.f32 %v2003, %v1915
      %v2036 = vadd.f32 %v2004, %v1920
      %v2037 = vadd.f32 %v2005, %v1923
      %v2038 = vadd.f32 %v2006, %v1928
      %v2039 = vadd.f32 %v2007, %v1931
      %v2040 = vadd.f32 %v2008, %v1936
      %v2041 = vadd.f32 %v2009, %v1939
      %v2042 = vadd.f32 %v2010, %v1944
      %v2043 = vadd.f32 %v2011, %v1947
      %v2044 = vadd.f32 %v2012, %v1952
      %v2045 = vadd.f32 %v2013, %v1955
      %v2046 = vadd.f32 %v2014, %v1960
      %v2047 = vadd.f32 %v2015, %v1963
      %v2048 = vadd.f32 %v2016, %v1968
      %v2049 = vadd.f32 %v2017, %v1971
      %v2050 = vadd.f32 %v2018, %v1976
      %v2051 = vadd.f32 %v2019, %v1979
      %v2052 = vadd.f32 %v2020, %v1984
      %v2053 = vadd.f32 %v2021, %v1987
      %2054 = vst.msk [vmem:[#allocation3] sm:$0xff] %vm1625, %v2022
      %2055 = vst.msk [vmem:[#allocation3 + $0x8] sm:$0xff] %vm1625, %v2023
      %2056 = vst.msk [vmem:[#allocation3 + $0x10] sm:$0xff] %vm1625, %v2024
      %2057 = vst.msk [vmem:[#allocation3 + $0x18] sm:$0xff] %vm1625, %v2025
      %2058 = vst.msk [vmem:[#allocation3 + $0x20] sm:$0xff] %vm1625, %v2026
      %2059 = vst.msk [vmem:[#allocation3 + $0x28] sm:$0xff] %vm1625, %v2027
      %2060 = vst.msk [vmem:[#allocation3 + $0x30] sm:$0xff] %vm1625, %v2028
      %2061 = vst.msk [vmem:[#allocation3 + $0x38] sm:$0xff] %vm1625, %v2029
      %2062 = vst.msk [vmem:[#allocation3 + $0x40] sm:$0xff] %vm1625, %v2030
      %2063 = vst.msk [vmem:[#allocation3 + $0x48] sm:$0xff] %vm1625, %v2031
      %2064 = vst.msk [vmem:[#allocation3 + $0x50] sm:$0xff] %vm1625, %v2032
      %2065 = vst.msk [vmem:[#allocation3 + $0x58] sm:$0xff] %vm1625, %v2033
      %2066 = vst.msk [vmem:[#allocation3 + $0x60] sm:$0xff] %vm1625, %v2034
      %2067 = vst.msk [vmem:[#allocation3 + $0x68] sm:$0xff] %vm1625, %v2035
      %2068 = vst.msk [vmem:[#allocation3 + $0x70] sm:$0xff] %vm1625, %v2036
      %2069 = vst.msk [vmem:[#allocation3 + $0x78] sm:$0xff] %vm1625, %v2037
      %2070 = vst.msk [vmem:[#allocation3 + $0x80] sm:$0xff] %vm1625, %v2038
      %2071 = vst.msk [vmem:[#allocation3 + $0x88] sm:$0xff] %vm1625, %v2039
      %2072 = vst.msk [vmem:[#allocation3 + $0x90] sm:$0xff] %vm1625, %v2040
      %2073 = vst.msk [vmem:[#allocation3 + $0x98] sm:$0xff] %vm1625, %v2041
      %2074 = vst.msk [vmem:[#allocation3 + $0xa0] sm:$0xff] %vm1625, %v2042
      %2075 = vst.msk [vmem:[#allocation3 + $0xa8] sm:$0xff] %vm1625, %v2043
      %2076 = vst.msk [vmem:[#allocation3 + $0xb0] sm:$0xff] %vm1625, %v2044
      %2077 = vst.msk [vmem:[#allocation3 + $0xb8] sm:$0xff] %vm1625, %v2045
      %2078 = vst.msk [vmem:[#allocation3 + $0xc0] sm:$0xff] %vm1625, %v2046
      %2079 = vst.msk [vmem:[#allocation3 + $0xc8] sm:$0xff] %vm1625, %v2047
      %2080 = vst.msk [vmem:[#allocation3 + $0xd0] sm:$0xff] %vm1625, %v2048
      %2081 = vst.msk [vmem:[#allocation3 + $0xd8] sm:$0xff] %vm1625, %v2049
      %2082 = vst.msk [vmem:[#allocation3 + $0xe0] sm:$0xff] %vm1625, %v2050
      %2083 = vst.msk [vmem:[#allocation3 + $0xe8] sm:$0xff] %vm1625, %v2051
      %2084 = vst.msk [vmem:[#allocation3 + $0xf0] sm:$0xff] %vm1625, %v2052
      %2085 = vst.msk [vmem:[#allocation3 + $0xf8] sm:$0xff] %vm1625, %v2053
      %v2086 = vld [vmem:[%s1280] sm:$0xf]
      %v2087 = vld [vmem:[%s1280 + $0x4] sm:$0xf]
      %v2088 = vld [vmem:[%s1280 + $0x8] sm:$0xf]
      %v2089 = vld [vmem:[%s1280 + $0xc] sm:$0xf]
      %v2090 = vld [vmem:[%s1280 + $0x10] sm:$0xf]
      %v2091 = vld [vmem:[%s1280 + $0x14] sm:$0xf]
      %v2092 = vld [vmem:[%s1280 + $0x18] sm:$0xf]
      %v2093 = vld [vmem:[%s1280 + $0x1c] sm:$0xf]
      %v2094 = vld [vmem:[%s1280 + $0x20] sm:$0xf]
      %v2095 = vld [vmem:[%s1280 + $0x24] sm:$0xf]
      %v2096 = vld [vmem:[%s1280 + $0x28] sm:$0xf]
      %v2097 = vld [vmem:[%s1280 + $0x2c] sm:$0xf]
      %v2098 = vld [vmem:[%s1280 + $0x30] sm:$0xf]
      %v2099 = vld [vmem:[%s1280 + $0x34] sm:$0xf]
      %v2100 = vld [vmem:[%s1280 + $0x38] sm:$0xf]
      %v2101 = vld [vmem:[%s1280 + $0x3c] sm:$0xf]
      %v2102 = vld [vmem:[%s1280 + $0x40] sm:$0xf]
      %v2103 = vld [vmem:[%s1280 + $0x44] sm:$0xf]
      %v2104 = vld [vmem:[%s1280 + $0x48] sm:$0xf]
      %v2105 = vld [vmem:[%s1280 + $0x4c] sm:$0xf]
      %v2106 = vld [vmem:[%s1280 + $0x50] sm:$0xf]
      %v2107 = vld [vmem:[%s1280 + $0x54] sm:$0xf]
      %v2108 = vld [vmem:[%s1280 + $0x58] sm:$0xf]
      %v2109 = vld [vmem:[%s1280 + $0x5c] sm:$0xf]
      %v2110 = vld [vmem:[%s1280 + $0x60] sm:$0xf]
      %v2111 = vld [vmem:[%s1280 + $0x64] sm:$0xf]
      %v2112 = vld [vmem:[%s1280 + $0x68] sm:$0xf]
      %v2113 = vld [vmem:[%s1280 + $0x6c] sm:$0xf]
      %v2114 = vld [vmem:[%s1280 + $0x70] sm:$0xf]
      %v2115 = vld [vmem:[%s1280 + $0x74] sm:$0xf]
      %v2116 = vld [vmem:[%s1280 + $0x78] sm:$0xf]
      %v2117 = vld [vmem:[%s1280 + $0x7c] sm:$0xf]
      %s2118 = scalar_lea.vmem %s1, 16
      %v2119 = vld [vmem:[%s2118] sm:$0xf]
      %v2120 = vld [vmem:[%s2118 + $0x4] sm:$0x3]
      %v2153 = vunpack.c.l.b16 %v2086
      %v2154 = vunpack.c.l.b16 %v2087
      %v2155 = vunpack.c.l.b16 %v2088
      %v2156 = vunpack.c.l.b16 %v2089
      %v2157 = vunpack.c.l.b16 %v2090
      %v2158 = vunpack.c.l.b16 %v2091
      %v2159 = vunpack.c.l.b16 %v2092
      %v2160 = vunpack.c.l.b16 %v2093
      %v2161 = vunpack.c.l.b16 %v2094
      %v2162 = vunpack.c.l.b16 %v2095
      %v2163 = vunpack.c.l.b16 %v2096
      %v2164 = vunpack.c.l.b16 %v2097
      %v2165 = vunpack.c.l.b16 %v2098
      %v2166 = vunpack.c.l.b16 %v2099
      %v2167 = vunpack.c.l.b16 %v2100
      %v2168 = vunpack.c.l.b16 %v2101
      %v2169 = vunpack.c.l.b16 %v2102
      %v2170 = vunpack.c.l.b16 %v2103
      %v2171 = vunpack.c.l.b16 %v2104
      %v2172 = vunpack.c.l.b16 %v2105
      %v2173 = vunpack.c.l.b16 %v2106
      %v2174 = vunpack.c.l.b16 %v2107
      %v2175 = vunpack.c.l.b16 %v2108
      %v2176 = vunpack.c.l.b16 %v2109
      %v2177 = vunpack.c.l.b16 %v2110
      %v2178 = vunpack.c.l.b16 %v2111
      %v2179 = vunpack.c.l.b16 %v2112
      %v2180 = vunpack.c.l.b16 %v2113
      %v2181 = vunpack.c.l.b16 %v2114
      %v2182 = vunpack.c.l.b16 %v2115
      %v2183 = vunpack.c.l.b16 %v2116
      %v2184 = vunpack.c.l.b16 %v2117
      %v2185 = vpack.c.b16 %v2154, %v2153
      %v2186 = vpack.c.b16 %v2156, %v2155
      %v2187 = vpack.c.b16 %v2158, %v2157
      %v2188 = vpack.c.b16 %v2160, %v2159
      %v2189 = vpack.c.b16 %v2162, %v2161
      %v2190 = vpack.c.b16 %v2164, %v2163
      %v2191 = vpack.c.b16 %v2166, %v2165
      %v2192 = vpack.c.b16 %v2168, %v2167
      %v2193 = vpack.c.b16 %v2170, %v2169
      %v2194 = vpack.c.b16 %v2172, %v2171
      %v2195 = vpack.c.b16 %v2174, %v2173
      %v2196 = vpack.c.b16 %v2176, %v2175
      %v2197 = vpack.c.b16 %v2178, %v2177
      %v2198 = vpack.c.b16 %v2180, %v2179
      %v2199 = vpack.c.b16 %v2182, %v2181
      %v2200 = vpack.c.b16 %v2184, %v2183
      %v2203 = vunpack.c.l.b16 %v2119
      %v2204 = vunpack.c.l.b16 %v2120
      %v2205 = vpack.c.b16 %v2204, %v2203
      %v2207 = vsel %vm1411, %v2185, 0
      %v2210 = vsel %vm1411, %v2186, 0
      %v2213 = vsel %vm1411, %v2187, 0
      %v2216 = vsel %vm1411, %v2188, 0
      %v2219 = vsel %vm1411, %v2189, 0
      %v2222 = vsel %vm1411, %v2190, 0
      %v2225 = vsel %vm1411, %v2191, 0
      %v2228 = vsel %vm1411, %v2192, 0
      %v2231 = vsel %vm1411, %v2193, 0
      %v2234 = vsel %vm1411, %v2194, 0
      %v2237 = vsel %vm1411, %v2195, 0
      %v2240 = vsel %vm1411, %v2196, 0
      %v2243 = vsel %vm1411, %v2197, 0
      %v2246 = vsel %vm1411, %v2198, 0
      %v2249 = vsel %vm1411, %v2199, 0
      %v2252 = vsel %vm1411, %v2200, 0
      %v2255 = vsel %vm1460, %v2205, 0
      %2257 = vmatprep.subr.bf16.mxu0 0
      %2258 = vmatpush1.bf16.msra.mxu0 0
      %2259 = vmatprep.subr.bf16.mxu0 0
      %2260 = vmatpush1.bf16.msra.mxu0 0
      %2261 = vmatprep.subr.bf16.mxu0 0
      %2262 = vmatpush1.bf16.msra.mxu0 0
      %2263 = vmatprep.subr.bf16.mxu0 0
      %2264 = vmatpush1.bf16.msra.mxu0 0
      %2265 = vmatprep.subr.bf16.mxu0 0
      %2266 = vmatpush1.bf16.msra.mxu0 0
      %2267 = vmatprep.subr.bf16.mxu0 0
      %2268 = vmatpush1.bf16.msra.mxu0 0
      %2269 = vmatprep.subr.bf16.mxu0 0
      %2270 = vmatpush1.bf16.msra.mxu0 0
      %2271 = vmatprep.subr.bf16.mxu0 0
      %2272 = vmatpush1.bf16.msra.mxu0 %v2255
      %2273 = vmatprep.subr.bf16.mxu0 0
      %2274 = vmatpush2.bf16.msra.mxu0 0
      %2275 = vmatprep.subr.bf16.mxu0 0
      %2276 = vmatpush2.bf16.msra.mxu0 0
      %2277 = vmatprep.subr.bf16.mxu0 0
      %2278 = vmatpush2.bf16.msra.mxu0 0
      %2279 = vmatprep.subr.bf16.mxu0 0
      %2280 = vmatpush2.bf16.msra.mxu0 0
      %2281 = vmatprep.subr.bf16.mxu0 0
      %2282 = vmatpush2.bf16.msra.mxu0 0
      %2283 = vmatprep.subr.bf16.mxu0 0
      %2284 = vmatpush2.bf16.msra.mxu0 0
      %2285 = vmatprep.subr.bf16.mxu0 0
      %2286 = vmatpush2.bf16.msra.mxu0 0
      %2287 = vmatprep.subr.bf16.mxu0 0
      %2288 = vmatpush2.bf16.msra.mxu0 0
      %2289 = vmatprep.mubr.bf16.mxu0 0
      %2290 = vmatmul.mubr.bf16.gmra.mxu0 %v2207
      %v2291 = vpop.f32.mrf.mxu0
      %v2292 = vadd.f32 0.0, %v2291
      %v2293 = vpop.f32.mrf.mxu0
      %v2294 = vpop.f32.mrf.mxu0
      %v2295 = vadd.f32 0.0, %v2294
      %v2296 = vpop.f32.mrf.mxu0
      %2297 = vmatprep.mubr.bf16.mxu0 0
      %2298 = vmatmul.mubr.bf16.gmra.mxu0 %v2210
      %v2299 = vpop.f32.mrf.mxu0
      %v2300 = vadd.f32 0.0, %v2299
      %v2301 = vpop.f32.mrf.mxu0
      %v2302 = vpop.f32.mrf.mxu0
      %v2303 = vadd.f32 0.0, %v2302
      %v2304 = vpop.f32.mrf.mxu0
      %2305 = vmatprep.mubr.bf16.mxu0 0
      %2306 = vmatmul.mubr.bf16.gmra.mxu0 %v2213
      %v2307 = vpop.f32.mrf.mxu0
      %v2308 = vadd.f32 0.0, %v2307
      %v2309 = vpop.f32.mrf.mxu0
      %v2310 = vpop.f32.mrf.mxu0
      %v2311 = vadd.f32 0.0, %v2310
      %v2312 = vpop.f32.mrf.mxu0
      %2313 = vmatprep.mubr.bf16.mxu0 0
      %2314 = vmatmul.mubr.bf16.gmra.mxu0 %v2216
      %v2315 = vpop.f32.mrf.mxu0
      %v2316 = vadd.f32 0.0, %v2315
      %v2317 = vpop.f32.mrf.mxu0
      %v2318 = vpop.f32.mrf.mxu0
      %v2319 = vadd.f32 0.0, %v2318
      %v2320 = vpop.f32.mrf.mxu0
      %2321 = vmatprep.mubr.bf16.mxu0 0
      %2322 = vmatmul.mubr.bf16.gmra.mxu0 %v2219
      %v2323 = vpop.f32.mrf.mxu0
      %v2324 = vadd.f32 0.0, %v2323
      %v2325 = vpop.f32.mrf.mxu0
      %v2326 = vpop.f32.mrf.mxu0
      %v2327 = vadd.f32 0.0, %v2326
      %v2328 = vpop.f32.mrf.mxu0
      %2329 = vmatprep.mubr.bf16.mxu0 0
      %2330 = vmatmul.mubr.bf16.gmra.mxu0 %v2222
      %v2331 = vpop.f32.mrf.mxu0
      %v2332 = vadd.f32 0.0, %v2331
      %v2333 = vpop.f32.mrf.mxu0
      %v2334 = vpop.f32.mrf.mxu0
      %v2335 = vadd.f32 0.0, %v2334
      %v2336 = vpop.f32.mrf.mxu0
      %2337 = vmatprep.mubr.bf16.mxu0 0
      %2338 = vmatmul.mubr.bf16.gmra.mxu0 %v2225
      %v2339 = vpop.f32.mrf.mxu0
      %v2340 = vadd.f32 0.0, %v2339
      %v2341 = vpop.f32.mrf.mxu0
      %v2342 = vpop.f32.mrf.mxu0
      %v2343 = vadd.f32 0.0, %v2342
      %v2344 = vpop.f32.mrf.mxu0
      %2345 = vmatprep.mubr.bf16.mxu0 0
      %2346 = vmatmul.mubr.bf16.gmra.mxu0 %v2228
      %v2347 = vpop.f32.mrf.mxu0
      %v2348 = vadd.f32 0.0, %v2347
      %v2349 = vpop.f32.mrf.mxu0
      %v2350 = vpop.f32.mrf.mxu0
      %v2351 = vadd.f32 0.0, %v2350
      %v2352 = vpop.f32.mrf.mxu0
      %2353 = vmatprep.mubr.bf16.mxu0 0
      %2354 = vmatmul.mubr.bf16.gmra.mxu0 %v2231
      %v2355 = vpop.f32.mrf.mxu0
      %v2356 = vadd.f32 0.0, %v2355
      %v2357 = vpop.f32.mrf.mxu0
      %v2358 = vpop.f32.mrf.mxu0
      %v2359 = vadd.f32 0.0, %v2358
      %v2360 = vpop.f32.mrf.mxu0
      %2361 = vmatprep.mubr.bf16.mxu0 0
      %2362 = vmatmul.mubr.bf16.gmra.mxu0 %v2234
      %v2363 = vpop.f32.mrf.mxu0
      %v2364 = vadd.f32 0.0, %v2363
      %v2365 = vpop.f32.mrf.mxu0
      %v2366 = vpop.f32.mrf.mxu0
      %v2367 = vadd.f32 0.0, %v2366
      %v2368 = vpop.f32.mrf.mxu0
      %2369 = vmatprep.mubr.bf16.mxu0 0
      %2370 = vmatmul.mubr.bf16.gmra.mxu0 %v2237
      %v2371 = vpop.f32.mrf.mxu0
      %v2372 = vadd.f32 0.0, %v2371
      %v2373 = vpop.f32.mrf.mxu0
      %v2374 = vpop.f32.mrf.mxu0
      %v2375 = vadd.f32 0.0, %v2374
      %v2376 = vpop.f32.mrf.mxu0
      %2377 = vmatprep.mubr.bf16.mxu0 0
      %2378 = vmatmul.mubr.bf16.gmra.mxu0 %v2240
      %v2379 = vpop.f32.mrf.mxu0
      %v2380 = vadd.f32 0.0, %v2379
      %v2381 = vpop.f32.mrf.mxu0
      %v2382 = vpop.f32.mrf.mxu0
      %v2383 = vadd.f32 0.0, %v2382
      %v2384 = vpop.f32.mrf.mxu0
      %2385 = vmatprep.mubr.bf16.mxu0 0
      %2386 = vmatmul.mubr.bf16.gmra.mxu0 %v2243
      %v2387 = vpop.f32.mrf.mxu0
      %v2388 = vadd.f32 0.0, %v2387
      %v2389 = vpop.f32.mrf.mxu0
      %v2390 = vpop.f32.mrf.mxu0
      %v2391 = vadd.f32 0.0, %v2390
      %v2392 = vpop.f32.mrf.mxu0
      %2393 = vmatprep.mubr.bf16.mxu0 0
      %2394 = vmatmul.mubr.bf16.gmra.mxu0 %v2246
      %v2395 = vpop.f32.mrf.mxu0
      %v2396 = vadd.f32 0.0, %v2395
      %v2397 = vpop.f32.mrf.mxu0
      %v2398 = vpop.f32.mrf.mxu0
      %v2399 = vadd.f32 0.0, %v2398
      %v2400 = vpop.f32.mrf.mxu0
      %2401 = vmatprep.mubr.bf16.mxu0 0
      %2402 = vmatmul.mubr.bf16.gmra.mxu0 %v2249
      %v2403 = vpop.f32.mrf.mxu0
      %v2404 = vadd.f32 0.0, %v2403
      %v2405 = vpop.f32.mrf.mxu0
      %v2406 = vpop.f32.mrf.mxu0
      %v2407 = vadd.f32 0.0, %v2406
      %v2408 = vpop.f32.mrf.mxu0
      %2409 = vmatprep.mubr.bf16.mxu0 0
      %2410 = vmatmul.mubr.bf16.gmra.mxu0 %v2252
      %v2411 = vpop.f32.mrf.mxu0
      %v2412 = vadd.f32 0.0, %v2411
      %v2413 = vpop.f32.mrf.mxu0
      %v2414 = vpop.f32.mrf.mxu0
      %v2415 = vadd.f32 0.0, %v2414
      %v2416 = vpop.f32.mrf.mxu0
      %2417 = vdwg.mxu0
      %v2418 = vld [vmem:[#allocation3] sm:$0xff]
      %v2419 = vld [vmem:[#allocation3 + $0x8] sm:$0xff]
      %v2420 = vld [vmem:[#allocation3 + $0x10] sm:$0xff]
      %v2421 = vld [vmem:[#allocation3 + $0x18] sm:$0xff]
      %v2422 = vld [vmem:[#allocation3 + $0x20] sm:$0xff]
      %v2423 = vld [vmem:[#allocation3 + $0x28] sm:$0xff]
      %v2424 = vld [vmem:[#allocation3 + $0x30] sm:$0xff]
      %v2425 = vld [vmem:[#allocation3 + $0x38] sm:$0xff]
      %v2426 = vld [vmem:[#allocation3 + $0x40] sm:$0xff]
      %v2427 = vld [vmem:[#allocation3 + $0x48] sm:$0xff]
      %v2428 = vld [vmem:[#allocation3 + $0x50] sm:$0xff]
      %v2429 = vld [vmem:[#allocation3 + $0x58] sm:$0xff]
      %v2430 = vld [vmem:[#allocation3 + $0x60] sm:$0xff]
      %v2431 = vld [vmem:[#allocation3 + $0x68] sm:$0xff]
      %v2432 = vld [vmem:[#allocation3 + $0x70] sm:$0xff]
      %v2433 = vld [vmem:[#allocation3 + $0x78] sm:$0xff]
      %v2434 = vld [vmem:[#allocation3 + $0x80] sm:$0xff]
      %v2435 = vld [vmem:[#allocation3 + $0x88] sm:$0xff]
      %v2436 = vld [vmem:[#allocation3 + $0x90] sm:$0xff]
      %v2437 = vld [vmem:[#allocation3 + $0x98] sm:$0xff]
      %v2438 = vld [vmem:[#allocation3 + $0xa0] sm:$0xff]
      %v2439 = vld [vmem:[#allocation3 + $0xa8] sm:$0xff]
      %v2440 = vld [vmem:[#allocation3 + $0xb0] sm:$0xff]
      %v2441 = vld [vmem:[#allocation3 + $0xb8] sm:$0xff]
      %v2442 = vld [vmem:[#allocation3 + $0xc0] sm:$0xff]
      %v2443 = vld [vmem:[#allocation3 + $0xc8] sm:$0xff]
      %v2444 = vld [vmem:[#allocation3 + $0xd0] sm:$0xff]
      %v2445 = vld [vmem:[#allocation3 + $0xd8] sm:$0xff]
      %v2446 = vld [vmem:[#allocation3 + $0xe0] sm:$0xff]
      %v2447 = vld [vmem:[#allocation3 + $0xe8] sm:$0xff]
      %v2448 = vld [vmem:[#allocation3 + $0xf0] sm:$0xff]
      %v2449 = vld [vmem:[#allocation3 + $0xf8] sm:$0xff]
      %v2450 = vadd.f32 %v2418, %v2292
      %v2451 = vadd.f32 %v2419, %v2295
      %v2452 = vadd.f32 %v2420, %v2300
      %v2453 = vadd.f32 %v2421, %v2303
      %v2454 = vadd.f32 %v2422, %v2308
      %v2455 = vadd.f32 %v2423, %v2311
      %v2456 = vadd.f32 %v2424, %v2316
      %v2457 = vadd.f32 %v2425, %v2319
      %v2458 = vadd.f32 %v2426, %v2324
      %v2459 = vadd.f32 %v2427, %v2327
      %v2460 = vadd.f32 %v2428, %v2332
      %v2461 = vadd.f32 %v2429, %v2335
      %v2462 = vadd.f32 %v2430, %v2340
      %v2463 = vadd.f32 %v2431, %v2343
      %v2464 = vadd.f32 %v2432, %v2348
      %v2465 = vadd.f32 %v2433, %v2351
      %v2466 = vadd.f32 %v2434, %v2356
      %v2467 = vadd.f32 %v2435, %v2359
      %v2468 = vadd.f32 %v2436, %v2364
      %v2469 = vadd.f32 %v2437, %v2367
      %v2470 = vadd.f32 %v2438, %v2372
      %v2471 = vadd.f32 %v2439, %v2375
      %v2472 = vadd.f32 %v2440, %v2380
      %v2473 = vadd.f32 %v2441, %v2383
      %v2474 = vadd.f32 %v2442, %v2388
      %v2475 = vadd.f32 %v2443, %v2391
      %v2476 = vadd.f32 %v2444, %v2396
      %v2477 = vadd.f32 %v2445, %v2399
      %v2478 = vadd.f32 %v2446, %v2404
      %v2479 = vadd.f32 %v2447, %v2407
      %v2480 = vadd.f32 %v2448, %v2412
      %v2481 = vadd.f32 %v2449, %v2415
      %2482 = vst.msk [vmem:[#allocation3] sm:$0xff] %vm1625, %v2450
      %2483 = vst.msk [vmem:[#allocation3 + $0x8] sm:$0xff] %vm1625, %v2451
      %2484 = vst.msk [vmem:[#allocation3 + $0x10] sm:$0xff] %vm1625, %v2452
      %2485 = vst.msk [vmem:[#allocation3 + $0x18] sm:$0xff] %vm1625, %v2453
      %2486 = vst.msk [vmem:[#allocation3 + $0x20] sm:$0xff] %vm1625, %v2454
      %2487 = vst.msk [vmem:[#allocation3 + $0x28] sm:$0xff] %vm1625, %v2455
      %2488 = vst.msk [vmem:[#allocation3 + $0x30] sm:$0xff] %vm1625, %v2456
      %2489 = vst.msk [vmem:[#allocation3 + $0x38] sm:$0xff] %vm1625, %v2457
      %2490 = vst.msk [vmem:[#allocation3 + $0x40] sm:$0xff] %vm1625, %v2458
      %2491 = vst.msk [vmem:[#allocation3 + $0x48] sm:$0xff] %vm1625, %v2459
      %2492 = vst.msk [vmem:[#allocation3 + $0x50] sm:$0xff] %vm1625, %v2460
      %2493 = vst.msk [vmem:[#allocation3 + $0x58] sm:$0xff] %vm1625, %v2461
      %2494 = vst.msk [vmem:[#allocation3 + $0x60] sm:$0xff] %vm1625, %v2462
      %2495 = vst.msk [vmem:[#allocation3 + $0x68] sm:$0xff] %vm1625, %v2463
      %2496 = vst.msk [vmem:[#allocation3 + $0x70] sm:$0xff] %vm1625, %v2464
      %2497 = vst.msk [vmem:[#allocation3 + $0x78] sm:$0xff] %vm1625, %v2465
      %2498 = vst.msk [vmem:[#allocation3 + $0x80] sm:$0xff] %vm1625, %v2466
      %2499 = vst.msk [vmem:[#allocation3 + $0x88] sm:$0xff] %vm1625, %v2467
      %2500 = vst.msk [vmem:[#allocation3 + $0x90] sm:$0xff] %vm1625, %v2468
      %2501 = vst.msk [vmem:[#allocation3 + $0x98] sm:$0xff] %vm1625, %v2469
      %2502 = vst.msk [vmem:[#allocation3 + $0xa0] sm:$0xff] %vm1625, %v2470
      %2503 = vst.msk [vmem:[#allocation3 + $0xa8] sm:$0xff] %vm1625, %v2471
      %2504 = vst.msk [vmem:[#allocation3 + $0xb0] sm:$0xff] %vm1625, %v2472
      %2505 = vst.msk [vmem:[#allocation3 + $0xb8] sm:$0xff] %vm1625, %v2473
      %2506 = vst.msk [vmem:[#allocation3 + $0xc0] sm:$0xff] %vm1625, %v2474
      %2507 = vst.msk [vmem:[#allocation3 + $0xc8] sm:$0xff] %vm1625, %v2475
      %2508 = vst.msk [vmem:[#allocation3 + $0xd0] sm:$0xff] %vm1625, %v2476
      %2509 = vst.msk [vmem:[#allocation3 + $0xd8] sm:$0xff] %vm1625, %v2477
      %2510 = vst.msk [vmem:[#allocation3 + $0xe0] sm:$0xff] %vm1625, %v2478
      %2511 = vst.msk [vmem:[#allocation3 + $0xe8] sm:$0xff] %vm1625, %v2479
      %2512 = vst.msk [vmem:[#allocation3 + $0xf0] sm:$0xff] %vm1625, %v2480
      %2513 = vst.msk [vmem:[#allocation3 + $0xf8] sm:$0xff] %vm1625, %v2481
      %v2514 = vld [vmem:[#allocation3] sm:$0xff]
      %v2515 = vld [vmem:[#allocation3 + $0x8] sm:$0xff]
      %v2516 = vld [vmem:[#allocation3 + $0x10] sm:$0xff]
      %v2517 = vld [vmem:[#allocation3 + $0x18] sm:$0xff]
      %v2518 = vld [vmem:[#allocation3 + $0x20] sm:$0xff]
      %v2519 = vld [vmem:[#allocation3 + $0x28] sm:$0xff]
      %v2520 = vld [vmem:[#allocation3 + $0x30] sm:$0xff]
      %v2521 = vld [vmem:[#allocation3 + $0x38] sm:$0xff]
      %v2522 = vld [vmem:[#allocation3 + $0x40] sm:$0xff]
      %v2523 = vld [vmem:[#allocation3 + $0x48] sm:$0xff]
      %v2524 = vld [vmem:[#allocation3 + $0x50] sm:$0xff]
      %v2525 = vld [vmem:[#allocation3 + $0x58] sm:$0xff]
      %v2526 = vld [vmem:[#allocation3 + $0x60] sm:$0xff]
      %v2527 = vld [vmem:[#allocation3 + $0x68] sm:$0xff]
      %v2528 = vld [vmem:[#allocation3 + $0x70] sm:$0xff]
      %v2529 = vld [vmem:[#allocation3 + $0x78] sm:$0xff]
      %v2530 = vld [vmem:[#allocation3 + $0x80] sm:$0xff]
      %v2531 = vld [vmem:[#allocation3 + $0x88] sm:$0xff]
      %v2532 = vld [vmem:[#allocation3 + $0x90] sm:$0xff]
      %v2533 = vld [vmem:[#allocation3 + $0x98] sm:$0xff]
      %v2534 = vld [vmem:[#allocation3 + $0xa0] sm:$0xff]
      %v2535 = vld [vmem:[#allocation3 + $0xa8] sm:$0xff]
      %v2536 = vld [vmem:[#allocation3 + $0xb0] sm:$0xff]
      %v2537 = vld [vmem:[#allocation3 + $0xb8] sm:$0xff]
      %v2538 = vld [vmem:[#allocation3 + $0xc0] sm:$0xff]
      %v2539 = vld [vmem:[#allocation3 + $0xc8] sm:$0xff]
      %v2540 = vld [vmem:[#allocation3 + $0xd0] sm:$0xff]
      %v2541 = vld [vmem:[#allocation3 + $0xd8] sm:$0xff]
      %v2542 = vld [vmem:[#allocation3 + $0xe0] sm:$0xff]
      %v2543 = vld [vmem:[#allocation3 + $0xe8] sm:$0xff]
      %v2544 = vld [vmem:[#allocation3 + $0xf0] sm:$0xff]
      %v2545 = vld [vmem:[#allocation3 + $0xf8] sm:$0xff]
      %v2546 = vsel %vm1625, %v2514, 0.0
      %v2547 = vsel %vm1625, %v2516, 0.0
      %v2548 = vadd.f32 %v2546, %v2547
      %v2549 = vsel %vm1625, %v2518, 0.0
      %v2550 = vadd.f32 %v2548, %v2549
      %v2551 = vsel %vm1625, %v2520, 0.0
      %v2552 = vadd.f32 %v2550, %v2551
      %v2553 = vsel %vm1625, %v2522, 0.0
      %v2554 = vadd.f32 %v2552, %v2553
      %v2555 = vsel %vm1625, %v2524, 0.0
      %v2556 = vadd.f32 %v2554, %v2555
      %v2557 = vsel %vm1625, %v2526, 0.0
      %v2558 = vadd.f32 %v2556, %v2557
      %v2559 = vsel %vm1625, %v2528, 0.0
      %v2560 = vadd.f32 %v2558, %v2559
      %v2561 = vsel %vm1625, %v2530, 0.0
      %v2562 = vadd.f32 %v2560, %v2561
      %v2563 = vsel %vm1625, %v2532, 0.0
      %v2564 = vadd.f32 %v2562, %v2563
      %v2565 = vsel %vm1625, %v2534, 0.0
      %v2566 = vadd.f32 %v2564, %v2565
      %v2567 = vsel %vm1625, %v2536, 0.0
      %v2568 = vadd.f32 %v2566, %v2567
      %v2569 = vsel %vm1625, %v2538, 0.0
      %v2570 = vadd.f32 %v2568, %v2569
      %v2571 = vsel %vm1625, %v2540, 0.0
      %v2572 = vadd.f32 %v2570, %v2571
      %v2573 = vsel %vm1625, %v2542, 0.0
      %v2574 = vadd.f32 %v2572, %v2573
      %v2575 = vsel %vm1625, %v2544, 0.0
      %v2576 = vadd.f32 %v2574, %v2575
      %v2577 = vsel %vm1625, %v2515, 0.0
      %v2578 = vsel %vm1625, %v2517, 0.0
      %v2579 = vadd.f32 %v2577, %v2578
      %v2580 = vsel %vm1625, %v2519, 0.0
      %v2581 = vadd.f32 %v2579, %v2580
      %v2582 = vsel %vm1625, %v2521, 0.0
      %v2583 = vadd.f32 %v2581, %v2582
      %v2584 = vsel %vm1625, %v2523, 0.0
      %v2585 = vadd.f32 %v2583, %v2584
      %v2586 = vsel %vm1625, %v2525, 0.0
      %v2587 = vadd.f32 %v2585, %v2586
      %v2588 = vsel %vm1625, %v2527, 0.0
      %v2589 = vadd.f32 %v2587, %v2588
      %v2590 = vsel %vm1625, %v2529, 0.0
      %v2591 = vadd.f32 %v2589, %v2590
      %v2592 = vsel %vm1625, %v2531, 0.0
      %v2593 = vadd.f32 %v2591, %v2592
      %v2594 = vsel %vm1625, %v2533, 0.0
      %v2595 = vadd.f32 %v2593, %v2594
      %v2596 = vsel %vm1625, %v2535, 0.0
      %v2597 = vadd.f32 %v2595, %v2596
      %v2598 = vsel %vm1625, %v2537, 0.0
      %v2599 = vadd.f32 %v2597, %v2598
      %v2600 = vsel %vm1625, %v2539, 0.0
      %v2601 = vadd.f32 %v2599, %v2600
      %v2602 = vsel %vm1625, %v2541, 0.0
      %v2603 = vadd.f32 %v2601, %v2602
      %v2604 = vsel %vm1625, %v2543, 0.0
      %v2605 = vadd.f32 %v2603, %v2604
      %v2606 = vsel %vm1625, %v2545, 0.0
      %v2607 = vadd.f32 %v2605, %v2606
      %v2608 = vsel %vm1625, %v2576, 0.0
      %v2609 = vsel %vm1625, %v2607, 0.0
      %v2610 = vadd.f32 %v2608, %v2609
      %v2611 = vrot.slane %v2610, 4
      %v2612 = vadd.f32 %v2610, %v2611
      %v2613 = vrot.slane %v2612, 2
      %v2614 = vadd.f32 %v2612, %v2613
      %v2615 = vrot.slane %v2614, 1
      %v2616 = vadd.f32 %v2614, %v2615
      %v2617 = vmul.f32 %v2514, %v2514
      %v2618 = vmul.f32 %v2515, %v2515
      %v2619 = vmul.f32 %v2516, %v2516
      %v2620 = vmul.f32 %v2517, %v2517
      %v2621 = vmul.f32 %v2518, %v2518
      %v2622 = vmul.f32 %v2519, %v2519
      %v2623 = vmul.f32 %v2520, %v2520
      %v2624 = vmul.f32 %v2521, %v2521
      %v2625 = vmul.f32 %v2522, %v2522
      %v2626 = vmul.f32 %v2523, %v2523
      %v2627 = vmul.f32 %v2524, %v2524
      %v2628 = vmul.f32 %v2525, %v2525
      %v2629 = vmul.f32 %v2526, %v2526
      %v2630 = vmul.f32 %v2527, %v2527
      %v2631 = vmul.f32 %v2528, %v2528
      %v2632 = vmul.f32 %v2529, %v2529
      %v2633 = vmul.f32 %v2530, %v2530
      %v2634 = vmul.f32 %v2531, %v2531
      %v2635 = vmul.f32 %v2532, %v2532
      %v2636 = vmul.f32 %v2533, %v2533
      %v2637 = vmul.f32 %v2534, %v2534
      %v2638 = vmul.f32 %v2535, %v2535
      %v2639 = vmul.f32 %v2536, %v2536
      %v2640 = vmul.f32 %v2537, %v2537
      %v2641 = vmul.f32 %v2538, %v2538
      %v2642 = vmul.f32 %v2539, %v2539
      %v2643 = vmul.f32 %v2540, %v2540
      %v2644 = vmul.f32 %v2541, %v2541
      %v2645 = vmul.f32 %v2542, %v2542
      %v2646 = vmul.f32 %v2543, %v2543
      %v2647 = vmul.f32 %v2544, %v2544
      %v2648 = vmul.f32 %v2545, %v2545
      %v2649 = vsel %vm1625, %v2617, 0.0
      %v2650 = vsel %vm1625, %v2619, 0.0
      %v2651 = vadd.f32 %v2649, %v2650
      %v2652 = vsel %vm1625, %v2621, 0.0
      %v2653 = vadd.f32 %v2651, %v2652
      %v2654 = vsel %vm1625, %v2623, 0.0
      %v2655 = vadd.f32 %v2653, %v2654
      %v2656 = vsel %vm1625, %v2625, 0.0
      %v2657 = vadd.f32 %v2655, %v2656
      %v2658 = vsel %vm1625, %v2627, 0.0
      %v2659 = vadd.f32 %v2657, %v2658
      %v2660 = vsel %vm1625, %v2629, 0.0
      %v2661 = vadd.f32 %v2659, %v2660
      %v2662 = vsel %vm1625, %v2631, 0.0
      %v2663 = vadd.f32 %v2661, %v2662
      %v2664 = vsel %vm1625, %v2633, 0.0
      %v2665 = vadd.f32 %v2663, %v2664
      %v2666 = vsel %vm1625, %v2635, 0.0
      %v2667 = vadd.f32 %v2665, %v2666
      %v2668 = vsel %vm1625, %v2637, 0.0
      %v2669 = vadd.f32 %v2667, %v2668
      %v2670 = vsel %vm1625, %v2639, 0.0
      %v2671 = vadd.f32 %v2669, %v2670
      %v2672 = vsel %vm1625, %v2641, 0.0
      %v2673 = vadd.f32 %v2671, %v2672
      %v2674 = vsel %vm1625, %v2643, 0.0
      %v2675 = vadd.f32 %v2673, %v2674
      %v2676 = vsel %vm1625, %v2645, 0.0
      %v2677 = vadd.f32 %v2675, %v2676
      %v2678 = vsel %vm1625, %v2647, 0.0
      %v2679 = vadd.f32 %v2677, %v2678
      %v2680 = vsel %vm1625, %v2618, 0.0
      %v2681 = vsel %vm1625, %v2620, 0.0
      %v2682 = vadd.f32 %v2680, %v2681
      %v2683 = vsel %vm1625, %v2622, 0.0
      %v2684 = vadd.f32 %v2682, %v2683
      %v2685 = vsel %vm1625, %v2624, 0.0
      %v2686 = vadd.f32 %v2684, %v2685
      %v2687 = vsel %vm1625, %v2626, 0.0
      %v2688 = vadd.f32 %v2686, %v2687
      %v2689 = vsel %vm1625, %v2628, 0.0
      %v2690 = vadd.f32 %v2688, %v2689
      %v2691 = vsel %vm1625, %v2630, 0.0
      %v2692 = vadd.f32 %v2690, %v2691
      %v2693 = vsel %vm1625, %v2632, 0.0
      %v2694 = vadd.f32 %v2692, %v2693
      %v2695 = vsel %vm1625, %v2634, 0.0
      %v2696 = vadd.f32 %v2694, %v2695
      %v2697 = vsel %vm1625, %v2636, 0.0
      %v2698 = vadd.f32 %v2696, %v2697
      %v2699 = vsel %vm1625, %v2638, 0.0
      %v2700 = vadd.f32 %v2698, %v2699
      %v2701 = vsel %vm1625, %v2640, 0.0
      %v2702 = vadd.f32 %v2700, %v2701
      %v2703 = vsel %vm1625, %v2642, 0.0
      %v2704 = vadd.f32 %v2702, %v2703
      %v2705 = vsel %vm1625, %v2644, 0.0
      %v2706 = vadd.f32 %v2704, %v2705
      %v2707 = vsel %vm1625, %v2646, 0.0
      %v2708 = vadd.f32 %v2706, %v2707
      %v2709 = vsel %vm1625, %v2648, 0.0
      %v2710 = vadd.f32 %v2708, %v2709
      %v2711 = vsel %vm1625, %v2679, 0.0
      %v2712 = vsel %vm1625, %v2710, 0.0
      %v2713 = vadd.f32 %v2711, %v2712
      %v2714 = vrot.slane %v2713, 4
      %v2715 = vadd.f32 %v2713, %v2714
      %v2716 = vrot.slane %v2715, 2
      %v2717 = vadd.f32 %v2715, %v2716
      %v2718 = vrot.slane %v2717, 1
      %v2719 = vadd.f32 %v2717, %v2718
      %v2720 = vmul.f32 %v2616, 0.00390625
      %v2721 = vmul.f32 %v2719, 0.00390625
      %v2722 = vmul.f32 %v2720, %v2720
      %v2723 = vsub.f32 %v2721, %v2722
      %v2724 = vmax.f32 %v2723, 0.0
      %v2725 = vsub.f32 %v2514, %v2720
      %v2726 = vsub.f32 %v2515, %v2720
      %v2727 = vsub.f32 %v2516, %v2720
      %v2728 = vsub.f32 %v2517, %v2720
      %v2729 = vsub.f32 %v2518, %v2720
      %v2730 = vsub.f32 %v2519, %v2720
      %v2731 = vsub.f32 %v2520, %v2720
      %v2732 = vsub.f32 %v2521, %v2720
      %v2733 = vsub.f32 %v2522, %v2720
      %v2734 = vsub.f32 %v2523, %v2720
      %v2735 = vsub.f32 %v2524, %v2720
      %v2736 = vsub.f32 %v2525, %v2720
      %v2737 = vsub.f32 %v2526, %v2720
      %v2738 = vsub.f32 %v2527, %v2720
      %v2739 = vsub.f32 %v2528, %v2720
      %v2740 = vsub.f32 %v2529, %v2720
      %v2741 = vsub.f32 %v2530, %v2720
      %v2742 = vsub.f32 %v2531, %v2720
      %v2743 = vsub.f32 %v2532, %v2720
      %v2744 = vsub.f32 %v2533, %v2720
      %v2745 = vsub.f32 %v2534, %v2720
      %v2746 = vsub.f32 %v2535, %v2720
      %v2747 = vsub.f32 %v2536, %v2720
      %v2748 = vsub.f32 %v2537, %v2720
      %v2749 = vsub.f32 %v2538, %v2720
      %v2750 = vsub.f32 %v2539, %v2720
      %v2751 = vsub.f32 %v2540, %v2720
      %v2752 = vsub.f32 %v2541, %v2720
      %v2753 = vsub.f32 %v2542, %v2720
      %v2754 = vsub.f32 %v2543, %v2720
      %v2755 = vsub.f32 %v2544, %v2720
      %v2756 = vsub.f32 %v2545, %v2720
      %v2757 = vadd.f32 %v2724, 1e-05
      %v2758 = vrsqrt.pop %v2757
      %v2759 = vmul.f32 %v2725, %v2758
      %v2760 = vmul.f32 %v2726, %v2758
      %v2761 = vmul.f32 %v2727, %v2758
      %v2762 = vmul.f32 %v2728, %v2758
      %v2763 = vmul.f32 %v2729, %v2758
      %v2764 = vmul.f32 %v2730, %v2758
      %v2765 = vmul.f32 %v2731, %v2758
      %v2766 = vmul.f32 %v2732, %v2758
      %v2767 = vmul.f32 %v2733, %v2758
      %v2768 = vmul.f32 %v2734, %v2758
      %v2769 = vmul.f32 %v2735, %v2758
      %v2770 = vmul.f32 %v2736, %v2758
      %v2771 = vmul.f32 %v2737, %v2758
      %v2772 = vmul.f32 %v2738, %v2758
      %v2773 = vmul.f32 %v2739, %v2758
      %v2774 = vmul.f32 %v2740, %v2758
      %v2775 = vmul.f32 %v2741, %v2758
      %v2776 = vmul.f32 %v2742, %v2758
      %v2777 = vmul.f32 %v2743, %v2758
      %v2778 = vmul.f32 %v2744, %v2758
      %v2779 = vmul.f32 %v2745, %v2758
      %v2780 = vmul.f32 %v2746, %v2758
      %v2781 = vmul.f32 %v2747, %v2758
      %v2782 = vmul.f32 %v2748, %v2758
      %v2783 = vmul.f32 %v2749, %v2758
      %v2784 = vmul.f32 %v2750, %v2758
      %v2785 = vmul.f32 %v2751, %v2758
      %v2786 = vmul.f32 %v2752, %v2758
      %v2787 = vmul.f32 %v2753, %v2758
      %v2788 = vmul.f32 %v2754, %v2758
      %v2789 = vmul.f32 %v2755, %v2758
      %v2790 = vmul.f32 %v2756, %v2758
      %v2791 = vmax.f32 %v2759, 0.0
      %v2792 = vmax.f32 %v2760, 0.0
      %v2793 = vmax.f32 %v2761, 0.0
      %v2794 = vmax.f32 %v2762, 0.0
      %v2795 = vmax.f32 %v2763, 0.0
      %v2796 = vmax.f32 %v2764, 0.0
      %v2797 = vmax.f32 %v2765, 0.0
      %v2798 = vmax.f32 %v2766, 0.0
      %v2799 = vmax.f32 %v2767, 0.0
      %v2800 = vmax.f32 %v2768, 0.0
      %v2801 = vmax.f32 %v2769, 0.0
      %v2802 = vmax.f32 %v2770, 0.0
      %v2803 = vmax.f32 %v2771, 0.0
      %v2804 = vmax.f32 %v2772, 0.0
      %v2805 = vmax.f32 %v2773, 0.0
      %v2806 = vmax.f32 %v2774, 0.0
      %v2807 = vmax.f32 %v2775, 0.0
      %v2808 = vmax.f32 %v2776, 0.0
      %v2809 = vmax.f32 %v2777, 0.0
      %v2810 = vmax.f32 %v2778, 0.0
      %v2811 = vmax.f32 %v2779, 0.0
      %v2812 = vmax.f32 %v2780, 0.0
      %v2813 = vmax.f32 %v2781, 0.0
      %v2814 = vmax.f32 %v2782, 0.0
      %v2815 = vmax.f32 %v2783, 0.0
      %v2816 = vmax.f32 %v2784, 0.0
      %v2817 = vmax.f32 %v2785, 0.0
      %v2818 = vmax.f32 %v2786, 0.0
      %v2819 = vmax.f32 %v2787, 0.0
      %v2820 = vmax.f32 %v2788, 0.0
      %v2821 = vmax.f32 %v2789, 0.0
      %v2822 = vmax.f32 %v2790, 0.0
      %v2823 = vpack.c.bf16 %v2792, %v2791
      %v2824 = vpack.c.bf16 %v2794, %v2793
      %v2825 = vpack.c.bf16 %v2796, %v2795
      %v2826 = vpack.c.bf16 %v2798, %v2797
      %v2827 = vpack.c.bf16 %v2800, %v2799
      %v2828 = vpack.c.bf16 %v2802, %v2801
      %v2829 = vpack.c.bf16 %v2804, %v2803
      %v2830 = vpack.c.bf16 %v2806, %v2805
      %v2831 = vpack.c.bf16 %v2808, %v2807
      %v2832 = vpack.c.bf16 %v2810, %v2809
      %v2833 = vpack.c.bf16 %v2812, %v2811
      %v2834 = vpack.c.bf16 %v2814, %v2813
      %v2835 = vpack.c.bf16 %v2816, %v2815
      %v2836 = vpack.c.bf16 %v2818, %v2817
      %v2837 = vpack.c.bf16 %v2820, %v2819
      %v2838 = vpack.c.bf16 %v2822, %v2821
      %v2855 = vunpack.c.l.b16 %v2823
      %v2856 = vunpack.c.l.b16 %v2824
      %v2857 = vunpack.c.l.b16 %v2825
      %v2858 = vunpack.c.l.b16 %v2826
      %v2859 = vunpack.c.l.b16 %v2827
      %v2860 = vunpack.c.l.b16 %v2828
      %v2861 = vunpack.c.l.b16 %v2829
      %v2862 = vunpack.c.l.b16 %v2830
      %v2863 = vunpack.c.l.b16 %v2831
      %v2864 = vunpack.c.l.b16 %v2832
      %v2865 = vunpack.c.l.b16 %v2833
      %v2866 = vunpack.c.l.b16 %v2834
      %v2867 = vunpack.c.l.b16 %v2835
      %v2868 = vunpack.c.l.b16 %v2836
      %v2869 = vunpack.c.l.b16 %v2837
      %v2870 = vunpack.c.l.b16 %v2838
      %v2871 = vpack.c.b16 %v2855, %v2855
      %v2872 = vpack.c.b16 %v2856, %v2856
      %v2873 = vpack.c.b16 %v2857, %v2857
      %v2874 = vpack.c.b16 %v2858, %v2858
      %v2875 = vpack.c.b16 %v2859, %v2859
      %v2876 = vpack.c.b16 %v2860, %v2860
      %v2877 = vpack.c.b16 %v2861, %v2861
      %v2878 = vpack.c.b16 %v2862, %v2862
      %v2879 = vpack.c.b16 %v2863, %v2863
      %v2880 = vpack.c.b16 %v2864, %v2864
      %v2881 = vpack.c.b16 %v2865, %v2865
      %v2882 = vpack.c.b16 %v2866, %v2866
      %v2883 = vpack.c.b16 %v2867, %v2867
      %v2884 = vpack.c.b16 %v2868, %v2868
      %v2885 = vpack.c.b16 %v2869, %v2869
      %v2886 = vpack.c.b16 %v2870, %v2870
      %v2888 = vshrl.u32 %v2871, 16
      %v2890 = vrot.slane %v2888, 4
      %v2891 = vrot.slane %v2890, 4
      %v2893 = vshrl.u32 %v2872, 16
      %v2895 = vrot.slane %v2893, 4
      %v2896 = vrot.slane %v2895, 4
      %v2898 = vshrl.u32 %v2873, 16
      %v2900 = vrot.slane %v2898, 4
      %v2901 = vrot.slane %v2900, 4
      %v2903 = vshrl.u32 %v2874, 16
      %v2905 = vrot.slane %v2903, 4
      %v2906 = vrot.slane %v2905, 4
      %v2908 = vshrl.u32 %v2875, 16
      %v2910 = vrot.slane %v2908, 4
      %v2911 = vrot.slane %v2910, 4
      %v2913 = vshrl.u32 %v2876, 16
      %v2915 = vrot.slane %v2913, 4
      %v2916 = vrot.slane %v2915, 4
      %v2918 = vshrl.u32 %v2877, 16
      %v2920 = vrot.slane %v2918, 4
      %v2921 = vrot.slane %v2920, 4
      %v2923 = vshrl.u32 %v2878, 16
      %v2925 = vrot.slane %v2923, 4
      %v2926 = vrot.slane %v2925, 4
      %v2928 = vshrl.u32 %v2879, 16
      %v2930 = vrot.slane %v2928, 4
      %v2931 = vrot.slane %v2930, 4
      %v2933 = vshrl.u32 %v2880, 16
      %v2935 = vrot.slane %v2933, 4
      %v2936 = vrot.slane %v2935, 4
      %v2938 = vshrl.u32 %v2881, 16
      %v2940 = vrot.slane %v2938, 4
      %v2941 = vrot.slane %v2940, 4
      %v2943 = vshrl.u32 %v2882, 16
      %v2945 = vrot.slane %v2943, 4
      %v2946 = vrot.slane %v2945, 4
      %v2948 = vshrl.u32 %v2883, 16
      %v2950 = vrot.slane %v2948, 4
      %v2951 = vrot.slane %v2950, 4
      %v2953 = vshrl.u32 %v2884, 16
      %v2955 = vrot.slane %v2953, 4
      %v2956 = vrot.slane %v2955, 4
      %v2958 = vshrl.u32 %v2885, 16
      %v2960 = vrot.slane %v2958, 4
      %v2961 = vrot.slane %v2960, 4
      %v2963 = vshrl.u32 %v2886, 16
      %v2965 = vrot.slane %v2963, 4
      %v2966 = vrot.slane %v2965, 4
      %v2983 = vld [vmem:[%s364] sm:$0x1]
      %v2984 = vsel %vm367, %v2891, %v2983
      %2985 = vst [vmem:[%s364] sm:$0x1] %v2984
      %v2986 = vld [vmem:[%s364 + $0x8] sm:$0x1]
      %v2987 = vsel %vm367, %v2896, %v2986
      %2988 = vst [vmem:[%s364 + $0x8] sm:$0x1] %v2987
      %v2989 = vld [vmem:[%s364 + $0x10] sm:$0x1]
      %v2990 = vsel %vm367, %v2901, %v2989
      %2991 = vst [vmem:[%s364 + $0x10] sm:$0x1] %v2990
      %v2992 = vld [vmem:[%s364 + $0x18] sm:$0x1]
      %v2993 = vsel %vm367, %v2906, %v2992
      %2994 = vst [vmem:[%s364 + $0x18] sm:$0x1] %v2993
      %v2995 = vld [vmem:[%s364 + $0x20] sm:$0x1]
      %v2996 = vsel %vm367, %v2911, %v2995
      %2997 = vst [vmem:[%s364 + $0x20] sm:$0x1] %v2996
      %v2998 = vld [vmem:[%s364 + $0x28] sm:$0x1]
      %v2999 = vsel %vm367, %v2916, %v2998
      %3000 = vst [vmem:[%s364 + $0x28] sm:$0x1] %v2999
      %v3001 = vld [vmem:[%s364 + $0x30] sm:$0x1]
      %v3002 = vsel %vm367, %v2921, %v3001
      %3003 = vst [vmem:[%s364 + $0x30] sm:$0x1] %v3002
      %v3004 = vld [vmem:[%s364 + $0x38] sm:$0x1]
      %v3005 = vsel %vm367, %v2926, %v3004
      %3006 = vst [vmem:[%s364 + $0x38] sm:$0x1] %v3005
      %v3007 = vld [vmem:[%s364 + $0x40] sm:$0x1]
      %v3008 = vsel %vm367, %v2931, %v3007
      %3009 = vst [vmem:[%s364 + $0x40] sm:$0x1] %v3008
      %v3010 = vld [vmem:[%s364 + $0x48] sm:$0x1]
      %v3011 = vsel %vm367, %v2936, %v3010
      %3012 = vst [vmem:[%s364 + $0x48] sm:$0x1] %v3011
      %v3013 = vld [vmem:[%s364 + $0x50] sm:$0x1]
      %v3014 = vsel %vm367, %v2941, %v3013
      %3015 = vst [vmem:[%s364 + $0x50] sm:$0x1] %v3014
      %v3016 = vld [vmem:[%s364 + $0x58] sm:$0x1]
      %v3017 = vsel %vm367, %v2946, %v3016
      %3018 = vst [vmem:[%s364 + $0x58] sm:$0x1] %v3017
      %v3019 = vld [vmem:[%s364 + $0x60] sm:$0x1]
      %v3020 = vsel %vm367, %v2951, %v3019
      %3021 = vst [vmem:[%s364 + $0x60] sm:$0x1] %v3020
      %v3022 = vld [vmem:[%s364 + $0x68] sm:$0x1]
      %v3023 = vsel %vm367, %v2956, %v3022
      %3024 = vst [vmem:[%s364 + $0x68] sm:$0x1] %v3023
      %v3025 = vld [vmem:[%s364 + $0x70] sm:$0x1]
      %v3026 = vsel %vm367, %v2961, %v3025
      %3027 = vst [vmem:[%s364 + $0x70] sm:$0x1] %v3026
      %v3028 = vld [vmem:[%s364 + $0x78] sm:$0x1]
      %v3029 = vsel %vm367, %v2966, %v3028
      %3030 = vst [vmem:[%s364 + $0x78] sm:$0x1] %v3029
      %v3031 = vunpack.c.h.b16 %v2823
      %v3032 = vunpack.c.h.b16 %v2824
      %v3033 = vunpack.c.h.b16 %v2825
      %v3034 = vunpack.c.h.b16 %v2826
      %v3035 = vunpack.c.h.b16 %v2827
      %v3036 = vunpack.c.h.b16 %v2828
      %v3037 = vunpack.c.h.b16 %v2829
      %v3038 = vunpack.c.h.b16 %v2830
      %v3039 = vunpack.c.h.b16 %v2831
      %v3040 = vunpack.c.h.b16 %v2832
      %v3041 = vunpack.c.h.b16 %v2833
      %v3042 = vunpack.c.h.b16 %v2834
      %v3043 = vunpack.c.h.b16 %v2835
      %v3044 = vunpack.c.h.b16 %v2836
      %v3045 = vunpack.c.h.b16 %v2837
      %v3046 = vunpack.c.h.b16 %v2838
      %v3047 = vpack.c.b16 %v3031, %v3031
      %v3048 = vpack.c.b16 %v3032, %v3032
      %v3049 = vpack.c.b16 %v3033, %v3033
      %v3050 = vpack.c.b16 %v3034, %v3034
      %v3051 = vpack.c.b16 %v3035, %v3035
      %v3052 = vpack.c.b16 %v3036, %v3036
      %v3053 = vpack.c.b16 %v3037, %v3037
      %v3054 = vpack.c.b16 %v3038, %v3038
      %v3055 = vpack.c.b16 %v3039, %v3039
      %v3056 = vpack.c.b16 %v3040, %v3040
      %v3057 = vpack.c.b16 %v3041, %v3041
      %v3058 = vpack.c.b16 %v3042, %v3042
      %v3059 = vpack.c.b16 %v3043, %v3043
      %v3060 = vpack.c.b16 %v3044, %v3044
      %v3061 = vpack.c.b16 %v3045, %v3045
      %v3062 = vpack.c.b16 %v3046, %v3046
      %v3063 = vrot.slane %v2888, 7
      %v3064 = vshll.u32 %v2871, 16
      %v3066 = vor.u32 %v3063, %v3064
      %v3067 = vrot.slane %v3063, 4
      %v3069 = vshrl.u32 %v3047, 16
      %v3071 = vrot.slane %v3069, 7
      %v3072 = vshll.u32 %v3047, 16
      %v3074 = vor.u32 %v3071, %v3072
      %v3075 = vsel %vm449, %v3067, %v3074
      %v3076 = vrot.slane %v2893, 7
      %v3077 = vshll.u32 %v2872, 16
      %v3079 = vor.u32 %v3076, %v3077
      %v3080 = vrot.slane %v3076, 4
      %v3082 = vshrl.u32 %v3048, 16
      %v3084 = vrot.slane %v3082, 7
      %v3085 = vshll.u32 %v3048, 16
      %v3087 = vor.u32 %v3084, %v3085
      %v3088 = vsel %vm449, %v3080, %v3087
      %v3089 = vrot.slane %v2898, 7
      %v3090 = vshll.u32 %v2873, 16
      %v3092 = vor.u32 %v3089, %v3090
      %v3093 = vrot.slane %v3089, 4
      %v3095 = vshrl.u32 %v3049, 16
      %v3097 = vrot.slane %v3095, 7
      %v3098 = vshll.u32 %v3049, 16
      %v3100 = vor.u32 %v3097, %v3098
      %v3101 = vsel %vm449, %v3093, %v3100
      %v3102 = vrot.slane %v2903, 7
      %v3103 = vshll.u32 %v2874, 16
      %v3105 = vor.u32 %v3102, %v3103
      %v3106 = vrot.slane %v3102, 4
      %v3108 = vshrl.u32 %v3050, 16
      %v3110 = vrot.slane %v3108, 7
      %v3111 = vshll.u32 %v3050, 16
      %v3113 = vor.u32 %v3110, %v3111
      %v3114 = vsel %vm449, %v3106, %v3113
      %v3115 = vrot.slane %v2908, 7
      %v3116 = vshll.u32 %v2875, 16
      %v3118 = vor.u32 %v3115, %v3116
      %v3119 = vrot.slane %v3115, 4
      %v3121 = vshrl.u32 %v3051, 16
      %v3123 = vrot.slane %v3121, 7
      %v3124 = vshll.u32 %v3051, 16
      %v3126 = vor.u32 %v3123, %v3124
      %v3127 = vsel %vm449, %v3119, %v3126
      %v3128 = vrot.slane %v2913, 7
      %v3129 = vshll.u32 %v2876, 16
      %v3131 = vor.u32 %v3128, %v3129
      %v3132 = vrot.slane %v3128, 4
      %v3134 = vshrl.u32 %v3052, 16
      %v3136 = vrot.slane %v3134, 7
      %v3137 = vshll.u32 %v3052, 16
      %v3139 = vor.u32 %v3136, %v3137
      %v3140 = vsel %vm449, %v3132, %v3139
      %v3141 = vrot.slane %v2918, 7
      %v3142 = vshll.u32 %v2877, 16
      %v3144 = vor.u32 %v3141, %v3142
      %v3145 = vrot.slane %v3141, 4
      %v3147 = vshrl.u32 %v3053, 16
      %v3149 = vrot.slane %v3147, 7
      %v3150 = vshll.u32 %v3053, 16
      %v3152 = vor.u32 %v3149, %v3150
      %v3153 = vsel %vm449, %v3145, %v3152
      %v3154 = vrot.slane %v2923, 7
      %v3155 = vshll.u32 %v2878, 16
      %v3157 = vor.u32 %v3154, %v3155
      %v3158 = vrot.slane %v3154, 4
      %v3160 = vshrl.u32 %v3054, 16
      %v3162 = vrot.slane %v3160, 7
      %v3163 = vshll.u32 %v3054, 16
      %v3165 = vor.u32 %v3162, %v3163
      %v3166 = vsel %vm449, %v3158, %v3165
      %v3167 = vrot.slane %v2928, 7
      %v3168 = vshll.u32 %v2879, 16
      %v3170 = vor.u32 %v3167, %v3168
      %v3171 = vrot.slane %v3167, 4
      %v3173 = vshrl.u32 %v3055, 16
      %v3175 = vrot.slane %v3173, 7
      %v3176 = vshll.u32 %v3055, 16
      %v3178 = vor.u32 %v3175, %v3176
      %v3179 = vsel %vm449, %v3171, %v3178
      %v3180 = vrot.slane %v2933, 7
      %v3181 = vshll.u32 %v2880, 16
      %v3183 = vor.u32 %v3180, %v3181
      %v3184 = vrot.slane %v3180, 4
      %v3186 = vshrl.u32 %v3056, 16
      %v3188 = vrot.slane %v3186, 7
      %v3189 = vshll.u32 %v3056, 16
      %v3191 = vor.u32 %v3188, %v3189
      %v3192 = vsel %vm449, %v3184, %v3191
      %v3193 = vrot.slane %v2938, 7
      %v3194 = vshll.u32 %v2881, 16
      %v3196 = vor.u32 %v3193, %v3194
      %v3197 = vrot.slane %v3193, 4
      %v3199 = vshrl.u32 %v3057, 16
      %v3201 = vrot.slane %v3199, 7
      %v3202 = vshll.u32 %v3057, 16
      %v3204 = vor.u32 %v3201, %v3202
      %v3205 = vsel %vm449, %v3197, %v3204
      %v3206 = vrot.slane %v2943, 7
      %v3207 = vshll.u32 %v2882, 16
      %v3209 = vor.u32 %v3206, %v3207
      %v3210 = vrot.slane %v3206, 4
      %v3212 = vshrl.u32 %v3058, 16
      %v3214 = vrot.slane %v3212, 7
      %v3215 = vshll.u32 %v3058, 16
      %v3217 = vor.u32 %v3214, %v3215
      %v3218 = vsel %vm449, %v3210, %v3217
      %v3219 = vrot.slane %v2948, 7
      %v3220 = vshll.u32 %v2883, 16
      %v3222 = vor.u32 %v3219, %v3220
      %v3223 = vrot.slane %v3219, 4
      %v3225 = vshrl.u32 %v3059, 16
      %v3227 = vrot.slane %v3225, 7
      %v3228 = vshll.u32 %v3059, 16
      %v3230 = vor.u32 %v3227, %v3228
      %v3231 = vsel %vm449, %v3223, %v3230
      %v3232 = vrot.slane %v2953, 7
      %v3233 = vshll.u32 %v2884, 16
      %v3235 = vor.u32 %v3232, %v3233
      %v3236 = vrot.slane %v3232, 4
      %v3238 = vshrl.u32 %v3060, 16
      %v3240 = vrot.slane %v3238, 7
      %v3241 = vshll.u32 %v3060, 16
      %v3243 = vor.u32 %v3240, %v3241
      %v3244 = vsel %vm449, %v3236, %v3243
      %v3245 = vrot.slane %v2958, 7
      %v3246 = vshll.u32 %v2885, 16
      %v3248 = vor.u32 %v3245, %v3246
      %v3249 = vrot.slane %v3245, 4
      %v3251 = vshrl.u32 %v3061, 16
      %v3253 = vrot.slane %v3251, 7
      %v3254 = vshll.u32 %v3061, 16
      %v3256 = vor.u32 %v3253, %v3254
      %v3257 = vsel %vm449, %v3249, %v3256
      %v3258 = vrot.slane %v2963, 7
      %v3259 = vshll.u32 %v2886, 16
      %v3261 = vor.u32 %v3258, %v3259
      %v3262 = vrot.slane %v3258, 4
      %v3264 = vshrl.u32 %v3062, 16
      %v3266 = vrot.slane %v3264, 7
      %v3267 = vshll.u32 %v3062, 16
      %v3269 = vor.u32 %v3266, %v3267
      %v3270 = vsel %vm449, %v3262, %v3269
      %v3303 = vld [vmem:[%s364] sm:$0xf]
      %v3304 = vsel %vm692, %v3066, %v3303
      %3305 = vst [vmem:[%s364] sm:$0xf] %v3304
      %3306 = vst.msk [vmem:[%s364 + $0x4] sm:$0xf] %vm696, %v3075
      %v3307 = vld [vmem:[%s364 + $0x8] sm:$0xf]
      %v3308 = vsel %vm692, %v3079, %v3307
      %3309 = vst [vmem:[%s364 + $0x8] sm:$0xf] %v3308
      %3310 = vst.msk [vmem:[%s364 + $0xc] sm:$0xf] %vm696, %v3088
      %v3311 = vld [vmem:[%s364 + $0x10] sm:$0xf]
      %v3312 = vsel %vm692, %v3092, %v3311
      %3313 = vst [vmem:[%s364 + $0x10] sm:$0xf] %v3312
      %3314 = vst.msk [vmem:[%s364 + $0x14] sm:$0xf] %vm696, %v3101
      %v3315 = vld [vmem:[%s364 + $0x18] sm:$0xf]
      %v3316 = vsel %vm692, %v3105, %v3315
      %3317 = vst [vmem:[%s364 + $0x18] sm:$0xf] %v3316
      %3318 = vst.msk [vmem:[%s364 + $0x1c] sm:$0xf] %vm696, %v3114
      %v3319 = vld [vmem:[%s364 + $0x20] sm:$0xf]
      %v3320 = vsel %vm692, %v3118, %v3319
      %3321 = vst [vmem:[%s364 + $0x20] sm:$0xf] %v3320
      %3322 = vst.msk [vmem:[%s364 + $0x24] sm:$0xf] %vm696, %v3127
      %v3323 = vld [vmem:[%s364 + $0x28] sm:$0xf]
      %v3324 = vsel %vm692, %v3131, %v3323
      %3325 = vst [vmem:[%s364 + $0x28] sm:$0xf] %v3324
      %3326 = vst.msk [vmem:[%s364 + $0x2c] sm:$0xf] %vm696, %v3140
      %v3327 = vld [vmem:[%s364 + $0x30] sm:$0xf]
      %v3328 = vsel %vm692, %v3144, %v3327
      %3329 = vst [vmem:[%s364 + $0x30] sm:$0xf] %v3328
      %3330 = vst.msk [vmem:[%s364 + $0x34] sm:$0xf] %vm696, %v3153
      %v3331 = vld [vmem:[%s364 + $0x38] sm:$0xf]
      %v3332 = vsel %vm692, %v3157, %v3331
      %3333 = vst [vmem:[%s364 + $0x38] sm:$0xf] %v3332
      %3334 = vst.msk [vmem:[%s364 + $0x3c] sm:$0xf] %vm696, %v3166
      %v3335 = vld [vmem:[%s364 + $0x40] sm:$0xf]
      %v3336 = vsel %vm692, %v3170, %v3335
      %3337 = vst [vmem:[%s364 + $0x40] sm:$0xf] %v3336
      %3338 = vst.msk [vmem:[%s364 + $0x44] sm:$0xf] %vm696, %v3179
      %v3339 = vld [vmem:[%s364 + $0x48] sm:$0xf]
      %v3340 = vsel %vm692, %v3183, %v3339
      %3341 = vst [vmem:[%s364 + $0x48] sm:$0xf] %v3340
      %3342 = vst.msk [vmem:[%s364 + $0x4c] sm:$0xf] %vm696, %v3192
      %v3343 = vld [vmem:[%s364 + $0x50] sm:$0xf]
      %v3344 = vsel %vm692, %v3196, %v3343
      %3345 = vst [vmem:[%s364 + $0x50] sm:$0xf] %v3344
      %3346 = vst.msk [vmem:[%s364 + $0x54] sm:$0xf] %vm696, %v3205
      %v3347 = vld [vmem:[%s364 + $0x58] sm:$0xf]
      %v3348 = vsel %vm692, %v3209, %v3347
      %3349 = vst [vmem:[%s364 + $0x58] sm:$0xf] %v3348
      %3350 = vst.msk [vmem:[%s364 + $0x5c] sm:$0xf] %vm696, %v3218
      %v3351 = vld [vmem:[%s364 + $0x60] sm:$0xf]
      %v3352 = vsel %vm692, %v3222, %v3351
      %3353 = vst [vmem:[%s364 + $0x60] sm:$0xf] %v3352
      %3354 = vst.msk [vmem:[%s364 + $0x64] sm:$0xf] %vm696, %v3231
      %v3355 = vld [vmem:[%s364 + $0x68] sm:$0xf]
      %v3356 = vsel %vm692, %v3235, %v3355
      %3357 = vst [vmem:[%s364 + $0x68] sm:$0xf] %v3356
      %3358 = vst.msk [vmem:[%s364 + $0x6c] sm:$0xf] %vm696, %v3244
      %v3359 = vld [vmem:[%s364 + $0x70] sm:$0xf]
      %v3360 = vsel %vm692, %v3248, %v3359
      %3361 = vst [vmem:[%s364 + $0x70] sm:$0xf] %v3360
      %3362 = vst.msk [vmem:[%s364 + $0x74] sm:$0xf] %vm696, %v3257
      %v3363 = vld [vmem:[%s364 + $0x78] sm:$0xf]
      %v3364 = vsel %vm692, %v3261, %v3363
      %3365 = vst [vmem:[%s364 + $0x78] sm:$0xf] %v3364
      %3366 = vst.msk [vmem:[%s364 + $0x7c] sm:$0xf] %vm696, %v3270
      %3367 = vrot.lane.b32.xlu0 %v2871, 4
      %v3368 = vpop.permute.xlu0 %3367
      %3369 = vrot.lane.b32.xlu0 %v3047, 4
      %v3370 = vpop.permute.xlu0 %3369
      %3371 = vrot.lane.b32.xlu0 %v2872, 4
      %v3372 = vpop.permute.xlu0 %3371
      %3373 = vrot.lane.b32.xlu0 %v3048, 4
      %v3374 = vpop.permute.xlu0 %3373
      %3375 = vrot.lane.b32.xlu0 %v2873, 4
      %v3376 = vpop.permute.xlu0 %3375
      %3377 = vrot.lane.b32.xlu0 %v3049, 4
      %v3378 = vpop.permute.xlu0 %3377
      %3379 = vrot.lane.b32.xlu0 %v2874, 4
      %v3380 = vpop.permute.xlu0 %3379
      %3381 = vrot.lane.b32.xlu0 %v3050, 4
      %v3382 = vpop.permute.xlu0 %3381
      %3383 = vrot.lane.b32.xlu0 %v2875, 4
      %v3384 = vpop.permute.xlu0 %3383
      %3385 = vrot.lane.b32.xlu0 %v3051, 4
      %v3386 = vpop.permute.xlu0 %3385
      %3387 = vrot.lane.b32.xlu0 %v2876, 4
      %v3388 = vpop.permute.xlu0 %3387
      %3389 = vrot.lane.b32.xlu0 %v3052, 4
      %v3390 = vpop.permute.xlu0 %3389
      %3391 = vrot.lane.b32.xlu0 %v2877, 4
      %v3392 = vpop.permute.xlu0 %3391
      %3393 = vrot.lane.b32.xlu0 %v3053, 4
      %v3394 = vpop.permute.xlu0 %3393
      %3395 = vrot.lane.b32.xlu0 %v2878, 4
      %v3396 = vpop.permute.xlu0 %3395
      %3397 = vrot.lane.b32.xlu0 %v3054, 4
      %v3398 = vpop.permute.xlu0 %3397
      %3399 = vrot.lane.b32.xlu0 %v2879, 4
      %v3400 = vpop.permute.xlu0 %3399
      %3401 = vrot.lane.b32.xlu0 %v3055, 4
      %v3402 = vpop.permute.xlu0 %3401
      %3403 = vrot.lane.b32.xlu0 %v2880, 4
      %v3404 = vpop.permute.xlu0 %3403
      %3405 = vrot.lane.b32.xlu0 %v3056, 4
      %v3406 = vpop.permute.xlu0 %3405
      %3407 = vrot.lane.b32.xlu0 %v2881, 4
      %v3408 = vpop.permute.xlu0 %3407
      %3409 = vrot.lane.b32.xlu0 %v3057, 4
      %v3410 = vpop.permute.xlu0 %3409
      %3411 = vrot.lane.b32.xlu0 %v2882, 4
      %v3412 = vpop.permute.xlu0 %3411
      %3413 = vrot.lane.b32.xlu0 %v3058, 4
      %v3414 = vpop.permute.xlu0 %3413
      %3415 = vrot.lane.b32.xlu0 %v2883, 4
      %v3416 = vpop.permute.xlu0 %3415
      %3417 = vrot.lane.b32.xlu0 %v3059, 4
      %v3418 = vpop.permute.xlu0 %3417
      %3419 = vrot.lane.b32.xlu0 %v2884, 4
      %v3420 = vpop.permute.xlu0 %3419
      %3421 = vrot.lane.b32.xlu0 %v3060, 4
      %v3422 = vpop.permute.xlu0 %3421
      %3423 = vrot.lane.b32.xlu0 %v2885, 4
      %v3424 = vpop.permute.xlu0 %3423
      %3425 = vrot.lane.b32.xlu0 %v3061, 4
      %v3426 = vpop.permute.xlu0 %3425
      %3427 = vrot.lane.b32.xlu0 %v2886, 4
      %v3428 = vpop.permute.xlu0 %3427
      %3429 = vrot.lane.b32.xlu0 %v3062, 4
      %v3430 = vpop.permute.xlu0 %3429
      %3463 = vst.msk [vmem:[%s364] sm:$0xf] %vm854, %v3368
      %3464 = vst.msk [vmem:[%s364 + $0x4] sm:$0xf] %vm854, %v3370
      %3465 = vst.msk [vmem:[%s364 + $0x8] sm:$0xf] %vm854, %v3372
      %3466 = vst.msk [vmem:[%s364 + $0xc] sm:$0xf] %vm854, %v3374
      %3467 = vst.msk [vmem:[%s364 + $0x10] sm:$0xf] %vm854, %v3376
      %3468 = vst.msk [vmem:[%s364 + $0x14] sm:$0xf] %vm854, %v3378
      %3469 = vst.msk [vmem:[%s364 + $0x18] sm:$0xf] %vm854, %v3380
      %3470 = vst.msk [vmem:[%s364 + $0x1c] sm:$0xf] %vm854, %v3382
      %3471 = vst.msk [vmem:[%s364 + $0x20] sm:$0xf] %vm854, %v3384
      %3472 = vst.msk [vmem:[%s364 + $0x24] sm:$0xf] %vm854, %v3386
      %3473 = vst.msk [vmem:[%s364 + $0x28] sm:$0xf] %vm854, %v3388
      %3474 = vst.msk [vmem:[%s364 + $0x2c] sm:$0xf] %vm854, %v3390
      %3475 = vst.msk [vmem:[%s364 + $0x30] sm:$0xf] %vm854, %v3392
      %3476 = vst.msk [vmem:[%s364 + $0x34] sm:$0xf] %vm854, %v3394
      %3477 = vst.msk [vmem:[%s364 + $0x38] sm:$0xf] %vm854, %v3396
      %3478 = vst.msk [vmem:[%s364 + $0x3c] sm:$0xf] %vm854, %v3398
      %3479 = vst.msk [vmem:[%s364 + $0x40] sm:$0xf] %vm854, %v3400
      %3480 = vst.msk [vmem:[%s364 + $0x44] sm:$0xf] %vm854, %v3402
      %3481 = vst.msk [vmem:[%s364 + $0x48] sm:$0xf] %vm854, %v3404
      %3482 = vst.msk [vmem:[%s364 + $0x4c] sm:$0xf] %vm854, %v3406
      %3483 = vst.msk [vmem:[%s364 + $0x50] sm:$0xf] %vm854, %v3408
      %3484 = vst.msk [vmem:[%s364 + $0x54] sm:$0xf] %vm854, %v3410
      %3485 = vst.msk [vmem:[%s364 + $0x58] sm:$0xf] %vm854, %v3412
      %3486 = vst.msk [vmem:[%s364 + $0x5c] sm:$0xf] %vm854, %v3414
      %3487 = vst.msk [vmem:[%s364 + $0x60] sm:$0xf] %vm854, %v3416
      %3488 = vst.msk [vmem:[%s364 + $0x64] sm:$0xf] %vm854, %v3418
      %3489 = vst.msk [vmem:[%s364 + $0x68] sm:$0xf] %vm854, %v3420
      %3490 = vst.msk [vmem:[%s364 + $0x6c] sm:$0xf] %vm854, %v3422
      %3491 = vst.msk [vmem:[%s364 + $0x70] sm:$0xf] %vm854, %v3424
      %3492 = vst.msk [vmem:[%s364 + $0x74] sm:$0xf] %vm854, %v3426
      %3493 = vst.msk [vmem:[%s364 + $0x78] sm:$0xf] %vm854, %v3428
      %3494 = vst.msk [vmem:[%s364 + $0x7c] sm:$0xf] %vm854, %v3430
      %v3495 = vrot.slane %v3064, 5
      %v3496 = vor.u32 %v2890, %v3495
      %v3497 = vrot.slane %v3496, 4
      %v3498 = vrot.slane %v3072, 5
      %v3499 = vsel %vm889, %v3497, %v3498
      %v3500 = vrot.slane %v3069, 4
      %v3501 = vor.u32 %v3500, %v3498
      %v3502 = vrot.slane %v3501, 4
      %v3503 = vrot.slane %v3077, 5
      %v3504 = vor.u32 %v2895, %v3503
      %v3505 = vrot.slane %v3504, 4
      %v3506 = vrot.slane %v3085, 5
      %v3507 = vsel %vm889, %v3505, %v3506
      %v3508 = vrot.slane %v3082, 4
      %v3509 = vor.u32 %v3508, %v3506
      %v3510 = vrot.slane %v3509, 4
      %v3511 = vrot.slane %v3090, 5
      %v3512 = vor.u32 %v2900, %v3511
      %v3513 = vrot.slane %v3512, 4
      %v3514 = vrot.slane %v3098, 5
      %v3515 = vsel %vm889, %v3513, %v3514
      %v3516 = vrot.slane %v3095, 4
      %v3517 = vor.u32 %v3516, %v3514
      %v3518 = vrot.slane %v3517, 4
      %v3519 = vrot.slane %v3103, 5
      %v3520 = vor.u32 %v2905, %v3519
      %v3521 = vrot.slane %v3520, 4
      %v3522 = vrot.slane %v3111, 5
      %v3523 = vsel %vm889, %v3521, %v3522
      %v3524 = vrot.slane %v3108, 4
      %v3525 = vor.u32 %v3524, %v3522
      %v3526 = vrot.slane %v3525, 4
      %v3527 = vrot.slane %v3116, 5
      %v3528 = vor.u32 %v2910, %v3527
      %v3529 = vrot.slane %v3528, 4
      %v3530 = vrot.slane %v3124, 5
      %v3531 = vsel %vm889, %v3529, %v3530
      %v3532 = vrot.slane %v3121, 4
      %v3533 = vor.u32 %v3532, %v3530
      %v3534 = vrot.slane %v3533, 4
      %v3535 = vrot.slane %v3129, 5
      %v3536 = vor.u32 %v2915, %v3535
      %v3537 = vrot.slane %v3536, 4
      %v3538 = vrot.slane %v3137, 5
      %v3539 = vsel %vm889, %v3537, %v3538
      %v3540 = vrot.slane %v3134, 4
      %v3541 = vor.u32 %v3540, %v3538
      %v3542 = vrot.slane %v3541, 4
      %v3543 = vrot.slane %v3142, 5
      %v3544 = vor.u32 %v2920, %v3543
      %v3545 = vrot.slane %v3544, 4
      %v3546 = vrot.slane %v3150, 5
      %v3547 = vsel %vm889, %v3545, %v3546
      %v3548 = vrot.slane %v3147, 4
      %v3549 = vor.u32 %v3548, %v3546
      %v3550 = vrot.slane %v3549, 4
      %v3551 = vrot.slane %v3155, 5
      %v3552 = vor.u32 %v2925, %v3551
      %v3553 = vrot.slane %v3552, 4
      %v3554 = vrot.slane %v3163, 5
      %v3555 = vsel %vm889, %v3553, %v3554
      %v3556 = vrot.slane %v3160, 4
      %v3557 = vor.u32 %v3556, %v3554
      %v3558 = vrot.slane %v3557, 4
      %v3559 = vrot.slane %v3168, 5
      %v3560 = vor.u32 %v2930, %v3559
      %v3561 = vrot.slane %v3560, 4
      %v3562 = vrot.slane %v3176, 5
      %v3563 = vsel %vm889, %v3561, %v3562
      %v3564 = vrot.slane %v3173, 4
      %v3565 = vor.u32 %v3564, %v3562
      %v3566 = vrot.slane %v3565, 4
      %v3567 = vrot.slane %v3181, 5
      %v3568 = vor.u32 %v2935, %v3567
      %v3569 = vrot.slane %v3568, 4
      %v3570 = vrot.slane %v3189, 5
      %v3571 = vsel %vm889, %v3569, %v3570
      %v3572 = vrot.slane %v3186, 4
      %v3573 = vor.u32 %v3572, %v3570
      %v3574 = vrot.slane %v3573, 4
      %v3575 = vrot.slane %v3194, 5
      %v3576 = vor.u32 %v2940, %v3575
      %v3577 = vrot.slane %v3576, 4
      %v3578 = vrot.slane %v3202, 5
      %v3579 = vsel %vm889, %v3577, %v3578
      %v3580 = vrot.slane %v3199, 4
      %v3581 = vor.u32 %v3580, %v3578
      %v3582 = vrot.slane %v3581, 4
      %v3583 = vrot.slane %v3207, 5
      %v3584 = vor.u32 %v2945, %v3583
      %v3585 = vrot.slane %v3584, 4
      %v3586 = vrot.slane %v3215, 5
      %v3587 = vsel %vm889, %v3585, %v3586
      %v3588 = vrot.slane %v3212, 4
      %v3589 = vor.u32 %v3588, %v3586
      %v3590 = vrot.slane %v3589, 4
      %v3591 = vrot.slane %v3220, 5
      %v3592 = vor.u32 %v2950, %v3591
      %v3593 = vrot.slane %v3592, 4
      %v3594 = vrot.slane %v3228, 5
      %v3595 = vsel %vm889, %v3593, %v3594
      %v3596 = vrot.slane %v3225, 4
      %v3597 = vor.u32 %v3596, %v3594
      %v3598 = vrot.slane %v3597, 4
      %v3599 = vrot.slane %v3233, 5
      %v3600 = vor.u32 %v2955, %v3599
      %v3601 = vrot.slane %v3600, 4
      %v3602 = vrot.slane %v3241, 5
      %v3603 = vsel %vm889, %v3601, %v3602
      %v3604 = vrot.slane %v3238, 4
      %v3605 = vor.u32 %v3604, %v3602
      %v3606 = vrot.slane %v3605, 4
      %v3607 = vrot.slane %v3246, 5
      %v3608 = vor.u32 %v2960, %v3607
      %v3609 = vrot.slane %v3608, 4
      %v3610 = vrot.slane %v3254, 5
      %v3611 = vsel %vm889, %v3609, %v3610
      %v3612 = vrot.slane %v3251, 4
      %v3613 = vor.u32 %v3612, %v3610
      %v3614 = vrot.slane %v3613, 4
      %v3615 = vrot.slane %v3259, 5
      %v3616 = vor.u32 %v2965, %v3615
      %v3617 = vrot.slane %v3616, 4
      %v3618 = vrot.slane %v3267, 5
      %v3619 = vsel %vm889, %v3617, %v3618
      %v3620 = vrot.slane %v3264, 4
      %v3621 = vor.u32 %v3620, %v3618
      %v3622 = vrot.slane %v3621, 4
      %3623 = vrot.lane.b32.xlu0 %v3499, 8
      %v3624 = vpop.permute.xlu0 %3623
      %3625 = vrot.lane.b32.xlu0 %v3502, 8
      %v3626 = vpop.permute.xlu0 %3625
      %3627 = vrot.lane.b32.xlu0 %v3507, 8
      %v3628 = vpop.permute.xlu0 %3627
      %3629 = vrot.lane.b32.xlu0 %v3510, 8
      %v3630 = vpop.permute.xlu0 %3629
      %3631 = vrot.lane.b32.xlu0 %v3515, 8
      %v3632 = vpop.permute.xlu0 %3631
      %3633 = vrot.lane.b32.xlu0 %v3518, 8
      %v3634 = vpop.permute.xlu0 %3633
      %3635 = vrot.lane.b32.xlu0 %v3523, 8
      %v3636 = vpop.permute.xlu0 %3635
      %3637 = vrot.lane.b32.xlu0 %v3526, 8
      %v3638 = vpop.permute.xlu0 %3637
      %3639 = vrot.lane.b32.xlu0 %v3531, 8
      %v3640 = vpop.permute.xlu0 %3639
      %3641 = vrot.lane.b32.xlu0 %v3534, 8
      %v3642 = vpop.permute.xlu0 %3641
      %3643 = vrot.lane.b32.xlu0 %v3539, 8
      %v3644 = vpop.permute.xlu0 %3643
      %3645 = vrot.lane.b32.xlu0 %v3542, 8
      %v3646 = vpop.permute.xlu0 %3645
      %3647 = vrot.lane.b32.xlu0 %v3547, 8
      %v3648 = vpop.permute.xlu0 %3647
      %3649 = vrot.lane.b32.xlu0 %v3550, 8
      %v3650 = vpop.permute.xlu0 %3649
      %3651 = vrot.lane.b32.xlu0 %v3555, 8
      %v3652 = vpop.permute.xlu0 %3651
      %3653 = vrot.lane.b32.xlu0 %v3558, 8
      %v3654 = vpop.permute.xlu0 %3653
      %3655 = vrot.lane.b32.xlu0 %v3563, 8
      %v3656 = vpop.permute.xlu0 %3655
      %3657 = vrot.lane.b32.xlu0 %v3566, 8
      %v3658 = vpop.permute.xlu0 %3657
      %3659 = vrot.lane.b32.xlu0 %v3571, 8
      %v3660 = vpop.permute.xlu0 %3659
      %3661 = vrot.lane.b32.xlu0 %v3574, 8
      %v3662 = vpop.permute.xlu0 %3661
      %3663 = vrot.lane.b32.xlu0 %v3579, 8
      %v3664 = vpop.permute.xlu0 %3663
      %3665 = vrot.lane.b32.xlu0 %v3582, 8
      %v3666 = vpop.permute.xlu0 %3665
      %3667 = vrot.lane.b32.xlu0 %v3587, 8
      %v3668 = vpop.permute.xlu0 %3667
      %3669 = vrot.lane.b32.xlu0 %v3590, 8
      %v3670 = vpop.permute.xlu0 %3669
      %3671 = vrot.lane.b32.xlu0 %v3595, 8
      %v3672 = vpop.permute.xlu0 %3671
      %3673 = vrot.lane.b32.xlu0 %v3598, 8
      %v3674 = vpop.permute.xlu0 %3673
      %3675 = vrot.lane.b32.xlu0 %v3603, 8
      %v3676 = vpop.permute.xlu0 %3675
      %3677 = vrot.lane.b32.xlu0 %v3606, 8
      %v3678 = vpop.permute.xlu0 %3677
      %3679 = vrot.lane.b32.xlu0 %v3611, 8
      %v3680 = vpop.permute.xlu0 %3679
      %3681 = vrot.lane.b32.xlu0 %v3614, 8
      %v3682 = vpop.permute.xlu0 %3681
      %3683 = vrot.lane.b32.xlu0 %v3619, 8
      %v3684 = vpop.permute.xlu0 %3683
      %3685 = vrot.lane.b32.xlu0 %v3622, 8
      %v3686 = vpop.permute.xlu0 %3685
      %3719 = vst.msk [vmem:[%s364] sm:$0xf] %vm1114, %v3624
      %v3720 = vld [vmem:[%s364 + $0x4] sm:$0xf]
      %v3721 = vsel %vm1117, %v3626, %v3720
      %3722 = vst [vmem:[%s364 + $0x4] sm:$0xf] %v3721
      %3723 = vst.msk [vmem:[%s364 + $0x8] sm:$0xf] %vm1114, %v3628
      %v3724 = vld [vmem:[%s364 + $0xc] sm:$0xf]
      %v3725 = vsel %vm1117, %v3630, %v3724
      %3726 = vst [vmem:[%s364 + $0xc] sm:$0xf] %v3725
      %3727 = vst.msk [vmem:[%s364 + $0x10] sm:$0xf] %vm1114, %v3632
      %v3728 = vld [vmem:[%s364 + $0x14] sm:$0xf]
      %v3729 = vsel %vm1117, %v3634, %v3728
      %3730 = vst [vmem:[%s364 + $0x14] sm:$0xf] %v3729
      %3731 = vst.msk [vmem:[%s364 + $0x18] sm:$0xf] %vm1114, %v3636
      %v3732 = vld [vmem:[%s364 + $0x1c] sm:$0xf]
      %v3733 = vsel %vm1117, %v3638, %v3732
      %3734 = vst [vmem:[%s364 + $0x1c] sm:$0xf] %v3733
      %3735 = vst.msk [vmem:[%s364 + $0x20] sm:$0xf] %vm1114, %v3640
      %v3736 = vld [vmem:[%s364 + $0x24] sm:$0xf]
      %v3737 = vsel %vm1117, %v3642, %v3736
      %3738 = vst [vmem:[%s364 + $0x24] sm:$0xf] %v3737
      %3739 = vst.msk [vmem:[%s364 + $0x28] sm:$0xf] %vm1114, %v3644
      %v3740 = vld [vmem:[%s364 + $0x2c] sm:$0xf]
      %v3741 = vsel %vm1117, %v3646, %v3740
      %3742 = vst [vmem:[%s364 + $0x2c] sm:$0xf] %v3741
      %3743 = vst.msk [vmem:[%s364 + $0x30] sm:$0xf] %vm1114, %v3648
      %v3744 = vld [vmem:[%s364 + $0x34] sm:$0xf]
      %v3745 = vsel %vm1117, %v3650, %v3744
      %3746 = vst [vmem:[%s364 + $0x34] sm:$0xf] %v3745
      %3747 = vst.msk [vmem:[%s364 + $0x38] sm:$0xf] %vm1114, %v3652
      %v3748 = vld [vmem:[%s364 + $0x3c] sm:$0xf]
      %v3749 = vsel %vm1117, %v3654, %v3748
      %3750 = vst [vmem:[%s364 + $0x3c] sm:$0xf] %v3749
      %3751 = vst.msk [vmem:[%s364 + $0x40] sm:$0xf] %vm1114, %v3656
      %v3752 = vld [vmem:[%s364 + $0x44] sm:$0xf]
      %v3753 = vsel %vm1117, %v3658, %v3752
      %3754 = vst [vmem:[%s364 + $0x44] sm:$0xf] %v3753
      %3755 = vst.msk [vmem:[%s364 + $0x48] sm:$0xf] %vm1114, %v3660
      %v3756 = vld [vmem:[%s364 + $0x4c] sm:$0xf]
      %v3757 = vsel %vm1117, %v3662, %v3756
      %3758 = vst [vmem:[%s364 + $0x4c] sm:$0xf] %v3757
      %3759 = vst.msk [vmem:[%s364 + $0x50] sm:$0xf] %vm1114, %v3664
      %v3760 = vld [vmem:[%s364 + $0x54] sm:$0xf]
      %v3761 = vsel %vm1117, %v3666, %v3760
      %3762 = vst [vmem:[%s364 + $0x54] sm:$0xf] %v3761
      %3763 = vst.msk [vmem:[%s364 + $0x58] sm:$0xf] %vm1114, %v3668
      %v3764 = vld [vmem:[%s364 + $0x5c] sm:$0xf]
      %v3765 = vsel %vm1117, %v3670, %v3764
      %3766 = vst [vmem:[%s364 + $0x5c] sm:$0xf] %v3765
      %3767 = vst.msk [vmem:[%s364 + $0x60] sm:$0xf] %vm1114, %v3672
      %v3768 = vld [vmem:[%s364 + $0x64] sm:$0xf]
      %v3769 = vsel %vm1117, %v3674, %v3768
      %3770 = vst [vmem:[%s364 + $0x64] sm:$0xf] %v3769
      %3771 = vst.msk [vmem:[%s364 + $0x68] sm:$0xf] %vm1114, %v3676
      %v3772 = vld [vmem:[%s364 + $0x6c] sm:$0xf]
      %v3773 = vsel %vm1117, %v3678, %v3772
      %3774 = vst [vmem:[%s364 + $0x6c] sm:$0xf] %v3773
      %3775 = vst.msk [vmem:[%s364 + $0x70] sm:$0xf] %vm1114, %v3680
      %v3776 = vld [vmem:[%s364 + $0x74] sm:$0xf]
      %v3777 = vsel %vm1117, %v3682, %v3776
      %3778 = vst [vmem:[%s364 + $0x74] sm:$0xf] %v3777
      %3779 = vst.msk [vmem:[%s364 + $0x78] sm:$0xf] %vm1114, %v3684
      %v3780 = vld [vmem:[%s364 + $0x7c] sm:$0xf]
      %v3781 = vsel %vm1117, %v3686, %v3780
      %3782 = vst [vmem:[%s364 + $0x7c] sm:$0xf] %v3781
      %3783 = vrot.lane.b32.xlu0 %v3072, 8
      %v3784 = vpop.permute.xlu0 %3783
      %3785 = vrot.lane.b32.xlu0 %v3085, 8
      %v3786 = vpop.permute.xlu0 %3785
      %3787 = vrot.lane.b32.xlu0 %v3098, 8
      %v3788 = vpop.permute.xlu0 %3787
      %3789 = vrot.lane.b32.xlu0 %v3111, 8
      %v3790 = vpop.permute.xlu0 %3789
      %3791 = vrot.lane.b32.xlu0 %v3124, 8
      %v3792 = vpop.permute.xlu0 %3791
      %3793 = vrot.lane.b32.xlu0 %v3137, 8
      %v3794 = vpop.permute.xlu0 %3793
      %3795 = vrot.lane.b32.xlu0 %v3150, 8
      %v3796 = vpop.permute.xlu0 %3795
      %3797 = vrot.lane.b32.xlu0 %v3163, 8
      %v3798 = vpop.permute.xlu0 %3797
      %3799 = vrot.lane.b32.xlu0 %v3176, 8
      %v3800 = vpop.permute.xlu0 %3799
      %3801 = vrot.lane.b32.xlu0 %v3189, 8
      %v3802 = vpop.permute.xlu0 %3801
      %3803 = vrot.lane.b32.xlu0 %v3202, 8
      %v3804 = vpop.permute.xlu0 %3803
      %3805 = vrot.lane.b32.xlu0 %v3215, 8
      %v3806 = vpop.permute.xlu0 %3805
      %3807 = vrot.lane.b32.xlu0 %v3228, 8
      %v3808 = vpop.permute.xlu0 %3807
      %3809 = vrot.lane.b32.xlu0 %v3241, 8
      %v3810 = vpop.permute.xlu0 %3809
      %3811 = vrot.lane.b32.xlu0 %v3254, 8
      %v3812 = vpop.permute.xlu0 %3811
      %3813 = vrot.lane.b32.xlu0 %v3267, 8
      %v3814 = vpop.permute.xlu0 %3813
      %v3831 = vld [vmem:[%s364 + $0x4] sm:$0x8]
      %v3832 = vsel %vm1231, %v3784, %v3831
      %3833 = vst [vmem:[%s364 + $0x4] sm:$0x8] %v3832
      %v3834 = vld [vmem:[%s364 + $0xc] sm:$0x8]
      %v3835 = vsel %vm1231, %v3786, %v3834
      %3836 = vst [vmem:[%s364 + $0xc] sm:$0x8] %v3835
      %v3837 = vld [vmem:[%s364 + $0x14] sm:$0x8]
      %v3838 = vsel %vm1231, %v3788, %v3837
      %3839 = vst [vmem:[%s364 + $0x14] sm:$0x8] %v3838
      %v3840 = vld [vmem:[%s364 + $0x1c] sm:$0x8]
      %v3841 = vsel %vm1231, %v3790, %v3840
      %3842 = vst [vmem:[%s364 + $0x1c] sm:$0x8] %v3841
      %v3843 = vld [vmem:[%s364 + $0x24] sm:$0x8]
      %v3844 = vsel %vm1231, %v3792, %v3843
      %3845 = vst [vmem:[%s364 + $0x24] sm:$0x8] %v3844
      %v3846 = vld [vmem:[%s364 + $0x2c] sm:$0x8]
      %v3847 = vsel %vm1231, %v3794, %v3846
      %3848 = vst [vmem:[%s364 + $0x2c] sm:$0x8] %v3847
      %v3849 = vld [vmem:[%s364 + $0x34] sm:$0x8]
      %v3850 = vsel %vm1231, %v3796, %v3849
      %3851 = vst [vmem:[%s364 + $0x34] sm:$0x8] %v3850
      %v3852 = vld [vmem:[%s364 + $0x3c] sm:$0x8]
      %v3853 = vsel %vm1231, %v3798, %v3852
      %3854 = vst [vmem:[%s364 + $0x3c] sm:$0x8] %v3853
      %v3855 = vld [vmem:[%s364 + $0x44] sm:$0x8]
      %v3856 = vsel %vm1231, %v3800, %v3855
      %3857 = vst [vmem:[%s364 + $0x44] sm:$0x8] %v3856
      %v3858 = vld [vmem:[%s364 + $0x4c] sm:$0x8]
      %v3859 = vsel %vm1231, %v3802, %v3858
      %3860 = vst [vmem:[%s364 + $0x4c] sm:$0x8] %v3859
      %v3861 = vld [vmem:[%s364 + $0x54] sm:$0x8]
      %v3862 = vsel %vm1231, %v3804, %v3861
      %3863 = vst [vmem:[%s364 + $0x54] sm:$0x8] %v3862
      %v3864 = vld [vmem:[%s364 + $0x5c] sm:$0x8]
      %v3865 = vsel %vm1231, %v3806, %v3864
      %3866 = vst [vmem:[%s364 + $0x5c] sm:$0x8] %v3865
      %v3867 = vld [vmem:[%s364 + $0x64] sm:$0x8]
      %v3868 = vsel %vm1231, %v3808, %v3867
      %3869 = vst [vmem:[%s364 + $0x64] sm:$0x8] %v3868
      %v3870 = vld [vmem:[%s364 + $0x6c] sm:$0x8]
      %v3871 = vsel %vm1231, %v3810, %v3870
      %3872 = vst [vmem:[%s364 + $0x6c] sm:$0x8] %v3871
      %v3873 = vld [vmem:[%s364 + $0x74] sm:$0x8]
      %v3874 = vsel %vm1231, %v3812, %v3873
      %3875 = vst [vmem:[%s364 + $0x74] sm:$0x8] %v3874
      %v3876 = vld [vmem:[%s364 + $0x7c] sm:$0x8]
      %v3877 = vsel %vm1231, %v3814, %v3876
      %3878 = vst [vmem:[%s364 + $0x7c] sm:$0x8] %v3877
      %v3879 = vld [vmem:[%s1280] sm:$0xf]
      %v3880 = vld [vmem:[%s1280 + $0x4] sm:$0xf]
      %3881 = vst.msk [vmem:[#allocation2] sm:$0xf] %vm1283, %v3879
      %3882 = vst.msk [vmem:[#allocation2 + $0x4] sm:$0xf] %vm1283, %v3880
      %v3883 = vld [vmem:[%s1286] sm:$0xf]
      %v3884 = vld [vmem:[%s1286 + $0x4] sm:$0xf]
      %3885 = vst.msk [vmem:[%s1289] sm:$0xf] %vm1283, %v3883
      %3886 = vst.msk [vmem:[%s1289 + $0x4] sm:$0xf] %vm1283, %v3884
      %v3887 = vld [vmem:[#allocation2] sm:$0xf]
      %v3888 = vld [vmem:[#allocation2 + $0x4] sm:$0xf]
      %v3889 = vld [vmem:[#allocation2 + $0x8] sm:$0xf]
      %v3890 = vld [vmem:[#allocation2 + $0xc] sm:$0xf]
      %v3891 = vld [vmem:[#allocation2 + $0x10] sm:$0xf]
      %v3892 = vld [vmem:[#allocation2 + $0x14] sm:$0xf]
      %v3893 = vld [vmem:[#allocation2 + $0x18] sm:$0xf]
      %v3894 = vld [vmem:[#allocation2 + $0x1c] sm:$0xf]
      %v3895 = vld [vmem:[#allocation2 + $0x20] sm:$0xf]
      %v3896 = vld [vmem:[#allocation2 + $0x24] sm:$0xf]
      %v3897 = vld [vmem:[#allocation2 + $0x28] sm:$0xf]
      %v3898 = vld [vmem:[#allocation2 + $0x2c] sm:$0xf]
      %v3899 = vld [vmem:[#allocation2 + $0x30] sm:$0xf]
      %v3900 = vld [vmem:[#allocation2 + $0x34] sm:$0xf]
      %v3901 = vld [vmem:[#allocation2 + $0x38] sm:$0xf]
      %v3902 = vld [vmem:[#allocation2 + $0x3c] sm:$0xf]
      %v3903 = vld [vmem:[#allocation2 + $0x40] sm:$0xf]
      %v3904 = vld [vmem:[#allocation2 + $0x44] sm:$0xf]
      %v3905 = vld [vmem:[#allocation2 + $0x48] sm:$0xf]
      %v3906 = vld [vmem:[#allocation2 + $0x4c] sm:$0xf]
      %v3907 = vld [vmem:[#allocation2 + $0x50] sm:$0xf]
      %v3908 = vld [vmem:[#allocation2 + $0x54] sm:$0xf]
      %v3909 = vld [vmem:[#allocation2 + $0x58] sm:$0xf]
      %v3910 = vld [vmem:[#allocation2 + $0x5c] sm:$0xf]
      %v3911 = vld [vmem:[#allocation2 + $0x60] sm:$0xf]
      %v3912 = vld [vmem:[#allocation2 + $0x64] sm:$0xf]
      %v3913 = vld [vmem:[#allocation2 + $0x68] sm:$0xf]
      %v3914 = vld [vmem:[#allocation2 + $0x6c] sm:$0xf]
      %v3915 = vld [vmem:[#allocation2 + $0x70] sm:$0xf]
      %v3916 = vld [vmem:[#allocation2 + $0x74] sm:$0xf]
      %v3917 = vld [vmem:[#allocation2 + $0x78] sm:$0xf]
      %v3918 = vld [vmem:[#allocation2 + $0x7c] sm:$0xf]
      %v3919 = vld [vmem:[%s2] sm:$0xf]
      %v3920 = vld [vmem:[%s2 + $0x4] sm:$0x3]
      %v3953 = vunpack.c.l.b16 %v3887
      %v3954 = vunpack.c.l.b16 %v3888
      %v3955 = vunpack.c.l.b16 %v3889
      %v3956 = vunpack.c.l.b16 %v3890
      %v3957 = vunpack.c.l.b16 %v3891
      %v3958 = vunpack.c.l.b16 %v3892
      %v3959 = vunpack.c.l.b16 %v3893
      %v3960 = vunpack.c.l.b16 %v3894
      %v3961 = vunpack.c.l.b16 %v3895
      %v3962 = vunpack.c.l.b16 %v3896
      %v3963 = vunpack.c.l.b16 %v3897
      %v3964 = vunpack.c.l.b16 %v3898
      %v3965 = vunpack.c.l.b16 %v3899
      %v3966 = vunpack.c.l.b16 %v3900
      %v3967 = vunpack.c.l.b16 %v3901
      %v3968 = vunpack.c.l.b16 %v3902
      %v3969 = vunpack.c.l.b16 %v3903
      %v3970 = vunpack.c.l.b16 %v3904
      %v3971 = vunpack.c.l.b16 %v3905
      %v3972 = vunpack.c.l.b16 %v3906
      %v3973 = vunpack.c.l.b16 %v3907
      %v3974 = vunpack.c.l.b16 %v3908
      %v3975 = vunpack.c.l.b16 %v3909
      %v3976 = vunpack.c.l.b16 %v3910
      %v3977 = vunpack.c.l.b16 %v3911
      %v3978 = vunpack.c.l.b16 %v3912
      %v3979 = vunpack.c.l.b16 %v3913
      %v3980 = vunpack.c.l.b16 %v3914
      %v3981 = vunpack.c.l.b16 %v3915
      %v3982 = vunpack.c.l.b16 %v3916
      %v3983 = vunpack.c.l.b16 %v3917
      %v3984 = vunpack.c.l.b16 %v3918
      %v3985 = vpack.c.b16 %v3954, %v3953
      %v3986 = vpack.c.b16 %v3956, %v3955
      %v3987 = vpack.c.b16 %v3958, %v3957
      %v3988 = vpack.c.b16 %v3960, %v3959
      %v3989 = vpack.c.b16 %v3962, %v3961
      %v3990 = vpack.c.b16 %v3964, %v3963
      %v3991 = vpack.c.b16 %v3966, %v3965
      %v3992 = vpack.c.b16 %v3968, %v3967
      %v3993 = vpack.c.b16 %v3970, %v3969
      %v3994 = vpack.c.b16 %v3972, %v3971
      %v3995 = vpack.c.b16 %v3974, %v3973
      %v3996 = vpack.c.b16 %v3976, %v3975
      %v3997 = vpack.c.b16 %v3978, %v3977
      %v3998 = vpack.c.b16 %v3980, %v3979
      %v3999 = vpack.c.b16 %v3982, %v3981
      %v4000 = vpack.c.b16 %v3984, %v3983
      %v4003 = vunpack.c.l.b16 %v3919
      %v4004 = vunpack.c.l.b16 %v3920
      %v4005 = vpack.c.b16 %v4004, %v4003
      %v4007 = vsel %vm1411, %v3985, 0
      %v4010 = vsel %vm1411, %v3986, 0
      %v4013 = vsel %vm1411, %v3987, 0
      %v4016 = vsel %vm1411, %v3988, 0
      %v4019 = vsel %vm1411, %v3989, 0
      %v4022 = vsel %vm1411, %v3990, 0
      %v4025 = vsel %vm1411, %v3991, 0
      %v4028 = vsel %vm1411, %v3992, 0
      %v4031 = vsel %vm1411, %v3993, 0
      %v4034 = vsel %vm1411, %v3994, 0
      %v4037 = vsel %vm1411, %v3995, 0
      %v4040 = vsel %vm1411, %v3996, 0
      %v4043 = vsel %vm1411, %v3997, 0
      %v4046 = vsel %vm1411, %v3998, 0
      %v4049 = vsel %vm1411, %v3999, 0
      %v4052 = vsel %vm1411, %v4000, 0
      %v4055 = vsel %vm1460, %v4005, 0
      %4057 = vmatprep.subr.bf16.mxu0 0
      %4058 = vmatpush1.bf16.msra.mxu0 0
      %4059 = vmatprep.subr.bf16.mxu0 0
      %4060 = vmatpush1.bf16.msra.mxu0 0
      %4061 = vmatprep.subr.bf16.mxu0 0
      %4062 = vmatpush1.bf16.msra.mxu0 0
      %4063 = vmatprep.subr.bf16.mxu0 0
      %4064 = vmatpush1.bf16.msra.mxu0 0
      %4065 = vmatprep.subr.bf16.mxu0 0
      %4066 = vmatpush1.bf16.msra.mxu0 0
      %4067 = vmatprep.subr.bf16.mxu0 0
      %4068 = vmatpush1.bf16.msra.mxu0 0
      %4069 = vmatprep.subr.bf16.mxu0 0
      %4070 = vmatpush1.bf16.msra.mxu0 0
      %4071 = vmatprep.subr.bf16.mxu0 0
      %4072 = vmatpush1.bf16.msra.mxu0 %v4055
      %4073 = vmatprep.subr.bf16.mxu0 0
      %4074 = vmatpush2.bf16.msra.mxu0 0
      %4075 = vmatprep.subr.bf16.mxu0 0
      %4076 = vmatpush2.bf16.msra.mxu0 0
      %4077 = vmatprep.subr.bf16.mxu0 0
      %4078 = vmatpush2.bf16.msra.mxu0 0
      %4079 = vmatprep.subr.bf16.mxu0 0
      %4080 = vmatpush2.bf16.msra.mxu0 0
      %4081 = vmatprep.subr.bf16.mxu0 0
      %4082 = vmatpush2.bf16.msra.mxu0 0
      %4083 = vmatprep.subr.bf16.mxu0 0
      %4084 = vmatpush2.bf16.msra.mxu0 0
      %4085 = vmatprep.subr.bf16.mxu0 0
      %4086 = vmatpush2.bf16.msra.mxu0 0
      %4087 = vmatprep.subr.bf16.mxu0 0
      %4088 = vmatpush2.bf16.msra.mxu0 0
      %4089 = vmatprep.mubr.bf16.mxu0 0
      %4090 = vmatmul.mubr.bf16.gmra.mxu0 %v4007
      %v4091 = vpop.f32.mrf.mxu0
      %v4092 = vadd.f32 0.0, %v4091
      %v4093 = vpop.f32.mrf.mxu0
      %v4094 = vpop.f32.mrf.mxu0
      %v4095 = vadd.f32 0.0, %v4094
      %v4096 = vpop.f32.mrf.mxu0
      %4097 = vmatprep.mubr.bf16.mxu0 0
      %4098 = vmatmul.mubr.bf16.gmra.mxu0 %v4010
      %v4099 = vpop.f32.mrf.mxu0
      %v4100 = vadd.f32 0.0, %v4099
      %v4101 = vpop.f32.mrf.mxu0
      %v4102 = vpop.f32.mrf.mxu0
      %v4103 = vadd.f32 0.0, %v4102
      %v4104 = vpop.f32.mrf.mxu0
      %4105 = vmatprep.mubr.bf16.mxu0 0
      %4106 = vmatmul.mubr.bf16.gmra.mxu0 %v4013
      %v4107 = vpop.f32.mrf.mxu0
      %v4108 = vadd.f32 0.0, %v4107
      %v4109 = vpop.f32.mrf.mxu0
      %v4110 = vpop.f32.mrf.mxu0
      %v4111 = vadd.f32 0.0, %v4110
      %v4112 = vpop.f32.mrf.mxu0
      %4113 = vmatprep.mubr.bf16.mxu0 0
      %4114 = vmatmul.mubr.bf16.gmra.mxu0 %v4016
      %v4115 = vpop.f32.mrf.mxu0
      %v4116 = vadd.f32 0.0, %v4115
      %v4117 = vpop.f32.mrf.mxu0
      %v4118 = vpop.f32.mrf.mxu0
      %v4119 = vadd.f32 0.0, %v4118
      %v4120 = vpop.f32.mrf.mxu0
      %4121 = vmatprep.mubr.bf16.mxu0 0
      %4122 = vmatmul.mubr.bf16.gmra.mxu0 %v4019
      %v4123 = vpop.f32.mrf.mxu0
      %v4124 = vadd.f32 0.0, %v4123
      %v4125 = vpop.f32.mrf.mxu0
      %v4126 = vpop.f32.mrf.mxu0
      %v4127 = vadd.f32 0.0, %v4126
      %v4128 = vpop.f32.mrf.mxu0
      %4129 = vmatprep.mubr.bf16.mxu0 0
      %4130 = vmatmul.mubr.bf16.gmra.mxu0 %v4022
      %v4131 = vpop.f32.mrf.mxu0
      %v4132 = vadd.f32 0.0, %v4131
      %v4133 = vpop.f32.mrf.mxu0
      %v4134 = vpop.f32.mrf.mxu0
      %v4135 = vadd.f32 0.0, %v4134
      %v4136 = vpop.f32.mrf.mxu0
      %4137 = vmatprep.mubr.bf16.mxu0 0
      %4138 = vmatmul.mubr.bf16.gmra.mxu0 %v4025
      %v4139 = vpop.f32.mrf.mxu0
      %v4140 = vadd.f32 0.0, %v4139
      %v4141 = vpop.f32.mrf.mxu0
      %v4142 = vpop.f32.mrf.mxu0
      %v4143 = vadd.f32 0.0, %v4142
      %v4144 = vpop.f32.mrf.mxu0
      %4145 = vmatprep.mubr.bf16.mxu0 0
      %4146 = vmatmul.mubr.bf16.gmra.mxu0 %v4028
      %v4147 = vpop.f32.mrf.mxu0
      %v4148 = vadd.f32 0.0, %v4147
      %v4149 = vpop.f32.mrf.mxu0
      %v4150 = vpop.f32.mrf.mxu0
      %v4151 = vadd.f32 0.0, %v4150
      %v4152 = vpop.f32.mrf.mxu0
      %4153 = vmatprep.mubr.bf16.mxu0 0
      %4154 = vmatmul.mubr.bf16.gmra.mxu0 %v4031
      %v4155 = vpop.f32.mrf.mxu0
      %v4156 = vadd.f32 0.0, %v4155
      %v4157 = vpop.f32.mrf.mxu0
      %v4158 = vpop.f32.mrf.mxu0
      %v4159 = vadd.f32 0.0, %v4158
      %v4160 = vpop.f32.mrf.mxu0
      %4161 = vmatprep.mubr.bf16.mxu0 0
      %4162 = vmatmul.mubr.bf16.gmra.mxu0 %v4034
      %v4163 = vpop.f32.mrf.mxu0
      %v4164 = vadd.f32 0.0, %v4163
      %v4165 = vpop.f32.mrf.mxu0
      %v4166 = vpop.f32.mrf.mxu0
      %v4167 = vadd.f32 0.0, %v4166
      %v4168 = vpop.f32.mrf.mxu0
      %4169 = vmatprep.mubr.bf16.mxu0 0
      %4170 = vmatmul.mubr.bf16.gmra.mxu0 %v4037
      %v4171 = vpop.f32.mrf.mxu0
      %v4172 = vadd.f32 0.0, %v4171
      %v4173 = vpop.f32.mrf.mxu0
      %v4174 = vpop.f32.mrf.mxu0
      %v4175 = vadd.f32 0.0, %v4174
      %v4176 = vpop.f32.mrf.mxu0
      %4177 = vmatprep.mubr.bf16.mxu0 0
      %4178 = vmatmul.mubr.bf16.gmra.mxu0 %v4040
      %v4179 = vpop.f32.mrf.mxu0
      %v4180 = vadd.f32 0.0, %v4179
      %v4181 = vpop.f32.mrf.mxu0
      %v4182 = vpop.f32.mrf.mxu0
      %v4183 = vadd.f32 0.0, %v4182
      %v4184 = vpop.f32.mrf.mxu0
      %4185 = vmatprep.mubr.bf16.mxu0 0
      %4186 = vmatmul.mubr.bf16.gmra.mxu0 %v4043
      %v4187 = vpop.f32.mrf.mxu0
      %v4188 = vadd.f32 0.0, %v4187
      %v4189 = vpop.f32.mrf.mxu0
      %v4190 = vpop.f32.mrf.mxu0
      %v4191 = vadd.f32 0.0, %v4190
      %v4192 = vpop.f32.mrf.mxu0
      %4193 = vmatprep.mubr.bf16.mxu0 0
      %4194 = vmatmul.mubr.bf16.gmra.mxu0 %v4046
      %v4195 = vpop.f32.mrf.mxu0
      %v4196 = vadd.f32 0.0, %v4195
      %v4197 = vpop.f32.mrf.mxu0
      %v4198 = vpop.f32.mrf.mxu0
      %v4199 = vadd.f32 0.0, %v4198
      %v4200 = vpop.f32.mrf.mxu0
      %4201 = vmatprep.mubr.bf16.mxu0 0
      %4202 = vmatmul.mubr.bf16.gmra.mxu0 %v4049
      %v4203 = vpop.f32.mrf.mxu0
      %v4204 = vadd.f32 0.0, %v4203
      %v4205 = vpop.f32.mrf.mxu0
      %v4206 = vpop.f32.mrf.mxu0
      %v4207 = vadd.f32 0.0, %v4206
      %v4208 = vpop.f32.mrf.mxu0
      %4209 = vmatprep.mubr.bf16.mxu0 0
      %4210 = vmatmul.mubr.bf16.gmra.mxu0 %v4052
      %v4211 = vpop.f32.mrf.mxu0
      %v4212 = vadd.f32 0.0, %v4211
      %v4213 = vpop.f32.mrf.mxu0
      %v4214 = vpop.f32.mrf.mxu0
      %v4215 = vadd.f32 0.0, %v4214
      %v4216 = vpop.f32.mrf.mxu0
      %4217 = vdwg.mxu0
      %4218 = vst.msk [vmem:[#allocation3] sm:$0xff] %vm1625, %v4092
      %4219 = vst.msk [vmem:[#allocation3 + $0x8] sm:$0xff] %vm1625, %v4095
      %4220 = vst.msk [vmem:[#allocation3 + $0x10] sm:$0xff] %vm1625, %v4100
      %4221 = vst.msk [vmem:[#allocation3 + $0x18] sm:$0xff] %vm1625, %v4103
      %4222 = vst.msk [vmem:[#allocation3 + $0x20] sm:$0xff] %vm1625, %v4108
      %4223 = vst.msk [vmem:[#allocation3 + $0x28] sm:$0xff] %vm1625, %v4111
      %4224 = vst.msk [vmem:[#allocation3 + $0x30] sm:$0xff] %vm1625, %v4116
      %4225 = vst.msk [vmem:[#allocation3 + $0x38] sm:$0xff] %vm1625, %v4119
      %4226 = vst.msk [vmem:[#allocation3 + $0x40] sm:$0xff] %vm1625, %v4124
      %4227 = vst.msk [vmem:[#allocation3 + $0x48] sm:$0xff] %vm1625, %v4127
      %4228 = vst.msk [vmem:[#allocation3 + $0x50] sm:$0xff] %vm1625, %v4132
      %4229 = vst.msk [vmem:[#allocation3 + $0x58] sm:$0xff] %vm1625, %v4135
      %4230 = vst.msk [vmem:[#allocation3 + $0x60] sm:$0xff] %vm1625, %v4140
      %4231 = vst.msk [vmem:[#allocation3 + $0x68] sm:$0xff] %vm1625, %v4143
      %4232 = vst.msk [vmem:[#allocation3 + $0x70] sm:$0xff] %vm1625, %v4148
      %4233 = vst.msk [vmem:[#allocation3 + $0x78] sm:$0xff] %vm1625, %v4151
      %4234 = vst.msk [vmem:[#allocation3 + $0x80] sm:$0xff] %vm1625, %v4156
      %4235 = vst.msk [vmem:[#allocation3 + $0x88] sm:$0xff] %vm1625, %v4159
      %4236 = vst.msk [vmem:[#allocation3 + $0x90] sm:$0xff] %vm1625, %v4164
      %4237 = vst.msk [vmem:[#allocation3 + $0x98] sm:$0xff] %vm1625, %v4167
      %4238 = vst.msk [vmem:[#allocation3 + $0xa0] sm:$0xff] %vm1625, %v4172
      %4239 = vst.msk [vmem:[#allocation3 + $0xa8] sm:$0xff] %vm1625, %v4175
      %4240 = vst.msk [vmem:[#allocation3 + $0xb0] sm:$0xff] %vm1625, %v4180
      %4241 = vst.msk [vmem:[#allocation3 + $0xb8] sm:$0xff] %vm1625, %v4183
      %4242 = vst.msk [vmem:[#allocation3 + $0xc0] sm:$0xff] %vm1625, %v4188
      %4243 = vst.msk [vmem:[#allocation3 + $0xc8] sm:$0xff] %vm1625, %v4191
      %4244 = vst.msk [vmem:[#allocation3 + $0xd0] sm:$0xff] %vm1625, %v4196
      %4245 = vst.msk [vmem:[#allocation3 + $0xd8] sm:$0xff] %vm1625, %v4199
      %4246 = vst.msk [vmem:[#allocation3 + $0xe0] sm:$0xff] %vm1625, %v4204
      %4247 = vst.msk [vmem:[#allocation3 + $0xe8] sm:$0xff] %vm1625, %v4207
      %4248 = vst.msk [vmem:[#allocation3 + $0xf0] sm:$0xff] %vm1625, %v4212
      %4249 = vst.msk [vmem:[#allocation3 + $0xf8] sm:$0xff] %vm1625, %v4215
      %v4250 = vld [vmem:[%s364] sm:$0xf]
      %v4251 = vld [vmem:[%s364 + $0x4] sm:$0xf]
      %v4252 = vld [vmem:[%s364 + $0x8] sm:$0xf]
      %v4253 = vld [vmem:[%s364 + $0xc] sm:$0xf]
      %v4254 = vld [vmem:[%s364 + $0x10] sm:$0xf]
      %v4255 = vld [vmem:[%s364 + $0x14] sm:$0xf]
      %v4256 = vld [vmem:[%s364 + $0x18] sm:$0xf]
      %v4257 = vld [vmem:[%s364 + $0x1c] sm:$0xf]
      %v4258 = vld [vmem:[%s364 + $0x20] sm:$0xf]
      %v4259 = vld [vmem:[%s364 + $0x24] sm:$0xf]
      %v4260 = vld [vmem:[%s364 + $0x28] sm:$0xf]
      %v4261 = vld [vmem:[%s364 + $0x2c] sm:$0xf]
      %v4262 = vld [vmem:[%s364 + $0x30] sm:$0xf]
      %v4263 = vld [vmem:[%s364 + $0x34] sm:$0xf]
      %v4264 = vld [vmem:[%s364 + $0x38] sm:$0xf]
      %v4265 = vld [vmem:[%s364 + $0x3c] sm:$0xf]
      %v4266 = vld [vmem:[%s364 + $0x40] sm:$0xf]
      %v4267 = vld [vmem:[%s364 + $0x44] sm:$0xf]
      %v4268 = vld [vmem:[%s364 + $0x48] sm:$0xf]
      %v4269 = vld [vmem:[%s364 + $0x4c] sm:$0xf]
      %v4270 = vld [vmem:[%s364 + $0x50] sm:$0xf]
      %v4271 = vld [vmem:[%s364 + $0x54] sm:$0xf]
      %v4272 = vld [vmem:[%s364 + $0x58] sm:$0xf]
      %v4273 = vld [vmem:[%s364 + $0x5c] sm:$0xf]
      %v4274 = vld [vmem:[%s364 + $0x60] sm:$0xf]
      %v4275 = vld [vmem:[%s364 + $0x64] sm:$0xf]
      %v4276 = vld [vmem:[%s364 + $0x68] sm:$0xf]
      %v4277 = vld [vmem:[%s364 + $0x6c] sm:$0xf]
      %v4278 = vld [vmem:[%s364 + $0x70] sm:$0xf]
      %v4279 = vld [vmem:[%s364 + $0x74] sm:$0xf]
      %v4280 = vld [vmem:[%s364 + $0x78] sm:$0xf]
      %v4281 = vld [vmem:[%s364 + $0x7c] sm:$0xf]
      %s4282 = scalar_lea.vmem %s2, 8
      %v4283 = vld [vmem:[%s4282] sm:$0xf]
      %v4284 = vld [vmem:[%s4282 + $0x4] sm:$0x3]
      %v4317 = vunpack.c.l.b16 %v4250
      %v4318 = vunpack.c.l.b16 %v4251
      %v4319 = vunpack.c.l.b16 %v4252
      %v4320 = vunpack.c.l.b16 %v4253
      %v4321 = vunpack.c.l.b16 %v4254
      %v4322 = vunpack.c.l.b16 %v4255
      %v4323 = vunpack.c.l.b16 %v4256
      %v4324 = vunpack.c.l.b16 %v4257
      %v4325 = vunpack.c.l.b16 %v4258
      %v4326 = vunpack.c.l.b16 %v4259
      %v4327 = vunpack.c.l.b16 %v4260
      %v4328 = vunpack.c.l.b16 %v4261
      %v4329 = vunpack.c.l.b16 %v4262
      %v4330 = vunpack.c.l.b16 %v4263
      %v4331 = vunpack.c.l.b16 %v4264
      %v4332 = vunpack.c.l.b16 %v4265
      %v4333 = vunpack.c.l.b16 %v4266
      %v4334 = vunpack.c.l.b16 %v4267
      %v4335 = vunpack.c.l.b16 %v4268
      %v4336 = vunpack.c.l.b16 %v4269
      %v4337 = vunpack.c.l.b16 %v4270
      %v4338 = vunpack.c.l.b16 %v4271
      %v4339 = vunpack.c.l.b16 %v4272
      %v4340 = vunpack.c.l.b16 %v4273
      %v4341 = vunpack.c.l.b16 %v4274
      %v4342 = vunpack.c.l.b16 %v4275
      %v4343 = vunpack.c.l.b16 %v4276
      %v4344 = vunpack.c.l.b16 %v4277
      %v4345 = vunpack.c.l.b16 %v4278
      %v4346 = vunpack.c.l.b16 %v4279
      %v4347 = vunpack.c.l.b16 %v4280
      %v4348 = vunpack.c.l.b16 %v4281
      %v4349 = vpack.c.b16 %v4318, %v4317
      %v4350 = vpack.c.b16 %v4320, %v4319
      %v4351 = vpack.c.b16 %v4322, %v4321
      %v4352 = vpack.c.b16 %v4324, %v4323
      %v4353 = vpack.c.b16 %v4326, %v4325
      %v4354 = vpack.c.b16 %v4328, %v4327
      %v4355 = vpack.c.b16 %v4330, %v4329
      %v4356 = vpack.c.b16 %v4332, %v4331
      %v4357 = vpack.c.b16 %v4334, %v4333
      %v4358 = vpack.c.b16 %v4336, %v4335
      %v4359 = vpack.c.b16 %v4338, %v4337
      %v4360 = vpack.c.b16 %v4340, %v4339
      %v4361 = vpack.c.b16 %v4342, %v4341
      %v4362 = vpack.c.b16 %v4344, %v4343
      %v4363 = vpack.c.b16 %v4346, %v4345
      %v4364 = vpack.c.b16 %v4348, %v4347
      %v4367 = vunpack.c.l.b16 %v4283
      %v4368 = vunpack.c.l.b16 %v4284
      %v4369 = vpack.c.b16 %v4368, %v4367
      %v4371 = vsel %vm1411, %v4349, 0
      %v4374 = vsel %vm1411, %v4350, 0
      %v4377 = vsel %vm1411, %v4351, 0
      %v4380 = vsel %vm1411, %v4352, 0
      %v4383 = vsel %vm1411, %v4353, 0
      %v4386 = vsel %vm1411, %v4354, 0
      %v4389 = vsel %vm1411, %v4355, 0
      %v4392 = vsel %vm1411, %v4356, 0
      %v4395 = vsel %vm1411, %v4357, 0
      %v4398 = vsel %vm1411, %v4358, 0
      %v4401 = vsel %vm1411, %v4359, 0
      %v4404 = vsel %vm1411, %v4360, 0
      %v4407 = vsel %vm1411, %v4361, 0
      %v4410 = vsel %vm1411, %v4362, 0
      %v4413 = vsel %vm1411, %v4363, 0
      %v4416 = vsel %vm1411, %v4364, 0
      %v4419 = vsel %vm1460, %v4369, 0
      %4421 = vmatprep.subr.bf16.mxu0 0
      %4422 = vmatpush1.bf16.msra.mxu0 0
      %4423 = vmatprep.subr.bf16.mxu0 0
      %4424 = vmatpush1.bf16.msra.mxu0 0
      %4425 = vmatprep.subr.bf16.mxu0 0
      %4426 = vmatpush1.bf16.msra.mxu0 0
      %4427 = vmatprep.subr.bf16.mxu0 0
      %4428 = vmatpush1.bf16.msra.mxu0 0
      %4429 = vmatprep.subr.bf16.mxu0 0
      %4430 = vmatpush1.bf16.msra.mxu0 0
      %4431 = vmatprep.subr.bf16.mxu0 0
      %4432 = vmatpush1.bf16.msra.mxu0 0
      %4433 = vmatprep.subr.bf16.mxu0 0
      %4434 = vmatpush1.bf16.msra.mxu0 0
      %4435 = vmatprep.subr.bf16.mxu0 0
      %4436 = vmatpush1.bf16.msra.mxu0 %v4419
      %4437 = vmatprep.subr.bf16.mxu0 0
      %4438 = vmatpush2.bf16.msra.mxu0 0
      %4439 = vmatprep.subr.bf16.mxu0 0
      %4440 = vmatpush2.bf16.msra.mxu0 0
      %4441 = vmatprep.subr.bf16.mxu0 0
      %4442 = vmatpush2.bf16.msra.mxu0 0
      %4443 = vmatprep.subr.bf16.mxu0 0
      %4444 = vmatpush2.bf16.msra.mxu0 0
      %4445 = vmatprep.subr.bf16.mxu0 0
      %4446 = vmatpush2.bf16.msra.mxu0 0
      %4447 = vmatprep.subr.bf16.mxu0 0
      %4448 = vmatpush2.bf16.msra.mxu0 0
      %4449 = vmatprep.subr.bf16.mxu0 0
      %4450 = vmatpush2.bf16.msra.mxu0 0
      %4451 = vmatprep.subr.bf16.mxu0 0
      %4452 = vmatpush2.bf16.msra.mxu0 0
      %4453 = vmatprep.mubr.bf16.mxu0 0
      %4454 = vmatmul.mubr.bf16.gmra.mxu0 %v4371
      %v4455 = vpop.f32.mrf.mxu0
      %v4456 = vadd.f32 0.0, %v4455
      %v4457 = vpop.f32.mrf.mxu0
      %v4458 = vpop.f32.mrf.mxu0
      %v4459 = vadd.f32 0.0, %v4458
      %v4460 = vpop.f32.mrf.mxu0
      %4461 = vmatprep.mubr.bf16.mxu0 0
      %4462 = vmatmul.mubr.bf16.gmra.mxu0 %v4374
      %v4463 = vpop.f32.mrf.mxu0
      %v4464 = vadd.f32 0.0, %v4463
      %v4465 = vpop.f32.mrf.mxu0
      %v4466 = vpop.f32.mrf.mxu0
      %v4467 = vadd.f32 0.0, %v4466
      %v4468 = vpop.f32.mrf.mxu0
      %4469 = vmatprep.mubr.bf16.mxu0 0
      %4470 = vmatmul.mubr.bf16.gmra.mxu0 %v4377
      %v4471 = vpop.f32.mrf.mxu0
      %v4472 = vadd.f32 0.0, %v4471
      %v4473 = vpop.f32.mrf.mxu0
      %v4474 = vpop.f32.mrf.mxu0
      %v4475 = vadd.f32 0.0, %v4474
      %v4476 = vpop.f32.mrf.mxu0
      %4477 = vmatprep.mubr.bf16.mxu0 0
      %4478 = vmatmul.mubr.bf16.gmra.mxu0 %v4380
      %v4479 = vpop.f32.mrf.mxu0
      %v4480 = vadd.f32 0.0, %v4479
      %v4481 = vpop.f32.mrf.mxu0
      %v4482 = vpop.f32.mrf.mxu0
      %v4483 = vadd.f32 0.0, %v4482
      %v4484 = vpop.f32.mrf.mxu0
      %4485 = vmatprep.mubr.bf16.mxu0 0
      %4486 = vmatmul.mubr.bf16.gmra.mxu0 %v4383
      %v4487 = vpop.f32.mrf.mxu0
      %v4488 = vadd.f32 0.0, %v4487
      %v4489 = vpop.f32.mrf.mxu0
      %v4490 = vpop.f32.mrf.mxu0
      %v4491 = vadd.f32 0.0, %v4490
      %v4492 = vpop.f32.mrf.mxu0
      %4493 = vmatprep.mubr.bf16.mxu0 0
      %4494 = vmatmul.mubr.bf16.gmra.mxu0 %v4386
      %v4495 = vpop.f32.mrf.mxu0
      %v4496 = vadd.f32 0.0, %v4495
      %v4497 = vpop.f32.mrf.mxu0
      %v4498 = vpop.f32.mrf.mxu0
      %v4499 = vadd.f32 0.0, %v4498
      %v4500 = vpop.f32.mrf.mxu0
      %4501 = vmatprep.mubr.bf16.mxu0 0
      %4502 = vmatmul.mubr.bf16.gmra.mxu0 %v4389
      %v4503 = vpop.f32.mrf.mxu0
      %v4504 = vadd.f32 0.0, %v4503
      %v4505 = vpop.f32.mrf.mxu0
      %v4506 = vpop.f32.mrf.mxu0
      %v4507 = vadd.f32 0.0, %v4506
      %v4508 = vpop.f32.mrf.mxu0
      %4509 = vmatprep.mubr.bf16.mxu0 0
      %4510 = vmatmul.mubr.bf16.gmra.mxu0 %v4392
      %v4511 = vpop.f32.mrf.mxu0
      %v4512 = vadd.f32 0.0, %v4511
      %v4513 = vpop.f32.mrf.mxu0
      %v4514 = vpop.f32.mrf.mxu0
      %v4515 = vadd.f32 0.0, %v4514
      %v4516 = vpop.f32.mrf.mxu0
      %4517 = vmatprep.mubr.bf16.mxu0 0
      %4518 = vmatmul.mubr.bf16.gmra.mxu0 %v4395
      %v4519 = vpop.f32.mrf.mxu0
      %v4520 = vadd.f32 0.0, %v4519
      %v4521 = vpop.f32.mrf.mxu0
      %v4522 = vpop.f32.mrf.mxu0
      %v4523 = vadd.f32 0.0, %v4522
      %v4524 = vpop.f32.mrf.mxu0
      %4525 = vmatprep.mubr.bf16.mxu0 0
      %4526 = vmatmul.mubr.bf16.gmra.mxu0 %v4398
      %v4527 = vpop.f32.mrf.mxu0
      %v4528 = vadd.f32 0.0, %v4527
      %v4529 = vpop.f32.mrf.mxu0
      %v4530 = vpop.f32.mrf.mxu0
      %v4531 = vadd.f32 0.0, %v4530
      %v4532 = vpop.f32.mrf.mxu0
      %4533 = vmatprep.mubr.bf16.mxu0 0
      %4534 = vmatmul.mubr.bf16.gmra.mxu0 %v4401
      %v4535 = vpop.f32.mrf.mxu0
      %v4536 = vadd.f32 0.0, %v4535
      %v4537 = vpop.f32.mrf.mxu0
      %v4538 = vpop.f32.mrf.mxu0
      %v4539 = vadd.f32 0.0, %v4538
      %v4540 = vpop.f32.mrf.mxu0
      %4541 = vmatprep.mubr.bf16.mxu0 0
      %4542 = vmatmul.mubr.bf16.gmra.mxu0 %v4404
      %v4543 = vpop.f32.mrf.mxu0
      %v4544 = vadd.f32 0.0, %v4543
      %v4545 = vpop.f32.mrf.mxu0
      %v4546 = vpop.f32.mrf.mxu0
      %v4547 = vadd.f32 0.0, %v4546
      %v4548 = vpop.f32.mrf.mxu0
      %4549 = vmatprep.mubr.bf16.mxu0 0
      %4550 = vmatmul.mubr.bf16.gmra.mxu0 %v4407
      %v4551 = vpop.f32.mrf.mxu0
      %v4552 = vadd.f32 0.0, %v4551
      %v4553 = vpop.f32.mrf.mxu0
      %v4554 = vpop.f32.mrf.mxu0
      %v4555 = vadd.f32 0.0, %v4554
      %v4556 = vpop.f32.mrf.mxu0
      %4557 = vmatprep.mubr.bf16.mxu0 0
      %4558 = vmatmul.mubr.bf16.gmra.mxu0 %v4410
      %v4559 = vpop.f32.mrf.mxu0
      %v4560 = vadd.f32 0.0, %v4559
      %v4561 = vpop.f32.mrf.mxu0
      %v4562 = vpop.f32.mrf.mxu0
      %v4563 = vadd.f32 0.0, %v4562
      %v4564 = vpop.f32.mrf.mxu0
      %4565 = vmatprep.mubr.bf16.mxu0 0
      %4566 = vmatmul.mubr.bf16.gmra.mxu0 %v4413
      %v4567 = vpop.f32.mrf.mxu0
      %v4568 = vadd.f32 0.0, %v4567
      %v4569 = vpop.f32.mrf.mxu0
      %v4570 = vpop.f32.mrf.mxu0
      %v4571 = vadd.f32 0.0, %v4570
      %v4572 = vpop.f32.mrf.mxu0
      %4573 = vmatprep.mubr.bf16.mxu0 0
      %4574 = vmatmul.mubr.bf16.gmra.mxu0 %v4416
      %v4575 = vpop.f32.mrf.mxu0
      %v4576 = vadd.f32 0.0, %v4575
      %v4577 = vpop.f32.mrf.mxu0
      %v4578 = vpop.f32.mrf.mxu0
      %v4579 = vadd.f32 0.0, %v4578
      %v4580 = vpop.f32.mrf.mxu0
      %4581 = vdwg.mxu0
      %v4582 = vld [vmem:[#allocation3] sm:$0xff]
      %v4583 = vld [vmem:[#allocation3 + $0x8] sm:$0xff]
      %v4584 = vld [vmem:[#allocation3 + $0x10] sm:$0xff]
      %v4585 = vld [vmem:[#allocation3 + $0x18] sm:$0xff]
      %v4586 = vld [vmem:[#allocation3 + $0x20] sm:$0xff]
      %v4587 = vld [vmem:[#allocation3 + $0x28] sm:$0xff]
      %v4588 = vld [vmem:[#allocation3 + $0x30] sm:$0xff]
      %v4589 = vld [vmem:[#allocation3 + $0x38] sm:$0xff]
      %v4590 = vld [vmem:[#allocation3 + $0x40] sm:$0xff]
      %v4591 = vld [vmem:[#allocation3 + $0x48] sm:$0xff]
      %v4592 = vld [vmem:[#allocation3 + $0x50] sm:$0xff]
      %v4593 = vld [vmem:[#allocation3 + $0x58] sm:$0xff]
      %v4594 = vld [vmem:[#allocation3 + $0x60] sm:$0xff]
      %v4595 = vld [vmem:[#allocation3 + $0x68] sm:$0xff]
      %v4596 = vld [vmem:[#allocation3 + $0x70] sm:$0xff]
      %v4597 = vld [vmem:[#allocation3 + $0x78] sm:$0xff]
      %v4598 = vld [vmem:[#allocation3 + $0x80] sm:$0xff]
      %v4599 = vld [vmem:[#allocation3 + $0x88] sm:$0xff]
      %v4600 = vld [vmem:[#allocation3 + $0x90] sm:$0xff]
      %v4601 = vld [vmem:[#allocation3 + $0x98] sm:$0xff]
      %v4602 = vld [vmem:[#allocation3 + $0xa0] sm:$0xff]
      %v4603 = vld [vmem:[#allocation3 + $0xa8] sm:$0xff]
      %v4604 = vld [vmem:[#allocation3 + $0xb0] sm:$0xff]
      %v4605 = vld [vmem:[#allocation3 + $0xb8] sm:$0xff]
      %v4606 = vld [vmem:[#allocation3 + $0xc0] sm:$0xff]
      %v4607 = vld [vmem:[#allocation3 + $0xc8] sm:$0xff]
      %v4608 = vld [vmem:[#allocation3 + $0xd0] sm:$0xff]
      %v4609 = vld [vmem:[#allocation3 + $0xd8] sm:$0xff]
      %v4610 = vld [vmem:[#allocation3 + $0xe0] sm:$0xff]
      %v4611 = vld [vmem:[#allocation3 + $0xe8] sm:$0xff]
      %v4612 = vld [vmem:[#allocation3 + $0xf0] sm:$0xff]
      %v4613 = vld [vmem:[#allocation3 + $0xf8] sm:$0xff]
      %v4614 = vadd.f32 %v4582, %v4456
      %v4615 = vadd.f32 %v4583, %v4459
      %v4616 = vadd.f32 %v4584, %v4464
      %v4617 = vadd.f32 %v4585, %v4467
      %v4618 = vadd.f32 %v4586, %v4472
      %v4619 = vadd.f32 %v4587, %v4475
      %v4620 = vadd.f32 %v4588, %v4480
      %v4621 = vadd.f32 %v4589, %v4483
      %v4622 = vadd.f32 %v4590, %v4488
      %v4623 = vadd.f32 %v4591, %v4491
      %v4624 = vadd.f32 %v4592, %v4496
      %v4625 = vadd.f32 %v4593, %v4499
      %v4626 = vadd.f32 %v4594, %v4504
      %v4627 = vadd.f32 %v4595, %v4507
      %v4628 = vadd.f32 %v4596, %v4512
      %v4629 = vadd.f32 %v4597, %v4515
      %v4630 = vadd.f32 %v4598, %v4520
      %v4631 = vadd.f32 %v4599, %v4523
      %v4632 = vadd.f32 %v4600, %v4528
      %v4633 = vadd.f32 %v4601, %v4531
      %v4634 = vadd.f32 %v4602, %v4536
      %v4635 = vadd.f32 %v4603, %v4539
      %v4636 = vadd.f32 %v4604, %v4544
      %v4637 = vadd.f32 %v4605, %v4547
      %v4638 = vadd.f32 %v4606, %v4552
      %v4639 = vadd.f32 %v4607, %v4555
      %v4640 = vadd.f32 %v4608, %v4560
      %v4641 = vadd.f32 %v4609, %v4563
      %v4642 = vadd.f32 %v4610, %v4568
      %v4643 = vadd.f32 %v4611, %v4571
      %v4644 = vadd.f32 %v4612, %v4576
      %v4645 = vadd.f32 %v4613, %v4579
      %4646 = vst.msk [vmem:[#allocation3] sm:$0xff] %vm1625, %v4614
      %4647 = vst.msk [vmem:[#allocation3 + $0x8] sm:$0xff] %vm1625, %v4615
      %4648 = vst.msk [vmem:[#allocation3 + $0x10] sm:$0xff] %vm1625, %v4616
      %4649 = vst.msk [vmem:[#allocation3 + $0x18] sm:$0xff] %vm1625, %v4617
      %4650 = vst.msk [vmem:[#allocation3 + $0x20] sm:$0xff] %vm1625, %v4618
      %4651 = vst.msk [vmem:[#allocation3 + $0x28] sm:$0xff] %vm1625, %v4619
      %4652 = vst.msk [vmem:[#allocation3 + $0x30] sm:$0xff] %vm1625, %v4620
      %4653 = vst.msk [vmem:[#allocation3 + $0x38] sm:$0xff] %vm1625, %v4621
      %4654 = vst.msk [vmem:[#allocation3 + $0x40] sm:$0xff] %vm1625, %v4622
      %4655 = vst.msk [vmem:[#allocation3 + $0x48] sm:$0xff] %vm1625, %v4623
      %4656 = vst.msk [vmem:[#allocation3 + $0x50] sm:$0xff] %vm1625, %v4624
      %4657 = vst.msk [vmem:[#allocation3 + $0x58] sm:$0xff] %vm1625, %v4625
      %4658 = vst.msk [vmem:[#allocation3 + $0x60] sm:$0xff] %vm1625, %v4626
      %4659 = vst.msk [vmem:[#allocation3 + $0x68] sm:$0xff] %vm1625, %v4627
      %4660 = vst.msk [vmem:[#allocation3 + $0x70] sm:$0xff] %vm1625, %v4628
      %4661 = vst.msk [vmem:[#allocation3 + $0x78] sm:$0xff] %vm1625, %v4629
      %4662 = vst.msk [vmem:[#allocation3 + $0x80] sm:$0xff] %vm1625, %v4630
      %4663 = vst.msk [vmem:[#allocation3 + $0x88] sm:$0xff] %vm1625, %v4631
      %4664 = vst.msk [vmem:[#allocation3 + $0x90] sm:$0xff] %vm1625, %v4632
      %4665 = vst.msk [vmem:[#allocation3 + $0x98] sm:$0xff] %vm1625, %v4633
      %4666 = vst.msk [vmem:[#allocation3 + $0xa0] sm:$0xff] %vm1625, %v4634
      %4667 = vst.msk [vmem:[#allocation3 + $0xa8] sm:$0xff] %vm1625, %v4635
      %4668 = vst.msk [vmem:[#allocation3 + $0xb0] sm:$0xff] %vm1625, %v4636
      %4669 = vst.msk [vmem:[#allocation3 + $0xb8] sm:$0xff] %vm1625, %v4637
      %4670 = vst.msk [vmem:[#allocation3 + $0xc0] sm:$0xff] %vm1625, %v4638
      %4671 = vst.msk [vmem:[#allocation3 + $0xc8] sm:$0xff] %vm1625, %v4639
      %4672 = vst.msk [vmem:[#allocation3 + $0xd0] sm:$0xff] %vm1625, %v4640
      %4673 = vst.msk [vmem:[#allocation3 + $0xd8] sm:$0xff] %vm1625, %v4641
      %4674 = vst.msk [vmem:[#allocation3 + $0xe0] sm:$0xff] %vm1625, %v4642
      %4675 = vst.msk [vmem:[#allocation3 + $0xe8] sm:$0xff] %vm1625, %v4643
      %4676 = vst.msk [vmem:[#allocation3 + $0xf0] sm:$0xff] %vm1625, %v4644
      %4677 = vst.msk [vmem:[#allocation3 + $0xf8] sm:$0xff] %vm1625, %v4645
      %v4678 = vld [vmem:[%s1280] sm:$0xf]
      %v4679 = vld [vmem:[%s1280 + $0x4] sm:$0xf]
      %v4680 = vld [vmem:[%s1280 + $0x8] sm:$0xf]
      %v4681 = vld [vmem:[%s1280 + $0xc] sm:$0xf]
      %v4682 = vld [vmem:[%s1280 + $0x10] sm:$0xf]
      %v4683 = vld [vmem:[%s1280 + $0x14] sm:$0xf]
      %v4684 = vld [vmem:[%s1280 + $0x18] sm:$0xf]
      %v4685 = vld [vmem:[%s1280 + $0x1c] sm:$0xf]
      %v4686 = vld [vmem:[%s1280 + $0x20] sm:$0xf]
      %v4687 = vld [vmem:[%s1280 + $0x24] sm:$0xf]
      %v4688 = vld [vmem:[%s1280 + $0x28] sm:$0xf]
      %v4689 = vld [vmem:[%s1280 + $0x2c] sm:$0xf]
      %v4690 = vld [vmem:[%s1280 + $0x30] sm:$0xf]
      %v4691 = vld [vmem:[%s1280 + $0x34] sm:$0xf]
      %v4692 = vld [vmem:[%s1280 + $0x38] sm:$0xf]
      %v4693 = vld [vmem:[%s1280 + $0x3c] sm:$0xf]
      %v4694 = vld [vmem:[%s1280 + $0x40] sm:$0xf]
      %v4695 = vld [vmem:[%s1280 + $0x44] sm:$0xf]
      %v4696 = vld [vmem:[%s1280 + $0x48] sm:$0xf]
      %v4697 = vld [vmem:[%s1280 + $0x4c] sm:$0xf]
      %v4698 = vld [vmem:[%s1280 + $0x50] sm:$0xf]
      %v4699 = vld [vmem:[%s1280 + $0x54] sm:$0xf]
      %v4700 = vld [vmem:[%s1280 + $0x58] sm:$0xf]
      %v4701 = vld [vmem:[%s1280 + $0x5c] sm:$0xf]
      %v4702 = vld [vmem:[%s1280 + $0x60] sm:$0xf]
      %v4703 = vld [vmem:[%s1280 + $0x64] sm:$0xf]
      %v4704 = vld [vmem:[%s1280 + $0x68] sm:$0xf]
      %v4705 = vld [vmem:[%s1280 + $0x6c] sm:$0xf]
      %v4706 = vld [vmem:[%s1280 + $0x70] sm:$0xf]
      %v4707 = vld [vmem:[%s1280 + $0x74] sm:$0xf]
      %v4708 = vld [vmem:[%s1280 + $0x78] sm:$0xf]
      %v4709 = vld [vmem:[%s1280 + $0x7c] sm:$0xf]
      %s4710 = scalar_lea.vmem %s2, 16
      %v4711 = vld [vmem:[%s4710] sm:$0xf]
      %v4712 = vld [vmem:[%s4710 + $0x4] sm:$0x3]
      %v4745 = vunpack.c.l.b16 %v4678
      %v4746 = vunpack.c.l.b16 %v4679
      %v4747 = vunpack.c.l.b16 %v4680
      %v4748 = vunpack.c.l.b16 %v4681
      %v4749 = vunpack.c.l.b16 %v4682
      %v4750 = vunpack.c.l.b16 %v4683
      %v4751 = vunpack.c.l.b16 %v4684
      %v4752 = vunpack.c.l.b16 %v4685
      %v4753 = vunpack.c.l.b16 %v4686
      %v4754 = vunpack.c.l.b16 %v4687
      %v4755 = vunpack.c.l.b16 %v4688
      %v4756 = vunpack.c.l.b16 %v4689
      %v4757 = vunpack.c.l.b16 %v4690
      %v4758 = vunpack.c.l.b16 %v4691
      %v4759 = vunpack.c.l.b16 %v4692
      %v4760 = vunpack.c.l.b16 %v4693
      %v4761 = vunpack.c.l.b16 %v4694
      %v4762 = vunpack.c.l.b16 %v4695
      %v4763 = vunpack.c.l.b16 %v4696
      %v4764 = vunpack.c.l.b16 %v4697
      %v4765 = vunpack.c.l.b16 %v4698
      %v4766 = vunpack.c.l.b16 %v4699
      %v4767 = vunpack.c.l.b16 %v4700
      %v4768 = vunpack.c.l.b16 %v4701
      %v4769 = vunpack.c.l.b16 %v4702
      %v4770 = vunpack.c.l.b16 %v4703
      %v4771 = vunpack.c.l.b16 %v4704
      %v4772 = vunpack.c.l.b16 %v4705
      %v4773 = vunpack.c.l.b16 %v4706
      %v4774 = vunpack.c.l.b16 %v4707
      %v4775 = vunpack.c.l.b16 %v4708
      %v4776 = vunpack.c.l.b16 %v4709
      %v4777 = vpack.c.b16 %v4746, %v4745
      %v4778 = vpack.c.b16 %v4748, %v4747
      %v4779 = vpack.c.b16 %v4750, %v4749
      %v4780 = vpack.c.b16 %v4752, %v4751
      %v4781 = vpack.c.b16 %v4754, %v4753
      %v4782 = vpack.c.b16 %v4756, %v4755
      %v4783 = vpack.c.b16 %v4758, %v4757
      %v4784 = vpack.c.b16 %v4760, %v4759
      %v4785 = vpack.c.b16 %v4762, %v4761
      %v4786 = vpack.c.b16 %v4764, %v4763
      %v4787 = vpack.c.b16 %v4766, %v4765
      %v4788 = vpack.c.b16 %v4768, %v4767
      %v4789 = vpack.c.b16 %v4770, %v4769
      %v4790 = vpack.c.b16 %v4772, %v4771
      %v4791 = vpack.c.b16 %v4774, %v4773
      %v4792 = vpack.c.b16 %v4776, %v4775
      %v4795 = vunpack.c.l.b16 %v4711
      %v4796 = vunpack.c.l.b16 %v4712
      %v4797 = vpack.c.b16 %v4796, %v4795
      %v4799 = vsel %vm1411, %v4777, 0
      %v4802 = vsel %vm1411, %v4778, 0
      %v4805 = vsel %vm1411, %v4779, 0
      %v4808 = vsel %vm1411, %v4780, 0
      %v4811 = vsel %vm1411, %v4781, 0
      %v4814 = vsel %vm1411, %v4782, 0
      %v4817 = vsel %vm1411, %v4783, 0
      %v4820 = vsel %vm1411, %v4784, 0
      %v4823 = vsel %vm1411, %v4785, 0
      %v4826 = vsel %vm1411, %v4786, 0
      %v4829 = vsel %vm1411, %v4787, 0
      %v4832 = vsel %vm1411, %v4788, 0
      %v4835 = vsel %vm1411, %v4789, 0
      %v4838 = vsel %vm1411, %v4790, 0
      %v4841 = vsel %vm1411, %v4791, 0
      %v4844 = vsel %vm1411, %v4792, 0
      %v4847 = vsel %vm1460, %v4797, 0
      %4849 = vmatprep.subr.bf16.mxu0 0
      %4850 = vmatpush1.bf16.msra.mxu0 0
      %4851 = vmatprep.subr.bf16.mxu0 0
      %4852 = vmatpush1.bf16.msra.mxu0 0
      %4853 = vmatprep.subr.bf16.mxu0 0
      %4854 = vmatpush1.bf16.msra.mxu0 0
      %4855 = vmatprep.subr.bf16.mxu0 0
      %4856 = vmatpush1.bf16.msra.mxu0 0
      %4857 = vmatprep.subr.bf16.mxu0 0
      %4858 = vmatpush1.bf16.msra.mxu0 0
      %4859 = vmatprep.subr.bf16.mxu0 0
      %4860 = vmatpush1.bf16.msra.mxu0 0
      %4861 = vmatprep.subr.bf16.mxu0 0
      %4862 = vmatpush1.bf16.msra.mxu0 0
      %4863 = vmatprep.subr.bf16.mxu0 0
      %4864 = vmatpush1.bf16.msra.mxu0 %v4847
      %4865 = vmatprep.subr.bf16.mxu0 0
      %4866 = vmatpush2.bf16.msra.mxu0 0
      %4867 = vmatprep.subr.bf16.mxu0 0
      %4868 = vmatpush2.bf16.msra.mxu0 0
      %4869 = vmatprep.subr.bf16.mxu0 0
      %4870 = vmatpush2.bf16.msra.mxu0 0
      %4871 = vmatprep.subr.bf16.mxu0 0
      %4872 = vmatpush2.bf16.msra.mxu0 0
      %4873 = vmatprep.subr.bf16.mxu0 0
      %4874 = vmatpush2.bf16.msra.mxu0 0
      %4875 = vmatprep.subr.bf16.mxu0 0
      %4876 = vmatpush2.bf16.msra.mxu0 0
      %4877 = vmatprep.subr.bf16.mxu0 0
      %4878 = vmatpush2.bf16.msra.mxu0 0
      %4879 = vmatprep.subr.bf16.mxu0 0
      %4880 = vmatpush2.bf16.msra.mxu0 0
      %4881 = vmatprep.mubr.bf16.mxu0 0
      %4882 = vmatmul.mubr.bf16.gmra.mxu0 %v4799
      %v4883 = vpop.f32.mrf.mxu0
      %v4884 = vadd.f32 0.0, %v4883
      %v4885 = vpop.f32.mrf.mxu0
      %v4886 = vpop.f32.mrf.mxu0
      %v4887 = vadd.f32 0.0, %v4886
      %v4888 = vpop.f32.mrf.mxu0
      %4889 = vmatprep.mubr.bf16.mxu0 0
      %4890 = vmatmul.mubr.bf16.gmra.mxu0 %v4802
      %v4891 = vpop.f32.mrf.mxu0
      %v4892 = vadd.f32 0.0, %v4891
      %v4893 = vpop.f32.mrf.mxu0
      %v4894 = vpop.f32.mrf.mxu0
      %v4895 = vadd.f32 0.0, %v4894
      %v4896 = vpop.f32.mrf.mxu0
      %4897 = vmatprep.mubr.bf16.mxu0 0
      %4898 = vmatmul.mubr.bf16.gmra.mxu0 %v4805
      %v4899 = vpop.f32.mrf.mxu0
      %v4900 = vadd.f32 0.0, %v4899
      %v4901 = vpop.f32.mrf.mxu0
      %v4902 = vpop.f32.mrf.mxu0
      %v4903 = vadd.f32 0.0, %v4902
      %v4904 = vpop.f32.mrf.mxu0
      %4905 = vmatprep.mubr.bf16.mxu0 0
      %4906 = vmatmul.mubr.bf16.gmra.mxu0 %v4808
      %v4907 = vpop.f32.mrf.mxu0
      %v4908 = vadd.f32 0.0, %v4907
      %v4909 = vpop.f32.mrf.mxu0
      %v4910 = vpop.f32.mrf.mxu0
      %v4911 = vadd.f32 0.0, %v4910
      %v4912 = vpop.f32.mrf.mxu0
      %4913 = vmatprep.mubr.bf16.mxu0 0
      %4914 = vmatmul.mubr.bf16.gmra.mxu0 %v4811
      %v4915 = vpop.f32.mrf.mxu0
      %v4916 = vadd.f32 0.0, %v4915
      %v4917 = vpop.f32.mrf.mxu0
      %v4918 = vpop.f32.mrf.mxu0
      %v4919 = vadd.f32 0.0, %v4918
      %v4920 = vpop.f32.mrf.mxu0
      %4921 = vmatprep.mubr.bf16.mxu0 0
      %4922 = vmatmul.mubr.bf16.gmra.mxu0 %v4814
      %v4923 = vpop.f32.mrf.mxu0
      %v4924 = vadd.f32 0.0, %v4923
      %v4925 = vpop.f32.mrf.mxu0
      %v4926 = vpop.f32.mrf.mxu0
      %v4927 = vadd.f32 0.0, %v4926
      %v4928 = vpop.f32.mrf.mxu0
      %4929 = vmatprep.mubr.bf16.mxu0 0
      %4930 = vmatmul.mubr.bf16.gmra.mxu0 %v4817
      %v4931 = vpop.f32.mrf.mxu0
      %v4932 = vadd.f32 0.0, %v4931
      %v4933 = vpop.f32.mrf.mxu0
      %v4934 = vpop.f32.mrf.mxu0
      %v4935 = vadd.f32 0.0, %v4934
      %v4936 = vpop.f32.mrf.mxu0
      %4937 = vmatprep.mubr.bf16.mxu0 0
      %4938 = vmatmul.mubr.bf16.gmra.mxu0 %v4820
      %v4939 = vpop.f32.mrf.mxu0
      %v4940 = vadd.f32 0.0, %v4939
      %v4941 = vpop.f32.mrf.mxu0
      %v4942 = vpop.f32.mrf.mxu0
      %v4943 = vadd.f32 0.0, %v4942
      %v4944 = vpop.f32.mrf.mxu0
      %4945 = vmatprep.mubr.bf16.mxu0 0
      %4946 = vmatmul.mubr.bf16.gmra.mxu0 %v4823
      %v4947 = vpop.f32.mrf.mxu0
      %v4948 = vadd.f32 0.0, %v4947
      %v4949 = vpop.f32.mrf.mxu0
      %v4950 = vpop.f32.mrf.mxu0
      %v4951 = vadd.f32 0.0, %v4950
      %v4952 = vpop.f32.mrf.mxu0
      %4953 = vmatprep.mubr.bf16.mxu0 0
      %4954 = vmatmul.mubr.bf16.gmra.mxu0 %v4826
      %v4955 = vpop.f32.mrf.mxu0
      %v4956 = vadd.f32 0.0, %v4955
      %v4957 = vpop.f32.mrf.mxu0
      %v4958 = vpop.f32.mrf.mxu0
      %v4959 = vadd.f32 0.0, %v4958
      %v4960 = vpop.f32.mrf.mxu0
      %4961 = vmatprep.mubr.bf16.mxu0 0
      %4962 = vmatmul.mubr.bf16.gmra.mxu0 %v4829
      %v4963 = vpop.f32.mrf.mxu0
      %v4964 = vadd.f32 0.0, %v4963
      %v4965 = vpop.f32.mrf.mxu0
      %v4966 = vpop.f32.mrf.mxu0
      %v4967 = vadd.f32 0.0, %v4966
      %v4968 = vpop.f32.mrf.mxu0
      %4969 = vmatprep.mubr.bf16.mxu0 0
      %4970 = vmatmul.mubr.bf16.gmra.mxu0 %v4832
      %v4971 = vpop.f32.mrf.mxu0
      %v4972 = vadd.f32 0.0, %v4971
      %v4973 = vpop.f32.mrf.mxu0
      %v4974 = vpop.f32.mrf.mxu0
      %v4975 = vadd.f32 0.0, %v4974
      %v4976 = vpop.f32.mrf.mxu0
      %4977 = vmatprep.mubr.bf16.mxu0 0
      %4978 = vmatmul.mubr.bf16.gmra.mxu0 %v4835
      %v4979 = vpop.f32.mrf.mxu0
      %v4980 = vadd.f32 0.0, %v4979
      %v4981 = vpop.f32.mrf.mxu0
      %v4982 = vpop.f32.mrf.mxu0
      %v4983 = vadd.f32 0.0, %v4982
      %v4984 = vpop.f32.mrf.mxu0
      %4985 = vmatprep.mubr.bf16.mxu0 0
      %4986 = vmatmul.mubr.bf16.gmra.mxu0 %v4838
      %v4987 = vpop.f32.mrf.mxu0
      %v4988 = vadd.f32 0.0, %v4987
      %v4989 = vpop.f32.mrf.mxu0
      %v4990 = vpop.f32.mrf.mxu0
      %v4991 = vadd.f32 0.0, %v4990
      %v4992 = vpop.f32.mrf.mxu0
      %4993 = vmatprep.mubr.bf16.mxu0 0
      %4994 = vmatmul.mubr.bf16.gmra.mxu0 %v4841
      %v4995 = vpop.f32.mrf.mxu0
      %v4996 = vadd.f32 0.0, %v4995
      %v4997 = vpop.f32.mrf.mxu0
      %v4998 = vpop.f32.mrf.mxu0
      %v4999 = vadd.f32 0.0, %v4998
      %v5000 = vpop.f32.mrf.mxu0
      %5001 = vmatprep.mubr.bf16.mxu0 0
      %5002 = vmatmul.mubr.bf16.gmra.mxu0 %v4844
      %v5003 = vpop.f32.mrf.mxu0
      %v5004 = vadd.f32 0.0, %v5003
      %v5005 = vpop.f32.mrf.mxu0
      %v5006 = vpop.f32.mrf.mxu0
      %v5007 = vadd.f32 0.0, %v5006
      %v5008 = vpop.f32.mrf.mxu0
      %5009 = vdwg.mxu0
      %v5010 = vld [vmem:[#allocation3] sm:$0xff]
      %v5011 = vld [vmem:[#allocation3 + $0x8] sm:$0xff]
      %v5012 = vld [vmem:[#allocation3 + $0x10] sm:$0xff]
      %v5013 = vld [vmem:[#allocation3 + $0x18] sm:$0xff]
      %v5014 = vld [vmem:[#allocation3 + $0x20] sm:$0xff]
      %v5015 = vld [vmem:[#allocation3 + $0x28] sm:$0xff]
      %v5016 = vld [vmem:[#allocation3 + $0x30] sm:$0xff]
      %v5017 = vld [vmem:[#allocation3 + $0x38] sm:$0xff]
      %v5018 = vld [vmem:[#allocation3 + $0x40] sm:$0xff]
      %v5019 = vld [vmem:[#allocation3 + $0x48] sm:$0xff]
      %v5020 = vld [vmem:[#allocation3 + $0x50] sm:$0xff]
      %v5021 = vld [vmem:[#allocation3 + $0x58] sm:$0xff]
      %v5022 = vld [vmem:[#allocation3 + $0x60] sm:$0xff]
      %v5023 = vld [vmem:[#allocation3 + $0x68] sm:$0xff]
      %v5024 = vld [vmem:[#allocation3 + $0x70] sm:$0xff]
      %v5025 = vld [vmem:[#allocation3 + $0x78] sm:$0xff]
      %v5026 = vld [vmem:[#allocation3 + $0x80] sm:$0xff]
      %v5027 = vld [vmem:[#allocation3 + $0x88] sm:$0xff]
      %v5028 = vld [vmem:[#allocation3 + $0x90] sm:$0xff]
      %v5029 = vld [vmem:[#allocation3 + $0x98] sm:$0xff]
      %v5030 = vld [vmem:[#allocation3 + $0xa0] sm:$0xff]
      %v5031 = vld [vmem:[#allocation3 + $0xa8] sm:$0xff]
      %v5032 = vld [vmem:[#allocation3 + $0xb0] sm:$0xff]
      %v5033 = vld [vmem:[#allocation3 + $0xb8] sm:$0xff]
      %v5034 = vld [vmem:[#allocation3 + $0xc0] sm:$0xff]
      %v5035 = vld [vmem:[#allocation3 + $0xc8] sm:$0xff]
      %v5036 = vld [vmem:[#allocation3 + $0xd0] sm:$0xff]
      %v5037 = vld [vmem:[#allocation3 + $0xd8] sm:$0xff]
      %v5038 = vld [vmem:[#allocation3 + $0xe0] sm:$0xff]
      %v5039 = vld [vmem:[#allocation3 + $0xe8] sm:$0xff]
      %v5040 = vld [vmem:[#allocation3 + $0xf0] sm:$0xff]
      %v5041 = vld [vmem:[#allocation3 + $0xf8] sm:$0xff]
      %v5042 = vadd.f32 %v5010, %v4884
      %v5043 = vadd.f32 %v5011, %v4887
      %v5044 = vadd.f32 %v5012, %v4892
      %v5045 = vadd.f32 %v5013, %v4895
      %v5046 = vadd.f32 %v5014, %v4900
      %v5047 = vadd.f32 %v5015, %v4903
      %v5048 = vadd.f32 %v5016, %v4908
      %v5049 = vadd.f32 %v5017, %v4911
      %v5050 = vadd.f32 %v5018, %v4916
      %v5051 = vadd.f32 %v5019, %v4919
      %v5052 = vadd.f32 %v5020, %v4924
      %v5053 = vadd.f32 %v5021, %v4927
      %v5054 = vadd.f32 %v5022, %v4932
      %v5055 = vadd.f32 %v5023, %v4935
      %v5056 = vadd.f32 %v5024, %v4940
      %v5057 = vadd.f32 %v5025, %v4943
      %v5058 = vadd.f32 %v5026, %v4948
      %v5059 = vadd.f32 %v5027, %v4951
      %v5060 = vadd.f32 %v5028, %v4956
      %v5061 = vadd.f32 %v5029, %v4959
      %v5062 = vadd.f32 %v5030, %v4964
      %v5063 = vadd.f32 %v5031, %v4967
      %v5064 = vadd.f32 %v5032, %v4972
      %v5065 = vadd.f32 %v5033, %v4975
      %v5066 = vadd.f32 %v5034, %v4980
      %v5067 = vadd.f32 %v5035, %v4983
      %v5068 = vadd.f32 %v5036, %v4988
      %v5069 = vadd.f32 %v5037, %v4991
      %v5070 = vadd.f32 %v5038, %v4996
      %v5071 = vadd.f32 %v5039, %v4999
      %v5072 = vadd.f32 %v5040, %v5004
      %v5073 = vadd.f32 %v5041, %v5007
      %5074 = vst.msk [vmem:[#allocation3] sm:$0xff] %vm1625, %v5042
      %5075 = vst.msk [vmem:[#allocation3 + $0x8] sm:$0xff] %vm1625, %v5043
      %5076 = vst.msk [vmem:[#allocation3 + $0x10] sm:$0xff] %vm1625, %v5044
      %5077 = vst.msk [vmem:[#allocation3 + $0x18] sm:$0xff] %vm1625, %v5045
      %5078 = vst.msk [vmem:[#allocation3 + $0x20] sm:$0xff] %vm1625, %v5046
      %5079 = vst.msk [vmem:[#allocation3 + $0x28] sm:$0xff] %vm1625, %v5047
      %5080 = vst.msk [vmem:[#allocation3 + $0x30] sm:$0xff] %vm1625, %v5048
      %5081 = vst.msk [vmem:[#allocation3 + $0x38] sm:$0xff] %vm1625, %v5049
      %5082 = vst.msk [vmem:[#allocation3 + $0x40] sm:$0xff] %vm1625, %v5050
      %5083 = vst.msk [vmem:[#allocation3 + $0x48] sm:$0xff] %vm1625, %v5051
      %5084 = vst.msk [vmem:[#allocation3 + $0x50] sm:$0xff] %vm1625, %v5052
      %5085 = vst.msk [vmem:[#allocation3 + $0x58] sm:$0xff] %vm1625, %v5053
      %5086 = vst.msk [vmem:[#allocation3 + $0x60] sm:$0xff] %vm1625, %v5054
      %5087 = vst.msk [vmem:[#allocation3 + $0x68] sm:$0xff] %vm1625, %v5055
      %5088 = vst.msk [vmem:[#allocation3 + $0x70] sm:$0xff] %vm1625, %v5056
      %5089 = vst.msk [vmem:[#allocation3 + $0x78] sm:$0xff] %vm1625, %v5057
      %5090 = vst.msk [vmem:[#allocation3 + $0x80] sm:$0xff] %vm1625, %v5058
      %5091 = vst.msk [vmem:[#allocation3 + $0x88] sm:$0xff] %vm1625, %v5059
      %5092 = vst.msk [vmem:[#allocation3 + $0x90] sm:$0xff] %vm1625, %v5060
      %5093 = vst.msk [vmem:[#allocation3 + $0x98] sm:$0xff] %vm1625, %v5061
      %5094 = vst.msk [vmem:[#allocation3 + $0xa0] sm:$0xff] %vm1625, %v5062
      %5095 = vst.msk [vmem:[#allocation3 + $0xa8] sm:$0xff] %vm1625, %v5063
      %5096 = vst.msk [vmem:[#allocation3 + $0xb0] sm:$0xff] %vm1625, %v5064
      %5097 = vst.msk [vmem:[#allocation3 + $0xb8] sm:$0xff] %vm1625, %v5065
      %5098 = vst.msk [vmem:[#allocation3 + $0xc0] sm:$0xff] %vm1625, %v5066
      %5099 = vst.msk [vmem:[#allocation3 + $0xc8] sm:$0xff] %vm1625, %v5067
      %5100 = vst.msk [vmem:[#allocation3 + $0xd0] sm:$0xff] %vm1625, %v5068
      %5101 = vst.msk [vmem:[#allocation3 + $0xd8] sm:$0xff] %vm1625, %v5069
      %5102 = vst.msk [vmem:[#allocation3 + $0xe0] sm:$0xff] %vm1625, %v5070
      %5103 = vst.msk [vmem:[#allocation3 + $0xe8] sm:$0xff] %vm1625, %v5071
      %5104 = vst.msk [vmem:[#allocation3 + $0xf0] sm:$0xff] %vm1625, %v5072
      %5105 = vst.msk [vmem:[#allocation3 + $0xf8] sm:$0xff] %vm1625, %v5073
      %v5106 = vld [vmem:[#allocation3] sm:$0xff]
      %v5107 = vld [vmem:[#allocation3 + $0x8] sm:$0xff]
      %v5108 = vld [vmem:[#allocation3 + $0x10] sm:$0xff]
      %v5109 = vld [vmem:[#allocation3 + $0x18] sm:$0xff]
      %v5110 = vld [vmem:[#allocation3 + $0x20] sm:$0xff]
      %v5111 = vld [vmem:[#allocation3 + $0x28] sm:$0xff]
      %v5112 = vld [vmem:[#allocation3 + $0x30] sm:$0xff]
      %v5113 = vld [vmem:[#allocation3 + $0x38] sm:$0xff]
      %v5114 = vld [vmem:[#allocation3 + $0x40] sm:$0xff]
      %v5115 = vld [vmem:[#allocation3 + $0x48] sm:$0xff]
      %v5116 = vld [vmem:[#allocation3 + $0x50] sm:$0xff]
      %v5117 = vld [vmem:[#allocation3 + $0x58] sm:$0xff]
      %v5118 = vld [vmem:[#allocation3 + $0x60] sm:$0xff]
      %v5119 = vld [vmem:[#allocation3 + $0x68] sm:$0xff]
      %v5120 = vld [vmem:[#allocation3 + $0x70] sm:$0xff]
      %v5121 = vld [vmem:[#allocation3 + $0x78] sm:$0xff]
      %v5122 = vld [vmem:[#allocation3 + $0x80] sm:$0xff]
      %v5123 = vld [vmem:[#allocation3 + $0x88] sm:$0xff]
      %v5124 = vld [vmem:[#allocation3 + $0x90] sm:$0xff]
      %v5125 = vld [vmem:[#allocation3 + $0x98] sm:$0xff]
      %v5126 = vld [vmem:[#allocation3 + $0xa0] sm:$0xff]
      %v5127 = vld [vmem:[#allocation3 + $0xa8] sm:$0xff]
      %v5128 = vld [vmem:[#allocation3 + $0xb0] sm:$0xff]
      %v5129 = vld [vmem:[#allocation3 + $0xb8] sm:$0xff]
      %v5130 = vld [vmem:[#allocation3 + $0xc0] sm:$0xff]
      %v5131 = vld [vmem:[#allocation3 + $0xc8] sm:$0xff]
      %v5132 = vld [vmem:[#allocation3 + $0xd0] sm:$0xff]
      %v5133 = vld [vmem:[#allocation3 + $0xd8] sm:$0xff]
      %v5134 = vld [vmem:[#allocation3 + $0xe0] sm:$0xff]
      %v5135 = vld [vmem:[#allocation3 + $0xe8] sm:$0xff]
      %v5136 = vld [vmem:[#allocation3 + $0xf0] sm:$0xff]
      %v5137 = vld [vmem:[#allocation3 + $0xf8] sm:$0xff]
      %v5138 = vsel %vm1625, %v5106, 0.0
      %v5139 = vsel %vm1625, %v5108, 0.0
      %v5140 = vadd.f32 %v5138, %v5139
      %v5141 = vsel %vm1625, %v5110, 0.0
      %v5142 = vadd.f32 %v5140, %v5141
      %v5143 = vsel %vm1625, %v5112, 0.0
      %v5144 = vadd.f32 %v5142, %v5143
      %v5145 = vsel %vm1625, %v5114, 0.0
      %v5146 = vadd.f32 %v5144, %v5145
      %v5147 = vsel %vm1625, %v5116, 0.0
      %v5148 = vadd.f32 %v5146, %v5147
      %v5149 = vsel %vm1625, %v5118, 0.0
      %v5150 = vadd.f32 %v5148, %v5149
      %v5151 = vsel %vm1625, %v5120, 0.0
      %v5152 = vadd.f32 %v5150, %v5151
      %v5153 = vsel %vm1625, %v5122, 0.0
      %v5154 = vadd.f32 %v5152, %v5153
      %v5155 = vsel %vm1625, %v5124, 0.0
      %v5156 = vadd.f32 %v5154, %v5155
      %v5157 = vsel %vm1625, %v5126, 0.0
      %v5158 = vadd.f32 %v5156, %v5157
      %v5159 = vsel %vm1625, %v5128, 0.0
      %v5160 = vadd.f32 %v5158, %v5159
      %v5161 = vsel %vm1625, %v5130, 0.0
      %v5162 = vadd.f32 %v5160, %v5161
      %v5163 = vsel %vm1625, %v5132, 0.0
      %v5164 = vadd.f32 %v5162, %v5163
      %v5165 = vsel %vm1625, %v5134, 0.0
      %v5166 = vadd.f32 %v5164, %v5165
      %v5167 = vsel %vm1625, %v5136, 0.0
      %v5168 = vadd.f32 %v5166, %v5167
      %v5169 = vsel %vm1625, %v5107, 0.0
      %v5170 = vsel %vm1625, %v5109, 0.0
      %v5171 = vadd.f32 %v5169, %v5170
      %v5172 = vsel %vm1625, %v5111, 0.0
      %v5173 = vadd.f32 %v5171, %v5172
      %v5174 = vsel %vm1625, %v5113, 0.0
      %v5175 = vadd.f32 %v5173, %v5174
      %v5176 = vsel %vm1625, %v5115, 0.0
      %v5177 = vadd.f32 %v5175, %v5176
      %v5178 = vsel %vm1625, %v5117, 0.0
      %v5179 = vadd.f32 %v5177, %v5178
      %v5180 = vsel %vm1625, %v5119, 0.0
      %v5181 = vadd.f32 %v5179, %v5180
      %v5182 = vsel %vm1625, %v5121, 0.0
      %v5183 = vadd.f32 %v5181, %v5182
      %v5184 = vsel %vm1625, %v5123, 0.0
      %v5185 = vadd.f32 %v5183, %v5184
      %v5186 = vsel %vm1625, %v5125, 0.0
      %v5187 = vadd.f32 %v5185, %v5186
      %v5188 = vsel %vm1625, %v5127, 0.0
      %v5189 = vadd.f32 %v5187, %v5188
      %v5190 = vsel %vm1625, %v5129, 0.0
      %v5191 = vadd.f32 %v5189, %v5190
      %v5192 = vsel %vm1625, %v5131, 0.0
      %v5193 = vadd.f32 %v5191, %v5192
      %v5194 = vsel %vm1625, %v5133, 0.0
      %v5195 = vadd.f32 %v5193, %v5194
      %v5196 = vsel %vm1625, %v5135, 0.0
      %v5197 = vadd.f32 %v5195, %v5196
      %v5198 = vsel %vm1625, %v5137, 0.0
      %v5199 = vadd.f32 %v5197, %v5198
      %v5200 = vsel %vm1625, %v5168, 0.0
      %v5201 = vsel %vm1625, %v5199, 0.0
      %v5202 = vadd.f32 %v5200, %v5201
      %v5203 = vrot.slane %v5202, 4
      %v5204 = vadd.f32 %v5202, %v5203
      %v5205 = vrot.slane %v5204, 2
      %v5206 = vadd.f32 %v5204, %v5205
      %v5207 = vrot.slane %v5206, 1
      %v5208 = vadd.f32 %v5206, %v5207
      %v5209 = vmul.f32 %v5106, %v5106
      %v5210 = vmul.f32 %v5107, %v5107
      %v5211 = vmul.f32 %v5108, %v5108
      %v5212 = vmul.f32 %v5109, %v5109
      %v5213 = vmul.f32 %v5110, %v5110
      %v5214 = vmul.f32 %v5111, %v5111
      %v5215 = vmul.f32 %v5112, %v5112
      %v5216 = vmul.f32 %v5113, %v5113
      %v5217 = vmul.f32 %v5114, %v5114
      %v5218 = vmul.f32 %v5115, %v5115
      %v5219 = vmul.f32 %v5116, %v5116
      %v5220 = vmul.f32 %v5117, %v5117
      %v5221 = vmul.f32 %v5118, %v5118
      %v5222 = vmul.f32 %v5119, %v5119
      %v5223 = vmul.f32 %v5120, %v5120
      %v5224 = vmul.f32 %v5121, %v5121
      %v5225 = vmul.f32 %v5122, %v5122
      %v5226 = vmul.f32 %v5123, %v5123
      %v5227 = vmul.f32 %v5124, %v5124
      %v5228 = vmul.f32 %v5125, %v5125
      %v5229 = vmul.f32 %v5126, %v5126
      %v5230 = vmul.f32 %v5127, %v5127
      %v5231 = vmul.f32 %v5128, %v5128
      %v5232 = vmul.f32 %v5129, %v5129
      %v5233 = vmul.f32 %v5130, %v5130
      %v5234 = vmul.f32 %v5131, %v5131
      %v5235 = vmul.f32 %v5132, %v5132
      %v5236 = vmul.f32 %v5133, %v5133
      %v5237 = vmul.f32 %v5134, %v5134
      %v5238 = vmul.f32 %v5135, %v5135
      %v5239 = vmul.f32 %v5136, %v5136
      %v5240 = vmul.f32 %v5137, %v5137
      %v5241 = vsel %vm1625, %v5209, 0.0
      %v5242 = vsel %vm1625, %v5211, 0.0
      %v5243 = vadd.f32 %v5241, %v5242
      %v5244 = vsel %vm1625, %v5213, 0.0
      %v5245 = vadd.f32 %v5243, %v5244
      %v5246 = vsel %vm1625, %v5215, 0.0
      %v5247 = vadd.f32 %v5245, %v5246
      %v5248 = vsel %vm1625, %v5217, 0.0
      %v5249 = vadd.f32 %v5247, %v5248
      %v5250 = vsel %vm1625, %v5219, 0.0
      %v5251 = vadd.f32 %v5249, %v5250
      %v5252 = vsel %vm1625, %v5221, 0.0
      %v5253 = vadd.f32 %v5251, %v5252
      %v5254 = vsel %vm1625, %v5223, 0.0
      %v5255 = vadd.f32 %v5253, %v5254
      %v5256 = vsel %vm1625, %v5225, 0.0
      %v5257 = vadd.f32 %v5255, %v5256
      %v5258 = vsel %vm1625, %v5227, 0.0
      %v5259 = vadd.f32 %v5257, %v5258
      %v5260 = vsel %vm1625, %v5229, 0.0
      %v5261 = vadd.f32 %v5259, %v5260
      %v5262 = vsel %vm1625, %v5231, 0.0
      %v5263 = vadd.f32 %v5261, %v5262
      %v5264 = vsel %vm1625, %v5233, 0.0
      %v5265 = vadd.f32 %v5263, %v5264
      %v5266 = vsel %vm1625, %v5235, 0.0
      %v5267 = vadd.f32 %v5265, %v5266
      %v5268 = vsel %vm1625, %v5237, 0.0
      %v5269 = vadd.f32 %v5267, %v5268
      %v5270 = vsel %vm1625, %v5239, 0.0
      %v5271 = vadd.f32 %v5269, %v5270
      %v5272 = vsel %vm1625, %v5210, 0.0
      %v5273 = vsel %vm1625, %v5212, 0.0
      %v5274 = vadd.f32 %v5272, %v5273
      %v5275 = vsel %vm1625, %v5214, 0.0
      %v5276 = vadd.f32 %v5274, %v5275
      %v5277 = vsel %vm1625, %v5216, 0.0
      %v5278 = vadd.f32 %v5276, %v5277
      %v5279 = vsel %vm1625, %v5218, 0.0
      %v5280 = vadd.f32 %v5278, %v5279
      %v5281 = vsel %vm1625, %v5220, 0.0
      %v5282 = vadd.f32 %v5280, %v5281
      %v5283 = vsel %vm1625, %v5222, 0.0
      %v5284 = vadd.f32 %v5282, %v5283
      %v5285 = vsel %vm1625, %v5224, 0.0
      %v5286 = vadd.f32 %v5284, %v5285
      %v5287 = vsel %vm1625, %v5226, 0.0
      %v5288 = vadd.f32 %v5286, %v5287
      %v5289 = vsel %vm1625, %v5228, 0.0
      %v5290 = vadd.f32 %v5288, %v5289
      %v5291 = vsel %vm1625, %v5230, 0.0
      %v5292 = vadd.f32 %v5290, %v5291
      %v5293 = vsel %vm1625, %v5232, 0.0
      %v5294 = vadd.f32 %v5292, %v5293
      %v5295 = vsel %vm1625, %v5234, 0.0
      %v5296 = vadd.f32 %v5294, %v5295
      %v5297 = vsel %vm1625, %v5236, 0.0
      %v5298 = vadd.f32 %v5296, %v5297
      %v5299 = vsel %vm1625, %v5238, 0.0
      %v5300 = vadd.f32 %v5298, %v5299
      %v5301 = vsel %vm1625, %v5240, 0.0
      %v5302 = vadd.f32 %v5300, %v5301
      %v5303 = vsel %vm1625, %v5271, 0.0
      %v5304 = vsel %vm1625, %v5302, 0.0
      %v5305 = vadd.f32 %v5303, %v5304
      %v5306 = vrot.slane %v5305, 4
      %v5307 = vadd.f32 %v5305, %v5306
      %v5308 = vrot.slane %v5307, 2
      %v5309 = vadd.f32 %v5307, %v5308
      %v5310 = vrot.slane %v5309, 1
      %v5311 = vadd.f32 %v5309, %v5310
      %v5312 = vmul.f32 %v5208, 0.00390625
      %v5313 = vmul.f32 %v5311, 0.00390625
      %v5314 = vmul.f32 %v5312, %v5312
      %v5315 = vsub.f32 %v5313, %v5314
      %v5316 = vmax.f32 %v5315, 0.0
      %v5317 = vsub.f32 %v5106, %v5312
      %v5318 = vsub.f32 %v5107, %v5312
      %v5319 = vsub.f32 %v5108, %v5312
      %v5320 = vsub.f32 %v5109, %v5312
      %v5321 = vsub.f32 %v5110, %v5312
      %v5322 = vsub.f32 %v5111, %v5312
      %v5323 = vsub.f32 %v5112, %v5312
      %v5324 = vsub.f32 %v5113, %v5312
      %v5325 = vsub.f32 %v5114, %v5312
      %v5326 = vsub.f32 %v5115, %v5312
      %v5327 = vsub.f32 %v5116, %v5312
      %v5328 = vsub.f32 %v5117, %v5312
      %v5329 = vsub.f32 %v5118, %v5312
      %v5330 = vsub.f32 %v5119, %v5312
      %v5331 = vsub.f32 %v5120, %v5312
      %v5332 = vsub.f32 %v5121, %v5312
      %v5333 = vsub.f32 %v5122, %v5312
      %v5334 = vsub.f32 %v5123, %v5312
      %v5335 = vsub.f32 %v5124, %v5312
      %v5336 = vsub.f32 %v5125, %v5312
      %v5337 = vsub.f32 %v5126, %v5312
      %v5338 = vsub.f32 %v5127, %v5312
      %v5339 = vsub.f32 %v5128, %v5312
      %v5340 = vsub.f32 %v5129, %v5312
      %v5341 = vsub.f32 %v5130, %v5312
      %v5342 = vsub.f32 %v5131, %v5312
      %v5343 = vsub.f32 %v5132, %v5312
      %v5344 = vsub.f32 %v5133, %v5312
      %v5345 = vsub.f32 %v5134, %v5312
      %v5346 = vsub.f32 %v5135, %v5312
      %v5347 = vsub.f32 %v5136, %v5312
      %v5348 = vsub.f32 %v5137, %v5312
      %v5349 = vadd.f32 %v5316, 1e-05
      %v5350 = vrsqrt.pop %v5349
      %v5351 = vmul.f32 %v5317, %v5350
      %v5352 = vmul.f32 %v5318, %v5350
      %v5353 = vmul.f32 %v5319, %v5350
      %v5354 = vmul.f32 %v5320, %v5350
      %v5355 = vmul.f32 %v5321, %v5350
      %v5356 = vmul.f32 %v5322, %v5350
      %v5357 = vmul.f32 %v5323, %v5350
      %v5358 = vmul.f32 %v5324, %v5350
      %v5359 = vmul.f32 %v5325, %v5350
      %v5360 = vmul.f32 %v5326, %v5350
      %v5361 = vmul.f32 %v5327, %v5350
      %v5362 = vmul.f32 %v5328, %v5350
      %v5363 = vmul.f32 %v5329, %v5350
      %v5364 = vmul.f32 %v5330, %v5350
      %v5365 = vmul.f32 %v5331, %v5350
      %v5366 = vmul.f32 %v5332, %v5350
      %v5367 = vmul.f32 %v5333, %v5350
      %v5368 = vmul.f32 %v5334, %v5350
      %v5369 = vmul.f32 %v5335, %v5350
      %v5370 = vmul.f32 %v5336, %v5350
      %v5371 = vmul.f32 %v5337, %v5350
      %v5372 = vmul.f32 %v5338, %v5350
      %v5373 = vmul.f32 %v5339, %v5350
      %v5374 = vmul.f32 %v5340, %v5350
      %v5375 = vmul.f32 %v5341, %v5350
      %v5376 = vmul.f32 %v5342, %v5350
      %v5377 = vmul.f32 %v5343, %v5350
      %v5378 = vmul.f32 %v5344, %v5350
      %v5379 = vmul.f32 %v5345, %v5350
      %v5380 = vmul.f32 %v5346, %v5350
      %v5381 = vmul.f32 %v5347, %v5350
      %v5382 = vmul.f32 %v5348, %v5350
      %v5383 = vld [vmem:[%s165] sm:$0xff]
      %v5384 = vld [vmem:[%s165 + $0x8] sm:$0xff]
      %v5385 = vld [vmem:[%s165 + $0x10] sm:$0xff]
      %v5386 = vld [vmem:[%s165 + $0x18] sm:$0xff]
      %v5387 = vld [vmem:[%s165 + $0x20] sm:$0xff]
      %v5388 = vld [vmem:[%s165 + $0x28] sm:$0xff]
      %v5389 = vld [vmem:[%s165 + $0x30] sm:$0xff]
      %v5390 = vld [vmem:[%s165 + $0x38] sm:$0xff]
      %v5391 = vld [vmem:[%s165 + $0x40] sm:$0xff]
      %v5392 = vld [vmem:[%s165 + $0x48] sm:$0xff]
      %v5393 = vld [vmem:[%s165 + $0x50] sm:$0xff]
      %v5394 = vld [vmem:[%s165 + $0x58] sm:$0xff]
      %v5395 = vld [vmem:[%s165 + $0x60] sm:$0xff]
      %v5396 = vld [vmem:[%s165 + $0x68] sm:$0xff]
      %v5397 = vld [vmem:[%s165 + $0x70] sm:$0xff]
      %v5398 = vld [vmem:[%s165 + $0x78] sm:$0xff]
      %v5399 = vld [vmem:[%s165 + $0x80] sm:$0xff]
      %v5400 = vld [vmem:[%s165 + $0x88] sm:$0xff]
      %v5401 = vld [vmem:[%s165 + $0x90] sm:$0xff]
      %v5402 = vld [vmem:[%s165 + $0x98] sm:$0xff]
      %v5403 = vld [vmem:[%s165 + $0xa0] sm:$0xff]
      %v5404 = vld [vmem:[%s165 + $0xa8] sm:$0xff]
      %v5405 = vld [vmem:[%s165 + $0xb0] sm:$0xff]
      %v5406 = vld [vmem:[%s165 + $0xb8] sm:$0xff]
      %v5407 = vld [vmem:[%s165 + $0xc0] sm:$0xff]
      %v5408 = vld [vmem:[%s165 + $0xc8] sm:$0xff]
      %v5409 = vld [vmem:[%s165 + $0xd0] sm:$0xff]
      %v5410 = vld [vmem:[%s165 + $0xd8] sm:$0xff]
      %v5411 = vld [vmem:[%s165 + $0xe0] sm:$0xff]
      %v5412 = vld [vmem:[%s165 + $0xe8] sm:$0xff]
      %v5413 = vld [vmem:[%s165 + $0xf0] sm:$0xff]
      %v5414 = vld [vmem:[%s165 + $0xf8] sm:$0xff]
      %v5415 = vadd.f32 %v5383, %v5351
      %v5416 = vadd.f32 %v5384, %v5352
      %v5417 = vadd.f32 %v5385, %v5353
      %v5418 = vadd.f32 %v5386, %v5354
      %v5419 = vadd.f32 %v5387, %v5355
      %v5420 = vadd.f32 %v5388, %v5356
      %v5421 = vadd.f32 %v5389, %v5357
      %v5422 = vadd.f32 %v5390, %v5358
      %v5423 = vadd.f32 %v5391, %v5359
      %v5424 = vadd.f32 %v5392, %v5360
      %v5425 = vadd.f32 %v5393, %v5361
      %v5426 = vadd.f32 %v5394, %v5362
      %v5427 = vadd.f32 %v5395, %v5363
      %v5428 = vadd.f32 %v5396, %v5364
      %v5429 = vadd.f32 %v5397, %v5365
      %v5430 = vadd.f32 %v5398, %v5366
      %v5431 = vadd.f32 %v5399, %v5367
      %v5432 = vadd.f32 %v5400, %v5368
      %v5433 = vadd.f32 %v5401, %v5369
      %v5434 = vadd.f32 %v5402, %v5370
      %v5435 = vadd.f32 %v5403, %v5371
      %v5436 = vadd.f32 %v5404, %v5372
      %v5437 = vadd.f32 %v5405, %v5373
      %v5438 = vadd.f32 %v5406, %v5374
      %v5439 = vadd.f32 %v5407, %v5375
      %v5440 = vadd.f32 %v5408, %v5376
      %v5441 = vadd.f32 %v5409, %v5377
      %v5442 = vadd.f32 %v5410, %v5378
      %v5443 = vadd.f32 %v5411, %v5379
      %v5444 = vadd.f32 %v5412, %v5380
      %v5445 = vadd.f32 %v5413, %v5381
      %v5446 = vadd.f32 %v5414, %v5382
      %5447 = vst.msk [vmem:[%s170] sm:$0xff] %vm1625, %v5415
      %5448 = vst.msk [vmem:[%s170 + $0x8] sm:$0xff] %vm1625, %v5416
      %5449 = vst.msk [vmem:[%s170 + $0x10] sm:$0xff] %vm1625, %v5417
      %5450 = vst.msk [vmem:[%s170 + $0x18] sm:$0xff] %vm1625, %v5418
      %5451 = vst.msk [vmem:[%s170 + $0x20] sm:$0xff] %vm1625, %v5419
      %5452 = vst.msk [vmem:[%s170 + $0x28] sm:$0xff] %vm1625, %v5420
      %5453 = vst.msk [vmem:[%s170 + $0x30] sm:$0xff] %vm1625, %v5421
      %5454 = vst.msk [vmem:[%s170 + $0x38] sm:$0xff] %vm1625, %v5422
      %5455 = vst.msk [vmem:[%s170 + $0x40] sm:$0xff] %vm1625, %v5423
      %5456 = vst.msk [vmem:[%s170 + $0x48] sm:$0xff] %vm1625, %v5424
      %5457 = vst.msk [vmem:[%s170 + $0x50] sm:$0xff] %vm1625, %v5425
      %5458 = vst.msk [vmem:[%s170 + $0x58] sm:$0xff] %vm1625, %v5426
      %5459 = vst.msk [vmem:[%s170 + $0x60] sm:$0xff] %vm1625, %v5427
      %5460 = vst.msk [vmem:[%s170 + $0x68] sm:$0xff] %vm1625, %v5428
      %5461 = vst.msk [vmem:[%s170 + $0x70] sm:$0xff] %vm1625, %v5429
      %5462 = vst.msk [vmem:[%s170 + $0x78] sm:$0xff] %vm1625, %v5430
      %5463 = vst.msk [vmem:[%s170 + $0x80] sm:$0xff] %vm1625, %v5431
      %5464 = vst.msk [vmem:[%s170 + $0x88] sm:$0xff] %vm1625, %v5432
      %5465 = vst.msk [vmem:[%s170 + $0x90] sm:$0xff] %vm1625, %v5433
      %5466 = vst.msk [vmem:[%s170 + $0x98] sm:$0xff] %vm1625, %v5434
      %5467 = vst.msk [vmem:[%s170 + $0xa0] sm:$0xff] %vm1625, %v5435
      %5468 = vst.msk [vmem:[%s170 + $0xa8] sm:$0xff] %vm1625, %v5436
      %5469 = vst.msk [vmem:[%s170 + $0xb0] sm:$0xff] %vm1625, %v5437
      %5470 = vst.msk [vmem:[%s170 + $0xb8] sm:$0xff] %vm1625, %v5438
      %5471 = vst.msk [vmem:[%s170 + $0xc0] sm:$0xff] %vm1625, %v5439
      %5472 = vst.msk [vmem:[%s170 + $0xc8] sm:$0xff] %vm1625, %v5440
      %5473 = vst.msk [vmem:[%s170 + $0xd0] sm:$0xff] %vm1625, %v5441
      %5474 = vst.msk [vmem:[%s170 + $0xd8] sm:$0xff] %vm1625, %v5442
      %5475 = vst.msk [vmem:[%s170 + $0xe0] sm:$0xff] %vm1625, %v5443
      %5476 = vst.msk [vmem:[%s170 + $0xe8] sm:$0xff] %vm1625, %v5444
      %5477 = vst.msk [vmem:[%s170 + $0xf0] sm:$0xff] %vm1625, %v5445
      %5478 = vst.msk [vmem:[%s170 + $0xf8] sm:$0xff] %vm1625, %v5446
      %p5479 = scmp.lt.s32.totalorder %s14, 1
      %s5480 = scalar_select %p5479, %s14, 1
      %s5481 = smul.addr %s5480, 32
      %s5482 = smul.addr %s5481, 8
      %s5483 = scalar_lea.vmem %s3, %s5482
      // Predicated region
      $region33: #{tpu_custom_call.1} parent=31 // pred_check
        %p5484 = pneg %p100
      $region34: #{tpu_custom_call.1} parent=31 // pred_check_branch
        %5486 = sbr.rel (%p5484) target = $region36
      $region35: #{tpu_custom_call.1} parent=31 // pred_region
        _
      $region36: #{tpu_custom_call.1} parent=31 // pred_fallthru
        _
    $region32: #{tpu_custom_call.1} parent=5 // pred_fallthru
      _
    %p5487 = scmp.le.s32.totalorder 2, %s9
    // Predicated region
    $region37: #{tpu_custom_call.1} parent=5 // pred_check
      %p5488 = pneg %p5487
    $region38: #{tpu_custom_call.1} parent=5 // pred_check_branch
      %5490 = sbr.rel (%p5488) target = $region40
    $region39: #{tpu_custom_call.1} parent=5 // pred_region
      %s5491 = ssub.s32 %s9, 2
      // Predicated region
      $region41: #{tpu_custom_call.1} parent=39 // pred_check
        %p5492 = pneg %p106
      $region42: #{tpu_custom_call.1} parent=39 // pred_check_branch
        %5494 = sbr.rel (%p5492) target = $region44
      $region43: #{tpu_custom_call.1} parent=39 // pred_region
        %p5495 = scmp.lt.s32.totalorder %s15, 1
        %s5496 = scalar_select %p5495, %s15, 1
        %s5497 = smul.addr %s5496, 32
        %s5498 = smul.addr %s5497, 8
        %s5499 = scalar_lea.vmem %s3, %s5498
      $region44: #{tpu_custom_call.1} parent=39 // pred_fallthru
        _
    $region40: #{tpu_custom_call.1} parent=5 // pred_fallthru
      _
  $region6: #{tpu_custom_call.1} parent=0 // loop_footer
    %s13 = sadd.s32 1, %s9
  $region7: #{tpu_custom_call.1} parent=0 // loop_footer_branch
    %8 = sbr.rel target = $region3
  $region8: #{tpu_custom_call.1} parent=0 // loop_exit
    _

</llo_original>
